<compile_context>
chip_gen: v7x
topology: tpu7x:2x2x1
jax: 0.10.0
libtpu: 0.0.40
codegen_flags: <defaults>
</compile_context>

<pallas_src>
import math

import jax
import jax.numpy as jnp
from jax.experimental import pallas as pl
from jax.experimental.pallas import tpu as pltpu  # noqa: F401  (TPU backend assumed)

D_MODEL = 256
NHEAD = 8
HEAD_DIM = D_MODEL // NHEAD
LN_EPS = 1e-5  # nn.LayerNorm default


def _layer_norm(y, gamma, beta, eps):
    mu = jnp.mean(y, axis=-1, keepdims=True)
    var = jnp.mean(jnp.square(y - mu), axis=-1, keepdims=True)
    return (y - mu) * jax.lax.rsqrt(var + eps) * gamma + beta


def _make_cross_attn_kernel(nhead, normalize_before, has_qpos, has_pos, eps=LN_EPS):
    """Build a fused cross-attention kernel with a trace-time-configurable signature."""

    def kernel(*refs):
        it = iter(refs)
        tgt_ref = next(it)                               # (bs, qn, d)
        mem_ref = next(it)                               # (bs, S,  d)
        qpos_ref = next(it) if has_qpos else None        # (bs, qn, d)
        pos_ref = next(it) if has_pos else None          # (bs, S,  d)
        wq_ref, bq_ref = next(it), next(it)              # (d, d), (1, d)
        wkv_ref, bkv_ref = next(it), next(it)            # (d, 2d), (1, 2d)
        wo_ref, bo_ref = next(it), next(it)              # (d, d), (1, d)
        g_ref, b_ref = next(it), next(it)                # (1, d), (1, d)
        o_ref = next(it)                                 # (bs, qn, d)

        bs, qn, d = tgt_ref.shape
        S = mem_ref.shape[1]
        hd = d // nhead

        tgt = tgt_ref[...].reshape(bs * qn, d).astype(jnp.float32)
        mem = mem_ref[...].reshape(bs * S, d).astype(jnp.float32)

        # ---- projections ------------------------------------------------------------
        # query source: norm(tgt) for pre-norm, tgt for post-norm; + query_pos if given
        q_src = _layer_norm(tgt, g_ref[...], b_ref[...], eps) if normalize_before else tgt
        if has_qpos:
            q_src = q_src + qpos_ref[...].reshape(bs * qn, d)
        q = jnp.dot(q_src, wq_ref[...], preferred_element_type=jnp.float32) + bq_ref[...]

        # fused k|v projection from raw memory (single lane-dense N=2d matmul)
        kv = jnp.dot(mem, wkv_ref[...], preferred_element_type=jnp.float32) + bkv_ref[...]
        k = kv[:, :d]
        v = kv[:, d:]
        if has_pos:
            # torch MHA: key = memory + pos, value = raw memory.
            # (mem + pos) @ Wk == mem @ Wk + pos @ Wk -> add the pos correction to k.
            k = k + jnp.dot(pos_ref[...].reshape(bs * S, d), wkv_ref[:, :d],
                            preferred_element_type=jnp.float32)

        # ---- head-batched attention (one batched dot_general pair) -------------------
        def split_heads(x, t):
            x = x.reshape(bs, t, nhead, hd)
            x = jnp.swapaxes(x, 1, 2)                    # (bs, nhead, t, hd)
            return x.reshape(bs * nhead, t, hd)

        qh = split_heads(q, qn)                          # (bs*nhead, qn, hd)
        kh = split_heads(k, S)                           # (bs*nhead, S,  hd)
        vh = split_heads(v, S)                           # (bs*nhead, S,  hd)

        s = jnp.einsum('gqd,gkd->gqk', qh, kh,
                       preferred_element_type=jnp.float32) * (1.0 / math.sqrt(hd))
        s = s - jnp.max(s, axis=-1, keepdims=True)
        p = jnp.exp(s)
        p = p * pl.reciprocal(jnp.sum(p, axis=-1, keepdims=True), approx=True)
        ctx = jnp.einsum('gqk,gkd->gqd', p, vh, preferred_element_type=jnp.float32)

        ctx = ctx.reshape(bs, nhead, qn, hd)
        ctx = jnp.swapaxes(ctx, 1, 2).reshape(bs * qn, d)

        # ---- out_proj + residual (+ LayerNorm for post-norm) --------------------------
        attn = jnp.dot(ctx, wo_ref[...], preferred_element_type=jnp.float32) + bo_ref[...]
        y = tgt + attn                                   # dropout(p=0.0) == identity
        if not normalize_before:
            y = _layer_norm(y, g_ref[...], b_ref[...], eps)
        o_ref[...] = y.reshape(bs, qn, d).astype(o_ref.dtype)

    return kernel


# TODO(synk): memory_mask / memory_key_padding_mask are not implemented (they are None in this
#             forward path); dropout is p=0.0 so it is the identity.
def cross_attention_layer(params, tgt, memory, pos=None, query_pos=None,
                          nhead=NHEAD, normalize_before=False):
    """Fused CrossAttentionLayer.forward. tgt: (bs, qn, d), memory: (bs, S, d)."""
    bs, qn, d = tgt.shape
    kernel = _make_cross_attn_kernel(nhead, normalize_before,
                                     query_pos is not None, pos is not None)
    args = [tgt, memory]
    if query_pos is not None:
        args.append(query_pos)
    if pos is not None:
        args.append(pos)
    args += [params['wq'], params['bq'], params['wkv'], params['bkv'],
             params['wo'], params['bo'], params['ln_gamma'], params['ln_beta']]
    # Single launch, no grid: everything (a few KiB of activations + ~1 MiB of weights)
    # fits comfortably in VMEM on v5e / v6e / v7x.
    return pl.pallas_call(
        kernel,
        out_shape=jax.ShapeDtypeStruct((bs, qn, d), jnp.float32),
    )(*args)


def init_params(key, d=D_MODEL):
    """Deterministic init mirroring the module's _reset_parameters (xavier on 2-D weights)."""
    k_in, k_out = jax.random.split(key, 2)
    # torch in_proj_weight is (3d, d); xavier limit uses fan_in=d, fan_out=3d.
    lim_in = math.sqrt(6.0 / (d + 3 * d))
    w_in = jax.random.uniform(k_in, (d, 3 * d), jnp.float32, -lim_in, lim_in)  # pre-transposed
    lim_out = math.sqrt(6.0 / (d + d))
    w_out = jax.random.uniform(k_out, (d, d), jnp.float32, -lim_out, lim_out)
    return dict(
        wq=w_in[:, :d],              bq=jnp.zeros((1, d), jnp.float32),
        wkv=w_in[:, d:],             bkv=jnp.zeros((1, 2 * d), jnp.float32),
        wo=w_out,                    bo=jnp.zeros((1, d), jnp.float32),
        ln_gamma=jnp.ones((1, d), jnp.float32),
        ln_beta=jnp.zeros((1, d), jnp.float32),
    )


if __name__ == "__main__":
    key = jax.random.PRNGKey(0)
    k_p, k_t, k_m, k_qp, k_mp = jax.random.split(key, 5)

    bs, qn, S = 2, 8, 16
    params = init_params(k_p)

    tgt = jax.random.normal(k_t, (bs, qn, D_MODEL), jnp.float32)
    memory = jax.random.normal(k_m, (bs, S, D_MODEL), jnp.float32)
    query_pos = jax.random.normal(k_qp, (bs, qn, D_MODEL), jnp.float32)
    pos = jax.random.normal(k_mp, (bs, S, D_MODEL), jnp.float32)

    out = cross_attention_layer(params, tgt, memory, pos=pos, query_pos=query_pos)
    out = jax.block_until_ready(out)
    assert out.shape == (bs, qn, D_MODEL), out.shape
    assert bool(jnp.all(jnp.isfinite(out)))
    print("KERNEL_OK")
</pallas_src>

<mosaic_0001>
module attributes {stable_mosaic.version = 11 : i64} {
  func.func @kernel(%arg0: memref<2x8x256xf32, #tpu.memory_space<vmem>>, %arg1: memref<2x16x256xf32, #tpu.memory_space<vmem>>, %arg2: memref<2x8x256xf32, #tpu.memory_space<vmem>>, %arg3: memref<2x16x256xf32, #tpu.memory_space<vmem>>, %arg4: memref<256x256xf32, #tpu.memory_space<vmem>>, %arg5: memref<1x256xf32, #tpu.memory_space<vmem>>, %arg6: memref<256x512xf32, #tpu.memory_space<vmem>>, %arg7: memref<1x512xf32, #tpu.memory_space<vmem>>, %arg8: memref<256x256xf32, #tpu.memory_space<vmem>>, %arg9: memref<1x256xf32, #tpu.memory_space<vmem>>, %arg10: memref<1x256xf32, #tpu.memory_space<vmem>>, %arg11: memref<1x256xf32, #tpu.memory_space<vmem>>, %arg12: memref<2x8x256xf32, #tpu.memory_space<vmem>>) attributes {dimension_semantics = [], scalar_prefetch = 0 : i64, scratch_operands = 0 : i64, tpu.core_type = #tpu.core_type<tc>} {
    %c0 = arith.constant 0 : index
    %c0_0 = arith.constant 0 : index
    %c0_1 = arith.constant 0 : index
    %0 = vector.load %arg0[%c0, %c0_0, %c0_1] : memref<2x8x256xf32, #tpu.memory_space<vmem>>, vector<2x8x256xf32>
    %1 = vector.shape_cast %0 : vector<2x8x256xf32> to vector<16x256xf32>
    %c0_2 = arith.constant 0 : index
    %c0_3 = arith.constant 0 : index
    %c0_4 = arith.constant 0 : index
    %2 = vector.load %arg1[%c0_2, %c0_3, %c0_4] : memref<2x16x256xf32, #tpu.memory_space<vmem>>, vector<2x16x256xf32>
    %3 = vector.shape_cast %2 : vector<2x16x256xf32> to vector<32x256xf32>
    %c0_5 = arith.constant 0 : index
    %c0_6 = arith.constant 0 : index
    %c0_7 = arith.constant 0 : index
    %4 = vector.load %arg2[%c0_5, %c0_6, %c0_7] : memref<2x8x256xf32, #tpu.memory_space<vmem>>, vector<2x8x256xf32>
    %5 = vector.shape_cast %4 : vector<2x8x256xf32> to vector<16x256xf32>
    %6 = arith.addf %1, %5 : vector<16x256xf32>
    %c0_8 = arith.constant 0 : index
    %c0_9 = arith.constant 0 : index
    %7 = vector.load %arg4[%c0_8, %c0_9] : memref<256x256xf32, #tpu.memory_space<vmem>>, vector<256x256xf32>
    %cst = arith.constant dense<0.000000e+00> : vector<16x256xf32>
    %8 = tpu.matmul %6, %7, %cst {dimension_numbers = #tpu.dot_dimension_numbers<[1], [0], [0], [1], [0, 0, 1, 1], [], []>} : vector<16x256xf32>, vector<256x256xf32>, vector<16x256xf32> -> vector<16x256xf32>
    %c0_10 = arith.constant 0 : index
    %c0_11 = arith.constant 0 : index
    %9 = vector.load %arg5[%c0_10, %c0_11] : memref<1x256xf32, #tpu.memory_space<vmem>>, vector<1x256xf32>
    %10 = vector.broadcast %9 : vector<1x256xf32> to vector<16x256xf32>
    %11 = arith.addf %8, %10 : vector<16x256xf32>
    %c0_12 = arith.constant 0 : index
    %c0_13 = arith.constant 0 : index
    %12 = vector.load %arg6[%c0_12, %c0_13] : memref<256x512xf32, #tpu.memory_space<vmem>>, vector<256x512xf32>
    %cst_14 = arith.constant dense<0.000000e+00> : vector<32x512xf32>
    %13 = tpu.matmul %3, %12, %cst_14 {dimension_numbers = #tpu.dot_dimension_numbers<[1], [0], [0], [1], [0, 0, 1, 1], [], []>} : vector<32x256xf32>, vector<256x512xf32>, vector<32x512xf32> -> vector<32x512xf32>
    %c0_15 = arith.constant 0 : index
    %c0_16 = arith.constant 0 : index
    %14 = vector.load %arg7[%c0_15, %c0_16] : memref<1x512xf32, #tpu.memory_space<vmem>>, vector<1x512xf32>
    %15 = vector.broadcast %14 : vector<1x512xf32> to vector<32x512xf32>
    %16 = arith.addf %13, %15 : vector<32x512xf32>
    %17 = vector.extract_strided_slice %16 {offsets = [0, 0], sizes = [32, 256], strides = [1, 1]} : vector<32x512xf32> to vector<32x256xf32>
    %18 = vector.extract_strided_slice %16 {offsets = [0, 256], sizes = [32, 256], strides = [1, 1]} : vector<32x512xf32> to vector<32x256xf32>
    %c0_17 = arith.constant 0 : index
    %c0_18 = arith.constant 0 : index
    %c0_19 = arith.constant 0 : index
    %19 = vector.load %arg3[%c0_17, %c0_18, %c0_19] : memref<2x16x256xf32, #tpu.memory_space<vmem>>, vector<2x16x256xf32>
    %20 = vector.shape_cast %19 : vector<2x16x256xf32> to vector<32x256xf32>
    %c0_20 = arith.constant 0 : index
    %c0_21 = arith.constant 0 : index
    %21 = vector.load %arg6[%c0_20, %c0_21] : memref<256x512xf32, #tpu.memory_space<vmem>>, vector<256x256xf32>
    %cst_22 = arith.constant dense<0.000000e+00> : vector<32x256xf32>
    %22 = tpu.matmul %20, %21, %cst_22 {dimension_numbers = #tpu.dot_dimension_numbers<[1], [0], [0], [1], [0, 0, 1, 1], [], []>} : vector<32x256xf32>, vector<256x256xf32>, vector<32x256xf32> -> vector<32x256xf32>
    %23 = arith.addf %17, %22 : vector<32x256xf32>
    %24 = vector.shape_cast %11 : vector<16x256xf32> to vector<2x8x8x32xf32>
    %25 = tpu.transpose %24, [0, 2, 1, 3] : vector<2x8x8x32xf32> -> vector<2x8x8x32xf32>
    %26 = vector.shape_cast %25 : vector<2x8x8x32xf32> to vector<16x8x32xf32>
    %27 = vector.shape_cast %23 : vector<32x256xf32> to vector<2x16x8x32xf32>
    %28 = tpu.transpose %27, [0, 2, 1, 3] : vector<2x16x8x32xf32> -> vector<2x8x16x32xf32>
    %29 = vector.shape_cast %28 : vector<2x8x16x32xf32> to vector<16x16x32xf32>
    %30 = vector.shape_cast %18 : vector<32x256xf32> to vector<2x16x8x32xf32>
    %31 = tpu.transpose %30, [0, 2, 1, 3] : vector<2x16x8x32xf32> -> vector<2x8x16x32xf32>
    %32 = vector.shape_cast %31 : vector<2x8x16x32xf32> to vector<16x16x32xf32>
    "tpu.trace_start"() <{level = 10 : i32, message = "gqd,gkd->gqk"}> : () -> ()
    %cst_23 = arith.constant dense<0.000000e+00> : vector<16x8x16xf32>
    %33 = tpu.matmul %26, %29, %cst_23 {dimension_numbers = #tpu.dot_dimension_numbers<[2], [2], [1], [1], [0, 0, 0, 1, 1, 1], [0], [0]>} : vector<16x8x32xf32>, vector<16x16x32xf32>, vector<16x8x16xf32> -> vector<16x8x16xf32>
    "tpu.trace_stop"() : () -> ()
    %cst_24 = arith.constant 0.176776692 : f32
    %34 = vector.broadcast %cst_24 : f32 to vector<16x8x16xf32>
    %35 = arith.mulf %33, %34 : vector<16x8x16xf32>
    %cst_25 = arith.constant dense<0xFF800000> : vector<16x8xf32>
    %36 = vector.multi_reduction <maximumf>, %35, %cst_25 [2] : vector<16x8x16xf32> to vector<16x8xf32>
    %37 = vector.shape_cast %36 : vector<16x8xf32> to vector<16x8x1xf32>
    %38 = vector.broadcast %37 : vector<16x8x1xf32> to vector<16x8x16xf32>
    %39 = arith.subf %35, %38 : vector<16x8x16xf32>
    %40 = math.exp %39 : vector<16x8x16xf32>
    %cst_26 = arith.constant dense<0.000000e+00> : vector<16x8xf32>
    %41 = vector.multi_reduction <add>, %40, %cst_26 [2] : vector<16x8x16xf32> to vector<16x8xf32>
    %42 = vector.shape_cast %41 : vector<16x8xf32> to vector<16x8x1xf32>
    %43 = tpu.reciprocal %42 {approx = true} : vector<16x8x1xf32> -> vector<16x8x1xf32>
    %44 = vector.broadcast %43 : vector<16x8x1xf32> to vector<16x8x16xf32>
    %45 = arith.mulf %40, %44 : vector<16x8x16xf32>
    "tpu.trace_start"() <{level = 10 : i32, message = "gqk,gkd->gqd"}> : () -> ()
    %cst_27 = arith.constant dense<0.000000e+00> : vector<16x8x32xf32>
    %46 = tpu.matmul %45, %32, %cst_27 {dimension_numbers = #tpu.dot_dimension_numbers<[2], [1], [1], [2], [0, 0, 0, 1, 1, 2], [0], [0]>} : vector<16x8x16xf32>, vector<16x16x32xf32>, vector<16x8x32xf32> -> vector<16x8x32xf32>
    "tpu.trace_stop"() : () -> ()
    %47 = vector.shape_cast %46 : vector<16x8x32xf32> to vector<2x8x8x32xf32>
    %48 = tpu.transpose %47, [0, 2, 1, 3] : vector<2x8x8x32xf32> -> vector<2x8x8x32xf32>
    %49 = vector.shape_cast %48 : vector<2x8x8x32xf32> to vector<16x256xf32>
    %c0_28 = arith.constant 0 : index
    %c0_29 = arith.constant 0 : index
    %50 = vector.load %arg8[%c0_28, %c0_29] : memref<256x256xf32, #tpu.memory_space<vmem>>, vector<256x256xf32>
    %cst_30 = arith.constant dense<0.000000e+00> : vector<16x256xf32>
    %51 = tpu.matmul %49, %50, %cst_30 {dimension_numbers = #tpu.dot_dimension_numbers<[1], [0], [0], [1], [0, 0, 1, 1], [], []>} : vector<16x256xf32>, vector<256x256xf32>, vector<16x256xf32> -> vector<16x256xf32>
    %c0_31 = arith.constant 0 : index
    %c0_32 = arith.constant 0 : index
    %52 = vector.load %arg9[%c0_31, %c0_32] : memref<1x256xf32, #tpu.memory_space<vmem>>, vector<1x256xf32>
    %53 = vector.broadcast %52 : vector<1x256xf32> to vector<16x256xf32>
    %54 = arith.addf %51, %53 : vector<16x256xf32>
    %55 = arith.addf %1, %54 : vector<16x256xf32>
    %c0_33 = arith.constant 0 : index
    %c0_34 = arith.constant 0 : index
    %56 = vector.load %arg10[%c0_33, %c0_34] : memref<1x256xf32, #tpu.memory_space<vmem>>, vector<1x256xf32>
    %c0_35 = arith.constant 0 : index
    %c0_36 = arith.constant 0 : index
    %57 = vector.load %arg11[%c0_35, %c0_36] : memref<1x256xf32, #tpu.memory_space<vmem>>, vector<1x256xf32>
    %cst_37 = arith.constant dense<0.000000e+00> : vector<16xf32>
    %58 = vector.multi_reduction <add>, %55, %cst_37 [1] : vector<16x256xf32> to vector<16xf32>
    %59 = vector.shape_cast %58 : vector<16xf32> to vector<16x1xf32>
    %cst_38 = arith.constant 2.560000e+02 : f32
    %60 = vector.broadcast %cst_38 : f32 to vector<16x1xf32>
    %61 = arith.divf %59, %60 : vector<16x1xf32>
    %62 = vector.broadcast %61 : vector<16x1xf32> to vector<16x256xf32>
    %63 = arith.subf %55, %62 : vector<16x256xf32>
    %64 = arith.mulf %63, %63 : vector<16x256xf32>
    %cst_39 = arith.constant dense<0.000000e+00> : vector<16xf32>
    %65 = vector.multi_reduction <add>, %64, %cst_39 [1] : vector<16x256xf32> to vector<16xf32>
    %66 = vector.shape_cast %65 : vector<16xf32> to vector<16x1xf32>
    %cst_40 = arith.constant 2.560000e+02 : f32
    %67 = vector.broadcast %cst_40 : f32 to vector<16x1xf32>
    %68 = arith.divf %66, %67 : vector<16x1xf32>
    %69 = vector.broadcast %61 : vector<16x1xf32> to vector<16x256xf32>
    %70 = arith.subf %55, %69 : vector<16x256xf32>
    %cst_41 = arith.constant 9.99999974E-6 : f32
    %71 = vector.broadcast %cst_41 : f32 to vector<16x1xf32>
    %72 = arith.addf %68, %71 : vector<16x1xf32>
    %73 = math.rsqrt %72 : vector<16x1xf32>
    %74 = vector.broadcast %73 : vector<16x1xf32> to vector<16x256xf32>
    %75 = arith.mulf %70, %74 : vector<16x256xf32>
    %76 = vector.broadcast %56 : vector<1x256xf32> to vector<16x256xf32>
    %77 = arith.mulf %75, %76 : vector<16x256xf32>
    %78 = vector.broadcast %57 : vector<1x256xf32> to vector<16x256xf32>
    %79 = arith.addf %77, %78 : vector<16x256xf32>
    %80 = vector.shape_cast %79 : vector<16x256xf32> to vector<2x8x256xf32>
    %c0_42 = arith.constant 0 : index
    %c0_43 = arith.constant 0 : index
    %c0_44 = arith.constant 0 : index
    %81 = vector.load %arg12[%c0_42, %c0_43, %c0_44] : memref<2x8x256xf32, #tpu.memory_space<vmem>>, vector<2x8x256xf32>
    tpu.vector_store %arg12[%c0_42, %c0_43, %c0_44], %80 {strides = array<i32>} : memref<2x8x256xf32, #tpu.memory_space<vmem>>, vector<2x8x256xf32>,
    return
  }
}

</mosaic_0001>

<llo_original>
// kernel: tpu_custom_call.1
$region0: #{tpu_custom_call.1}
  #allocation0 [shape = 'u32[]', space=smem, size = 0x4, offset = 0x4, fixed_abs, tag = 'smem constant byte address 0x4 - core index']
  #allocation1 [shape = 'u32[144,128]{1,0:T(1,128)}', space=vmem, size = 0x12000, scoped, tag = 'internal scratch']
  %s0 = inlined_call_operand.hbm [shape: f32[2,8,256], index: 0, kind: input, shape index: {}]
  %s1 = inlined_call_operand.hbm [shape: f32[2,16,256], index: 1, kind: input, shape index: {}]
  %s2 = inlined_call_operand.hbm [shape: f32[2,8,256], index: 2, kind: input, shape index: {}]
  %s3 = inlined_call_operand.hbm [shape: f32[2,16,256], index: 3, kind: input, shape index: {}]
  %s4 = inlined_call_operand.hbm [shape: f32[256,256], index: 4, kind: input, shape index: {}]
  %s5 = inlined_call_operand.vmem [shape: f32[1,256], index: 5, kind: input, shape index: {}]
  %s6 = inlined_call_operand.hbm [shape: f32[256,512], index: 6, kind: input, shape index: {}]
  %s7 = inlined_call_operand.vmem [shape: f32[1,512], index: 7, kind: input, shape index: {}]
  %s8 = inlined_call_operand.hbm [shape: f32[256,256], index: 8, kind: input, shape index: {}]
  %s9 = inlined_call_operand.vmem [shape: f32[1,256], index: 9, kind: input, shape index: {}]
  %s10 = inlined_call_operand.vmem [shape: f32[1,256], index: 10, kind: input, shape index: {}]
  %s11 = inlined_call_operand.vmem [shape: f32[1,256], index: 11, kind: input, shape index: {}]
  %s12 = inlined_call_operand.hbm [shape: f32[2,8,256], index: 12, kind: output, shape index: {}]
  %s13 = sld [smem:[#allocation0]]
  $region86: #{tpu_custom_call.1} parent=0
    _
  %s15 = ssub.s32 1, %s13
  %s16 = scalar_select 0, %s15, %s13
  $region1: #{tpu_custom_call.1} parent=0
    #allocation2 [shape = 'u8[16384]{0}', space=vmem, size = 0x4000, scoped, tag = 'input window, operand 0, single buffered']
    #allocation3 [shape = 's32[1]{0}', space=sflag, size = 0x4, scoped, tag = 'scoped memory for tpu_custom_call.1']
    #allocation4 [shape = 's32[1]{0}', space=sflag, size = 0x4, scoped, tag = 'scoped memory for tpu_custom_call.1']
    #allocation5 [shape = 'u8[32768]{0}', space=vmem, size = 0x8000, scoped, tag = 'input window, operand 1, single buffered']
    #allocation6 [shape = 's32[1]{0}', space=sflag, size = 0x4, scoped, tag = 'scoped memory for tpu_custom_call.1']
    #allocation7 [shape = 'u8[16384]{0}', space=vmem, size = 0x4000, scoped, tag = 'input window, operand 2, single buffered']
    #allocation8 [shape = 'u8[32768]{0}', space=vmem, size = 0x8000, scoped, tag = 'input window, operand 3, single buffered']
    #allocation9 [shape = 's32[1]{0}', space=sflag, size = 0x4, scoped, tag = 'scoped memory for tpu_custom_call.1']
    #allocation10 [shape = 'u8[262144]{0}', space=vmem, size = 0x40000, scoped, tag = 'input window, operand 4, single buffered']
    #allocation11 [shape = 'u8[524288]{0}', space=vmem, size = 0x80000, scoped, tag = 'input window, operand 6, single buffered']
    #allocation12 [shape = 's32[1]{0}', space=sflag, size = 0x4, scoped, tag = 'scoped memory for tpu_custom_call.1']
    #allocation13 [shape = 'u8[262144]{0}', space=vmem, size = 0x40000, scoped, tag = 'input window, operand 8, single buffered']
    #allocation14 [shape = 'u8[16384]{0}', space=vmem, size = 0x4000, scoped, tag = 'output window, operand 0, single buffered']
    %17 = vsyncpa [#allocation3], 0
    %18 = vsyncpa [#allocation6], 0
    %19 = vsyncpa [#allocation9], 0
    %20 = vsyncpa [#allocation12], 0
    %21 = vsyncpa [#allocation4], 0
    // Predicated region
    $region2: #{tpu_custom_call.1} parent=1 // pred_check
      _
    $region3: #{tpu_custom_call.1} parent=1 // pred_check_branch
      %23 = sbr.rel (0) target = $region5
    $region4: #{tpu_custom_call.1} parent=1 // pred_region
      %s25 = ssub.s32 512, 512
      %26 = vsyncadd [#allocation3], %s25
      %s27 = sshll.u32 [#allocation2], 4
      %s28 = int_to_ptr.vmem [resolvable:$true] %s27
      %33 = dma.hbm_to_vmem [thread:$0]  %s0, 512, %s28, [#allocation3], 256, 256, 16
    $region5: #{tpu_custom_call.1} parent=1 // pred_fallthru
      _
    // Predicated region
    $region6: #{tpu_custom_call.1} parent=1 // pred_check
      _
    $region7: #{tpu_custom_call.1} parent=1 // pred_check_branch
      %35 = sbr.rel (0) target = $region9
    $region8: #{tpu_custom_call.1} parent=1 // pred_region
      %s37 = ssub.s32 1024, 1024
      %38 = vsyncadd [#allocation6], %s37
      %s39 = sshll.u32 [#allocation5], 4
      %s40 = int_to_ptr.vmem [resolvable:$true] %s39
      %45 = dma.hbm_to_vmem [thread:$0]  %s1, 1024, %s40, [#allocation6], 256, 256, 16
    $region9: #{tpu_custom_call.1} parent=1 // pred_fallthru
      _
    // Predicated region
    $region10: #{tpu_custom_call.1} parent=1 // pred_check
      _
    $region11: #{tpu_custom_call.1} parent=1 // pred_check_branch
      %47 = sbr.rel (0) target = $region13
    $region12: #{tpu_custom_call.1} parent=1 // pred_region
      %s49 = ssub.s32 512, 512
      %50 = vsyncadd [#allocation6], %s49
      %s51 = sshll.u32 [#allocation7], 4
      %s52 = int_to_ptr.vmem [resolvable:$true] %s51
      %57 = dma.hbm_to_vmem [thread:$0]  %s2, 512, %s52, [#allocation6], 256, 256, 16
    $region13: #{tpu_custom_call.1} parent=1 // pred_fallthru
      _
    // Predicated region
    $region14: #{tpu_custom_call.1} parent=1 // pred_check
      _
    $region15: #{tpu_custom_call.1} parent=1 // pred_check_branch
      %59 = sbr.rel (0) target = $region17
    $region16: #{tpu_custom_call.1} parent=1 // pred_region
      %s61 = ssub.s32 1024, 1024
      %62 = vsyncadd [#allocation9], %s61
      %s63 = sshll.u32 [#allocation8], 4
      %s64 = int_to_ptr.vmem [resolvable:$true] %s63
      %69 = dma.hbm_to_vmem [thread:$0]  %s3, 1024, %s64, [#allocation9], 256, 256, 16
    $region17: #{tpu_custom_call.1} parent=1 // pred_fallthru
      _
    // Predicated region
    $region18: #{tpu_custom_call.1} parent=1 // pred_check
      _
    $region19: #{tpu_custom_call.1} parent=1 // pred_check_branch
      %71 = sbr.rel (0) target = $region21
    $region20: #{tpu_custom_call.1} parent=1 // pred_region
      %s73 = ssub.s32 8192, 8192
      %74 = vsyncadd [#allocation9], %s73
      %s75 = sshll.u32 [#allocation10], 4
      %s76 = int_to_ptr.vmem [resolvable:$true] %s75
      %81 = dma.hbm_to_vmem [thread:$0]  %s4, 8192, %s76, [#allocation9], 256, 256, 16
    $region21: #{tpu_custom_call.1} parent=1 // pred_fallthru
      _
    // Predicated region
    $region22: #{tpu_custom_call.1} parent=1 // pred_check
      _
    $region23: #{tpu_custom_call.1} parent=1 // pred_check_branch
      %83 = sbr.rel (0) target = $region25
    $region24: #{tpu_custom_call.1} parent=1 // pred_region
      _
    $region25: #{tpu_custom_call.1} parent=1 // pred_fallthru
      _
    // Predicated region
    $region26: #{tpu_custom_call.1} parent=1 // pred_check
      _
    $region27: #{tpu_custom_call.1} parent=1 // pred_check_branch
      %85 = sbr.rel (0) target = $region29
    $region28: #{tpu_custom_call.1} parent=1 // pred_region
      %s87 = ssub.s32 16384, 16384
      %88 = vsyncadd [#allocation12], %s87
      %s89 = sshll.u32 [#allocation11], 4
      %s90 = int_to_ptr.vmem [resolvable:$true] %s89
      %95 = dma.hbm_to_vmem [thread:$0]  %s6, 16384, %s90, [#allocation12], 512, 512, 32
    $region29: #{tpu_custom_call.1} parent=1 // pred_fallthru
      _
    // Predicated region
    $region30: #{tpu_custom_call.1} parent=1 // pred_check
      _
    $region31: #{tpu_custom_call.1} parent=1 // pred_check_branch
      %97 = sbr.rel (0) target = $region33
    $region32: #{tpu_custom_call.1} parent=1 // pred_region
      _
    $region33: #{tpu_custom_call.1} parent=1 // pred_fallthru
      _
    // Predicated region
    $region34: #{tpu_custom_call.1} parent=1 // pred_check
      _
    $region35: #{tpu_custom_call.1} parent=1 // pred_check_branch
      %99 = sbr.rel (0) target = $region37
    $region36: #{tpu_custom_call.1} parent=1 // pred_region
      %s101 = ssub.s32 8192, 8192
      %102 = vsyncadd [#allocation12], %s101
      %s103 = sshll.u32 [#allocation13], 4
      %s104 = int_to_ptr.vmem [resolvable:$true] %s103
      %109 = dma.hbm_to_vmem [thread:$0]  %s8, 8192, %s104, [#allocation12], 256, 256, 16
    $region37: #{tpu_custom_call.1} parent=1 // pred_fallthru
      _
    // Predicated region
    $region38: #{tpu_custom_call.1} parent=1 // pred_check
      _
    $region39: #{tpu_custom_call.1} parent=1 // pred_check_branch
      %111 = sbr.rel (0) target = $region41
    $region40: #{tpu_custom_call.1} parent=1 // pred_region
      _
    $region41: #{tpu_custom_call.1} parent=1 // pred_fallthru
      _
    // Predicated region
    $region42: #{tpu_custom_call.1} parent=1 // pred_check
      _
    $region43: #{tpu_custom_call.1} parent=1 // pred_check_branch
      %113 = sbr.rel (0) target = $region45
    $region44: #{tpu_custom_call.1} parent=1 // pred_region
      _
    $region45: #{tpu_custom_call.1} parent=1 // pred_fallthru
      _
    // Predicated region
    $region46: #{tpu_custom_call.1} parent=1 // pred_check
      _
    $region47: #{tpu_custom_call.1} parent=1 // pred_check_branch
      %115 = sbr.rel (0) target = $region49
    $region48: #{tpu_custom_call.1} parent=1 // pred_region
      _
    $region49: #{tpu_custom_call.1} parent=1 // pred_fallthru
      _
    // Predicated region
    $region50: #{tpu_custom_call.1} parent=1 // pred_check
      _
    $region51: #{tpu_custom_call.1} parent=1 // pred_check_branch
      %117 = sbr.rel (0) target = $region53
    $region52: #{tpu_custom_call.1} parent=1 // pred_region
      %118 = dma.done [#allocation3], 512
    $region53: #{tpu_custom_call.1} parent=1 // pred_fallthru
      _
    // Predicated region
    $region54: #{tpu_custom_call.1} parent=1 // pred_check
      _
    $region55: #{tpu_custom_call.1} parent=1 // pred_check_branch
      %120 = sbr.rel (0) target = $region57
    $region56: #{tpu_custom_call.1} parent=1 // pred_region
      %121 = dma.done [#allocation6], 1024
    $region57: #{tpu_custom_call.1} parent=1 // pred_fallthru
      _
    // Predicated region
    $region58: #{tpu_custom_call.1} parent=1 // pred_check
      _
    $region59: #{tpu_custom_call.1} parent=1 // pred_check_branch
      %123 = sbr.rel (0) target = $region61
    $region60: #{tpu_custom_call.1} parent=1 // pred_region
      %124 = dma.done [#allocation6], 512
    $region61: #{tpu_custom_call.1} parent=1 // pred_fallthru
      _
    // Predicated region
    $region62: #{tpu_custom_call.1} parent=1 // pred_check
      _
    $region63: #{tpu_custom_call.1} parent=1 // pred_check_branch
      %126 = sbr.rel (0) target = $region65
    $region64: #{tpu_custom_call.1} parent=1 // pred_region
      %127 = dma.done [#allocation9], 1024
    $region65: #{tpu_custom_call.1} parent=1 // pred_fallthru
      _
    // Predicated region
    $region66: #{tpu_custom_call.1} parent=1 // pred_check
      _
    $region67: #{tpu_custom_call.1} parent=1 // pred_check_branch
      %129 = sbr.rel (0) target = $region69
    $region68: #{tpu_custom_call.1} parent=1 // pred_region
      %130 = dma.done [#allocation9], 8192
    $region69: #{tpu_custom_call.1} parent=1 // pred_fallthru
      _
    // Predicated region
    $region70: #{tpu_custom_call.1} parent=1 // pred_check
      _
    $region71: #{tpu_custom_call.1} parent=1 // pred_check_branch
      %132 = sbr.rel (0) target = $region73
    $region72: #{tpu_custom_call.1} parent=1 // pred_region
      %133 = dma.done [#allocation12], 16384
    $region73: #{tpu_custom_call.1} parent=1 // pred_fallthru
      _
    // Predicated region
    $region74: #{tpu_custom_call.1} parent=1 // pred_check
      _
    $region75: #{tpu_custom_call.1} parent=1 // pred_check_branch
      %135 = sbr.rel (0) target = $region77
    $region76: #{tpu_custom_call.1} parent=1 // pred_region
      %136 = dma.done [#allocation12], 8192
    $region77: #{tpu_custom_call.1} parent=1 // pred_fallthru
      _
    %v137 = vld [vmem:[#allocation2] sm:$0xff]
    %v138 = vld [vmem:[#allocation2 + $0x8] sm:$0xff]
    %v139 = vld [vmem:[#allocation2 + $0x10] sm:$0xff]
    %v140 = vld [vmem:[#allocation2 + $0x18] sm:$0xff]
    %v141 = vld [vmem:[#allocation5] sm:$0xff]
    %v142 = vld [vmem:[#allocation5 + $0x8] sm:$0xff]
    %v143 = vld [vmem:[#allocation5 + $0x10] sm:$0xff]
    %v144 = vld [vmem:[#allocation5 + $0x18] sm:$0xff]
    %v145 = vld [vmem:[#allocation5 + $0x20] sm:$0xff]
    %v146 = vld [vmem:[#allocation5 + $0x28] sm:$0xff]
    %v147 = vld [vmem:[#allocation5 + $0x30] sm:$0xff]
    %v148 = vld [vmem:[#allocation5 + $0x38] sm:$0xff]
    %v149 = vld [vmem:[#allocation7] sm:$0xff]
    %v150 = vld [vmem:[#allocation7 + $0x8] sm:$0xff]
    %v151 = vld [vmem:[#allocation7 + $0x10] sm:$0xff]
    %v152 = vld [vmem:[#allocation7 + $0x18] sm:$0xff]
    %v153 = vadd.f32 %v137, %v149
    %v154 = vadd.f32 %v138, %v150
    %v155 = vadd.f32 %v139, %v151
    %v156 = vadd.f32 %v140, %v152
    %v157 = vld [vmem:[#allocation10] sm:$0xff]
    %v158 = vld [vmem:[#allocation10 + $0x8] sm:$0xff]
    %v159 = vld [vmem:[#allocation10 + $0x10] sm:$0xff]
    %v160 = vld [vmem:[#allocation10 + $0x18] sm:$0xff]
    %v161 = vld [vmem:[#allocation10 + $0x20] sm:$0xff]
    %v162 = vld [vmem:[#allocation10 + $0x28] sm:$0xff]
    %v163 = vld [vmem:[#allocation10 + $0x30] sm:$0xff]
    %v164 = vld [vmem:[#allocation10 + $0x38] sm:$0xff]
    %v165 = vld [vmem:[#allocation10 + $0x40] sm:$0xff]
    %v166 = vld [vmem:[#allocation10 + $0x48] sm:$0xff]
    %v167 = vld [vmem:[#allocation10 + $0x50] sm:$0xff]
    %v168 = vld [vmem:[#allocation10 + $0x58] sm:$0xff]
    %v169 = vld [vmem:[#allocation10 + $0x60] sm:$0xff]
    %v170 = vld [vmem:[#allocation10 + $0x68] sm:$0xff]
    %v171 = vld [vmem:[#allocation10 + $0x70] sm:$0xff]
    %v172 = vld [vmem:[#allocation10 + $0x78] sm:$0xff]
    %v173 = vld [vmem:[#allocation10 + $0x80] sm:$0xff]
    %v174 = vld [vmem:[#allocation10 + $0x88] sm:$0xff]
    %v175 = vld [vmem:[#allocation10 + $0x90] sm:$0xff]
    %v176 = vld [vmem:[#allocation10 + $0x98] sm:$0xff]
    %v177 = vld [vmem:[#allocation10 + $0xa0] sm:$0xff]
    %v178 = vld [vmem:[#allocation10 + $0xa8] sm:$0xff]
    %v179 = vld [vmem:[#allocation10 + $0xb0] sm:$0xff]
    %v180 = vld [vmem:[#allocation10 + $0xb8] sm:$0xff]
    %v181 = vld [vmem:[#allocation10 + $0xc0] sm:$0xff]
    %v182 = vld [vmem:[#allocation10 + $0xc8] sm:$0xff]
    %v183 = vld [vmem:[#allocation10 + $0xd0] sm:$0xff]
    %v184 = vld [vmem:[#allocation10 + $0xd8] sm:$0xff]
    %v185 = vld [vmem:[#allocation10 + $0xe0] sm:$0xff]
    %v186 = vld [vmem:[#allocation10 + $0xe8] sm:$0xff]
    %v187 = vld [vmem:[#allocation10 + $0xf0] sm:$0xff]
    %v188 = vld [vmem:[#allocation10 + $0xf8] sm:$0xff]
    %v189 = vld [vmem:[#allocation10 + $0x100] sm:$0xff]
    %v190 = vld [vmem:[#allocation10 + $0x108] sm:$0xff]
    %v191 = vld [vmem:[#allocation10 + $0x110] sm:$0xff]
    %v192 = vld [vmem:[#allocation10 + $0x118] sm:$0xff]
    %v193 = vld [vmem:[#allocation10 + $0x120] sm:$0xff]
    %v194 = vld [vmem:[#allocation10 + $0x128] sm:$0xff]
    %v195 = vld [vmem:[#allocation10 + $0x130] sm:$0xff]
    %v196 = vld [vmem:[#allocation10 + $0x138] sm:$0xff]
    %v197 = vld [vmem:[#allocation10 + $0x140] sm:$0xff]
    %v198 = vld [vmem:[#allocation10 + $0x148] sm:$0xff]
    %v199 = vld [vmem:[#allocation10 + $0x150] sm:$0xff]
    %v200 = vld [vmem:[#allocation10 + $0x158] sm:$0xff]
    %v201 = vld [vmem:[#allocation10 + $0x160] sm:$0xff]
    %v202 = vld [vmem:[#allocation10 + $0x168] sm:$0xff]
    %v203 = vld [vmem:[#allocation10 + $0x170] sm:$0xff]
    %v204 = vld [vmem:[#allocation10 + $0x178] sm:$0xff]
    %v205 = vld [vmem:[#allocation10 + $0x180] sm:$0xff]
    %v206 = vld [vmem:[#allocation10 + $0x188] sm:$0xff]
    %v207 = vld [vmem:[#allocation10 + $0x190] sm:$0xff]
    %v208 = vld [vmem:[#allocation10 + $0x198] sm:$0xff]
    %v209 = vld [vmem:[#allocation10 + $0x1a0] sm:$0xff]
    %v210 = vld [vmem:[#allocation10 + $0x1a8] sm:$0xff]
    %v211 = vld [vmem:[#allocation10 + $0x1b0] sm:$0xff]
    %v212 = vld [vmem:[#allocation10 + $0x1b8] sm:$0xff]
    %v213 = vld [vmem:[#allocation10 + $0x1c0] sm:$0xff]
    %v214 = vld [vmem:[#allocation10 + $0x1c8] sm:$0xff]
    %v215 = vld [vmem:[#allocation10 + $0x1d0] sm:$0xff]
    %v216 = vld [vmem:[#allocation10 + $0x1d8] sm:$0xff]
    %v217 = vld [vmem:[#allocation10 + $0x1e0] sm:$0xff]
    %v218 = vld [vmem:[#allocation10 + $0x1e8] sm:$0xff]
    %v219 = vld [vmem:[#allocation10 + $0x1f0] sm:$0xff]
    %v220 = vld [vmem:[#allocation10 + $0x1f8] sm:$0xff]
    %v221 = vld [vmem:[%s5] sm:$0x3]
    %v223 = vlaneseq
    %v224 = vshrl.u32 %v223, 7
    %v225 = vsub.s32 0, %v224
    %v226 = vrot.slane %v221, %v225
    %v227 = vlaneseq
    %v228 = vshrl.u32 %v227, 7
    %v229 = vsub.s32 1, %v228
    %v230 = vrot.slane %v221, %v229
    %233 = vmatprep.subr.mxu0 %v158
    %234 = vmatpush1.msra.mxu0 %v157
    %235 = vmatprep.subr.mxu0 %v160
    %236 = vmatpush1.msra.mxu0 %v159
    %237 = vmatprep.subr.mxu0 %v162
    %238 = vmatpush1.msra.mxu0 %v161
    %239 = vmatprep.subr.mxu0 %v164
    %240 = vmatpush1.msra.mxu0 %v163
    %241 = vmatprep.subr.mxu0 %v166
    %242 = vmatpush1.msra.mxu0 %v165
    %243 = vmatprep.subr.mxu0 %v168
    %244 = vmatpush1.msra.mxu0 %v167
    %245 = vmatprep.subr.mxu0 %v170
    %246 = vmatpush1.msra.mxu0 %v169
    %247 = vmatprep.subr.mxu0 %v172
    %248 = vmatpush1.msra.mxu0 %v171
    %249 = vmatprep.subr.mxu0 %v174
    %250 = vmatpush1.msra.mxu0 %v173
    %251 = vmatprep.subr.mxu0 %v176
    %252 = vmatpush1.msra.mxu0 %v175
    %253 = vmatprep.subr.mxu0 %v178
    %254 = vmatpush1.msra.mxu0 %v177
    %255 = vmatprep.subr.mxu0 %v180
    %256 = vmatpush1.msra.mxu0 %v179
    %257 = vmatprep.subr.mxu0 %v182
    %258 = vmatpush1.msra.mxu0 %v181
    %259 = vmatprep.subr.mxu0 %v184
    %260 = vmatpush1.msra.mxu0 %v183
    %261 = vmatprep.subr.mxu0 %v186
    %262 = vmatpush1.msra.mxu0 %v185
    %263 = vmatprep.subr.mxu0 %v188
    %264 = vmatpush1.msra.mxu0 %v187
    %265 = vmatprep.subr.mxu0 %v190
    %266 = vmatpush1.msra.mxu0 %v189
    %267 = vmatprep.subr.mxu0 %v192
    %268 = vmatpush1.msra.mxu0 %v191
    %269 = vmatprep.subr.mxu0 %v194
    %270 = vmatpush1.msra.mxu0 %v193
    %271 = vmatprep.subr.mxu0 %v196
    %272 = vmatpush1.msra.mxu0 %v195
    %273 = vmatprep.subr.mxu0 %v198
    %274 = vmatpush1.msra.mxu0 %v197
    %275 = vmatprep.subr.mxu0 %v200
    %276 = vmatpush1.msra.mxu0 %v199
    %277 = vmatprep.subr.mxu0 %v202
    %278 = vmatpush1.msra.mxu0 %v201
    %279 = vmatprep.subr.mxu0 %v204
    %280 = vmatpush1.msra.mxu0 %v203
    %281 = vmatprep.subr.mxu0 %v206
    %282 = vmatpush1.msra.mxu0 %v205
    %283 = vmatprep.subr.mxu0 %v208
    %284 = vmatpush1.msra.mxu0 %v207
    %285 = vmatprep.subr.mxu0 %v210
    %286 = vmatpush1.msra.mxu0 %v209
    %287 = vmatprep.subr.mxu0 %v212
    %288 = vmatpush1.msra.mxu0 %v211
    %289 = vmatprep.subr.mxu0 %v214
    %290 = vmatpush1.msra.mxu0 %v213
    %291 = vmatprep.subr.mxu0 %v216
    %292 = vmatpush1.msra.mxu0 %v215
    %293 = vmatprep.subr.mxu0 %v218
    %294 = vmatpush1.msra.mxu0 %v217
    %295 = vmatprep.subr.mxu0 %v220
    %296 = vmatpush1.msra.mxu0 %v219
    %297 = vmatprep.mubr.f32.mxu0 %v154
    %298 = vmatmul.mubr.f32.gmra.mrb[0].mxu0 %v153
    %v299 = vpop.f32.mrb[0].mxu0
    %v300 = vadd.f32 %v226, %v299
    %v301 = vpop.f32.mrb[0].mxu0
    %v302 = vadd.f32 %v230, %v301
    %303 = vmatprep.mubr.f32.mxu0 %v156
    %304 = vmatmul.mubr.f32.gmra.mrb[0].mxu0 %v155
    %v305 = vpop.f32.mrb[0].mxu0
    %v306 = vadd.f32 %v226, %v305
    %v307 = vpop.f32.mrb[0].mxu0
    %v308 = vadd.f32 %v230, %v307
    %309 = vdwg.mxu0
    %v310 = vld [vmem:[#allocation11] sm:$0xff]
    %v311 = vld [vmem:[#allocation11 + $0x8] sm:$0xff]
    %v312 = vld [vmem:[#allocation11 + $0x10] sm:$0xff]
    %v313 = vld [vmem:[#allocation11 + $0x18] sm:$0xff]
    %v314 = vld [vmem:[#allocation11 + $0x20] sm:$0xff]
    %v315 = vld [vmem:[#allocation11 + $0x28] sm:$0xff]
    %v316 = vld [vmem:[#allocation11 + $0x30] sm:$0xff]
    %v317 = vld [vmem:[#allocation11 + $0x38] sm:$0xff]
    %v318 = vld [vmem:[#allocation11 + $0x40] sm:$0xff]
    %v319 = vld [vmem:[#allocation11 + $0x48] sm:$0xff]
    %v320 = vld [vmem:[#allocation11 + $0x50] sm:$0xff]
    %v321 = vld [vmem:[#allocation11 + $0x58] sm:$0xff]
    %v322 = vld [vmem:[#allocation11 + $0x60] sm:$0xff]
    %v323 = vld [vmem:[#allocation11 + $0x68] sm:$0xff]
    %v324 = vld [vmem:[#allocation11 + $0x70] sm:$0xff]
    %v325 = vld [vmem:[#allocation11 + $0x78] sm:$0xff]
    %v326 = vld [vmem:[#allocation11 + $0x80] sm:$0xff]
    %v327 = vld [vmem:[#allocation11 + $0x88] sm:$0xff]
    %v328 = vld [vmem:[#allocation11 + $0x90] sm:$0xff]
    %v329 = vld [vmem:[#allocation11 + $0x98] sm:$0xff]
    %v330 = vld [vmem:[#allocation11 + $0xa0] sm:$0xff]
    %v331 = vld [vmem:[#allocation11 + $0xa8] sm:$0xff]
    %v332 = vld [vmem:[#allocation11 + $0xb0] sm:$0xff]
    %v333 = vld [vmem:[#allocation11 + $0xb8] sm:$0xff]
    %v334 = vld [vmem:[#allocation11 + $0xc0] sm:$0xff]
    %v335 = vld [vmem:[#allocation11 + $0xc8] sm:$0xff]
    %v336 = vld [vmem:[#allocation11 + $0xd0] sm:$0xff]
    %v337 = vld [vmem:[#allocation11 + $0xd8] sm:$0xff]
    %v338 = vld [vmem:[#allocation11 + $0xe0] sm:$0xff]
    %v339 = vld [vmem:[#allocation11 + $0xe8] sm:$0xff]
    %v340 = vld [vmem:[#allocation11 + $0xf0] sm:$0xff]
    %v341 = vld [vmem:[#allocation11 + $0xf8] sm:$0xff]
    %v342 = vld [vmem:[#allocation11 + $0x100] sm:$0xff]
    %v343 = vld [vmem:[#allocation11 + $0x108] sm:$0xff]
    %v344 = vld [vmem:[#allocation11 + $0x110] sm:$0xff]
    %v345 = vld [vmem:[#allocation11 + $0x118] sm:$0xff]
    %v346 = vld [vmem:[#allocation11 + $0x120] sm:$0xff]
    %v347 = vld [vmem:[#allocation11 + $0x128] sm:$0xff]
    %v348 = vld [vmem:[#allocation11 + $0x130] sm:$0xff]
    %v349 = vld [vmem:[#allocation11 + $0x138] sm:$0xff]
    %v350 = vld [vmem:[#allocation11 + $0x140] sm:$0xff]
    %v351 = vld [vmem:[#allocation11 + $0x148] sm:$0xff]
    %v352 = vld [vmem:[#allocation11 + $0x150] sm:$0xff]
    %v353 = vld [vmem:[#allocation11 + $0x158] sm:$0xff]
    %v354 = vld [vmem:[#allocation11 + $0x160] sm:$0xff]
    %v355 = vld [vmem:[#allocation11 + $0x168] sm:$0xff]
    %v356 = vld [vmem:[#allocation11 + $0x170] sm:$0xff]
    %v357 = vld [vmem:[#allocation11 + $0x178] sm:$0xff]
    %v358 = vld [vmem:[#allocation11 + $0x180] sm:$0xff]
    %v359 = vld [vmem:[#allocation11 + $0x188] sm:$0xff]
    %v360 = vld [vmem:[#allocation11 + $0x190] sm:$0xff]
    %v361 = vld [vmem:[#allocation11 + $0x198] sm:$0xff]
    %v362 = vld [vmem:[#allocation11 + $0x1a0] sm:$0xff]
    %v363 = vld [vmem:[#allocation11 + $0x1a8] sm:$0xff]
    %v364 = vld [vmem:[#allocation11 + $0x1b0] sm:$0xff]
    %v365 = vld [vmem:[#allocation11 + $0x1b8] sm:$0xff]
    %v366 = vld [vmem:[#allocation11 + $0x1c0] sm:$0xff]
    %v367 = vld [vmem:[#allocation11 + $0x1c8] sm:$0xff]
    %v368 = vld [vmem:[#allocation11 + $0x1d0] sm:$0xff]
    %v369 = vld [vmem:[#allocation11 + $0x1d8] sm:$0xff]
    %v370 = vld [vmem:[#allocation11 + $0x1e0] sm:$0xff]
    %v371 = vld [vmem:[#allocation11 + $0x1e8] sm:$0xff]
    %v372 = vld [vmem:[#allocation11 + $0x1f0] sm:$0xff]
    %v373 = vld [vmem:[#allocation11 + $0x1f8] sm:$0xff]
    %v374 = vld [vmem:[#allocation11 + $0x200] sm:$0xff]
    %v375 = vld [vmem:[#allocation11 + $0x208] sm:$0xff]
    %v376 = vld [vmem:[#allocation11 + $0x210] sm:$0xff]
    %v377 = vld [vmem:[#allocation11 + $0x218] sm:$0xff]
    %v378 = vld [vmem:[#allocation11 + $0x220] sm:$0xff]
    %v379 = vld [vmem:[#allocation11 + $0x228] sm:$0xff]
    %v380 = vld [vmem:[#allocation11 + $0x230] sm:$0xff]
    %v381 = vld [vmem:[#allocation11 + $0x238] sm:$0xff]
    %v382 = vld [vmem:[#allocation11 + $0x240] sm:$0xff]
    %v383 = vld [vmem:[#allocation11 + $0x248] sm:$0xff]
    %v384 = vld [vmem:[#allocation11 + $0x250] sm:$0xff]
    %v385 = vld [vmem:[#allocation11 + $0x258] sm:$0xff]
    %v386 = vld [vmem:[#allocation11 + $0x260] sm:$0xff]
    %v387 = vld [vmem:[#allocation11 + $0x268] sm:$0xff]
    %v388 = vld [vmem:[#allocation11 + $0x270] sm:$0xff]
    %v389 = vld [vmem:[#allocation11 + $0x278] sm:$0xff]
    %v390 = vld [vmem:[#allocation11 + $0x280] sm:$0xff]
    %v391 = vld [vmem:[#allocation11 + $0x288] sm:$0xff]
    %v392 = vld [vmem:[#allocation11 + $0x290] sm:$0xff]
    %v393 = vld [vmem:[#allocation11 + $0x298] sm:$0xff]
    %v394 = vld [vmem:[#allocation11 + $0x2a0] sm:$0xff]
    %v395 = vld [vmem:[#allocation11 + $0x2a8] sm:$0xff]
    %v396 = vld [vmem:[#allocation11 + $0x2b0] sm:$0xff]
    %v397 = vld [vmem:[#allocation11 + $0x2b8] sm:$0xff]
    %v398 = vld [vmem:[#allocation11 + $0x2c0] sm:$0xff]
    %v399 = vld [vmem:[#allocation11 + $0x2c8] sm:$0xff]
    %v400 = vld [vmem:[#allocation11 + $0x2d0] sm:$0xff]
    %v401 = vld [vmem:[#allocation11 + $0x2d8] sm:$0xff]
    %v402 = vld [vmem:[#allocation11 + $0x2e0] sm:$0xff]
    %v403 = vld [vmem:[#allocation11 + $0x2e8] sm:$0xff]
    %v404 = vld [vmem:[#allocation11 + $0x2f0] sm:$0xff]
    %v405 = vld [vmem:[#allocation11 + $0x2f8] sm:$0xff]
    %v406 = vld [vmem:[#allocation11 + $0x300] sm:$0xff]
    %v407 = vld [vmem:[#allocation11 + $0x308] sm:$0xff]
    %v408 = vld [vmem:[#allocation11 + $0x310] sm:$0xff]
    %v409 = vld [vmem:[#allocation11 + $0x318] sm:$0xff]
    %v410 = vld [vmem:[#allocation11 + $0x320] sm:$0xff]
    %v411 = vld [vmem:[#allocation11 + $0x328] sm:$0xff]
    %v412 = vld [vmem:[#allocation11 + $0x330] sm:$0xff]
    %v413 = vld [vmem:[#allocation11 + $0x338] sm:$0xff]
    %v414 = vld [vmem:[#allocation11 + $0x340] sm:$0xff]
    %v415 = vld [vmem:[#allocation11 + $0x348] sm:$0xff]
    %v416 = vld [vmem:[#allocation11 + $0x350] sm:$0xff]
    %v417 = vld [vmem:[#allocation11 + $0x358] sm:$0xff]
    %v418 = vld [vmem:[#allocation11 + $0x360] sm:$0xff]
    %v419 = vld [vmem:[#allocation11 + $0x368] sm:$0xff]
    %v420 = vld [vmem:[#allocation11 + $0x370] sm:$0xff]
    %v421 = vld [vmem:[#allocation11 + $0x378] sm:$0xff]
    %v422 = vld [vmem:[#allocation11 + $0x380] sm:$0xff]
    %v423 = vld [vmem:[#allocation11 + $0x388] sm:$0xff]
    %v424 = vld [vmem:[#allocation11 + $0x390] sm:$0xff]
    %v425 = vld [vmem:[#allocation11 + $0x398] sm:$0xff]
    %v426 = vld [vmem:[#allocation11 + $0x3a0] sm:$0xff]
    %v427 = vld [vmem:[#allocation11 + $0x3a8] sm:$0xff]
    %v428 = vld [vmem:[#allocation11 + $0x3b0] sm:$0xff]
    %v429 = vld [vmem:[#allocation11 + $0x3b8] sm:$0xff]
    %v430 = vld [vmem:[#allocation11 + $0x3c0] sm:$0xff]
    %v431 = vld [vmem:[#allocation11 + $0x3c8] sm:$0xff]
    %v432 = vld [vmem:[#allocation11 + $0x3d0] sm:$0xff]
    %v433 = vld [vmem:[#allocation11 + $0x3d8] sm:$0xff]
    %v434 = vld [vmem:[#allocation11 + $0x3e0] sm:$0xff]
    %v435 = vld [vmem:[#allocation11 + $0x3e8] sm:$0xff]
    %v436 = vld [vmem:[#allocation11 + $0x3f0] sm:$0xff]
    %v437 = vld [vmem:[#allocation11 + $0x3f8] sm:$0xff]
    %v438 = vld [vmem:[%s7] sm:$0xf]
    %v440 = vlaneseq
    %v441 = vshrl.u32 %v440, 7
    %v442 = vsub.s32 0, %v441
    %v443 = vrot.slane %v438, %v442
    %v444 = vlaneseq
    %v445 = vshrl.u32 %v444, 7
    %v446 = vsub.s32 1, %v445
    %v447 = vrot.slane %v438, %v446
    %v448 = vlaneseq
    %v449 = vshrl.u32 %v448, 7
    %v450 = vsub.s32 2, %v449
    %v451 = vrot.slane %v438, %v450
    %v452 = vlaneseq
    %v453 = vshrl.u32 %v452, 7
    %v454 = vsub.s32 3, %v453
    %v455 = vrot.slane %v438, %v454
    %460 = vmatprep.subr.mxu0 %v311
    %461 = vmatpush1.msra.mxu0 %v310
    %462 = vmatprep.subr.mxu0 %v315
    %463 = vmatpush1.msra.mxu0 %v314
    %464 = vmatprep.subr.mxu0 %v319
    %465 = vmatpush1.msra.mxu0 %v318
    %466 = vmatprep.subr.mxu0 %v323
    %467 = vmatpush1.msra.mxu0 %v322
    %468 = vmatprep.subr.mxu0 %v327
    %469 = vmatpush1.msra.mxu0 %v326
    %470 = vmatprep.subr.mxu0 %v331
    %471 = vmatpush1.msra.mxu0 %v330
    %472 = vmatprep.subr.mxu0 %v335
    %473 = vmatpush1.msra.mxu0 %v334
    %474 = vmatprep.subr.mxu0 %v339
    %475 = vmatpush1.msra.mxu0 %v338
    %476 = vmatprep.subr.mxu0 %v343
    %477 = vmatpush1.msra.mxu0 %v342
    %478 = vmatprep.subr.mxu0 %v347
    %479 = vmatpush1.msra.mxu0 %v346
    %480 = vmatprep.subr.mxu0 %v351
    %481 = vmatpush1.msra.mxu0 %v350
    %482 = vmatprep.subr.mxu0 %v355
    %483 = vmatpush1.msra.mxu0 %v354
    %484 = vmatprep.subr.mxu0 %v359
    %485 = vmatpush1.msra.mxu0 %v358
    %486 = vmatprep.subr.mxu0 %v363
    %487 = vmatpush1.msra.mxu0 %v362
    %488 = vmatprep.subr.mxu0 %v367
    %489 = vmatpush1.msra.mxu0 %v366
    %490 = vmatprep.subr.mxu0 %v371
    %491 = vmatpush1.msra.mxu0 %v370
    %492 = vmatprep.subr.mxu0 %v375
    %493 = vmatpush1.msra.mxu0 %v374
    %494 = vmatprep.subr.mxu0 %v379
    %495 = vmatpush1.msra.mxu0 %v378
    %496 = vmatprep.subr.mxu0 %v383
    %497 = vmatpush1.msra.mxu0 %v382
    %498 = vmatprep.subr.mxu0 %v387
    %499 = vmatpush1.msra.mxu0 %v386
    %500 = vmatprep.subr.mxu0 %v391
    %501 = vmatpush1.msra.mxu0 %v390
    %502 = vmatprep.subr.mxu0 %v395
    %503 = vmatpush1.msra.mxu0 %v394
    %504 = vmatprep.subr.mxu0 %v399
    %505 = vmatpush1.msra.mxu0 %v398
    %506 = vmatprep.subr.mxu0 %v403
    %507 = vmatpush1.msra.mxu0 %v402
    %508 = vmatprep.subr.mxu0 %v407
    %509 = vmatpush1.msra.mxu0 %v406
    %510 = vmatprep.subr.mxu0 %v411
    %511 = vmatpush1.msra.mxu0 %v410
    %512 = vmatprep.subr.mxu0 %v415
    %513 = vmatpush1.msra.mxu0 %v414
    %514 = vmatprep.subr.mxu0 %v419
    %515 = vmatpush1.msra.mxu0 %v418
    %516 = vmatprep.subr.mxu0 %v423
    %517 = vmatpush1.msra.mxu0 %v422
    %518 = vmatprep.subr.mxu0 %v427
    %519 = vmatpush1.msra.mxu0 %v426
    %520 = vmatprep.subr.mxu0 %v431
    %521 = vmatpush1.msra.mxu0 %v430
    %522 = vmatprep.subr.mxu0 %v435
    %523 = vmatpush1.msra.mxu0 %v434
    %524 = vmatprep.mubr.f32.mxu0 %v142
    %525 = vmatmul.mubr.f32.gmra.mrb[0].mxu0 %v141
    %v526 = vpop.f32.mrb[0].mxu0
    %v527 = vadd.f32 %v443, %v526
    %v528 = vpop.f32.mrb[0].mxu0
    %v529 = vadd.f32 %v447, %v528
    %530 = vmatprep.mubr.f32.mxu0 %v144
    %531 = vmatmul.mubr.f32.gmra.mrb[0].mxu0 %v143
    %v532 = vpop.f32.mrb[0].mxu0
    %v533 = vadd.f32 %v443, %v532
    %v534 = vpop.f32.mrb[0].mxu0
    %v535 = vadd.f32 %v447, %v534
    %536 = vmatprep.mubr.f32.mxu0 %v146
    %537 = vmatmul.mubr.f32.gmra.mrb[0].mxu0 %v145
    %v538 = vpop.f32.mrb[0].mxu0
    %v539 = vadd.f32 %v443, %v538
    %v540 = vpop.f32.mrb[0].mxu0
    %v541 = vadd.f32 %v447, %v540
    %542 = vmatprep.mubr.f32.mxu0 %v148
    %543 = vmatmul.mubr.f32.gmra.mrb[0].mxu0 %v147
    %v544 = vpop.f32.mrb[0].mxu0
    %v545 = vadd.f32 %v443, %v544
    %v546 = vpop.f32.mrb[0].mxu0
    %v547 = vadd.f32 %v447, %v546
    %548 = vdwg.mxu0
    %549 = vmatprep.subr.mxu0 %v313
    %550 = vmatpush1.msra.mxu0 %v312
    %551 = vmatprep.subr.mxu0 %v317
    %552 = vmatpush1.msra.mxu0 %v316
    %553 = vmatprep.subr.mxu0 %v321
    %554 = vmatpush1.msra.mxu0 %v320
    %555 = vmatprep.subr.mxu0 %v325
    %556 = vmatpush1.msra.mxu0 %v324
    %557 = vmatprep.subr.mxu0 %v329
    %558 = vmatpush1.msra.mxu0 %v328
    %559 = vmatprep.subr.mxu0 %v333
    %560 = vmatpush1.msra.mxu0 %v332
    %561 = vmatprep.subr.mxu0 %v337
    %562 = vmatpush1.msra.mxu0 %v336
    %563 = vmatprep.subr.mxu0 %v341
    %564 = vmatpush1.msra.mxu0 %v340
    %565 = vmatprep.subr.mxu0 %v345
    %566 = vmatpush1.msra.mxu0 %v344
    %567 = vmatprep.subr.mxu0 %v349
    %568 = vmatpush1.msra.mxu0 %v348
    %569 = vmatprep.subr.mxu0 %v353
    %570 = vmatpush1.msra.mxu0 %v352
    %571 = vmatprep.subr.mxu0 %v357
    %572 = vmatpush1.msra.mxu0 %v356
    %573 = vmatprep.subr.mxu0 %v361
    %574 = vmatpush1.msra.mxu0 %v360
    %575 = vmatprep.subr.mxu0 %v365
    %576 = vmatpush1.msra.mxu0 %v364
    %577 = vmatprep.subr.mxu0 %v369
    %578 = vmatpush1.msra.mxu0 %v368
    %579 = vmatprep.subr.mxu0 %v373
    %580 = vmatpush1.msra.mxu0 %v372
    %581 = vmatprep.subr.mxu0 %v377
    %582 = vmatpush1.msra.mxu0 %v376
    %583 = vmatprep.subr.mxu0 %v381
    %584 = vmatpush1.msra.mxu0 %v380
    %585 = vmatprep.subr.mxu0 %v385
    %586 = vmatpush1.msra.mxu0 %v384
    %587 = vmatprep.subr.mxu0 %v389
    %588 = vmatpush1.msra.mxu0 %v388
    %589 = vmatprep.subr.mxu0 %v393
    %590 = vmatpush1.msra.mxu0 %v392
    %591 = vmatprep.subr.mxu0 %v397
    %592 = vmatpush1.msra.mxu0 %v396
    %593 = vmatprep.subr.mxu0 %v401
    %594 = vmatpush1.msra.mxu0 %v400
    %595 = vmatprep.subr.mxu0 %v405
    %596 = vmatpush1.msra.mxu0 %v404
    %597 = vmatprep.subr.mxu0 %v409
    %598 = vmatpush1.msra.mxu0 %v408
    %599 = vmatprep.subr.mxu0 %v413
    %600 = vmatpush1.msra.mxu0 %v412
    %601 = vmatprep.subr.mxu0 %v417
    %602 = vmatpush1.msra.mxu0 %v416
    %603 = vmatprep.subr.mxu0 %v421
    %604 = vmatpush1.msra.mxu0 %v420
    %605 = vmatprep.subr.mxu0 %v425
    %606 = vmatpush1.msra.mxu0 %v424
    %607 = vmatprep.subr.mxu0 %v429
    %608 = vmatpush1.msra.mxu0 %v428
    %609 = vmatprep.subr.mxu0 %v433
    %610 = vmatpush1.msra.mxu0 %v432
    %611 = vmatprep.subr.mxu0 %v437
    %612 = vmatpush1.msra.mxu0 %v436
    %613 = vmatprep.mubr.f32.mxu0 %v142
    %614 = vmatmul.mubr.f32.gmra.mrb[0].mxu0 %v141
    %v615 = vpop.f32.mrb[0].mxu0
    %v616 = vadd.f32 %v451, %v615
    %v617 = vpop.f32.mrb[0].mxu0
    %v618 = vadd.f32 %v455, %v617
    %619 = vmatprep.mubr.f32.mxu0 %v144
    %620 = vmatmul.mubr.f32.gmra.mrb[0].mxu0 %v143
    %v621 = vpop.f32.mrb[0].mxu0
    %v622 = vadd.f32 %v451, %v621
    %v623 = vpop.f32.mrb[0].mxu0
    %v624 = vadd.f32 %v455, %v623
    %625 = vmatprep.mubr.f32.mxu0 %v146
    %626 = vmatmul.mubr.f32.gmra.mrb[0].mxu0 %v145
    %v627 = vpop.f32.mrb[0].mxu0
    %v628 = vadd.f32 %v451, %v627
    %v629 = vpop.f32.mrb[0].mxu0
    %v630 = vadd.f32 %v455, %v629
    %631 = vmatprep.mubr.f32.mxu0 %v148
    %632 = vmatmul.mubr.f32.gmra.mrb[0].mxu0 %v147
    %v633 = vpop.f32.mrb[0].mxu0
    %v634 = vadd.f32 %v451, %v633
    %v635 = vpop.f32.mrb[0].mxu0
    %v636 = vadd.f32 %v455, %v635
    %637 = vdwg.mxu0
    %v638 = vld [vmem:[#allocation8] sm:$0xff]
    %v639 = vld [vmem:[#allocation8 + $0x8] sm:$0xff]
    %v640 = vld [vmem:[#allocation8 + $0x10] sm:$0xff]
    %v641 = vld [vmem:[#allocation8 + $0x18] sm:$0xff]
    %v642 = vld [vmem:[#allocation8 + $0x20] sm:$0xff]
    %v643 = vld [vmem:[#allocation8 + $0x28] sm:$0xff]
    %v644 = vld [vmem:[#allocation8 + $0x30] sm:$0xff]
    %v645 = vld [vmem:[#allocation8 + $0x38] sm:$0xff]
    %v646 = vld [vmem:[#allocation11] sm:$0xff]
    %v647 = vld [vmem:[#allocation11 + $0x8] sm:$0xff]
    %v648 = vld [vmem:[#allocation11 + $0x20] sm:$0xff]
    %v649 = vld [vmem:[#allocation11 + $0x28] sm:$0xff]
    %v650 = vld [vmem:[#allocation11 + $0x40] sm:$0xff]
    %v651 = vld [vmem:[#allocation11 + $0x48] sm:$0xff]
    %v652 = vld [vmem:[#allocation11 + $0x60] sm:$0xff]
    %v653 = vld [vmem:[#allocation11 + $0x68] sm:$0xff]
    %v654 = vld [vmem:[#allocation11 + $0x80] sm:$0xff]
    %v655 = vld [vmem:[#allocation11 + $0x88] sm:$0xff]
    %v656 = vld [vmem:[#allocation11 + $0xa0] sm:$0xff]
    %v657 = vld [vmem:[#allocation11 + $0xa8] sm:$0xff]
    %v658 = vld [vmem:[#allocation11 + $0xc0] sm:$0xff]
    %v659 = vld [vmem:[#allocation11 + $0xc8] sm:$0xff]
    %v660 = vld [vmem:[#allocation11 + $0xe0] sm:$0xff]
    %v661 = vld [vmem:[#allocation11 + $0xe8] sm:$0xff]
    %v662 = vld [vmem:[#allocation11 + $0x100] sm:$0xff]
    %v663 = vld [vmem:[#allocation11 + $0x108] sm:$0xff]
    %v664 = vld [vmem:[#allocation11 + $0x120] sm:$0xff]
    %v665 = vld [vmem:[#allocation11 + $0x128] sm:$0xff]
    %v666 = vld [vmem:[#allocation11 + $0x140] sm:$0xff]
    %v667 = vld [vmem:[#allocation11 + $0x148] sm:$0xff]
    %v668 = vld [vmem:[#allocation11 + $0x160] sm:$0xff]
    %v669 = vld [vmem:[#allocation11 + $0x168] sm:$0xff]
    %v670 = vld [vmem:[#allocation11 + $0x180] sm:$0xff]
    %v671 = vld [vmem:[#allocation11 + $0x188] sm:$0xff]
    %v672 = vld [vmem:[#allocation11 + $0x1a0] sm:$0xff]
    %v673 = vld [vmem:[#allocation11 + $0x1a8] sm:$0xff]
    %v674 = vld [vmem:[#allocation11 + $0x1c0] sm:$0xff]
    %v675 = vld [vmem:[#allocation11 + $0x1c8] sm:$0xff]
    %v676 = vld [vmem:[#allocation11 + $0x1e0] sm:$0xff]
    %v677 = vld [vmem:[#allocation11 + $0x1e8] sm:$0xff]
    %v678 = vld [vmem:[#allocation11 + $0x200] sm:$0xff]
    %v679 = vld [vmem:[#allocation11 + $0x208] sm:$0xff]
    %v680 = vld [vmem:[#allocation11 + $0x220] sm:$0xff]
    %v681 = vld [vmem:[#allocation11 + $0x228] sm:$0xff]
    %v682 = vld [vmem:[#allocation11 + $0x240] sm:$0xff]
    %v683 = vld [vmem:[#allocation11 + $0x248] sm:$0xff]
    %v684 = vld [vmem:[#allocation11 + $0x260] sm:$0xff]
    %v685 = vld [vmem:[#allocation11 + $0x268] sm:$0xff]
    %v686 = vld [vmem:[#allocation11 + $0x280] sm:$0xff]
    %v687 = vld [vmem:[#allocation11 + $0x288] sm:$0xff]
    %v688 = vld [vmem:[#allocation11 + $0x2a0] sm:$0xff]
    %v689 = vld [vmem:[#allocation11 + $0x2a8] sm:$0xff]
    %v690 = vld [vmem:[#allocation11 + $0x2c0] sm:$0xff]
    %v691 = vld [vmem:[#allocation11 + $0x2c8] sm:$0xff]
    %v692 = vld [vmem:[#allocation11 + $0x2e0] sm:$0xff]
    %v693 = vld [vmem:[#allocation11 + $0x2e8] sm:$0xff]
    %v694 = vld [vmem:[#allocation11 + $0x300] sm:$0xff]
    %v695 = vld [vmem:[#allocation11 + $0x308] sm:$0xff]
    %v696 = vld [vmem:[#allocation11 + $0x320] sm:$0xff]
    %v697 = vld [vmem:[#allocation11 + $0x328] sm:$0xff]
    %v698 = vld [vmem:[#allocation11 + $0x340] sm:$0xff]
    %v699 = vld [vmem:[#allocation11 + $0x348] sm:$0xff]
    %v700 = vld [vmem:[#allocation11 + $0x360] sm:$0xff]
    %v701 = vld [vmem:[#allocation11 + $0x368] sm:$0xff]
    %v702 = vld [vmem:[#allocation11 + $0x380] sm:$0xff]
    %v703 = vld [vmem:[#allocation11 + $0x388] sm:$0xff]
    %v704 = vld [vmem:[#allocation11 + $0x3a0] sm:$0xff]
    %v705 = vld [vmem:[#allocation11 + $0x3a8] sm:$0xff]
    %v706 = vld [vmem:[#allocation11 + $0x3c0] sm:$0xff]
    %v707 = vld [vmem:[#allocation11 + $0x3c8] sm:$0xff]
    %v708 = vld [vmem:[#allocation11 + $0x3e0] sm:$0xff]
    %v709 = vld [vmem:[#allocation11 + $0x3e8] sm:$0xff]
    %710 = vmatprep.subr.mxu0 %v647
    %711 = vmatpush1.msra.mxu0 %v646
    %712 = vmatprep.subr.mxu0 %v649
    %713 = vmatpush1.msra.mxu0 %v648
    %714 = vmatprep.subr.mxu0 %v651
    %715 = vmatpush1.msra.mxu0 %v650
    %716 = vmatprep.subr.mxu0 %v653
    %717 = vmatpush1.msra.mxu0 %v652
    %718 = vmatprep.subr.mxu0 %v655
    %719 = vmatpush1.msra.mxu0 %v654
    %720 = vmatprep.subr.mxu0 %v657
    %721 = vmatpush1.msra.mxu0 %v656
    %722 = vmatprep.subr.mxu0 %v659
    %723 = vmatpush1.msra.mxu0 %v658
    %724 = vmatprep.subr.mxu0 %v661
    %725 = vmatpush1.msra.mxu0 %v660
    %726 = vmatprep.subr.mxu0 %v663
    %727 = vmatpush1.msra.mxu0 %v662
    %728 = vmatprep.subr.mxu0 %v665
    %729 = vmatpush1.msra.mxu0 %v664
    %730 = vmatprep.subr.mxu0 %v667
    %731 = vmatpush1.msra.mxu0 %v666
    %732 = vmatprep.subr.mxu0 %v669
    %733 = vmatpush1.msra.mxu0 %v668
    %734 = vmatprep.subr.mxu0 %v671
    %735 = vmatpush1.msra.mxu0 %v670
    %736 = vmatprep.subr.mxu0 %v673
    %737 = vmatpush1.msra.mxu0 %v672
    %738 = vmatprep.subr.mxu0 %v675
    %739 = vmatpush1.msra.mxu0 %v674
    %740 = vmatprep.subr.mxu0 %v677
    %741 = vmatpush1.msra.mxu0 %v676
    %742 = vmatprep.subr.mxu0 %v679
    %743 = vmatpush1.msra.mxu0 %v678
    %744 = vmatprep.subr.mxu0 %v681
    %745 = vmatpush1.msra.mxu0 %v680
    %746 = vmatprep.subr.mxu0 %v683
    %747 = vmatpush1.msra.mxu0 %v682
    %748 = vmatprep.subr.mxu0 %v685
    %749 = vmatpush1.msra.mxu0 %v684
    %750 = vmatprep.subr.mxu0 %v687
    %751 = vmatpush1.msra.mxu0 %v686
    %752 = vmatprep.subr.mxu0 %v689
    %753 = vmatpush1.msra.mxu0 %v688
    %754 = vmatprep.subr.mxu0 %v691
    %755 = vmatpush1.msra.mxu0 %v690
    %756 = vmatprep.subr.mxu0 %v693
    %757 = vmatpush1.msra.mxu0 %v692
    %758 = vmatprep.subr.mxu0 %v695
    %759 = vmatpush1.msra.mxu0 %v694
    %760 = vmatprep.subr.mxu0 %v697
    %761 = vmatpush1.msra.mxu0 %v696
    %762 = vmatprep.subr.mxu0 %v699
    %763 = vmatpush1.msra.mxu0 %v698
    %764 = vmatprep.subr.mxu0 %v701
    %765 = vmatpush1.msra.mxu0 %v700
    %766 = vmatprep.subr.mxu0 %v703
    %767 = vmatpush1.msra.mxu0 %v702
    %768 = vmatprep.subr.mxu0 %v705
    %769 = vmatpush1.msra.mxu0 %v704
    %770 = vmatprep.subr.mxu0 %v707
    %771 = vmatpush1.msra.mxu0 %v706
    %772 = vmatprep.subr.mxu0 %v709
    %773 = vmatpush1.msra.mxu0 %v708
    %774 = vmatprep.mubr.f32.mxu0 %v639
    %775 = vmatmul.mubr.f32.gmra.mrb[0].mxu0 %v638
    %v776 = vpop.f32.mrb[0].mxu0
    %v777 = vadd.f32 0.0, %v776
    %v778 = vpop.f32.mrb[0].mxu0
    %v779 = vadd.f32 0.0, %v778
    %780 = vmatprep.mubr.f32.mxu0 %v641
    %781 = vmatmul.mubr.f32.gmra.mrb[0].mxu0 %v640
    %v782 = vpop.f32.mrb[0].mxu0
    %v783 = vadd.f32 0.0, %v782
    %v784 = vpop.f32.mrb[0].mxu0
    %v785 = vadd.f32 0.0, %v784
    %786 = vmatprep.mubr.f32.mxu0 %v643
    %787 = vmatmul.mubr.f32.gmra.mrb[0].mxu0 %v642
    %v788 = vpop.f32.mrb[0].mxu0
    %v789 = vadd.f32 0.0, %v788
    %v790 = vpop.f32.mrb[0].mxu0
    %v791 = vadd.f32 0.0, %v790
    %792 = vmatprep.mubr.f32.mxu0 %v645
    %793 = vmatmul.mubr.f32.gmra.mrb[0].mxu0 %v644
    %v794 = vpop.f32.mrb[0].mxu0
    %v795 = vadd.f32 0.0, %v794
    %v796 = vpop.f32.mrb[0].mxu0
    %v797 = vadd.f32 0.0, %v796
    %798 = vdwg.mxu0
    %v799 = vadd.f32 %v527, %v777
    %v800 = vadd.f32 %v529, %v779
    %v801 = vadd.f32 %v533, %v783
    %v802 = vadd.f32 %v535, %v785
    %v803 = vadd.f32 %v539, %v789
    %v804 = vadd.f32 %v541, %v791
    %v805 = vadd.f32 %v545, %v795
    %v806 = vadd.f32 %v547, %v797
    %809 = vrot.lane.b32.xlu0 %v300, 96
    %v810 = vpop.permute.xlu0 %809
    %811 = vrot.lane.b32.xlu0 %v306, 96
    %v812 = vpop.permute.xlu0 %811
    %815 = vrot.lane.b32.xlu0 %v300, 64
    %v816 = vpop.permute.xlu0 %815
    %817 = vrot.lane.b32.xlu0 %v306, 64
    %v818 = vpop.permute.xlu0 %817
    %821 = vrot.lane.b32.xlu0 %v300, 32
    %v822 = vpop.permute.xlu0 %821
    %823 = vrot.lane.b32.xlu0 %v306, 32
    %v824 = vpop.permute.xlu0 %823
    %829 = vrot.lane.b32.xlu0 %v302, 96
    %v830 = vpop.permute.xlu0 %829
    %831 = vrot.lane.b32.xlu0 %v308, 96
    %v832 = vpop.permute.xlu0 %831
    %835 = vrot.lane.b32.xlu0 %v302, 64
    %v836 = vpop.permute.xlu0 %835
    %837 = vrot.lane.b32.xlu0 %v308, 64
    %v838 = vpop.permute.xlu0 %837
    %841 = vrot.lane.b32.xlu0 %v302, 32
    %v842 = vpop.permute.xlu0 %841
    %843 = vrot.lane.b32.xlu0 %v308, 32
    %v844 = vpop.permute.xlu0 %843
    %v847 = vcombine.low %v300, %v816
    %v848 = vcombine.high %v300, %v816
    %v850 = vunpack.c.l.s4 1983009808
    %v851 = vunpack.c.0.s8 %v850
    %v852 = vlaneseq
    %v853 = vshrl.u32 %v852, 7
    %v854 = vsub.s32 %v851, %v853
    %v855 = vrot.slane %v847, %v854
    %v857 = vunpack.c.l.s4 1983009808
    %v858 = vunpack.c.0.s8 %v857
    %v859 = vlaneseq
    %v860 = vshrl.u32 %v859, 7
    %v861 = vsub.s32 %v858, %v860
    %v862 = vrot.slane %v848, %v861
    %v863 = vcombine.low %v810, %v822
    %v864 = vcombine.high %v810, %v822
    %v866 = vunpack.c.l.s4 1983009808
    %v867 = vunpack.c.0.s8 %v866
    %v868 = vlaneseq
    %v869 = vshrl.u32 %v868, 7
    %v870 = vsub.s32 %v867, %v869
    %v871 = vrot.slane %v863, %v870
    %v873 = vunpack.c.l.s4 1983009808
    %v874 = vunpack.c.0.s8 %v873
    %v875 = vlaneseq
    %v876 = vshrl.u32 %v875, 7
    %v877 = vsub.s32 %v874, %v876
    %v878 = vrot.slane %v864, %v877
    %v879 = vcombine.low %v302, %v836
    %v880 = vcombine.high %v302, %v836
    %v882 = vunpack.c.l.s4 1983009808
    %v883 = vunpack.c.0.s8 %v882
    %v884 = vlaneseq
    %v885 = vshrl.u32 %v884, 7
    %v886 = vsub.s32 %v883, %v885
    %v887 = vrot.slane %v879, %v886
    %v889 = vunpack.c.l.s4 1983009808
    %v890 = vunpack.c.0.s8 %v889
    %v891 = vlaneseq
    %v892 = vshrl.u32 %v891, 7
    %v893 = vsub.s32 %v890, %v892
    %v894 = vrot.slane %v880, %v893
    %v895 = vcombine.low %v830, %v842
    %v896 = vcombine.high %v830, %v842
    %v898 = vunpack.c.l.s4 1983009808
    %v899 = vunpack.c.0.s8 %v898
    %v900 = vlaneseq
    %v901 = vshrl.u32 %v900, 7
    %v902 = vsub.s32 %v899, %v901
    %v903 = vrot.slane %v895, %v902
    %v905 = vunpack.c.l.s4 1983009808
    %v906 = vunpack.c.0.s8 %v905
    %v907 = vlaneseq
    %v908 = vshrl.u32 %v907, 7
    %v909 = vsub.s32 %v906, %v908
    %v910 = vrot.slane %v896, %v909
    %v911 = vcombine.low %v855, %v871
    %v912 = vcombine.high %v855, %v871
    %v914 = vunpack.c.l.s4 1934713408
    %v915 = vunpack.c.0.s8 %v914
    %v916 = vlaneseq
    %v917 = vshrl.u32 %v916, 7
    %v918 = vsub.s32 %v915, %v917
    %v919 = vrot.slane %v911, %v918
    %v921 = vunpack.c.l.s4 1934713408
    %v922 = vunpack.c.0.s8 %v921
    %v923 = vlaneseq
    %v924 = vshrl.u32 %v923, 7
    %v925 = vsub.s32 %v922, %v924
    %v926 = vrot.slane %v912, %v925
    %v927 = vcombine.low %v862, %v878
    %v928 = vcombine.high %v862, %v878
    %v930 = vunpack.c.l.s4 1934713408
    %v931 = vunpack.c.0.s8 %v930
    %v932 = vlaneseq
    %v933 = vshrl.u32 %v932, 7
    %v934 = vsub.s32 %v931, %v933
    %v935 = vrot.slane %v927, %v934
    %v937 = vunpack.c.l.s4 1934713408
    %v938 = vunpack.c.0.s8 %v937
    %v939 = vlaneseq
    %v940 = vshrl.u32 %v939, 7
    %v941 = vsub.s32 %v938, %v940
    %v942 = vrot.slane %v928, %v941
    %v943 = vcombine.low %v887, %v903
    %v944 = vcombine.high %v887, %v903
    %v946 = vunpack.c.l.s4 1934713408
    %v947 = vunpack.c.0.s8 %v946
    %v948 = vlaneseq
    %v949 = vshrl.u32 %v948, 7
    %v950 = vsub.s32 %v947, %v949
    %v951 = vrot.slane %v943, %v950
    %v953 = vunpack.c.l.s4 1934713408
    %v954 = vunpack.c.0.s8 %v953
    %v955 = vlaneseq
    %v956 = vshrl.u32 %v955, 7
    %v957 = vsub.s32 %v954, %v956
    %v958 = vrot.slane %v944, %v957
    %v959 = vcombine.low %v894, %v910
    %v960 = vcombine.high %v894, %v910
    %v962 = vunpack.c.l.s4 1934713408
    %v963 = vunpack.c.0.s8 %v962
    %v964 = vlaneseq
    %v965 = vshrl.u32 %v964, 7
    %v966 = vsub.s32 %v963, %v965
    %v967 = vrot.slane %v959, %v966
    %v969 = vunpack.c.l.s4 1934713408
    %v970 = vunpack.c.0.s8 %v969
    %v971 = vlaneseq
    %v972 = vshrl.u32 %v971, 7
    %v973 = vsub.s32 %v970, %v972
    %v974 = vrot.slane %v960, %v973
    %v975 = vcombine.low %v919, %v951
    %v976 = vcombine.high %v919, %v951
    %v977 = vcombine.low %v926, %v958
    %v978 = vcombine.high %v926, %v958
    %v979 = vcombine.low %v935, %v967
    %v980 = vcombine.high %v935, %v967
    %v981 = vcombine.low %v942, %v974
    %v982 = vcombine.high %v942, %v974
    %v983 = vcombine.low %v306, %v818
    %v984 = vcombine.high %v306, %v818
    %v986 = vunpack.c.l.s4 1983009808
    %v987 = vunpack.c.0.s8 %v986
    %v988 = vlaneseq
    %v989 = vshrl.u32 %v988, 7
    %v990 = vsub.s32 %v987, %v989
    %v991 = vrot.slane %v983, %v990
    %v993 = vunpack.c.l.s4 1983009808
    %v994 = vunpack.c.0.s8 %v993
    %v995 = vlaneseq
    %v996 = vshrl.u32 %v995, 7
    %v997 = vsub.s32 %v994, %v996
    %v998 = vrot.slane %v984, %v997
    %v999 = vcombine.low %v812, %v824
    %v1000 = vcombine.high %v812, %v824
    %v1002 = vunpack.c.l.s4 1983009808
    %v1003 = vunpack.c.0.s8 %v1002
    %v1004 = vlaneseq
    %v1005 = vshrl.u32 %v1004, 7
    %v1006 = vsub.s32 %v1003, %v1005
    %v1007 = vrot.slane %v999, %v1006
    %v1009 = vunpack.c.l.s4 1983009808
    %v1010 = vunpack.c.0.s8 %v1009
    %v1011 = vlaneseq
    %v1012 = vshrl.u32 %v1011, 7
    %v1013 = vsub.s32 %v1010, %v1012
    %v1014 = vrot.slane %v1000, %v1013
    %v1015 = vcombine.low %v308, %v838
    %v1016 = vcombine.high %v308, %v838
    %v1018 = vunpack.c.l.s4 1983009808
    %v1019 = vunpack.c.0.s8 %v1018
    %v1020 = vlaneseq
    %v1021 = vshrl.u32 %v1020, 7
    %v1022 = vsub.s32 %v1019, %v1021
    %v1023 = vrot.slane %v1015, %v1022
    %v1025 = vunpack.c.l.s4 1983009808
    %v1026 = vunpack.c.0.s8 %v1025
    %v1027 = vlaneseq
    %v1028 = vshrl.u32 %v1027, 7
    %v1029 = vsub.s32 %v1026, %v1028
    %v1030 = vrot.slane %v1016, %v1029
    %v1031 = vcombine.low %v832, %v844
    %v1032 = vcombine.high %v832, %v844
    %v1034 = vunpack.c.l.s4 1983009808
    %v1035 = vunpack.c.0.s8 %v1034
    %v1036 = vlaneseq
    %v1037 = vshrl.u32 %v1036, 7
    %v1038 = vsub.s32 %v1035, %v1037
    %v1039 = vrot.slane %v1031, %v1038
    %v1041 = vunpack.c.l.s4 1983009808
    %v1042 = vunpack.c.0.s8 %v1041
    %v1043 = vlaneseq
    %v1044 = vshrl.u32 %v1043, 7
    %v1045 = vsub.s32 %v1042, %v1044
    %v1046 = vrot.slane %v1032, %v1045
    %v1047 = vcombine.low %v991, %v1007
    %v1048 = vcombine.high %v991, %v1007
    %v1050 = vunpack.c.l.s4 1934713408
    %v1051 = vunpack.c.0.s8 %v1050
    %v1052 = vlaneseq
    %v1053 = vshrl.u32 %v1052, 7
    %v1054 = vsub.s32 %v1051, %v1053
    %v1055 = vrot.slane %v1047, %v1054
    %v1057 = vunpack.c.l.s4 1934713408
    %v1058 = vunpack.c.0.s8 %v1057
    %v1059 = vlaneseq
    %v1060 = vshrl.u32 %v1059, 7
    %v1061 = vsub.s32 %v1058, %v1060
    %v1062 = vrot.slane %v1048, %v1061
    %v1063 = vcombine.low %v998, %v1014
    %v1064 = vcombine.high %v998, %v1014
    %v1066 = vunpack.c.l.s4 1934713408
    %v1067 = vunpack.c.0.s8 %v1066
    %v1068 = vlaneseq
    %v1069 = vshrl.u32 %v1068, 7
    %v1070 = vsub.s32 %v1067, %v1069
    %v1071 = vrot.slane %v1063, %v1070
    %v1073 = vunpack.c.l.s4 1934713408
    %v1074 = vunpack.c.0.s8 %v1073
    %v1075 = vlaneseq
    %v1076 = vshrl.u32 %v1075, 7
    %v1077 = vsub.s32 %v1074, %v1076
    %v1078 = vrot.slane %v1064, %v1077
    %v1079 = vcombine.low %v1023, %v1039
    %v1080 = vcombine.high %v1023, %v1039
    %v1082 = vunpack.c.l.s4 1934713408
    %v1083 = vunpack.c.0.s8 %v1082
    %v1084 = vlaneseq
    %v1085 = vshrl.u32 %v1084, 7
    %v1086 = vsub.s32 %v1083, %v1085
    %v1087 = vrot.slane %v1079, %v1086
    %v1089 = vunpack.c.l.s4 1934713408
    %v1090 = vunpack.c.0.s8 %v1089
    %v1091 = vlaneseq
    %v1092 = vshrl.u32 %v1091, 7
    %v1093 = vsub.s32 %v1090, %v1092
    %v1094 = vrot.slane %v1080, %v1093
    %v1095 = vcombine.low %v1030, %v1046
    %v1096 = vcombine.high %v1030, %v1046
    %v1098 = vunpack.c.l.s4 1934713408
    %v1099 = vunpack.c.0.s8 %v1098
    %v1100 = vlaneseq
    %v1101 = vshrl.u32 %v1100, 7
    %v1102 = vsub.s32 %v1099, %v1101
    %v1103 = vrot.slane %v1095, %v1102
    %v1105 = vunpack.c.l.s4 1934713408
    %v1106 = vunpack.c.0.s8 %v1105
    %v1107 = vlaneseq
    %v1108 = vshrl.u32 %v1107, 7
    %v1109 = vsub.s32 %v1106, %v1108
    %v1110 = vrot.slane %v1096, %v1109
    %v1111 = vcombine.low %v1055, %v1087
    %v1112 = vcombine.high %v1055, %v1087
    %v1113 = vcombine.low %v1062, %v1094
    %v1114 = vcombine.high %v1062, %v1094
    %v1115 = vcombine.low %v1071, %v1103
    %v1116 = vcombine.high %v1071, %v1103
    %v1117 = vcombine.low %v1078, %v1110
    %v1118 = vcombine.high %v1078, %v1110
    %v1119 = vcombine.low %v975, %v977
    %v1120 = vcombine.high %v975, %v977
    %v1122 = vunpack.c.l.s4 1983009808
    %v1123 = vunpack.c.0.s8 %v1122
    %v1124 = vlaneseq
    %v1125 = vshrl.u32 %v1124, 7
    %v1126 = vsub.s32 %v1123, %v1125
    %v1127 = vrot.slane %v1119, %v1126
    %v1129 = vunpack.c.l.s4 1983009808
    %v1130 = vunpack.c.0.s8 %v1129
    %v1131 = vlaneseq
    %v1132 = vshrl.u32 %v1131, 7
    %v1133 = vsub.s32 %v1130, %v1132
    %v1134 = vrot.slane %v1120, %v1133
    %v1135 = vcombine.low %v976, %v978
    %v1136 = vcombine.high %v976, %v978
    %v1138 = vunpack.c.l.s4 1983009808
    %v1139 = vunpack.c.0.s8 %v1138
    %v1140 = vlaneseq
    %v1141 = vshrl.u32 %v1140, 7
    %v1142 = vsub.s32 %v1139, %v1141
    %v1143 = vrot.slane %v1135, %v1142
    %v1145 = vunpack.c.l.s4 1983009808
    %v1146 = vunpack.c.0.s8 %v1145
    %v1147 = vlaneseq
    %v1148 = vshrl.u32 %v1147, 7
    %v1149 = vsub.s32 %v1146, %v1148
    %v1150 = vrot.slane %v1136, %v1149
    %v1151 = vcombine.low %v979, %v981
    %v1152 = vcombine.high %v979, %v981
    %v1154 = vunpack.c.l.s4 1983009808
    %v1155 = vunpack.c.0.s8 %v1154
    %v1156 = vlaneseq
    %v1157 = vshrl.u32 %v1156, 7
    %v1158 = vsub.s32 %v1155, %v1157
    %v1159 = vrot.slane %v1151, %v1158
    %v1161 = vunpack.c.l.s4 1983009808
    %v1162 = vunpack.c.0.s8 %v1161
    %v1163 = vlaneseq
    %v1164 = vshrl.u32 %v1163, 7
    %v1165 = vsub.s32 %v1162, %v1164
    %v1166 = vrot.slane %v1152, %v1165
    %v1167 = vcombine.low %v980, %v982
    %v1168 = vcombine.high %v980, %v982
    %v1170 = vunpack.c.l.s4 1983009808
    %v1171 = vunpack.c.0.s8 %v1170
    %v1172 = vlaneseq
    %v1173 = vshrl.u32 %v1172, 7
    %v1174 = vsub.s32 %v1171, %v1173
    %v1175 = vrot.slane %v1167, %v1174
    %v1177 = vunpack.c.l.s4 1983009808
    %v1178 = vunpack.c.0.s8 %v1177
    %v1179 = vlaneseq
    %v1180 = vshrl.u32 %v1179, 7
    %v1181 = vsub.s32 %v1178, %v1180
    %v1182 = vrot.slane %v1168, %v1181
    %v1183 = vcombine.low %v1127, %v1143
    %v1184 = vcombine.high %v1127, %v1143
    %v1186 = vunpack.c.l.s4 1934713408
    %v1187 = vunpack.c.0.s8 %v1186
    %v1188 = vlaneseq
    %v1189 = vshrl.u32 %v1188, 7
    %v1190 = vsub.s32 %v1187, %v1189
    %v1191 = vrot.slane %v1183, %v1190
    %v1193 = vunpack.c.l.s4 1934713408
    %v1194 = vunpack.c.0.s8 %v1193
    %v1195 = vlaneseq
    %v1196 = vshrl.u32 %v1195, 7
    %v1197 = vsub.s32 %v1194, %v1196
    %v1198 = vrot.slane %v1184, %v1197
    %v1199 = vcombine.low %v1134, %v1150
    %v1200 = vcombine.high %v1134, %v1150
    %v1202 = vunpack.c.l.s4 1934713408
    %v1203 = vunpack.c.0.s8 %v1202
    %v1204 = vlaneseq
    %v1205 = vshrl.u32 %v1204, 7
    %v1206 = vsub.s32 %v1203, %v1205
    %v1207 = vrot.slane %v1199, %v1206
    %v1209 = vunpack.c.l.s4 1934713408
    %v1210 = vunpack.c.0.s8 %v1209
    %v1211 = vlaneseq
    %v1212 = vshrl.u32 %v1211, 7
    %v1213 = vsub.s32 %v1210, %v1212
    %v1214 = vrot.slane %v1200, %v1213
    %v1215 = vcombine.low %v1159, %v1175
    %v1216 = vcombine.high %v1159, %v1175
    %v1218 = vunpack.c.l.s4 1934713408
    %v1219 = vunpack.c.0.s8 %v1218
    %v1220 = vlaneseq
    %v1221 = vshrl.u32 %v1220, 7
    %v1222 = vsub.s32 %v1219, %v1221
    %v1223 = vrot.slane %v1215, %v1222
    %v1225 = vunpack.c.l.s4 1934713408
    %v1226 = vunpack.c.0.s8 %v1225
    %v1227 = vlaneseq
    %v1228 = vshrl.u32 %v1227, 7
    %v1229 = vsub.s32 %v1226, %v1228
    %v1230 = vrot.slane %v1216, %v1229
    %v1231 = vcombine.low %v1166, %v1182
    %v1232 = vcombine.high %v1166, %v1182
    %v1234 = vunpack.c.l.s4 1934713408
    %v1235 = vunpack.c.0.s8 %v1234
    %v1236 = vlaneseq
    %v1237 = vshrl.u32 %v1236, 7
    %v1238 = vsub.s32 %v1235, %v1237
    %v1239 = vrot.slane %v1231, %v1238
    %v1241 = vunpack.c.l.s4 1934713408
    %v1242 = vunpack.c.0.s8 %v1241
    %v1243 = vlaneseq
    %v1244 = vshrl.u32 %v1243, 7
    %v1245 = vsub.s32 %v1242, %v1244
    %v1246 = vrot.slane %v1232, %v1245
    %v1247 = vcombine.low %v1191, %v1223
    %v1248 = vcombine.high %v1191, %v1223
    %v1249 = vcombine.low %v1198, %v1230
    %v1250 = vcombine.high %v1198, %v1230
    %v1251 = vcombine.low %v1207, %v1239
    %v1252 = vcombine.high %v1207, %v1239
    %v1253 = vcombine.low %v1214, %v1246
    %v1254 = vcombine.high %v1214, %v1246
    %v1255 = vcombine.low %v1111, %v1113
    %v1256 = vcombine.high %v1111, %v1113
    %v1258 = vunpack.c.l.s4 1983009808
    %v1259 = vunpack.c.0.s8 %v1258
    %v1260 = vlaneseq
    %v1261 = vshrl.u32 %v1260, 7
    %v1262 = vsub.s32 %v1259, %v1261
    %v1263 = vrot.slane %v1255, %v1262
    %v1265 = vunpack.c.l.s4 1983009808
    %v1266 = vunpack.c.0.s8 %v1265
    %v1267 = vlaneseq
    %v1268 = vshrl.u32 %v1267, 7
    %v1269 = vsub.s32 %v1266, %v1268
    %v1270 = vrot.slane %v1256, %v1269
    %v1271 = vcombine.low %v1112, %v1114
    %v1272 = vcombine.high %v1112, %v1114
    %v1274 = vunpack.c.l.s4 1983009808
    %v1275 = vunpack.c.0.s8 %v1274
    %v1276 = vlaneseq
    %v1277 = vshrl.u32 %v1276, 7
    %v1278 = vsub.s32 %v1275, %v1277
    %v1279 = vrot.slane %v1271, %v1278
    %v1281 = vunpack.c.l.s4 1983009808
    %v1282 = vunpack.c.0.s8 %v1281
    %v1283 = vlaneseq
    %v1284 = vshrl.u32 %v1283, 7
    %v1285 = vsub.s32 %v1282, %v1284
    %v1286 = vrot.slane %v1272, %v1285
    %v1287 = vcombine.low %v1115, %v1117
    %v1288 = vcombine.high %v1115, %v1117
    %v1290 = vunpack.c.l.s4 1983009808
    %v1291 = vunpack.c.0.s8 %v1290
    %v1292 = vlaneseq
    %v1293 = vshrl.u32 %v1292, 7
    %v1294 = vsub.s32 %v1291, %v1293
    %v1295 = vrot.slane %v1287, %v1294
    %v1297 = vunpack.c.l.s4 1983009808
    %v1298 = vunpack.c.0.s8 %v1297
    %v1299 = vlaneseq
    %v1300 = vshrl.u32 %v1299, 7
    %v1301 = vsub.s32 %v1298, %v1300
    %v1302 = vrot.slane %v1288, %v1301
    %v1303 = vcombine.low %v1116, %v1118
    %v1304 = vcombine.high %v1116, %v1118
    %v1306 = vunpack.c.l.s4 1983009808
    %v1307 = vunpack.c.0.s8 %v1306
    %v1308 = vlaneseq
    %v1309 = vshrl.u32 %v1308, 7
    %v1310 = vsub.s32 %v1307, %v1309
    %v1311 = vrot.slane %v1303, %v1310
    %v1313 = vunpack.c.l.s4 1983009808
    %v1314 = vunpack.c.0.s8 %v1313
    %v1315 = vlaneseq
    %v1316 = vshrl.u32 %v1315, 7
    %v1317 = vsub.s32 %v1314, %v1316
    %v1318 = vrot.slane %v1304, %v1317
    %v1319 = vcombine.low %v1263, %v1279
    %v1320 = vcombine.high %v1263, %v1279
    %v1322 = vunpack.c.l.s4 1934713408
    %v1323 = vunpack.c.0.s8 %v1322
    %v1324 = vlaneseq
    %v1325 = vshrl.u32 %v1324, 7
    %v1326 = vsub.s32 %v1323, %v1325
    %v1327 = vrot.slane %v1319, %v1326
    %v1329 = vunpack.c.l.s4 1934713408
    %v1330 = vunpack.c.0.s8 %v1329
    %v1331 = vlaneseq
    %v1332 = vshrl.u32 %v1331, 7
    %v1333 = vsub.s32 %v1330, %v1332
    %v1334 = vrot.slane %v1320, %v1333
    %v1335 = vcombine.low %v1270, %v1286
    %v1336 = vcombine.high %v1270, %v1286
    %v1338 = vunpack.c.l.s4 1934713408
    %v1339 = vunpack.c.0.s8 %v1338
    %v1340 = vlaneseq
    %v1341 = vshrl.u32 %v1340, 7
    %v1342 = vsub.s32 %v1339, %v1341
    %v1343 = vrot.slane %v1335, %v1342
    %v1345 = vunpack.c.l.s4 1934713408
    %v1346 = vunpack.c.0.s8 %v1345
    %v1347 = vlaneseq
    %v1348 = vshrl.u32 %v1347, 7
    %v1349 = vsub.s32 %v1346, %v1348
    %v1350 = vrot.slane %v1336, %v1349
    %v1351 = vcombine.low %v1295, %v1311
    %v1352 = vcombine.high %v1295, %v1311
    %v1354 = vunpack.c.l.s4 1934713408
    %v1355 = vunpack.c.0.s8 %v1354
    %v1356 = vlaneseq
    %v1357 = vshrl.u32 %v1356, 7
    %v1358 = vsub.s32 %v1355, %v1357
    %v1359 = vrot.slane %v1351, %v1358
    %v1361 = vunpack.c.l.s4 1934713408
    %v1362 = vunpack.c.0.s8 %v1361
    %v1363 = vlaneseq
    %v1364 = vshrl.u32 %v1363, 7
    %v1365 = vsub.s32 %v1362, %v1364
    %v1366 = vrot.slane %v1352, %v1365
    %v1367 = vcombine.low %v1302, %v1318
    %v1368 = vcombine.high %v1302, %v1318
    %v1370 = vunpack.c.l.s4 1934713408
    %v1371 = vunpack.c.0.s8 %v1370
    %v1372 = vlaneseq
    %v1373 = vshrl.u32 %v1372, 7
    %v1374 = vsub.s32 %v1371, %v1373
    %v1375 = vrot.slane %v1367, %v1374
    %v1377 = vunpack.c.l.s4 1934713408
    %v1378 = vunpack.c.0.s8 %v1377
    %v1379 = vlaneseq
    %v1380 = vshrl.u32 %v1379, 7
    %v1381 = vsub.s32 %v1378, %v1380
    %v1382 = vrot.slane %v1368, %v1381
    %v1383 = vcombine.low %v1327, %v1359
    %v1384 = vcombine.high %v1327, %v1359
    %v1385 = vcombine.low %v1334, %v1366
    %v1386 = vcombine.high %v1334, %v1366
    %v1387 = vcombine.low %v1343, %v1375
    %v1388 = vcombine.high %v1343, %v1375
    %v1389 = vcombine.low %v1350, %v1382
    %v1390 = vcombine.high %v1350, %v1382
    %1395 = vrot.lane.b32.xlu0 %v799, 96
    %v1396 = vpop.permute.xlu0 %1395
    %1397 = vrot.lane.b32.xlu0 %v801, 96
    %v1398 = vpop.permute.xlu0 %1397
    %1399 = vrot.lane.b32.xlu0 %v803, 96
    %v1400 = vpop.permute.xlu0 %1399
    %1401 = vrot.lane.b32.xlu0 %v805, 96
    %v1402 = vpop.permute.xlu0 %1401
    %1407 = vrot.lane.b32.xlu0 %v799, 64
    %v1408 = vpop.permute.xlu0 %1407
    %1409 = vrot.lane.b32.xlu0 %v801, 64
    %v1410 = vpop.permute.xlu0 %1409
    %1411 = vrot.lane.b32.xlu0 %v803, 64
    %v1412 = vpop.permute.xlu0 %1411
    %1413 = vrot.lane.b32.xlu0 %v805, 64
    %v1414 = vpop.permute.xlu0 %1413
    %1419 = vrot.lane.b32.xlu0 %v799, 32
    %v1420 = vpop.permute.xlu0 %1419
    %1421 = vrot.lane.b32.xlu0 %v801, 32
    %v1422 = vpop.permute.xlu0 %1421
    %1423 = vrot.lane.b32.xlu0 %v803, 32
    %v1424 = vpop.permute.xlu0 %1423
    %1425 = vrot.lane.b32.xlu0 %v805, 32
    %v1426 = vpop.permute.xlu0 %1425
    %1435 = vrot.lane.b32.xlu0 %v800, 96
    %v1436 = vpop.permute.xlu0 %1435
    %1437 = vrot.lane.b32.xlu0 %v802, 96
    %v1438 = vpop.permute.xlu0 %1437
    %1439 = vrot.lane.b32.xlu0 %v804, 96
    %v1440 = vpop.permute.xlu0 %1439
    %1441 = vrot.lane.b32.xlu0 %v806, 96
    %v1442 = vpop.permute.xlu0 %1441
    %1447 = vrot.lane.b32.xlu0 %v800, 64
    %v1448 = vpop.permute.xlu0 %1447
    %1449 = vrot.lane.b32.xlu0 %v802, 64
    %v1450 = vpop.permute.xlu0 %1449
    %1451 = vrot.lane.b32.xlu0 %v804, 64
    %v1452 = vpop.permute.xlu0 %1451
    %1453 = vrot.lane.b32.xlu0 %v806, 64
    %v1454 = vpop.permute.xlu0 %1453
    %1459 = vrot.lane.b32.xlu0 %v800, 32
    %v1460 = vpop.permute.xlu0 %1459
    %1461 = vrot.lane.b32.xlu0 %v802, 32
    %v1462 = vpop.permute.xlu0 %1461
    %1463 = vrot.lane.b32.xlu0 %v804, 32
    %v1464 = vpop.permute.xlu0 %1463
    %1465 = vrot.lane.b32.xlu0 %v806, 32
    %v1466 = vpop.permute.xlu0 %1465
    %v1471 = vcombine.low %v799, %v1408
    %v1472 = vcombine.high %v799, %v1408
    %v1474 = vunpack.c.l.s4 1983009808
    %v1475 = vunpack.c.0.s8 %v1474
    %v1476 = vlaneseq
    %v1477 = vshrl.u32 %v1476, 7
    %v1478 = vsub.s32 %v1475, %v1477
    %v1479 = vrot.slane %v1471, %v1478
    %v1481 = vunpack.c.l.s4 1983009808
    %v1482 = vunpack.c.0.s8 %v1481
    %v1483 = vlaneseq
    %v1484 = vshrl.u32 %v1483, 7
    %v1485 = vsub.s32 %v1482, %v1484
    %v1486 = vrot.slane %v1472, %v1485
    %v1487 = vcombine.low %v1396, %v1420
    %v1488 = vcombine.high %v1396, %v1420
    %v1490 = vunpack.c.l.s4 1983009808
    %v1491 = vunpack.c.0.s8 %v1490
    %v1492 = vlaneseq
    %v1493 = vshrl.u32 %v1492, 7
    %v1494 = vsub.s32 %v1491, %v1493
    %v1495 = vrot.slane %v1487, %v1494
    %v1497 = vunpack.c.l.s4 1983009808
    %v1498 = vunpack.c.0.s8 %v1497
    %v1499 = vlaneseq
    %v1500 = vshrl.u32 %v1499, 7
    %v1501 = vsub.s32 %v1498, %v1500
    %v1502 = vrot.slane %v1488, %v1501
    %v1503 = vcombine.low %v800, %v1448
    %v1504 = vcombine.high %v800, %v1448
    %v1506 = vunpack.c.l.s4 1983009808
    %v1507 = vunpack.c.0.s8 %v1506
    %v1508 = vlaneseq
    %v1509 = vshrl.u32 %v1508, 7
    %v1510 = vsub.s32 %v1507, %v1509
    %v1511 = vrot.slane %v1503, %v1510
    %v1513 = vunpack.c.l.s4 1983009808
    %v1514 = vunpack.c.0.s8 %v1513
    %v1515 = vlaneseq
    %v1516 = vshrl.u32 %v1515, 7
    %v1517 = vsub.s32 %v1514, %v1516
    %v1518 = vrot.slane %v1504, %v1517
    %v1519 = vcombine.low %v1436, %v1460
    %v1520 = vcombine.high %v1436, %v1460
    %v1522 = vunpack.c.l.s4 1983009808
    %v1523 = vunpack.c.0.s8 %v1522
    %v1524 = vlaneseq
    %v1525 = vshrl.u32 %v1524, 7
    %v1526 = vsub.s32 %v1523, %v1525
    %v1527 = vrot.slane %v1519, %v1526
    %v1529 = vunpack.c.l.s4 1983009808
    %v1530 = vunpack.c.0.s8 %v1529
    %v1531 = vlaneseq
    %v1532 = vshrl.u32 %v1531, 7
    %v1533 = vsub.s32 %v1530, %v1532
    %v1534 = vrot.slane %v1520, %v1533
    %v1535 = vcombine.low %v1479, %v1495
    %v1536 = vcombine.high %v1479, %v1495
    %v1538 = vunpack.c.l.s4 1934713408
    %v1539 = vunpack.c.0.s8 %v1538
    %v1540 = vlaneseq
    %v1541 = vshrl.u32 %v1540, 7
    %v1542 = vsub.s32 %v1539, %v1541
    %v1543 = vrot.slane %v1535, %v1542
    %v1545 = vunpack.c.l.s4 1934713408
    %v1546 = vunpack.c.0.s8 %v1545
    %v1547 = vlaneseq
    %v1548 = vshrl.u32 %v1547, 7
    %v1549 = vsub.s32 %v1546, %v1548
    %v1550 = vrot.slane %v1536, %v1549
    %v1551 = vcombine.low %v1486, %v1502
    %v1552 = vcombine.high %v1486, %v1502
    %v1554 = vunpack.c.l.s4 1934713408
    %v1555 = vunpack.c.0.s8 %v1554
    %v1556 = vlaneseq
    %v1557 = vshrl.u32 %v1556, 7
    %v1558 = vsub.s32 %v1555, %v1557
    %v1559 = vrot.slane %v1551, %v1558
    %v1561 = vunpack.c.l.s4 1934713408
    %v1562 = vunpack.c.0.s8 %v1561
    %v1563 = vlaneseq
    %v1564 = vshrl.u32 %v1563, 7
    %v1565 = vsub.s32 %v1562, %v1564
    %v1566 = vrot.slane %v1552, %v1565
    %v1567 = vcombine.low %v1511, %v1527
    %v1568 = vcombine.high %v1511, %v1527
    %v1570 = vunpack.c.l.s4 1934713408
    %v1571 = vunpack.c.0.s8 %v1570
    %v1572 = vlaneseq
    %v1573 = vshrl.u32 %v1572, 7
    %v1574 = vsub.s32 %v1571, %v1573
    %v1575 = vrot.slane %v1567, %v1574
    %v1577 = vunpack.c.l.s4 1934713408
    %v1578 = vunpack.c.0.s8 %v1577
    %v1579 = vlaneseq
    %v1580 = vshrl.u32 %v1579, 7
    %v1581 = vsub.s32 %v1578, %v1580
    %v1582 = vrot.slane %v1568, %v1581
    %v1583 = vcombine.low %v1518, %v1534
    %v1584 = vcombine.high %v1518, %v1534
    %v1586 = vunpack.c.l.s4 1934713408
    %v1587 = vunpack.c.0.s8 %v1586
    %v1588 = vlaneseq
    %v1589 = vshrl.u32 %v1588, 7
    %v1590 = vsub.s32 %v1587, %v1589
    %v1591 = vrot.slane %v1583, %v1590
    %v1593 = vunpack.c.l.s4 1934713408
    %v1594 = vunpack.c.0.s8 %v1593
    %v1595 = vlaneseq
    %v1596 = vshrl.u32 %v1595, 7
    %v1597 = vsub.s32 %v1594, %v1596
    %v1598 = vrot.slane %v1584, %v1597
    %v1599 = vcombine.low %v1543, %v1575
    %v1600 = vcombine.high %v1543, %v1575
    %v1601 = vcombine.low %v1550, %v1582
    %v1602 = vcombine.high %v1550, %v1582
    %v1603 = vcombine.low %v1559, %v1591
    %v1604 = vcombine.high %v1559, %v1591
    %v1605 = vcombine.low %v1566, %v1598
    %v1606 = vcombine.high %v1566, %v1598
    %v1607 = vcombine.low %v801, %v1410
    %v1608 = vcombine.high %v801, %v1410
    %v1610 = vunpack.c.l.s4 1983009808
    %v1611 = vunpack.c.0.s8 %v1610
    %v1612 = vlaneseq
    %v1613 = vshrl.u32 %v1612, 7
    %v1614 = vsub.s32 %v1611, %v1613
    %v1615 = vrot.slane %v1607, %v1614
    %v1617 = vunpack.c.l.s4 1983009808
    %v1618 = vunpack.c.0.s8 %v1617
    %v1619 = vlaneseq
    %v1620 = vshrl.u32 %v1619, 7
    %v1621 = vsub.s32 %v1618, %v1620
    %v1622 = vrot.slane %v1608, %v1621
    %v1623 = vcombine.low %v1398, %v1422
    %v1624 = vcombine.high %v1398, %v1422
    %v1626 = vunpack.c.l.s4 1983009808
    %v1627 = vunpack.c.0.s8 %v1626
    %v1628 = vlaneseq
    %v1629 = vshrl.u32 %v1628, 7
    %v1630 = vsub.s32 %v1627, %v1629
    %v1631 = vrot.slane %v1623, %v1630
    %v1633 = vunpack.c.l.s4 1983009808
    %v1634 = vunpack.c.0.s8 %v1633
    %v1635 = vlaneseq
    %v1636 = vshrl.u32 %v1635, 7
    %v1637 = vsub.s32 %v1634, %v1636
    %v1638 = vrot.slane %v1624, %v1637
    %v1639 = vcombine.low %v802, %v1450
    %v1640 = vcombine.high %v802, %v1450
    %v1642 = vunpack.c.l.s4 1983009808
    %v1643 = vunpack.c.0.s8 %v1642
    %v1644 = vlaneseq
    %v1645 = vshrl.u32 %v1644, 7
    %v1646 = vsub.s32 %v1643, %v1645
    %v1647 = vrot.slane %v1639, %v1646
    %v1649 = vunpack.c.l.s4 1983009808
    %v1650 = vunpack.c.0.s8 %v1649
    %v1651 = vlaneseq
    %v1652 = vshrl.u32 %v1651, 7
    %v1653 = vsub.s32 %v1650, %v1652
    %v1654 = vrot.slane %v1640, %v1653
    %v1655 = vcombine.low %v1438, %v1462
    %v1656 = vcombine.high %v1438, %v1462
    %v1658 = vunpack.c.l.s4 1983009808
    %v1659 = vunpack.c.0.s8 %v1658
    %v1660 = vlaneseq
    %v1661 = vshrl.u32 %v1660, 7
    %v1662 = vsub.s32 %v1659, %v1661
    %v1663 = vrot.slane %v1655, %v1662
    %v1665 = vunpack.c.l.s4 1983009808
    %v1666 = vunpack.c.0.s8 %v1665
    %v1667 = vlaneseq
    %v1668 = vshrl.u32 %v1667, 7
    %v1669 = vsub.s32 %v1666, %v1668
    %v1670 = vrot.slane %v1656, %v1669
    %v1671 = vcombine.low %v1615, %v1631
    %v1672 = vcombine.high %v1615, %v1631
    %v1674 = vunpack.c.l.s4 1934713408
    %v1675 = vunpack.c.0.s8 %v1674
    %v1676 = vlaneseq
    %v1677 = vshrl.u32 %v1676, 7
    %v1678 = vsub.s32 %v1675, %v1677
    %v1679 = vrot.slane %v1671, %v1678
    %v1681 = vunpack.c.l.s4 1934713408
    %v1682 = vunpack.c.0.s8 %v1681
    %v1683 = vlaneseq
    %v1684 = vshrl.u32 %v1683, 7
    %v1685 = vsub.s32 %v1682, %v1684
    %v1686 = vrot.slane %v1672, %v1685
    %v1687 = vcombine.low %v1622, %v1638
    %v1688 = vcombine.high %v1622, %v1638
    %v1690 = vunpack.c.l.s4 1934713408
    %v1691 = vunpack.c.0.s8 %v1690
    %v1692 = vlaneseq
    %v1693 = vshrl.u32 %v1692, 7
    %v1694 = vsub.s32 %v1691, %v1693
    %v1695 = vrot.slane %v1687, %v1694
    %v1697 = vunpack.c.l.s4 1934713408
    %v1698 = vunpack.c.0.s8 %v1697
    %v1699 = vlaneseq
    %v1700 = vshrl.u32 %v1699, 7
    %v1701 = vsub.s32 %v1698, %v1700
    %v1702 = vrot.slane %v1688, %v1701
    %v1703 = vcombine.low %v1647, %v1663
    %v1704 = vcombine.high %v1647, %v1663
    %v1706 = vunpack.c.l.s4 1934713408
    %v1707 = vunpack.c.0.s8 %v1706
    %v1708 = vlaneseq
    %v1709 = vshrl.u32 %v1708, 7
    %v1710 = vsub.s32 %v1707, %v1709
    %v1711 = vrot.slane %v1703, %v1710
    %v1713 = vunpack.c.l.s4 1934713408
    %v1714 = vunpack.c.0.s8 %v1713
    %v1715 = vlaneseq
    %v1716 = vshrl.u32 %v1715, 7
    %v1717 = vsub.s32 %v1714, %v1716
    %v1718 = vrot.slane %v1704, %v1717
    %v1719 = vcombine.low %v1654, %v1670
    %v1720 = vcombine.high %v1654, %v1670
    %v1722 = vunpack.c.l.s4 1934713408
    %v1723 = vunpack.c.0.s8 %v1722
    %v1724 = vlaneseq
    %v1725 = vshrl.u32 %v1724, 7
    %v1726 = vsub.s32 %v1723, %v1725
    %v1727 = vrot.slane %v1719, %v1726
    %v1729 = vunpack.c.l.s4 1934713408
    %v1730 = vunpack.c.0.s8 %v1729
    %v1731 = vlaneseq
    %v1732 = vshrl.u32 %v1731, 7
    %v1733 = vsub.s32 %v1730, %v1732
    %v1734 = vrot.slane %v1720, %v1733
    %v1735 = vcombine.low %v1679, %v1711
    %v1736 = vcombine.high %v1679, %v1711
    %v1737 = vcombine.low %v1686, %v1718
    %v1738 = vcombine.high %v1686, %v1718
    %v1739 = vcombine.low %v1695, %v1727
    %v1740 = vcombine.high %v1695, %v1727
    %v1741 = vcombine.low %v1702, %v1734
    %v1742 = vcombine.high %v1702, %v1734
    %v1743 = vcombine.low %v803, %v1412
    %v1744 = vcombine.high %v803, %v1412
    %v1746 = vunpack.c.l.s4 1983009808
    %v1747 = vunpack.c.0.s8 %v1746
    %v1748 = vlaneseq
    %v1749 = vshrl.u32 %v1748, 7
    %v1750 = vsub.s32 %v1747, %v1749
    %v1751 = vrot.slane %v1743, %v1750
    %v1753 = vunpack.c.l.s4 1983009808
    %v1754 = vunpack.c.0.s8 %v1753
    %v1755 = vlaneseq
    %v1756 = vshrl.u32 %v1755, 7
    %v1757 = vsub.s32 %v1754, %v1756
    %v1758 = vrot.slane %v1744, %v1757
    %v1759 = vcombine.low %v1400, %v1424
    %v1760 = vcombine.high %v1400, %v1424
    %v1762 = vunpack.c.l.s4 1983009808
    %v1763 = vunpack.c.0.s8 %v1762
    %v1764 = vlaneseq
    %v1765 = vshrl.u32 %v1764, 7
    %v1766 = vsub.s32 %v1763, %v1765
    %v1767 = vrot.slane %v1759, %v1766
    %v1769 = vunpack.c.l.s4 1983009808
    %v1770 = vunpack.c.0.s8 %v1769
    %v1771 = vlaneseq
    %v1772 = vshrl.u32 %v1771, 7
    %v1773 = vsub.s32 %v1770, %v1772
    %v1774 = vrot.slane %v1760, %v1773
    %v1775 = vcombine.low %v804, %v1452
    %v1776 = vcombine.high %v804, %v1452
    %v1778 = vunpack.c.l.s4 1983009808
    %v1779 = vunpack.c.0.s8 %v1778
    %v1780 = vlaneseq
    %v1781 = vshrl.u32 %v1780, 7
    %v1782 = vsub.s32 %v1779, %v1781
    %v1783 = vrot.slane %v1775, %v1782
    %v1785 = vunpack.c.l.s4 1983009808
    %v1786 = vunpack.c.0.s8 %v1785
    %v1787 = vlaneseq
    %v1788 = vshrl.u32 %v1787, 7
    %v1789 = vsub.s32 %v1786, %v1788
    %v1790 = vrot.slane %v1776, %v1789
    %v1791 = vcombine.low %v1440, %v1464
    %v1792 = vcombine.high %v1440, %v1464
    %v1794 = vunpack.c.l.s4 1983009808
    %v1795 = vunpack.c.0.s8 %v1794
    %v1796 = vlaneseq
    %v1797 = vshrl.u32 %v1796, 7
    %v1798 = vsub.s32 %v1795, %v1797
    %v1799 = vrot.slane %v1791, %v1798
    %v1801 = vunpack.c.l.s4 1983009808
    %v1802 = vunpack.c.0.s8 %v1801
    %v1803 = vlaneseq
    %v1804 = vshrl.u32 %v1803, 7
    %v1805 = vsub.s32 %v1802, %v1804
    %v1806 = vrot.slane %v1792, %v1805
    %v1807 = vcombine.low %v1751, %v1767
    %v1808 = vcombine.high %v1751, %v1767
    %v1810 = vunpack.c.l.s4 1934713408
    %v1811 = vunpack.c.0.s8 %v1810
    %v1812 = vlaneseq
    %v1813 = vshrl.u32 %v1812, 7
    %v1814 = vsub.s32 %v1811, %v1813
    %v1815 = vrot.slane %v1807, %v1814
    %v1817 = vunpack.c.l.s4 1934713408
    %v1818 = vunpack.c.0.s8 %v1817
    %v1819 = vlaneseq
    %v1820 = vshrl.u32 %v1819, 7
    %v1821 = vsub.s32 %v1818, %v1820
    %v1822 = vrot.slane %v1808, %v1821
    %v1823 = vcombine.low %v1758, %v1774
    %v1824 = vcombine.high %v1758, %v1774
    %v1826 = vunpack.c.l.s4 1934713408
    %v1827 = vunpack.c.0.s8 %v1826
    %v1828 = vlaneseq
    %v1829 = vshrl.u32 %v1828, 7
    %v1830 = vsub.s32 %v1827, %v1829
    %v1831 = vrot.slane %v1823, %v1830
    %v1833 = vunpack.c.l.s4 1934713408
    %v1834 = vunpack.c.0.s8 %v1833
    %v1835 = vlaneseq
    %v1836 = vshrl.u32 %v1835, 7
    %v1837 = vsub.s32 %v1834, %v1836
    %v1838 = vrot.slane %v1824, %v1837
    %v1839 = vcombine.low %v1783, %v1799
    %v1840 = vcombine.high %v1783, %v1799
    %v1842 = vunpack.c.l.s4 1934713408
    %v1843 = vunpack.c.0.s8 %v1842
    %v1844 = vlaneseq
    %v1845 = vshrl.u32 %v1844, 7
    %v1846 = vsub.s32 %v1843, %v1845
    %v1847 = vrot.slane %v1839, %v1846
    %v1849 = vunpack.c.l.s4 1934713408
    %v1850 = vunpack.c.0.s8 %v1849
    %v1851 = vlaneseq
    %v1852 = vshrl.u32 %v1851, 7
    %v1853 = vsub.s32 %v1850, %v1852
    %v1854 = vrot.slane %v1840, %v1853
    %v1855 = vcombine.low %v1790, %v1806
    %v1856 = vcombine.high %v1790, %v1806
    %v1858 = vunpack.c.l.s4 1934713408
    %v1859 = vunpack.c.0.s8 %v1858
    %v1860 = vlaneseq
    %v1861 = vshrl.u32 %v1860, 7
    %v1862 = vsub.s32 %v1859, %v1861
    %v1863 = vrot.slane %v1855, %v1862
    %v1865 = vunpack.c.l.s4 1934713408
    %v1866 = vunpack.c.0.s8 %v1865
    %v1867 = vlaneseq
    %v1868 = vshrl.u32 %v1867, 7
    %v1869 = vsub.s32 %v1866, %v1868
    %v1870 = vrot.slane %v1856, %v1869
    %v1871 = vcombine.low %v1815, %v1847
    %v1872 = vcombine.high %v1815, %v1847
    %v1873 = vcombine.low %v1822, %v1854
    %v1874 = vcombine.high %v1822, %v1854
    %v1875 = vcombine.low %v1831, %v1863
    %v1876 = vcombine.high %v1831, %v1863
    %v1877 = vcombine.low %v1838, %v1870
    %v1878 = vcombine.high %v1838, %v1870
    %v1879 = vcombine.low %v805, %v1414
    %v1880 = vcombine.high %v805, %v1414
    %v1882 = vunpack.c.l.s4 1983009808
    %v1883 = vunpack.c.0.s8 %v1882
    %v1884 = vlaneseq
    %v1885 = vshrl.u32 %v1884, 7
    %v1886 = vsub.s32 %v1883, %v1885
    %v1887 = vrot.slane %v1879, %v1886
    %v1889 = vunpack.c.l.s4 1983009808
    %v1890 = vunpack.c.0.s8 %v1889
    %v1891 = vlaneseq
    %v1892 = vshrl.u32 %v1891, 7
    %v1893 = vsub.s32 %v1890, %v1892
    %v1894 = vrot.slane %v1880, %v1893
    %v1895 = vcombine.low %v1402, %v1426
    %v1896 = vcombine.high %v1402, %v1426
    %v1898 = vunpack.c.l.s4 1983009808
    %v1899 = vunpack.c.0.s8 %v1898
    %v1900 = vlaneseq
    %v1901 = vshrl.u32 %v1900, 7
    %v1902 = vsub.s32 %v1899, %v1901
    %v1903 = vrot.slane %v1895, %v1902
    %v1905 = vunpack.c.l.s4 1983009808
    %v1906 = vunpack.c.0.s8 %v1905
    %v1907 = vlaneseq
    %v1908 = vshrl.u32 %v1907, 7
    %v1909 = vsub.s32 %v1906, %v1908
    %v1910 = vrot.slane %v1896, %v1909
    %v1911 = vcombine.low %v806, %v1454
    %v1912 = vcombine.high %v806, %v1454
    %v1914 = vunpack.c.l.s4 1983009808
    %v1915 = vunpack.c.0.s8 %v1914
    %v1916 = vlaneseq
    %v1917 = vshrl.u32 %v1916, 7
    %v1918 = vsub.s32 %v1915, %v1917
    %v1919 = vrot.slane %v1911, %v1918
    %v1921 = vunpack.c.l.s4 1983009808
    %v1922 = vunpack.c.0.s8 %v1921
    %v1923 = vlaneseq
    %v1924 = vshrl.u32 %v1923, 7
    %v1925 = vsub.s32 %v1922, %v1924
    %v1926 = vrot.slane %v1912, %v1925
    %v1927 = vcombine.low %v1442, %v1466
    %v1928 = vcombine.high %v1442, %v1466
    %v1930 = vunpack.c.l.s4 1983009808
    %v1931 = vunpack.c.0.s8 %v1930
    %v1932 = vlaneseq
    %v1933 = vshrl.u32 %v1932, 7
    %v1934 = vsub.s32 %v1931, %v1933
    %v1935 = vrot.slane %v1927, %v1934
    %v1937 = vunpack.c.l.s4 1983009808
    %v1938 = vunpack.c.0.s8 %v1937
    %v1939 = vlaneseq
    %v1940 = vshrl.u32 %v1939, 7
    %v1941 = vsub.s32 %v1938, %v1940
    %v1942 = vrot.slane %v1928, %v1941
    %v1943 = vcombine.low %v1887, %v1903
    %v1944 = vcombine.high %v1887, %v1903
    %v1946 = vunpack.c.l.s4 1934713408
    %v1947 = vunpack.c.0.s8 %v1946
    %v1948 = vlaneseq
    %v1949 = vshrl.u32 %v1948, 7
    %v1950 = vsub.s32 %v1947, %v1949
    %v1951 = vrot.slane %v1943, %v1950
    %v1953 = vunpack.c.l.s4 1934713408
    %v1954 = vunpack.c.0.s8 %v1953
    %v1955 = vlaneseq
    %v1956 = vshrl.u32 %v1955, 7
    %v1957 = vsub.s32 %v1954, %v1956
    %v1958 = vrot.slane %v1944, %v1957
    %v1959 = vcombine.low %v1894, %v1910
    %v1960 = vcombine.high %v1894, %v1910
    %v1962 = vunpack.c.l.s4 1934713408
    %v1963 = vunpack.c.0.s8 %v1962
    %v1964 = vlaneseq
    %v1965 = vshrl.u32 %v1964, 7
    %v1966 = vsub.s32 %v1963, %v1965
    %v1967 = vrot.slane %v1959, %v1966
    %v1969 = vunpack.c.l.s4 1934713408
    %v1970 = vunpack.c.0.s8 %v1969
    %v1971 = vlaneseq
    %v1972 = vshrl.u32 %v1971, 7
    %v1973 = vsub.s32 %v1970, %v1972
    %v1974 = vrot.slane %v1960, %v1973
    %v1975 = vcombine.low %v1919, %v1935
    %v1976 = vcombine.high %v1919, %v1935
    %v1978 = vunpack.c.l.s4 1934713408
    %v1979 = vunpack.c.0.s8 %v1978
    %v1980 = vlaneseq
    %v1981 = vshrl.u32 %v1980, 7
    %v1982 = vsub.s32 %v1979, %v1981
    %v1983 = vrot.slane %v1975, %v1982
    %v1985 = vunpack.c.l.s4 1934713408
    %v1986 = vunpack.c.0.s8 %v1985
    %v1987 = vlaneseq
    %v1988 = vshrl.u32 %v1987, 7
    %v1989 = vsub.s32 %v1986, %v1988
    %v1990 = vrot.slane %v1976, %v1989
    %v1991 = vcombine.low %v1926, %v1942
    %v1992 = vcombine.high %v1926, %v1942
    %v1994 = vunpack.c.l.s4 1934713408
    %v1995 = vunpack.c.0.s8 %v1994
    %v1996 = vlaneseq
    %v1997 = vshrl.u32 %v1996, 7
    %v1998 = vsub.s32 %v1995, %v1997
    %v1999 = vrot.slane %v1991, %v1998
    %v2001 = vunpack.c.l.s4 1934713408
    %v2002 = vunpack.c.0.s8 %v2001
    %v2003 = vlaneseq
    %v2004 = vshrl.u32 %v2003, 7
    %v2005 = vsub.s32 %v2002, %v2004
    %v2006 = vrot.slane %v1992, %v2005
    %v2007 = vcombine.low %v1951, %v1983
    %v2008 = vcombine.high %v1951, %v1983
    %v2009 = vcombine.low %v1958, %v1990
    %v2010 = vcombine.high %v1958, %v1990
    %v2011 = vcombine.low %v1967, %v1999
    %v2012 = vcombine.high %v1967, %v1999
    %v2013 = vcombine.low %v1974, %v2006
    %v2014 = vcombine.high %v1974, %v2006
    %v2015 = vcombine.low %v1599, %v1601
    %v2016 = vcombine.high %v1599, %v1601
    %v2018 = vunpack.c.l.s4 1983009808
    %v2019 = vunpack.c.0.s8 %v2018
    %v2020 = vlaneseq
    %v2021 = vshrl.u32 %v2020, 7
    %v2022 = vsub.s32 %v2019, %v2021
    %v2023 = vrot.slane %v2015, %v2022
    %v2025 = vunpack.c.l.s4 1983009808
    %v2026 = vunpack.c.0.s8 %v2025
    %v2027 = vlaneseq
    %v2028 = vshrl.u32 %v2027, 7
    %v2029 = vsub.s32 %v2026, %v2028
    %v2030 = vrot.slane %v2016, %v2029
    %v2031 = vcombine.low %v1600, %v1602
    %v2032 = vcombine.high %v1600, %v1602
    %v2034 = vunpack.c.l.s4 1983009808
    %v2035 = vunpack.c.0.s8 %v2034
    %v2036 = vlaneseq
    %v2037 = vshrl.u32 %v2036, 7
    %v2038 = vsub.s32 %v2035, %v2037
    %v2039 = vrot.slane %v2031, %v2038
    %v2041 = vunpack.c.l.s4 1983009808
    %v2042 = vunpack.c.0.s8 %v2041
    %v2043 = vlaneseq
    %v2044 = vshrl.u32 %v2043, 7
    %v2045 = vsub.s32 %v2042, %v2044
    %v2046 = vrot.slane %v2032, %v2045
    %v2047 = vcombine.low %v1603, %v1605
    %v2048 = vcombine.high %v1603, %v1605
    %v2050 = vunpack.c.l.s4 1983009808
    %v2051 = vunpack.c.0.s8 %v2050
    %v2052 = vlaneseq
    %v2053 = vshrl.u32 %v2052, 7
    %v2054 = vsub.s32 %v2051, %v2053
    %v2055 = vrot.slane %v2047, %v2054
    %v2057 = vunpack.c.l.s4 1983009808
    %v2058 = vunpack.c.0.s8 %v2057
    %v2059 = vlaneseq
    %v2060 = vshrl.u32 %v2059, 7
    %v2061 = vsub.s32 %v2058, %v2060
    %v2062 = vrot.slane %v2048, %v2061
    %v2063 = vcombine.low %v1604, %v1606
    %v2064 = vcombine.high %v1604, %v1606
    %v2066 = vunpack.c.l.s4 1983009808
    %v2067 = vunpack.c.0.s8 %v2066
    %v2068 = vlaneseq
    %v2069 = vshrl.u32 %v2068, 7
    %v2070 = vsub.s32 %v2067, %v2069
    %v2071 = vrot.slane %v2063, %v2070
    %v2073 = vunpack.c.l.s4 1983009808
    %v2074 = vunpack.c.0.s8 %v2073
    %v2075 = vlaneseq
    %v2076 = vshrl.u32 %v2075, 7
    %v2077 = vsub.s32 %v2074, %v2076
    %v2078 = vrot.slane %v2064, %v2077
    %v2079 = vcombine.low %v2023, %v2039
    %v2080 = vcombine.high %v2023, %v2039
    %v2082 = vunpack.c.l.s4 1934713408
    %v2083 = vunpack.c.0.s8 %v2082
    %v2084 = vlaneseq
    %v2085 = vshrl.u32 %v2084, 7
    %v2086 = vsub.s32 %v2083, %v2085
    %v2087 = vrot.slane %v2079, %v2086
    %v2089 = vunpack.c.l.s4 1934713408
    %v2090 = vunpack.c.0.s8 %v2089
    %v2091 = vlaneseq
    %v2092 = vshrl.u32 %v2091, 7
    %v2093 = vsub.s32 %v2090, %v2092
    %v2094 = vrot.slane %v2080, %v2093
    %v2095 = vcombine.low %v2030, %v2046
    %v2096 = vcombine.high %v2030, %v2046
    %v2098 = vunpack.c.l.s4 1934713408
    %v2099 = vunpack.c.0.s8 %v2098
    %v2100 = vlaneseq
    %v2101 = vshrl.u32 %v2100, 7
    %v2102 = vsub.s32 %v2099, %v2101
    %v2103 = vrot.slane %v2095, %v2102
    %v2105 = vunpack.c.l.s4 1934713408
    %v2106 = vunpack.c.0.s8 %v2105
    %v2107 = vlaneseq
    %v2108 = vshrl.u32 %v2107, 7
    %v2109 = vsub.s32 %v2106, %v2108
    %v2110 = vrot.slane %v2096, %v2109
    %v2111 = vcombine.low %v2055, %v2071
    %v2112 = vcombine.high %v2055, %v2071
    %v2114 = vunpack.c.l.s4 1934713408
    %v2115 = vunpack.c.0.s8 %v2114
    %v2116 = vlaneseq
    %v2117 = vshrl.u32 %v2116, 7
    %v2118 = vsub.s32 %v2115, %v2117
    %v2119 = vrot.slane %v2111, %v2118
    %v2121 = vunpack.c.l.s4 1934713408
    %v2122 = vunpack.c.0.s8 %v2121
    %v2123 = vlaneseq
    %v2124 = vshrl.u32 %v2123, 7
    %v2125 = vsub.s32 %v2122, %v2124
    %v2126 = vrot.slane %v2112, %v2125
    %v2127 = vcombine.low %v2062, %v2078
    %v2128 = vcombine.high %v2062, %v2078
    %v2130 = vunpack.c.l.s4 1934713408
    %v2131 = vunpack.c.0.s8 %v2130
    %v2132 = vlaneseq
    %v2133 = vshrl.u32 %v2132, 7
    %v2134 = vsub.s32 %v2131, %v2133
    %v2135 = vrot.slane %v2127, %v2134
    %v2137 = vunpack.c.l.s4 1934713408
    %v2138 = vunpack.c.0.s8 %v2137
    %v2139 = vlaneseq
    %v2140 = vshrl.u32 %v2139, 7
    %v2141 = vsub.s32 %v2138, %v2140
    %v2142 = vrot.slane %v2128, %v2141
    %v2143 = vcombine.low %v2087, %v2119
    %v2144 = vcombine.high %v2087, %v2119
    %v2145 = vcombine.low %v2094, %v2126
    %v2146 = vcombine.high %v2094, %v2126
    %v2147 = vcombine.low %v2103, %v2135
    %v2148 = vcombine.high %v2103, %v2135
    %v2149 = vcombine.low %v2110, %v2142
    %v2150 = vcombine.high %v2110, %v2142
    %v2151 = vcombine.low %v1735, %v1737
    %v2152 = vcombine.high %v1735, %v1737
    %v2154 = vunpack.c.l.s4 1983009808
    %v2155 = vunpack.c.0.s8 %v2154
    %v2156 = vlaneseq
    %v2157 = vshrl.u32 %v2156, 7
    %v2158 = vsub.s32 %v2155, %v2157
    %v2159 = vrot.slane %v2151, %v2158
    %v2161 = vunpack.c.l.s4 1983009808
    %v2162 = vunpack.c.0.s8 %v2161
    %v2163 = vlaneseq
    %v2164 = vshrl.u32 %v2163, 7
    %v2165 = vsub.s32 %v2162, %v2164
    %v2166 = vrot.slane %v2152, %v2165
    %v2167 = vcombine.low %v1736, %v1738
    %v2168 = vcombine.high %v1736, %v1738
    %v2170 = vunpack.c.l.s4 1983009808
    %v2171 = vunpack.c.0.s8 %v2170
    %v2172 = vlaneseq
    %v2173 = vshrl.u32 %v2172, 7
    %v2174 = vsub.s32 %v2171, %v2173
    %v2175 = vrot.slane %v2167, %v2174
    %v2177 = vunpack.c.l.s4 1983009808
    %v2178 = vunpack.c.0.s8 %v2177
    %v2179 = vlaneseq
    %v2180 = vshrl.u32 %v2179, 7
    %v2181 = vsub.s32 %v2178, %v2180
    %v2182 = vrot.slane %v2168, %v2181
    %v2183 = vcombine.low %v1739, %v1741
    %v2184 = vcombine.high %v1739, %v1741
    %v2186 = vunpack.c.l.s4 1983009808
    %v2187 = vunpack.c.0.s8 %v2186
    %v2188 = vlaneseq
    %v2189 = vshrl.u32 %v2188, 7
    %v2190 = vsub.s32 %v2187, %v2189
    %v2191 = vrot.slane %v2183, %v2190
    %v2193 = vunpack.c.l.s4 1983009808
    %v2194 = vunpack.c.0.s8 %v2193
    %v2195 = vlaneseq
    %v2196 = vshrl.u32 %v2195, 7
    %v2197 = vsub.s32 %v2194, %v2196
    %v2198 = vrot.slane %v2184, %v2197
    %v2199 = vcombine.low %v1740, %v1742
    %v2200 = vcombine.high %v1740, %v1742
    %v2202 = vunpack.c.l.s4 1983009808
    %v2203 = vunpack.c.0.s8 %v2202
    %v2204 = vlaneseq
    %v2205 = vshrl.u32 %v2204, 7
    %v2206 = vsub.s32 %v2203, %v2205
    %v2207 = vrot.slane %v2199, %v2206
    %v2209 = vunpack.c.l.s4 1983009808
    %v2210 = vunpack.c.0.s8 %v2209
    %v2211 = vlaneseq
    %v2212 = vshrl.u32 %v2211, 7
    %v2213 = vsub.s32 %v2210, %v2212
    %v2214 = vrot.slane %v2200, %v2213
    %v2215 = vcombine.low %v2159, %v2175
    %v2216 = vcombine.high %v2159, %v2175
    %v2218 = vunpack.c.l.s4 1934713408
    %v2219 = vunpack.c.0.s8 %v2218
    %v2220 = vlaneseq
    %v2221 = vshrl.u32 %v2220, 7
    %v2222 = vsub.s32 %v2219, %v2221
    %v2223 = vrot.slane %v2215, %v2222
    %v2225 = vunpack.c.l.s4 1934713408
    %v2226 = vunpack.c.0.s8 %v2225
    %v2227 = vlaneseq
    %v2228 = vshrl.u32 %v2227, 7
    %v2229 = vsub.s32 %v2226, %v2228
    %v2230 = vrot.slane %v2216, %v2229
    %v2231 = vcombine.low %v2166, %v2182
    %v2232 = vcombine.high %v2166, %v2182
    %v2234 = vunpack.c.l.s4 1934713408
    %v2235 = vunpack.c.0.s8 %v2234
    %v2236 = vlaneseq
    %v2237 = vshrl.u32 %v2236, 7
    %v2238 = vsub.s32 %v2235, %v2237
    %v2239 = vrot.slane %v2231, %v2238
    %v2241 = vunpack.c.l.s4 1934713408
    %v2242 = vunpack.c.0.s8 %v2241
    %v2243 = vlaneseq
    %v2244 = vshrl.u32 %v2243, 7
    %v2245 = vsub.s32 %v2242, %v2244
    %v2246 = vrot.slane %v2232, %v2245
    %v2247 = vcombine.low %v2191, %v2207
    %v2248 = vcombine.high %v2191, %v2207
    %v2250 = vunpack.c.l.s4 1934713408
    %v2251 = vunpack.c.0.s8 %v2250
    %v2252 = vlaneseq
    %v2253 = vshrl.u32 %v2252, 7
    %v2254 = vsub.s32 %v2251, %v2253
    %v2255 = vrot.slane %v2247, %v2254
    %v2257 = vunpack.c.l.s4 1934713408
    %v2258 = vunpack.c.0.s8 %v2257
    %v2259 = vlaneseq
    %v2260 = vshrl.u32 %v2259, 7
    %v2261 = vsub.s32 %v2258, %v2260
    %v2262 = vrot.slane %v2248, %v2261
    %v2263 = vcombine.low %v2198, %v2214
    %v2264 = vcombine.high %v2198, %v2214
    %v2266 = vunpack.c.l.s4 1934713408
    %v2267 = vunpack.c.0.s8 %v2266
    %v2268 = vlaneseq
    %v2269 = vshrl.u32 %v2268, 7
    %v2270 = vsub.s32 %v2267, %v2269
    %v2271 = vrot.slane %v2263, %v2270
    %v2273 = vunpack.c.l.s4 1934713408
    %v2274 = vunpack.c.0.s8 %v2273
    %v2275 = vlaneseq
    %v2276 = vshrl.u32 %v2275, 7
    %v2277 = vsub.s32 %v2274, %v2276
    %v2278 = vrot.slane %v2264, %v2277
    %v2279 = vcombine.low %v2223, %v2255
    %v2280 = vcombine.high %v2223, %v2255
    %v2281 = vcombine.low %v2230, %v2262
    %v2282 = vcombine.high %v2230, %v2262
    %v2283 = vcombine.low %v2239, %v2271
    %v2284 = vcombine.high %v2239, %v2271
    %v2285 = vcombine.low %v2246, %v2278
    %v2286 = vcombine.high %v2246, %v2278
    %v2287 = vcombine.low %v1871, %v1873
    %v2288 = vcombine.high %v1871, %v1873
    %v2290 = vunpack.c.l.s4 1983009808
    %v2291 = vunpack.c.0.s8 %v2290
    %v2292 = vlaneseq
    %v2293 = vshrl.u32 %v2292, 7
    %v2294 = vsub.s32 %v2291, %v2293
    %v2295 = vrot.slane %v2287, %v2294
    %v2297 = vunpack.c.l.s4 1983009808
    %v2298 = vunpack.c.0.s8 %v2297
    %v2299 = vlaneseq
    %v2300 = vshrl.u32 %v2299, 7
    %v2301 = vsub.s32 %v2298, %v2300
    %v2302 = vrot.slane %v2288, %v2301
    %v2303 = vcombine.low %v1872, %v1874
    %v2304 = vcombine.high %v1872, %v1874
    %v2306 = vunpack.c.l.s4 1983009808
    %v2307 = vunpack.c.0.s8 %v2306
    %v2308 = vlaneseq
    %v2309 = vshrl.u32 %v2308, 7
    %v2310 = vsub.s32 %v2307, %v2309
    %v2311 = vrot.slane %v2303, %v2310
    %v2313 = vunpack.c.l.s4 1983009808
    %v2314 = vunpack.c.0.s8 %v2313
    %v2315 = vlaneseq
    %v2316 = vshrl.u32 %v2315, 7
    %v2317 = vsub.s32 %v2314, %v2316
    %v2318 = vrot.slane %v2304, %v2317
    %v2319 = vcombine.low %v1875, %v1877
    %v2320 = vcombine.high %v1875, %v1877
    %v2322 = vunpack.c.l.s4 1983009808
    %v2323 = vunpack.c.0.s8 %v2322
    %v2324 = vlaneseq
    %v2325 = vshrl.u32 %v2324, 7
    %v2326 = vsub.s32 %v2323, %v2325
    %v2327 = vrot.slane %v2319, %v2326
    %v2329 = vunpack.c.l.s4 1983009808
    %v2330 = vunpack.c.0.s8 %v2329
    %v2331 = vlaneseq
    %v2332 = vshrl.u32 %v2331, 7
    %v2333 = vsub.s32 %v2330, %v2332
    %v2334 = vrot.slane %v2320, %v2333
    %v2335 = vcombine.low %v1876, %v1878
    %v2336 = vcombine.high %v1876, %v1878
    %v2338 = vunpack.c.l.s4 1983009808
    %v2339 = vunpack.c.0.s8 %v2338
    %v2340 = vlaneseq
    %v2341 = vshrl.u32 %v2340, 7
    %v2342 = vsub.s32 %v2339, %v2341
    %v2343 = vrot.slane %v2335, %v2342
    %v2345 = vunpack.c.l.s4 1983009808
    %v2346 = vunpack.c.0.s8 %v2345
    %v2347 = vlaneseq
    %v2348 = vshrl.u32 %v2347, 7
    %v2349 = vsub.s32 %v2346, %v2348
    %v2350 = vrot.slane %v2336, %v2349
    %v2351 = vcombine.low %v2295, %v2311
    %v2352 = vcombine.high %v2295, %v2311
    %v2354 = vunpack.c.l.s4 1934713408
    %v2355 = vunpack.c.0.s8 %v2354
    %v2356 = vlaneseq
    %v2357 = vshrl.u32 %v2356, 7
    %v2358 = vsub.s32 %v2355, %v2357
    %v2359 = vrot.slane %v2351, %v2358
    %v2361 = vunpack.c.l.s4 1934713408
    %v2362 = vunpack.c.0.s8 %v2361
    %v2363 = vlaneseq
    %v2364 = vshrl.u32 %v2363, 7
    %v2365 = vsub.s32 %v2362, %v2364
    %v2366 = vrot.slane %v2352, %v2365
    %v2367 = vcombine.low %v2302, %v2318
    %v2368 = vcombine.high %v2302, %v2318
    %v2370 = vunpack.c.l.s4 1934713408
    %v2371 = vunpack.c.0.s8 %v2370
    %v2372 = vlaneseq
    %v2373 = vshrl.u32 %v2372, 7
    %v2374 = vsub.s32 %v2371, %v2373
    %v2375 = vrot.slane %v2367, %v2374
    %v2377 = vunpack.c.l.s4 1934713408
    %v2378 = vunpack.c.0.s8 %v2377
    %v2379 = vlaneseq
    %v2380 = vshrl.u32 %v2379, 7
    %v2381 = vsub.s32 %v2378, %v2380
    %v2382 = vrot.slane %v2368, %v2381
    %v2383 = vcombine.low %v2327, %v2343
    %v2384 = vcombine.high %v2327, %v2343
    %v2386 = vunpack.c.l.s4 1934713408
    %v2387 = vunpack.c.0.s8 %v2386
    %v2388 = vlaneseq
    %v2389 = vshrl.u32 %v2388, 7
    %v2390 = vsub.s32 %v2387, %v2389
    %v2391 = vrot.slane %v2383, %v2390
    %v2393 = vunpack.c.l.s4 1934713408
    %v2394 = vunpack.c.0.s8 %v2393
    %v2395 = vlaneseq
    %v2396 = vshrl.u32 %v2395, 7
    %v2397 = vsub.s32 %v2394, %v2396
    %v2398 = vrot.slane %v2384, %v2397
    %v2399 = vcombine.low %v2334, %v2350
    %v2400 = vcombine.high %v2334, %v2350
    %v2402 = vunpack.c.l.s4 1934713408
    %v2403 = vunpack.c.0.s8 %v2402
    %v2404 = vlaneseq
    %v2405 = vshrl.u32 %v2404, 7
    %v2406 = vsub.s32 %v2403, %v2405
    %v2407 = vrot.slane %v2399, %v2406
    %v2409 = vunpack.c.l.s4 1934713408
    %v2410 = vunpack.c.0.s8 %v2409
    %v2411 = vlaneseq
    %v2412 = vshrl.u32 %v2411, 7
    %v2413 = vsub.s32 %v2410, %v2412
    %v2414 = vrot.slane %v2400, %v2413
    %v2415 = vcombine.low %v2359, %v2391
    %v2416 = vcombine.high %v2359, %v2391
    %v2417 = vcombine.low %v2366, %v2398
    %v2418 = vcombine.high %v2366, %v2398
    %v2419 = vcombine.low %v2375, %v2407
    %v2420 = vcombine.high %v2375, %v2407
    %v2421 = vcombine.low %v2382, %v2414
    %v2422 = vcombine.high %v2382, %v2414
    %v2423 = vcombine.low %v2007, %v2009
    %v2424 = vcombine.high %v2007, %v2009
    %v2426 = vunpack.c.l.s4 1983009808
    %v2427 = vunpack.c.0.s8 %v2426
    %v2428 = vlaneseq
    %v2429 = vshrl.u32 %v2428, 7
    %v2430 = vsub.s32 %v2427, %v2429
    %v2431 = vrot.slane %v2423, %v2430
    %v2433 = vunpack.c.l.s4 1983009808
    %v2434 = vunpack.c.0.s8 %v2433
    %v2435 = vlaneseq
    %v2436 = vshrl.u32 %v2435, 7
    %v2437 = vsub.s32 %v2434, %v2436
    %v2438 = vrot.slane %v2424, %v2437
    %v2439 = vcombine.low %v2008, %v2010
    %v2440 = vcombine.high %v2008, %v2010
    %v2442 = vunpack.c.l.s4 1983009808
    %v2443 = vunpack.c.0.s8 %v2442
    %v2444 = vlaneseq
    %v2445 = vshrl.u32 %v2444, 7
    %v2446 = vsub.s32 %v2443, %v2445
    %v2447 = vrot.slane %v2439, %v2446
    %v2449 = vunpack.c.l.s4 1983009808
    %v2450 = vunpack.c.0.s8 %v2449
    %v2451 = vlaneseq
    %v2452 = vshrl.u32 %v2451, 7
    %v2453 = vsub.s32 %v2450, %v2452
    %v2454 = vrot.slane %v2440, %v2453
    %v2455 = vcombine.low %v2011, %v2013
    %v2456 = vcombine.high %v2011, %v2013
    %v2458 = vunpack.c.l.s4 1983009808
    %v2459 = vunpack.c.0.s8 %v2458
    %v2460 = vlaneseq
    %v2461 = vshrl.u32 %v2460, 7
    %v2462 = vsub.s32 %v2459, %v2461
    %v2463 = vrot.slane %v2455, %v2462
    %v2465 = vunpack.c.l.s4 1983009808
    %v2466 = vunpack.c.0.s8 %v2465
    %v2467 = vlaneseq
    %v2468 = vshrl.u32 %v2467, 7
    %v2469 = vsub.s32 %v2466, %v2468
    %v2470 = vrot.slane %v2456, %v2469
    %v2471 = vcombine.low %v2012, %v2014
    %v2472 = vcombine.high %v2012, %v2014
    %v2474 = vunpack.c.l.s4 1983009808
    %v2475 = vunpack.c.0.s8 %v2474
    %v2476 = vlaneseq
    %v2477 = vshrl.u32 %v2476, 7
    %v2478 = vsub.s32 %v2475, %v2477
    %v2479 = vrot.slane %v2471, %v2478
    %v2481 = vunpack.c.l.s4 1983009808
    %v2482 = vunpack.c.0.s8 %v2481
    %v2483 = vlaneseq
    %v2484 = vshrl.u32 %v2483, 7
    %v2485 = vsub.s32 %v2482, %v2484
    %v2486 = vrot.slane %v2472, %v2485
    %v2487 = vcombine.low %v2431, %v2447
    %v2488 = vcombine.high %v2431, %v2447
    %v2490 = vunpack.c.l.s4 1934713408
    %v2491 = vunpack.c.0.s8 %v2490
    %v2492 = vlaneseq
    %v2493 = vshrl.u32 %v2492, 7
    %v2494 = vsub.s32 %v2491, %v2493
    %v2495 = vrot.slane %v2487, %v2494
    %v2497 = vunpack.c.l.s4 1934713408
    %v2498 = vunpack.c.0.s8 %v2497
    %v2499 = vlaneseq
    %v2500 = vshrl.u32 %v2499, 7
    %v2501 = vsub.s32 %v2498, %v2500
    %v2502 = vrot.slane %v2488, %v2501
    %v2503 = vcombine.low %v2438, %v2454
    %v2504 = vcombine.high %v2438, %v2454
    %v2506 = vunpack.c.l.s4 1934713408
    %v2507 = vunpack.c.0.s8 %v2506
    %v2508 = vlaneseq
    %v2509 = vshrl.u32 %v2508, 7
    %v2510 = vsub.s32 %v2507, %v2509
    %v2511 = vrot.slane %v2503, %v2510
    %v2513 = vunpack.c.l.s4 1934713408
    %v2514 = vunpack.c.0.s8 %v2513
    %v2515 = vlaneseq
    %v2516 = vshrl.u32 %v2515, 7
    %v2517 = vsub.s32 %v2514, %v2516
    %v2518 = vrot.slane %v2504, %v2517
    %v2519 = vcombine.low %v2463, %v2479
    %v2520 = vcombine.high %v2463, %v2479
    %v2522 = vunpack.c.l.s4 1934713408
    %v2523 = vunpack.c.0.s8 %v2522
    %v2524 = vlaneseq
    %v2525 = vshrl.u32 %v2524, 7
    %v2526 = vsub.s32 %v2523, %v2525
    %v2527 = vrot.slane %v2519, %v2526
    %v2529 = vunpack.c.l.s4 1934713408
    %v2530 = vunpack.c.0.s8 %v2529
    %v2531 = vlaneseq
    %v2532 = vshrl.u32 %v2531, 7
    %v2533 = vsub.s32 %v2530, %v2532
    %v2534 = vrot.slane %v2520, %v2533
    %v2535 = vcombine.low %v2470, %v2486
    %v2536 = vcombine.high %v2470, %v2486
    %v2538 = vunpack.c.l.s4 1934713408
    %v2539 = vunpack.c.0.s8 %v2538
    %v2540 = vlaneseq
    %v2541 = vshrl.u32 %v2540, 7
    %v2542 = vsub.s32 %v2539, %v2541
    %v2543 = vrot.slane %v2535, %v2542
    %v2545 = vunpack.c.l.s4 1934713408
    %v2546 = vunpack.c.0.s8 %v2545
    %v2547 = vlaneseq
    %v2548 = vshrl.u32 %v2547, 7
    %v2549 = vsub.s32 %v2546, %v2548
    %v2550 = vrot.slane %v2536, %v2549
    %v2551 = vcombine.low %v2495, %v2527
    %v2552 = vcombine.high %v2495, %v2527
    %v2553 = vcombine.low %v2502, %v2534
    %v2554 = vcombine.high %v2502, %v2534
    %v2555 = vcombine.low %v2511, %v2543
    %v2556 = vcombine.high %v2511, %v2543
    %v2557 = vcombine.low %v2518, %v2550
    %v2558 = vcombine.high %v2518, %v2550
    %2563 = vrot.lane.b32.xlu0 %v616, 96
    %v2564 = vpop.permute.xlu0 %2563
    %2565 = vrot.lane.b32.xlu0 %v622, 96
    %v2566 = vpop.permute.xlu0 %2565
    %2567 = vrot.lane.b32.xlu0 %v628, 96
    %v2568 = vpop.permute.xlu0 %2567
    %2569 = vrot.lane.b32.xlu0 %v634, 96
    %v2570 = vpop.permute.xlu0 %2569
    %2575 = vrot.lane.b32.xlu0 %v616, 64
    %v2576 = vpop.permute.xlu0 %2575
    %2577 = vrot.lane.b32.xlu0 %v622, 64
    %v2578 = vpop.permute.xlu0 %2577
    %2579 = vrot.lane.b32.xlu0 %v628, 64
    %v2580 = vpop.permute.xlu0 %2579
    %2581 = vrot.lane.b32.xlu0 %v634, 64
    %v2582 = vpop.permute.xlu0 %2581
    %2587 = vrot.lane.b32.xlu0 %v616, 32
    %v2588 = vpop.permute.xlu0 %2587
    %2589 = vrot.lane.b32.xlu0 %v622, 32
    %v2590 = vpop.permute.xlu0 %2589
    %2591 = vrot.lane.b32.xlu0 %v628, 32
    %v2592 = vpop.permute.xlu0 %2591
    %2593 = vrot.lane.b32.xlu0 %v634, 32
    %v2594 = vpop.permute.xlu0 %2593
    %2603 = vrot.lane.b32.xlu0 %v618, 96
    %v2604 = vpop.permute.xlu0 %2603
    %2605 = vrot.lane.b32.xlu0 %v624, 96
    %v2606 = vpop.permute.xlu0 %2605
    %2607 = vrot.lane.b32.xlu0 %v630, 96
    %v2608 = vpop.permute.xlu0 %2607
    %2609 = vrot.lane.b32.xlu0 %v636, 96
    %v2610 = vpop.permute.xlu0 %2609
    %2615 = vrot.lane.b32.xlu0 %v618, 64
    %v2616 = vpop.permute.xlu0 %2615
    %2617 = vrot.lane.b32.xlu0 %v624, 64
    %v2618 = vpop.permute.xlu0 %2617
    %2619 = vrot.lane.b32.xlu0 %v630, 64
    %v2620 = vpop.permute.xlu0 %2619
    %2621 = vrot.lane.b32.xlu0 %v636, 64
    %v2622 = vpop.permute.xlu0 %2621
    %2627 = vrot.lane.b32.xlu0 %v618, 32
    %v2628 = vpop.permute.xlu0 %2627
    %2629 = vrot.lane.b32.xlu0 %v624, 32
    %v2630 = vpop.permute.xlu0 %2629
    %2631 = vrot.lane.b32.xlu0 %v630, 32
    %v2632 = vpop.permute.xlu0 %2631
    %2633 = vrot.lane.b32.xlu0 %v636, 32
    %v2634 = vpop.permute.xlu0 %2633
    %v2639 = vcombine.low %v616, %v2576
    %v2640 = vcombine.high %v616, %v2576
    %v2642 = vunpack.c.l.s4 1983009808
    %v2643 = vunpack.c.0.s8 %v2642
    %v2644 = vlaneseq
    %v2645 = vshrl.u32 %v2644, 7
    %v2646 = vsub.s32 %v2643, %v2645
    %v2647 = vrot.slane %v2639, %v2646
    %v2649 = vunpack.c.l.s4 1983009808
    %v2650 = vunpack.c.0.s8 %v2649
    %v2651 = vlaneseq
    %v2652 = vshrl.u32 %v2651, 7
    %v2653 = vsub.s32 %v2650, %v2652
    %v2654 = vrot.slane %v2640, %v2653
    %v2655 = vcombine.low %v2564, %v2588
    %v2656 = vcombine.high %v2564, %v2588
    %v2658 = vunpack.c.l.s4 1983009808
    %v2659 = vunpack.c.0.s8 %v2658
    %v2660 = vlaneseq
    %v2661 = vshrl.u32 %v2660, 7
    %v2662 = vsub.s32 %v2659, %v2661
    %v2663 = vrot.slane %v2655, %v2662
    %v2665 = vunpack.c.l.s4 1983009808
    %v2666 = vunpack.c.0.s8 %v2665
    %v2667 = vlaneseq
    %v2668 = vshrl.u32 %v2667, 7
    %v2669 = vsub.s32 %v2666, %v2668
    %v2670 = vrot.slane %v2656, %v2669
    %v2671 = vcombine.low %v618, %v2616
    %v2672 = vcombine.high %v618, %v2616
    %v2674 = vunpack.c.l.s4 1983009808
    %v2675 = vunpack.c.0.s8 %v2674
    %v2676 = vlaneseq
    %v2677 = vshrl.u32 %v2676, 7
    %v2678 = vsub.s32 %v2675, %v2677
    %v2679 = vrot.slane %v2671, %v2678
    %v2681 = vunpack.c.l.s4 1983009808
    %v2682 = vunpack.c.0.s8 %v2681
    %v2683 = vlaneseq
    %v2684 = vshrl.u32 %v2683, 7
    %v2685 = vsub.s32 %v2682, %v2684
    %v2686 = vrot.slane %v2672, %v2685
    %v2687 = vcombine.low %v2604, %v2628
    %v2688 = vcombine.high %v2604, %v2628
    %v2690 = vunpack.c.l.s4 1983009808
    %v2691 = vunpack.c.0.s8 %v2690
    %v2692 = vlaneseq
    %v2693 = vshrl.u32 %v2692, 7
    %v2694 = vsub.s32 %v2691, %v2693
    %v2695 = vrot.slane %v2687, %v2694
    %v2697 = vunpack.c.l.s4 1983009808
    %v2698 = vunpack.c.0.s8 %v2697
    %v2699 = vlaneseq
    %v2700 = vshrl.u32 %v2699, 7
    %v2701 = vsub.s32 %v2698, %v2700
    %v2702 = vrot.slane %v2688, %v2701
    %v2703 = vcombine.low %v2647, %v2663
    %v2704 = vcombine.high %v2647, %v2663
    %v2706 = vunpack.c.l.s4 1934713408
    %v2707 = vunpack.c.0.s8 %v2706
    %v2708 = vlaneseq
    %v2709 = vshrl.u32 %v2708, 7
    %v2710 = vsub.s32 %v2707, %v2709
    %v2711 = vrot.slane %v2703, %v2710
    %v2713 = vunpack.c.l.s4 1934713408
    %v2714 = vunpack.c.0.s8 %v2713
    %v2715 = vlaneseq
    %v2716 = vshrl.u32 %v2715, 7
    %v2717 = vsub.s32 %v2714, %v2716
    %v2718 = vrot.slane %v2704, %v2717
    %v2719 = vcombine.low %v2654, %v2670
    %v2720 = vcombine.high %v2654, %v2670
    %v2722 = vunpack.c.l.s4 1934713408
    %v2723 = vunpack.c.0.s8 %v2722
    %v2724 = vlaneseq
    %v2725 = vshrl.u32 %v2724, 7
    %v2726 = vsub.s32 %v2723, %v2725
    %v2727 = vrot.slane %v2719, %v2726
    %v2729 = vunpack.c.l.s4 1934713408
    %v2730 = vunpack.c.0.s8 %v2729
    %v2731 = vlaneseq
    %v2732 = vshrl.u32 %v2731, 7
    %v2733 = vsub.s32 %v2730, %v2732
    %v2734 = vrot.slane %v2720, %v2733
    %v2735 = vcombine.low %v2679, %v2695
    %v2736 = vcombine.high %v2679, %v2695
    %v2738 = vunpack.c.l.s4 1934713408
    %v2739 = vunpack.c.0.s8 %v2738
    %v2740 = vlaneseq
    %v2741 = vshrl.u32 %v2740, 7
    %v2742 = vsub.s32 %v2739, %v2741
    %v2743 = vrot.slane %v2735, %v2742
    %v2745 = vunpack.c.l.s4 1934713408
    %v2746 = vunpack.c.0.s8 %v2745
    %v2747 = vlaneseq
    %v2748 = vshrl.u32 %v2747, 7
    %v2749 = vsub.s32 %v2746, %v2748
    %v2750 = vrot.slane %v2736, %v2749
    %v2751 = vcombine.low %v2686, %v2702
    %v2752 = vcombine.high %v2686, %v2702
    %v2754 = vunpack.c.l.s4 1934713408
    %v2755 = vunpack.c.0.s8 %v2754
    %v2756 = vlaneseq
    %v2757 = vshrl.u32 %v2756, 7
    %v2758 = vsub.s32 %v2755, %v2757
    %v2759 = vrot.slane %v2751, %v2758
    %v2761 = vunpack.c.l.s4 1934713408
    %v2762 = vunpack.c.0.s8 %v2761
    %v2763 = vlaneseq
    %v2764 = vshrl.u32 %v2763, 7
    %v2765 = vsub.s32 %v2762, %v2764
    %v2766 = vrot.slane %v2752, %v2765
    %v2767 = vcombine.low %v2711, %v2743
    %v2768 = vcombine.high %v2711, %v2743
    %v2769 = vcombine.low %v2718, %v2750
    %v2770 = vcombine.high %v2718, %v2750
    %v2771 = vcombine.low %v2727, %v2759
    %v2772 = vcombine.high %v2727, %v2759
    %v2773 = vcombine.low %v2734, %v2766
    %v2774 = vcombine.high %v2734, %v2766
    %v2775 = vcombine.low %v622, %v2578
    %v2776 = vcombine.high %v622, %v2578
    %v2778 = vunpack.c.l.s4 1983009808
    %v2779 = vunpack.c.0.s8 %v2778
    %v2780 = vlaneseq
    %v2781 = vshrl.u32 %v2780, 7
    %v2782 = vsub.s32 %v2779, %v2781
    %v2783 = vrot.slane %v2775, %v2782
    %v2785 = vunpack.c.l.s4 1983009808
    %v2786 = vunpack.c.0.s8 %v2785
    %v2787 = vlaneseq
    %v2788 = vshrl.u32 %v2787, 7
    %v2789 = vsub.s32 %v2786, %v2788
    %v2790 = vrot.slane %v2776, %v2789
    %v2791 = vcombine.low %v2566, %v2590
    %v2792 = vcombine.high %v2566, %v2590
    %v2794 = vunpack.c.l.s4 1983009808
    %v2795 = vunpack.c.0.s8 %v2794
    %v2796 = vlaneseq
    %v2797 = vshrl.u32 %v2796, 7
    %v2798 = vsub.s32 %v2795, %v2797
    %v2799 = vrot.slane %v2791, %v2798
    %v2801 = vunpack.c.l.s4 1983009808
    %v2802 = vunpack.c.0.s8 %v2801
    %v2803 = vlaneseq
    %v2804 = vshrl.u32 %v2803, 7
    %v2805 = vsub.s32 %v2802, %v2804
    %v2806 = vrot.slane %v2792, %v2805
    %v2807 = vcombine.low %v624, %v2618
    %v2808 = vcombine.high %v624, %v2618
    %v2810 = vunpack.c.l.s4 1983009808
    %v2811 = vunpack.c.0.s8 %v2810
    %v2812 = vlaneseq
    %v2813 = vshrl.u32 %v2812, 7
    %v2814 = vsub.s32 %v2811, %v2813
    %v2815 = vrot.slane %v2807, %v2814
    %v2817 = vunpack.c.l.s4 1983009808
    %v2818 = vunpack.c.0.s8 %v2817
    %v2819 = vlaneseq
    %v2820 = vshrl.u32 %v2819, 7
    %v2821 = vsub.s32 %v2818, %v2820
    %v2822 = vrot.slane %v2808, %v2821
    %v2823 = vcombine.low %v2606, %v2630
    %v2824 = vcombine.high %v2606, %v2630
    %v2826 = vunpack.c.l.s4 1983009808
    %v2827 = vunpack.c.0.s8 %v2826
    %v2828 = vlaneseq
    %v2829 = vshrl.u32 %v2828, 7
    %v2830 = vsub.s32 %v2827, %v2829
    %v2831 = vrot.slane %v2823, %v2830
    %v2833 = vunpack.c.l.s4 1983009808
    %v2834 = vunpack.c.0.s8 %v2833
    %v2835 = vlaneseq
    %v2836 = vshrl.u32 %v2835, 7
    %v2837 = vsub.s32 %v2834, %v2836
    %v2838 = vrot.slane %v2824, %v2837
    %v2839 = vcombine.low %v2783, %v2799
    %v2840 = vcombine.high %v2783, %v2799
    %v2842 = vunpack.c.l.s4 1934713408
    %v2843 = vunpack.c.0.s8 %v2842
    %v2844 = vlaneseq
    %v2845 = vshrl.u32 %v2844, 7
    %v2846 = vsub.s32 %v2843, %v2845
    %v2847 = vrot.slane %v2839, %v2846
    %v2849 = vunpack.c.l.s4 1934713408
    %v2850 = vunpack.c.0.s8 %v2849
    %v2851 = vlaneseq
    %v2852 = vshrl.u32 %v2851, 7
    %v2853 = vsub.s32 %v2850, %v2852
    %v2854 = vrot.slane %v2840, %v2853
    %v2855 = vcombine.low %v2790, %v2806
    %v2856 = vcombine.high %v2790, %v2806
    %v2858 = vunpack.c.l.s4 1934713408
    %v2859 = vunpack.c.0.s8 %v2858
    %v2860 = vlaneseq
    %v2861 = vshrl.u32 %v2860, 7
    %v2862 = vsub.s32 %v2859, %v2861
    %v2863 = vrot.slane %v2855, %v2862
    %v2865 = vunpack.c.l.s4 1934713408
    %v2866 = vunpack.c.0.s8 %v2865
    %v2867 = vlaneseq
    %v2868 = vshrl.u32 %v2867, 7
    %v2869 = vsub.s32 %v2866, %v2868
    %v2870 = vrot.slane %v2856, %v2869
    %v2871 = vcombine.low %v2815, %v2831
    %v2872 = vcombine.high %v2815, %v2831
    %v2874 = vunpack.c.l.s4 1934713408
    %v2875 = vunpack.c.0.s8 %v2874
    %v2876 = vlaneseq
    %v2877 = vshrl.u32 %v2876, 7
    %v2878 = vsub.s32 %v2875, %v2877
    %v2879 = vrot.slane %v2871, %v2878
    %v2881 = vunpack.c.l.s4 1934713408
    %v2882 = vunpack.c.0.s8 %v2881
    %v2883 = vlaneseq
    %v2884 = vshrl.u32 %v2883, 7
    %v2885 = vsub.s32 %v2882, %v2884
    %v2886 = vrot.slane %v2872, %v2885
    %v2887 = vcombine.low %v2822, %v2838
    %v2888 = vcombine.high %v2822, %v2838
    %v2890 = vunpack.c.l.s4 1934713408
    %v2891 = vunpack.c.0.s8 %v2890
    %v2892 = vlaneseq
    %v2893 = vshrl.u32 %v2892, 7
    %v2894 = vsub.s32 %v2891, %v2893
    %v2895 = vrot.slane %v2887, %v2894
    %v2897 = vunpack.c.l.s4 1934713408
    %v2898 = vunpack.c.0.s8 %v2897
    %v2899 = vlaneseq
    %v2900 = vshrl.u32 %v2899, 7
    %v2901 = vsub.s32 %v2898, %v2900
    %v2902 = vrot.slane %v2888, %v2901
    %v2903 = vcombine.low %v2847, %v2879
    %v2904 = vcombine.high %v2847, %v2879
    %v2905 = vcombine.low %v2854, %v2886
    %v2906 = vcombine.high %v2854, %v2886
    %v2907 = vcombine.low %v2863, %v2895
    %v2908 = vcombine.high %v2863, %v2895
    %v2909 = vcombine.low %v2870, %v2902
    %v2910 = vcombine.high %v2870, %v2902
    %v2911 = vcombine.low %v628, %v2580
    %v2912 = vcombine.high %v628, %v2580
    %v2914 = vunpack.c.l.s4 1983009808
    %v2915 = vunpack.c.0.s8 %v2914
    %v2916 = vlaneseq
    %v2917 = vshrl.u32 %v2916, 7
    %v2918 = vsub.s32 %v2915, %v2917
    %v2919 = vrot.slane %v2911, %v2918
    %v2921 = vunpack.c.l.s4 1983009808
    %v2922 = vunpack.c.0.s8 %v2921
    %v2923 = vlaneseq
    %v2924 = vshrl.u32 %v2923, 7
    %v2925 = vsub.s32 %v2922, %v2924
    %v2926 = vrot.slane %v2912, %v2925
    %v2927 = vcombine.low %v2568, %v2592
    %v2928 = vcombine.high %v2568, %v2592
    %v2930 = vunpack.c.l.s4 1983009808
    %v2931 = vunpack.c.0.s8 %v2930
    %v2932 = vlaneseq
    %v2933 = vshrl.u32 %v2932, 7
    %v2934 = vsub.s32 %v2931, %v2933
    %v2935 = vrot.slane %v2927, %v2934
    %v2937 = vunpack.c.l.s4 1983009808
    %v2938 = vunpack.c.0.s8 %v2937
    %v2939 = vlaneseq
    %v2940 = vshrl.u32 %v2939, 7
    %v2941 = vsub.s32 %v2938, %v2940
    %v2942 = vrot.slane %v2928, %v2941
    %v2943 = vcombine.low %v630, %v2620
    %v2944 = vcombine.high %v630, %v2620
    %v2946 = vunpack.c.l.s4 1983009808
    %v2947 = vunpack.c.0.s8 %v2946
    %v2948 = vlaneseq
    %v2949 = vshrl.u32 %v2948, 7
    %v2950 = vsub.s32 %v2947, %v2949
    %v2951 = vrot.slane %v2943, %v2950
    %v2953 = vunpack.c.l.s4 1983009808
    %v2954 = vunpack.c.0.s8 %v2953
    %v2955 = vlaneseq
    %v2956 = vshrl.u32 %v2955, 7
    %v2957 = vsub.s32 %v2954, %v2956
    %v2958 = vrot.slane %v2944, %v2957
    %v2959 = vcombine.low %v2608, %v2632
    %v2960 = vcombine.high %v2608, %v2632
    %v2962 = vunpack.c.l.s4 1983009808
    %v2963 = vunpack.c.0.s8 %v2962
    %v2964 = vlaneseq
    %v2965 = vshrl.u32 %v2964, 7
    %v2966 = vsub.s32 %v2963, %v2965
    %v2967 = vrot.slane %v2959, %v2966
    %v2969 = vunpack.c.l.s4 1983009808
    %v2970 = vunpack.c.0.s8 %v2969
    %v2971 = vlaneseq
    %v2972 = vshrl.u32 %v2971, 7
    %v2973 = vsub.s32 %v2970, %v2972
    %v2974 = vrot.slane %v2960, %v2973
    %v2975 = vcombine.low %v2919, %v2935
    %v2976 = vcombine.high %v2919, %v2935
    %v2978 = vunpack.c.l.s4 1934713408
    %v2979 = vunpack.c.0.s8 %v2978
    %v2980 = vlaneseq
    %v2981 = vshrl.u32 %v2980, 7
    %v2982 = vsub.s32 %v2979, %v2981
    %v2983 = vrot.slane %v2975, %v2982
    %v2985 = vunpack.c.l.s4 1934713408
    %v2986 = vunpack.c.0.s8 %v2985
    %v2987 = vlaneseq
    %v2988 = vshrl.u32 %v2987, 7
    %v2989 = vsub.s32 %v2986, %v2988
    %v2990 = vrot.slane %v2976, %v2989
    %v2991 = vcombine.low %v2926, %v2942
    %v2992 = vcombine.high %v2926, %v2942
    %v2994 = vunpack.c.l.s4 1934713408
    %v2995 = vunpack.c.0.s8 %v2994
    %v2996 = vlaneseq
    %v2997 = vshrl.u32 %v2996, 7
    %v2998 = vsub.s32 %v2995, %v2997
    %v2999 = vrot.slane %v2991, %v2998
    %v3001 = vunpack.c.l.s4 1934713408
    %v3002 = vunpack.c.0.s8 %v3001
    %v3003 = vlaneseq
    %v3004 = vshrl.u32 %v3003, 7
    %v3005 = vsub.s32 %v3002, %v3004
    %v3006 = vrot.slane %v2992, %v3005
    %v3007 = vcombine.low %v2951, %v2967
    %v3008 = vcombine.high %v2951, %v2967
    %v3010 = vunpack.c.l.s4 1934713408
    %v3011 = vunpack.c.0.s8 %v3010
    %v3012 = vlaneseq
    %v3013 = vshrl.u32 %v3012, 7
    %v3014 = vsub.s32 %v3011, %v3013
    %v3015 = vrot.slane %v3007, %v3014
    %v3017 = vunpack.c.l.s4 1934713408
    %v3018 = vunpack.c.0.s8 %v3017
    %v3019 = vlaneseq
    %v3020 = vshrl.u32 %v3019, 7
    %v3021 = vsub.s32 %v3018, %v3020
    %v3022 = vrot.slane %v3008, %v3021
    %v3023 = vcombine.low %v2958, %v2974
    %v3024 = vcombine.high %v2958, %v2974
    %v3026 = vunpack.c.l.s4 1934713408
    %v3027 = vunpack.c.0.s8 %v3026
    %v3028 = vlaneseq
    %v3029 = vshrl.u32 %v3028, 7
    %v3030 = vsub.s32 %v3027, %v3029
    %v3031 = vrot.slane %v3023, %v3030
    %v3033 = vunpack.c.l.s4 1934713408
    %v3034 = vunpack.c.0.s8 %v3033
    %v3035 = vlaneseq
    %v3036 = vshrl.u32 %v3035, 7
    %v3037 = vsub.s32 %v3034, %v3036
    %v3038 = vrot.slane %v3024, %v3037
    %v3039 = vcombine.low %v2983, %v3015
    %v3040 = vcombine.high %v2983, %v3015
    %v3041 = vcombine.low %v2990, %v3022
    %v3042 = vcombine.high %v2990, %v3022
    %v3043 = vcombine.low %v2999, %v3031
    %v3044 = vcombine.high %v2999, %v3031
    %v3045 = vcombine.low %v3006, %v3038
    %v3046 = vcombine.high %v3006, %v3038
    %v3047 = vcombine.low %v634, %v2582
    %v3048 = vcombine.high %v634, %v2582
    %v3050 = vunpack.c.l.s4 1983009808
    %v3051 = vunpack.c.0.s8 %v3050
    %v3052 = vlaneseq
    %v3053 = vshrl.u32 %v3052, 7
    %v3054 = vsub.s32 %v3051, %v3053
    %v3055 = vrot.slane %v3047, %v3054
    %v3057 = vunpack.c.l.s4 1983009808
    %v3058 = vunpack.c.0.s8 %v3057
    %v3059 = vlaneseq
    %v3060 = vshrl.u32 %v3059, 7
    %v3061 = vsub.s32 %v3058, %v3060
    %v3062 = vrot.slane %v3048, %v3061
    %v3063 = vcombine.low %v2570, %v2594
    %v3064 = vcombine.high %v2570, %v2594
    %v3066 = vunpack.c.l.s4 1983009808
    %v3067 = vunpack.c.0.s8 %v3066
    %v3068 = vlaneseq
    %v3069 = vshrl.u32 %v3068, 7
    %v3070 = vsub.s32 %v3067, %v3069
    %v3071 = vrot.slane %v3063, %v3070
    %v3073 = vunpack.c.l.s4 1983009808
    %v3074 = vunpack.c.0.s8 %v3073
    %v3075 = vlaneseq
    %v3076 = vshrl.u32 %v3075, 7
    %v3077 = vsub.s32 %v3074, %v3076
    %v3078 = vrot.slane %v3064, %v3077
    %v3079 = vcombine.low %v636, %v2622
    %v3080 = vcombine.high %v636, %v2622
    %v3082 = vunpack.c.l.s4 1983009808
    %v3083 = vunpack.c.0.s8 %v3082
    %v3084 = vlaneseq
    %v3085 = vshrl.u32 %v3084, 7
    %v3086 = vsub.s32 %v3083, %v3085
    %v3087 = vrot.slane %v3079, %v3086
    %v3089 = vunpack.c.l.s4 1983009808
    %v3090 = vunpack.c.0.s8 %v3089
    %v3091 = vlaneseq
    %v3092 = vshrl.u32 %v3091, 7
    %v3093 = vsub.s32 %v3090, %v3092
    %v3094 = vrot.slane %v3080, %v3093
    %v3095 = vcombine.low %v2610, %v2634
    %v3096 = vcombine.high %v2610, %v2634
    %v3098 = vunpack.c.l.s4 1983009808
    %v3099 = vunpack.c.0.s8 %v3098
    %v3100 = vlaneseq
    %v3101 = vshrl.u32 %v3100, 7
    %v3102 = vsub.s32 %v3099, %v3101
    %v3103 = vrot.slane %v3095, %v3102
    %v3105 = vunpack.c.l.s4 1983009808
    %v3106 = vunpack.c.0.s8 %v3105
    %v3107 = vlaneseq
    %v3108 = vshrl.u32 %v3107, 7
    %v3109 = vsub.s32 %v3106, %v3108
    %v3110 = vrot.slane %v3096, %v3109
    %v3111 = vcombine.low %v3055, %v3071
    %v3112 = vcombine.high %v3055, %v3071
    %v3114 = vunpack.c.l.s4 1934713408
    %v3115 = vunpack.c.0.s8 %v3114
    %v3116 = vlaneseq
    %v3117 = vshrl.u32 %v3116, 7
    %v3118 = vsub.s32 %v3115, %v3117
    %v3119 = vrot.slane %v3111, %v3118
    %v3121 = vunpack.c.l.s4 1934713408
    %v3122 = vunpack.c.0.s8 %v3121
    %v3123 = vlaneseq
    %v3124 = vshrl.u32 %v3123, 7
    %v3125 = vsub.s32 %v3122, %v3124
    %v3126 = vrot.slane %v3112, %v3125
    %v3127 = vcombine.low %v3062, %v3078
    %v3128 = vcombine.high %v3062, %v3078
    %v3130 = vunpack.c.l.s4 1934713408
    %v3131 = vunpack.c.0.s8 %v3130
    %v3132 = vlaneseq
    %v3133 = vshrl.u32 %v3132, 7
    %v3134 = vsub.s32 %v3131, %v3133
    %v3135 = vrot.slane %v3127, %v3134
    %v3137 = vunpack.c.l.s4 1934713408
    %v3138 = vunpack.c.0.s8 %v3137
    %v3139 = vlaneseq
    %v3140 = vshrl.u32 %v3139, 7
    %v3141 = vsub.s32 %v3138, %v3140
    %v3142 = vrot.slane %v3128, %v3141
    %v3143 = vcombine.low %v3087, %v3103
    %v3144 = vcombine.high %v3087, %v3103
    %v3146 = vunpack.c.l.s4 1934713408
    %v3147 = vunpack.c.0.s8 %v3146
    %v3148 = vlaneseq
    %v3149 = vshrl.u32 %v3148, 7
    %v3150 = vsub.s32 %v3147, %v3149
    %v3151 = vrot.slane %v3143, %v3150
    %v3153 = vunpack.c.l.s4 1934713408
    %v3154 = vunpack.c.0.s8 %v3153
    %v3155 = vlaneseq
    %v3156 = vshrl.u32 %v3155, 7
    %v3157 = vsub.s32 %v3154, %v3156
    %v3158 = vrot.slane %v3144, %v3157
    %v3159 = vcombine.low %v3094, %v3110
    %v3160 = vcombine.high %v3094, %v3110
    %v3162 = vunpack.c.l.s4 1934713408
    %v3163 = vunpack.c.0.s8 %v3162
    %v3164 = vlaneseq
    %v3165 = vshrl.u32 %v3164, 7
    %v3166 = vsub.s32 %v3163, %v3165
    %v3167 = vrot.slane %v3159, %v3166
    %v3169 = vunpack.c.l.s4 1934713408
    %v3170 = vunpack.c.0.s8 %v3169
    %v3171 = vlaneseq
    %v3172 = vshrl.u32 %v3171, 7
    %v3173 = vsub.s32 %v3170, %v3172
    %v3174 = vrot.slane %v3160, %v3173
    %v3175 = vcombine.low %v3119, %v3151
    %v3176 = vcombine.high %v3119, %v3151
    %v3177 = vcombine.low %v3126, %v3158
    %v3178 = vcombine.high %v3126, %v3158
    %v3179 = vcombine.low %v3135, %v3167
    %v3180 = vcombine.high %v3135, %v3167
    %v3181 = vcombine.low %v3142, %v3174
    %v3182 = vcombine.high %v3142, %v3174
    %v3183 = vcombine.low %v2767, %v2769
    %v3184 = vcombine.high %v2767, %v2769
    %v3186 = vunpack.c.l.s4 1983009808
    %v3187 = vunpack.c.0.s8 %v3186
    %v3188 = vlaneseq
    %v3189 = vshrl.u32 %v3188, 7
    %v3190 = vsub.s32 %v3187, %v3189
    %v3191 = vrot.slane %v3183, %v3190
    %v3193 = vunpack.c.l.s4 1983009808
    %v3194 = vunpack.c.0.s8 %v3193
    %v3195 = vlaneseq
    %v3196 = vshrl.u32 %v3195, 7
    %v3197 = vsub.s32 %v3194, %v3196
    %v3198 = vrot.slane %v3184, %v3197
    %v3199 = vcombine.low %v2768, %v2770
    %v3200 = vcombine.high %v2768, %v2770
    %v3202 = vunpack.c.l.s4 1983009808
    %v3203 = vunpack.c.0.s8 %v3202
    %v3204 = vlaneseq
    %v3205 = vshrl.u32 %v3204, 7
    %v3206 = vsub.s32 %v3203, %v3205
    %v3207 = vrot.slane %v3199, %v3206
    %v3209 = vunpack.c.l.s4 1983009808
    %v3210 = vunpack.c.0.s8 %v3209
    %v3211 = vlaneseq
    %v3212 = vshrl.u32 %v3211, 7
    %v3213 = vsub.s32 %v3210, %v3212
    %v3214 = vrot.slane %v3200, %v3213
    %v3215 = vcombine.low %v2771, %v2773
    %v3216 = vcombine.high %v2771, %v2773
    %v3218 = vunpack.c.l.s4 1983009808
    %v3219 = vunpack.c.0.s8 %v3218
    %v3220 = vlaneseq
    %v3221 = vshrl.u32 %v3220, 7
    %v3222 = vsub.s32 %v3219, %v3221
    %v3223 = vrot.slane %v3215, %v3222
    %v3225 = vunpack.c.l.s4 1983009808
    %v3226 = vunpack.c.0.s8 %v3225
    %v3227 = vlaneseq
    %v3228 = vshrl.u32 %v3227, 7
    %v3229 = vsub.s32 %v3226, %v3228
    %v3230 = vrot.slane %v3216, %v3229
    %v3231 = vcombine.low %v2772, %v2774
    %v3232 = vcombine.high %v2772, %v2774
    %v3234 = vunpack.c.l.s4 1983009808
    %v3235 = vunpack.c.0.s8 %v3234
    %v3236 = vlaneseq
    %v3237 = vshrl.u32 %v3236, 7
    %v3238 = vsub.s32 %v3235, %v3237
    %v3239 = vrot.slane %v3231, %v3238
    %v3241 = vunpack.c.l.s4 1983009808
    %v3242 = vunpack.c.0.s8 %v3241
    %v3243 = vlaneseq
    %v3244 = vshrl.u32 %v3243, 7
    %v3245 = vsub.s32 %v3242, %v3244
    %v3246 = vrot.slane %v3232, %v3245
    %v3247 = vcombine.low %v3191, %v3207
    %v3248 = vcombine.high %v3191, %v3207
    %v3250 = vunpack.c.l.s4 1934713408
    %v3251 = vunpack.c.0.s8 %v3250
    %v3252 = vlaneseq
    %v3253 = vshrl.u32 %v3252, 7
    %v3254 = vsub.s32 %v3251, %v3253
    %v3255 = vrot.slane %v3247, %v3254
    %v3257 = vunpack.c.l.s4 1934713408
    %v3258 = vunpack.c.0.s8 %v3257
    %v3259 = vlaneseq
    %v3260 = vshrl.u32 %v3259, 7
    %v3261 = vsub.s32 %v3258, %v3260
    %v3262 = vrot.slane %v3248, %v3261
    %v3263 = vcombine.low %v3198, %v3214
    %v3264 = vcombine.high %v3198, %v3214
    %v3266 = vunpack.c.l.s4 1934713408
    %v3267 = vunpack.c.0.s8 %v3266
    %v3268 = vlaneseq
    %v3269 = vshrl.u32 %v3268, 7
    %v3270 = vsub.s32 %v3267, %v3269
    %v3271 = vrot.slane %v3263, %v3270
    %v3273 = vunpack.c.l.s4 1934713408
    %v3274 = vunpack.c.0.s8 %v3273
    %v3275 = vlaneseq
    %v3276 = vshrl.u32 %v3275, 7
    %v3277 = vsub.s32 %v3274, %v3276
    %v3278 = vrot.slane %v3264, %v3277
    %v3279 = vcombine.low %v3223, %v3239
    %v3280 = vcombine.high %v3223, %v3239
    %v3282 = vunpack.c.l.s4 1934713408
    %v3283 = vunpack.c.0.s8 %v3282
    %v3284 = vlaneseq
    %v3285 = vshrl.u32 %v3284, 7
    %v3286 = vsub.s32 %v3283, %v3285
    %v3287 = vrot.slane %v3279, %v3286
    %v3289 = vunpack.c.l.s4 1934713408
    %v3290 = vunpack.c.0.s8 %v3289
    %v3291 = vlaneseq
    %v3292 = vshrl.u32 %v3291, 7
    %v3293 = vsub.s32 %v3290, %v3292
    %v3294 = vrot.slane %v3280, %v3293
    %v3295 = vcombine.low %v3230, %v3246
    %v3296 = vcombine.high %v3230, %v3246
    %v3298 = vunpack.c.l.s4 1934713408
    %v3299 = vunpack.c.0.s8 %v3298
    %v3300 = vlaneseq
    %v3301 = vshrl.u32 %v3300, 7
    %v3302 = vsub.s32 %v3299, %v3301
    %v3303 = vrot.slane %v3295, %v3302
    %v3305 = vunpack.c.l.s4 1934713408
    %v3306 = vunpack.c.0.s8 %v3305
    %v3307 = vlaneseq
    %v3308 = vshrl.u32 %v3307, 7
    %v3309 = vsub.s32 %v3306, %v3308
    %v3310 = vrot.slane %v3296, %v3309
    %v3311 = vcombine.low %v3255, %v3287
    %v3312 = vcombine.high %v3255, %v3287
    %v3313 = vcombine.low %v3262, %v3294
    %v3314 = vcombine.high %v3262, %v3294
    %v3315 = vcombine.low %v3271, %v3303
    %v3316 = vcombine.high %v3271, %v3303
    %v3317 = vcombine.low %v3278, %v3310
    %v3318 = vcombine.high %v3278, %v3310
    %v3319 = vcombine.low %v2903, %v2905
    %v3320 = vcombine.high %v2903, %v2905
    %v3322 = vunpack.c.l.s4 1983009808
    %v3323 = vunpack.c.0.s8 %v3322
    %v3324 = vlaneseq
    %v3325 = vshrl.u32 %v3324, 7
    %v3326 = vsub.s32 %v3323, %v3325
    %v3327 = vrot.slane %v3319, %v3326
    %v3329 = vunpack.c.l.s4 1983009808
    %v3330 = vunpack.c.0.s8 %v3329
    %v3331 = vlaneseq
    %v3332 = vshrl.u32 %v3331, 7
    %v3333 = vsub.s32 %v3330, %v3332
    %v3334 = vrot.slane %v3320, %v3333
    %v3335 = vcombine.low %v2904, %v2906
    %v3336 = vcombine.high %v2904, %v2906
    %v3338 = vunpack.c.l.s4 1983009808
    %v3339 = vunpack.c.0.s8 %v3338
    %v3340 = vlaneseq
    %v3341 = vshrl.u32 %v3340, 7
    %v3342 = vsub.s32 %v3339, %v3341
    %v3343 = vrot.slane %v3335, %v3342
    %v3345 = vunpack.c.l.s4 1983009808
    %v3346 = vunpack.c.0.s8 %v3345
    %v3347 = vlaneseq
    %v3348 = vshrl.u32 %v3347, 7
    %v3349 = vsub.s32 %v3346, %v3348
    %v3350 = vrot.slane %v3336, %v3349
    %v3351 = vcombine.low %v2907, %v2909
    %v3352 = vcombine.high %v2907, %v2909
    %v3354 = vunpack.c.l.s4 1983009808
    %v3355 = vunpack.c.0.s8 %v3354
    %v3356 = vlaneseq
    %v3357 = vshrl.u32 %v3356, 7
    %v3358 = vsub.s32 %v3355, %v3357
    %v3359 = vrot.slane %v3351, %v3358
    %v3361 = vunpack.c.l.s4 1983009808
    %v3362 = vunpack.c.0.s8 %v3361
    %v3363 = vlaneseq
    %v3364 = vshrl.u32 %v3363, 7
    %v3365 = vsub.s32 %v3362, %v3364
    %v3366 = vrot.slane %v3352, %v3365
    %v3367 = vcombine.low %v2908, %v2910
    %v3368 = vcombine.high %v2908, %v2910
    %v3370 = vunpack.c.l.s4 1983009808
    %v3371 = vunpack.c.0.s8 %v3370
    %v3372 = vlaneseq
    %v3373 = vshrl.u32 %v3372, 7
    %v3374 = vsub.s32 %v3371, %v3373
    %v3375 = vrot.slane %v3367, %v3374
    %v3377 = vunpack.c.l.s4 1983009808
    %v3378 = vunpack.c.0.s8 %v3377
    %v3379 = vlaneseq
    %v3380 = vshrl.u32 %v3379, 7
    %v3381 = vsub.s32 %v3378, %v3380
    %v3382 = vrot.slane %v3368, %v3381
    %v3383 = vcombine.low %v3327, %v3343
    %v3384 = vcombine.high %v3327, %v3343
    %v3386 = vunpack.c.l.s4 1934713408
    %v3387 = vunpack.c.0.s8 %v3386
    %v3388 = vlaneseq
    %v3389 = vshrl.u32 %v3388, 7
    %v3390 = vsub.s32 %v3387, %v3389
    %v3391 = vrot.slane %v3383, %v3390
    %v3393 = vunpack.c.l.s4 1934713408
    %v3394 = vunpack.c.0.s8 %v3393
    %v3395 = vlaneseq
    %v3396 = vshrl.u32 %v3395, 7
    %v3397 = vsub.s32 %v3394, %v3396
    %v3398 = vrot.slane %v3384, %v3397
    %v3399 = vcombine.low %v3334, %v3350
    %v3400 = vcombine.high %v3334, %v3350
    %v3402 = vunpack.c.l.s4 1934713408
    %v3403 = vunpack.c.0.s8 %v3402
    %v3404 = vlaneseq
    %v3405 = vshrl.u32 %v3404, 7
    %v3406 = vsub.s32 %v3403, %v3405
    %v3407 = vrot.slane %v3399, %v3406
    %v3409 = vunpack.c.l.s4 1934713408
    %v3410 = vunpack.c.0.s8 %v3409
    %v3411 = vlaneseq
    %v3412 = vshrl.u32 %v3411, 7
    %v3413 = vsub.s32 %v3410, %v3412
    %v3414 = vrot.slane %v3400, %v3413
    %v3415 = vcombine.low %v3359, %v3375
    %v3416 = vcombine.high %v3359, %v3375
    %v3418 = vunpack.c.l.s4 1934713408
    %v3419 = vunpack.c.0.s8 %v3418
    %v3420 = vlaneseq
    %v3421 = vshrl.u32 %v3420, 7
    %v3422 = vsub.s32 %v3419, %v3421
    %v3423 = vrot.slane %v3415, %v3422
    %v3425 = vunpack.c.l.s4 1934713408
    %v3426 = vunpack.c.0.s8 %v3425
    %v3427 = vlaneseq
    %v3428 = vshrl.u32 %v3427, 7
    %v3429 = vsub.s32 %v3426, %v3428
    %v3430 = vrot.slane %v3416, %v3429
    %v3431 = vcombine.low %v3366, %v3382
    %v3432 = vcombine.high %v3366, %v3382
    %v3434 = vunpack.c.l.s4 1934713408
    %v3435 = vunpack.c.0.s8 %v3434
    %v3436 = vlaneseq
    %v3437 = vshrl.u32 %v3436, 7
    %v3438 = vsub.s32 %v3435, %v3437
    %v3439 = vrot.slane %v3431, %v3438
    %v3441 = vunpack.c.l.s4 1934713408
    %v3442 = vunpack.c.0.s8 %v3441
    %v3443 = vlaneseq
    %v3444 = vshrl.u32 %v3443, 7
    %v3445 = vsub.s32 %v3442, %v3444
    %v3446 = vrot.slane %v3432, %v3445
    %v3447 = vcombine.low %v3391, %v3423
    %v3448 = vcombine.high %v3391, %v3423
    %v3449 = vcombine.low %v3398, %v3430
    %v3450 = vcombine.high %v3398, %v3430
    %v3451 = vcombine.low %v3407, %v3439
    %v3452 = vcombine.high %v3407, %v3439
    %v3453 = vcombine.low %v3414, %v3446
    %v3454 = vcombine.high %v3414, %v3446
    %v3455 = vcombine.low %v3039, %v3041
    %v3456 = vcombine.high %v3039, %v3041
    %v3458 = vunpack.c.l.s4 1983009808
    %v3459 = vunpack.c.0.s8 %v3458
    %v3460 = vlaneseq
    %v3461 = vshrl.u32 %v3460, 7
    %v3462 = vsub.s32 %v3459, %v3461
    %v3463 = vrot.slane %v3455, %v3462
    %v3465 = vunpack.c.l.s4 1983009808
    %v3466 = vunpack.c.0.s8 %v3465
    %v3467 = vlaneseq
    %v3468 = vshrl.u32 %v3467, 7
    %v3469 = vsub.s32 %v3466, %v3468
    %v3470 = vrot.slane %v3456, %v3469
    %v3471 = vcombine.low %v3040, %v3042
    %v3472 = vcombine.high %v3040, %v3042
    %v3474 = vunpack.c.l.s4 1983009808
    %v3475 = vunpack.c.0.s8 %v3474
    %v3476 = vlaneseq
    %v3477 = vshrl.u32 %v3476, 7
    %v3478 = vsub.s32 %v3475, %v3477
    %v3479 = vrot.slane %v3471, %v3478
    %v3481 = vunpack.c.l.s4 1983009808
    %v3482 = vunpack.c.0.s8 %v3481
    %v3483 = vlaneseq
    %v3484 = vshrl.u32 %v3483, 7
    %v3485 = vsub.s32 %v3482, %v3484
    %v3486 = vrot.slane %v3472, %v3485
    %v3487 = vcombine.low %v3043, %v3045
    %v3488 = vcombine.high %v3043, %v3045
    %v3490 = vunpack.c.l.s4 1983009808
    %v3491 = vunpack.c.0.s8 %v3490
    %v3492 = vlaneseq
    %v3493 = vshrl.u32 %v3492, 7
    %v3494 = vsub.s32 %v3491, %v3493
    %v3495 = vrot.slane %v3487, %v3494
    %v3497 = vunpack.c.l.s4 1983009808
    %v3498 = vunpack.c.0.s8 %v3497
    %v3499 = vlaneseq
    %v3500 = vshrl.u32 %v3499, 7
    %v3501 = vsub.s32 %v3498, %v3500
    %v3502 = vrot.slane %v3488, %v3501
    %v3503 = vcombine.low %v3044, %v3046
    %v3504 = vcombine.high %v3044, %v3046
    %v3506 = vunpack.c.l.s4 1983009808
    %v3507 = vunpack.c.0.s8 %v3506
    %v3508 = vlaneseq
    %v3509 = vshrl.u32 %v3508, 7
    %v3510 = vsub.s32 %v3507, %v3509
    %v3511 = vrot.slane %v3503, %v3510
    %v3513 = vunpack.c.l.s4 1983009808
    %v3514 = vunpack.c.0.s8 %v3513
    %v3515 = vlaneseq
    %v3516 = vshrl.u32 %v3515, 7
    %v3517 = vsub.s32 %v3514, %v3516
    %v3518 = vrot.slane %v3504, %v3517
    %v3519 = vcombine.low %v3463, %v3479
    %v3520 = vcombine.high %v3463, %v3479
    %v3522 = vunpack.c.l.s4 1934713408
    %v3523 = vunpack.c.0.s8 %v3522
    %v3524 = vlaneseq
    %v3525 = vshrl.u32 %v3524, 7
    %v3526 = vsub.s32 %v3523, %v3525
    %v3527 = vrot.slane %v3519, %v3526
    %v3529 = vunpack.c.l.s4 1934713408
    %v3530 = vunpack.c.0.s8 %v3529
    %v3531 = vlaneseq
    %v3532 = vshrl.u32 %v3531, 7
    %v3533 = vsub.s32 %v3530, %v3532
    %v3534 = vrot.slane %v3520, %v3533
    %v3535 = vcombine.low %v3470, %v3486
    %v3536 = vcombine.high %v3470, %v3486
    %v3538 = vunpack.c.l.s4 1934713408
    %v3539 = vunpack.c.0.s8 %v3538
    %v3540 = vlaneseq
    %v3541 = vshrl.u32 %v3540, 7
    %v3542 = vsub.s32 %v3539, %v3541
    %v3543 = vrot.slane %v3535, %v3542
    %v3545 = vunpack.c.l.s4 1934713408
    %v3546 = vunpack.c.0.s8 %v3545
    %v3547 = vlaneseq
    %v3548 = vshrl.u32 %v3547, 7
    %v3549 = vsub.s32 %v3546, %v3548
    %v3550 = vrot.slane %v3536, %v3549
    %v3551 = vcombine.low %v3495, %v3511
    %v3552 = vcombine.high %v3495, %v3511
    %v3554 = vunpack.c.l.s4 1934713408
    %v3555 = vunpack.c.0.s8 %v3554
    %v3556 = vlaneseq
    %v3557 = vshrl.u32 %v3556, 7
    %v3558 = vsub.s32 %v3555, %v3557
    %v3559 = vrot.slane %v3551, %v3558
    %v3561 = vunpack.c.l.s4 1934713408
    %v3562 = vunpack.c.0.s8 %v3561
    %v3563 = vlaneseq
    %v3564 = vshrl.u32 %v3563, 7
    %v3565 = vsub.s32 %v3562, %v3564
    %v3566 = vrot.slane %v3552, %v3565
    %v3567 = vcombine.low %v3502, %v3518
    %v3568 = vcombine.high %v3502, %v3518
    %v3570 = vunpack.c.l.s4 1934713408
    %v3571 = vunpack.c.0.s8 %v3570
    %v3572 = vlaneseq
    %v3573 = vshrl.u32 %v3572, 7
    %v3574 = vsub.s32 %v3571, %v3573
    %v3575 = vrot.slane %v3567, %v3574
    %v3577 = vunpack.c.l.s4 1934713408
    %v3578 = vunpack.c.0.s8 %v3577
    %v3579 = vlaneseq
    %v3580 = vshrl.u32 %v3579, 7
    %v3581 = vsub.s32 %v3578, %v3580
    %v3582 = vrot.slane %v3568, %v3581
    %v3583 = vcombine.low %v3527, %v3559
    %v3584 = vcombine.high %v3527, %v3559
    %v3585 = vcombine.low %v3534, %v3566
    %v3586 = vcombine.high %v3534, %v3566
    %v3587 = vcombine.low %v3543, %v3575
    %v3588 = vcombine.high %v3543, %v3575
    %v3589 = vcombine.low %v3550, %v3582
    %v3590 = vcombine.high %v3550, %v3582
    %v3591 = vcombine.low %v3175, %v3177
    %v3592 = vcombine.high %v3175, %v3177
    %v3594 = vunpack.c.l.s4 1983009808
    %v3595 = vunpack.c.0.s8 %v3594
    %v3596 = vlaneseq
    %v3597 = vshrl.u32 %v3596, 7
    %v3598 = vsub.s32 %v3595, %v3597
    %v3599 = vrot.slane %v3591, %v3598
    %v3601 = vunpack.c.l.s4 1983009808
    %v3602 = vunpack.c.0.s8 %v3601
    %v3603 = vlaneseq
    %v3604 = vshrl.u32 %v3603, 7
    %v3605 = vsub.s32 %v3602, %v3604
    %v3606 = vrot.slane %v3592, %v3605
    %v3607 = vcombine.low %v3176, %v3178
    %v3608 = vcombine.high %v3176, %v3178
    %v3610 = vunpack.c.l.s4 1983009808
    %v3611 = vunpack.c.0.s8 %v3610
    %v3612 = vlaneseq
    %v3613 = vshrl.u32 %v3612, 7
    %v3614 = vsub.s32 %v3611, %v3613
    %v3615 = vrot.slane %v3607, %v3614
    %v3617 = vunpack.c.l.s4 1983009808
    %v3618 = vunpack.c.0.s8 %v3617
    %v3619 = vlaneseq
    %v3620 = vshrl.u32 %v3619, 7
    %v3621 = vsub.s32 %v3618, %v3620
    %v3622 = vrot.slane %v3608, %v3621
    %v3623 = vcombine.low %v3179, %v3181
    %v3624 = vcombine.high %v3179, %v3181
    %v3626 = vunpack.c.l.s4 1983009808
    %v3627 = vunpack.c.0.s8 %v3626
    %v3628 = vlaneseq
    %v3629 = vshrl.u32 %v3628, 7
    %v3630 = vsub.s32 %v3627, %v3629
    %v3631 = vrot.slane %v3623, %v3630
    %v3633 = vunpack.c.l.s4 1983009808
    %v3634 = vunpack.c.0.s8 %v3633
    %v3635 = vlaneseq
    %v3636 = vshrl.u32 %v3635, 7
    %v3637 = vsub.s32 %v3634, %v3636
    %v3638 = vrot.slane %v3624, %v3637
    %v3639 = vcombine.low %v3180, %v3182
    %v3640 = vcombine.high %v3180, %v3182
    %v3642 = vunpack.c.l.s4 1983009808
    %v3643 = vunpack.c.0.s8 %v3642
    %v3644 = vlaneseq
    %v3645 = vshrl.u32 %v3644, 7
    %v3646 = vsub.s32 %v3643, %v3645
    %v3647 = vrot.slane %v3639, %v3646
    %v3649 = vunpack.c.l.s4 1983009808
    %v3650 = vunpack.c.0.s8 %v3649
    %v3651 = vlaneseq
    %v3652 = vshrl.u32 %v3651, 7
    %v3653 = vsub.s32 %v3650, %v3652
    %v3654 = vrot.slane %v3640, %v3653
    %v3655 = vcombine.low %v3599, %v3615
    %v3656 = vcombine.high %v3599, %v3615
    %v3658 = vunpack.c.l.s4 1934713408
    %v3659 = vunpack.c.0.s8 %v3658
    %v3660 = vlaneseq
    %v3661 = vshrl.u32 %v3660, 7
    %v3662 = vsub.s32 %v3659, %v3661
    %v3663 = vrot.slane %v3655, %v3662
    %v3665 = vunpack.c.l.s4 1934713408
    %v3666 = vunpack.c.0.s8 %v3665
    %v3667 = vlaneseq
    %v3668 = vshrl.u32 %v3667, 7
    %v3669 = vsub.s32 %v3666, %v3668
    %v3670 = vrot.slane %v3656, %v3669
    %v3671 = vcombine.low %v3606, %v3622
    %v3672 = vcombine.high %v3606, %v3622
    %v3674 = vunpack.c.l.s4 1934713408
    %v3675 = vunpack.c.0.s8 %v3674
    %v3676 = vlaneseq
    %v3677 = vshrl.u32 %v3676, 7
    %v3678 = vsub.s32 %v3675, %v3677
    %v3679 = vrot.slane %v3671, %v3678
    %v3681 = vunpack.c.l.s4 1934713408
    %v3682 = vunpack.c.0.s8 %v3681
    %v3683 = vlaneseq
    %v3684 = vshrl.u32 %v3683, 7
    %v3685 = vsub.s32 %v3682, %v3684
    %v3686 = vrot.slane %v3672, %v3685
    %v3687 = vcombine.low %v3631, %v3647
    %v3688 = vcombine.high %v3631, %v3647
    %v3690 = vunpack.c.l.s4 1934713408
    %v3691 = vunpack.c.0.s8 %v3690
    %v3692 = vlaneseq
    %v3693 = vshrl.u32 %v3692, 7
    %v3694 = vsub.s32 %v3691, %v3693
    %v3695 = vrot.slane %v3687, %v3694
    %v3697 = vunpack.c.l.s4 1934713408
    %v3698 = vunpack.c.0.s8 %v3697
    %v3699 = vlaneseq
    %v3700 = vshrl.u32 %v3699, 7
    %v3701 = vsub.s32 %v3698, %v3700
    %v3702 = vrot.slane %v3688, %v3701
    %v3703 = vcombine.low %v3638, %v3654
    %v3704 = vcombine.high %v3638, %v3654
    %v3706 = vunpack.c.l.s4 1934713408
    %v3707 = vunpack.c.0.s8 %v3706
    %v3708 = vlaneseq
    %v3709 = vshrl.u32 %v3708, 7
    %v3710 = vsub.s32 %v3707, %v3709
    %v3711 = vrot.slane %v3703, %v3710
    %v3713 = vunpack.c.l.s4 1934713408
    %v3714 = vunpack.c.0.s8 %v3713
    %v3715 = vlaneseq
    %v3716 = vshrl.u32 %v3715, 7
    %v3717 = vsub.s32 %v3714, %v3716
    %v3718 = vrot.slane %v3704, %v3717
    %v3719 = vcombine.low %v3663, %v3695
    %v3720 = vcombine.high %v3663, %v3695
    %v3721 = vcombine.low %v3670, %v3702
    %v3722 = vcombine.high %v3670, %v3702
    %v3723 = vcombine.low %v3679, %v3711
    %v3724 = vcombine.high %v3679, %v3711
    %v3725 = vcombine.low %v3686, %v3718
    %v3726 = vcombine.high %v3686, %v3718
    %vm3727 = vcmask 261120
    %v3729 = vsel %vm3727, %v1247, 0
    %v3732 = vsel %vm3727, %v2143, 0
    %v3735 = vsel %vm3727, %v2279, 0
    %3737 = vmatprep.subr.mxu0 0.0
    %3738 = vmatpush1.xpose.msra.mxu0 %v3732
    %3739 = vmatprep.subr.mxu0 0.0
    %3740 = vmatpush1.xpose.msra.mxu0 %v3735
    %3741 = vmatprep.subr.mxu0 0.0
    %3742 = vmatpush1.xpose.msra.mxu0 0.0
    %3743 = vmatprep.subr.mxu0 0.0
    %3744 = vmatpush1.xpose.msra.mxu0 0.0
    %3745 = vmatprep.subr.mxu0 0.0
    %3746 = vmatpush1.xpose.msra.mxu0 0.0
    %3747 = vmatprep.subr.mxu0 0.0
    %3748 = vmatpush1.xpose.msra.mxu0 0.0
    %3749 = vmatprep.subr.mxu0 0.0
    %3750 = vmatpush1.xpose.msra.mxu0 0.0
    %3751 = vmatprep.subr.mxu0 0.0
    %3752 = vmatpush1.xpose.msra.mxu0 0.0
    %3753 = vmatprep.subr.mxu0 0.0
    %3754 = vmatpush1.xpose.msra.mxu0 0.0
    %3755 = vmatprep.subr.mxu0 0.0
    %3756 = vmatpush1.xpose.msra.mxu0 0.0
    %3757 = vmatprep.subr.mxu0 0.0
    %3758 = vmatpush1.xpose.msra.mxu0 0.0
    %3759 = vmatprep.subr.mxu0 0.0
    %3760 = vmatpush1.xpose.msra.mxu0 0.0
    %3761 = vmatprep.subr.mxu0 0.0
    %3762 = vmatpush1.xpose.msra.mxu0 0.0
    %3763 = vmatprep.subr.mxu0 0.0
    %3764 = vmatpush1.xpose.msra.mxu0 0.0
    %3765 = vmatprep.subr.mxu0 0.0
    %3766 = vmatpush1.xpose.msra.mxu0 0.0
    %3767 = vmatprep.subr.mxu0 0.0
    %3768 = vmatpush1.xpose.msra.mxu0 0.0
    %3769 = vmatprep.subr.mxu0 0.0
    %3770 = vmatpush1.xpose.msra.mxu0 0.0
    %3771 = vmatprep.subr.mxu0 0.0
    %3772 = vmatpush1.xpose.msra.mxu0 0.0
    %3773 = vmatprep.subr.mxu0 0.0
    %3774 = vmatpush1.xpose.msra.mxu0 0.0
    %3775 = vmatprep.subr.mxu0 0.0
    %3776 = vmatpush1.xpose.msra.mxu0 0.0
    %3777 = vmatprep.subr.mxu0 0.0
    %3778 = vmatpush1.xpose.msra.mxu0 0.0
    %3779 = vmatprep.subr.mxu0 0.0
    %3780 = vmatpush1.xpose.msra.mxu0 0.0
    %3781 = vmatprep.subr.mxu0 0.0
    %3782 = vmatpush1.xpose.msra.mxu0 0.0
    %3783 = vmatprep.subr.mxu0 0.0
    %3784 = vmatpush1.xpose.msra.mxu0 0.0
    %3785 = vmatprep.subr.mxu0 0.0
    %3786 = vmatpush1.xpose.msra.mxu0 0.0
    %3787 = vmatprep.subr.mxu0 0.0
    %3788 = vmatpush1.xpose.msra.mxu0 0.0
    %3789 = vmatprep.subr.mxu0 0.0
    %3790 = vmatpush1.xpose.msra.mxu0 0.0
    %3791 = vmatprep.subr.mxu0 0.0
    %3792 = vmatpush1.xpose.msra.mxu0 0.0
    %3793 = vmatprep.subr.mxu0 0.0
    %3794 = vmatpush1.xpose.msra.mxu0 0.0
    %3795 = vmatprep.subr.mxu0 0.0
    %3796 = vmatpush1.xpose.msra.mxu0 0.0
    %3797 = vmatprep.subr.mxu0 0.0
    %3798 = vmatpush1.xpose.msra.mxu0 0.0
    %3799 = vmatprep.subr.mxu0 0.0
    %3800 = vmatpush1.xpose.msra.mxu0 0.0
    %3801 = vmatprep.mubr.f32.mxu0 0.0
    %3802 = vmatmul.mubr.f32.gmra.mrb[0].mxu0 %v3729
    %v3803 = vpop.f32.mrb[0].mxu0
    %v3804 = vadd.f32 0.0, %v3803
    %v3805 = vpop.f32.mrb[0].mxu0
    %3806 = vdwg.mxu0
    %v3808 = vsel %vm3727, %v1248, 0
    %v3811 = vsel %vm3727, %v2144, 0
    %v3814 = vsel %vm3727, %v2280, 0
    %3816 = vmatprep.subr.mxu0 0.0
    %3817 = vmatpush1.xpose.msra.mxu0 %v3811
    %3818 = vmatprep.subr.mxu0 0.0
    %3819 = vmatpush1.xpose.msra.mxu0 %v3814
    %3820 = vmatprep.subr.mxu0 0.0
    %3821 = vmatpush1.xpose.msra.mxu0 0.0
    %3822 = vmatprep.subr.mxu0 0.0
    %3823 = vmatpush1.xpose.msra.mxu0 0.0
    %3824 = vmatprep.subr.mxu0 0.0
    %3825 = vmatpush1.xpose.msra.mxu0 0.0
    %3826 = vmatprep.subr.mxu0 0.0
    %3827 = vmatpush1.xpose.msra.mxu0 0.0
    %3828 = vmatprep.subr.mxu0 0.0
    %3829 = vmatpush1.xpose.msra.mxu0 0.0
    %3830 = vmatprep.subr.mxu0 0.0
    %3831 = vmatpush1.xpose.msra.mxu0 0.0
    %3832 = vmatprep.subr.mxu0 0.0
    %3833 = vmatpush1.xpose.msra.mxu0 0.0
    %3834 = vmatprep.subr.mxu0 0.0
    %3835 = vmatpush1.xpose.msra.mxu0 0.0
    %3836 = vmatprep.subr.mxu0 0.0
    %3837 = vmatpush1.xpose.msra.mxu0 0.0
    %3838 = vmatprep.subr.mxu0 0.0
    %3839 = vmatpush1.xpose.msra.mxu0 0.0
    %3840 = vmatprep.subr.mxu0 0.0
    %3841 = vmatpush1.xpose.msra.mxu0 0.0
    %3842 = vmatprep.subr.mxu0 0.0
    %3843 = vmatpush1.xpose.msra.mxu0 0.0
    %3844 = vmatprep.subr.mxu0 0.0
    %3845 = vmatpush1.xpose.msra.mxu0 0.0
    %3846 = vmatprep.subr.mxu0 0.0
    %3847 = vmatpush1.xpose.msra.mxu0 0.0
    %3848 = vmatprep.subr.mxu0 0.0
    %3849 = vmatpush1.xpose.msra.mxu0 0.0
    %3850 = vmatprep.subr.mxu0 0.0
    %3851 = vmatpush1.xpose.msra.mxu0 0.0
    %3852 = vmatprep.subr.mxu0 0.0
    %3853 = vmatpush1.xpose.msra.mxu0 0.0
    %3854 = vmatprep.subr.mxu0 0.0
    %3855 = vmatpush1.xpose.msra.mxu0 0.0
    %3856 = vmatprep.subr.mxu0 0.0
    %3857 = vmatpush1.xpose.msra.mxu0 0.0
    %3858 = vmatprep.subr.mxu0 0.0
    %3859 = vmatpush1.xpose.msra.mxu0 0.0
    %3860 = vmatprep.subr.mxu0 0.0
    %3861 = vmatpush1.xpose.msra.mxu0 0.0
    %3862 = vmatprep.subr.mxu0 0.0
    %3863 = vmatpush1.xpose.msra.mxu0 0.0
    %3864 = vmatprep.subr.mxu0 0.0
    %3865 = vmatpush1.xpose.msra.mxu0 0.0
    %3866 = vmatprep.subr.mxu0 0.0
    %3867 = vmatpush1.xpose.msra.mxu0 0.0
    %3868 = vmatprep.subr.mxu0 0.0
    %3869 = vmatpush1.xpose.msra.mxu0 0.0
    %3870 = vmatprep.subr.mxu0 0.0
    %3871 = vmatpush1.xpose.msra.mxu0 0.0
    %3872 = vmatprep.subr.mxu0 0.0
    %3873 = vmatpush1.xpose.msra.mxu0 0.0
    %3874 = vmatprep.subr.mxu0 0.0
    %3875 = vmatpush1.xpose.msra.mxu0 0.0
    %3876 = vmatprep.subr.mxu0 0.0
    %3877 = vmatpush1.xpose.msra.mxu0 0.0
    %3878 = vmatprep.subr.mxu0 0.0
    %3879 = vmatpush1.xpose.msra.mxu0 0.0
    %3880 = vmatprep.mubr.f32.mxu0 0.0
    %3881 = vmatmul.mubr.f32.gmra.mrb[0].mxu0 %v3808
    %v3882 = vpop.f32.mrb[0].mxu0
    %v3883 = vadd.f32 0.0, %v3882
    %v3884 = vpop.f32.mrb[0].mxu0
    %3885 = vdwg.mxu0
    %v3887 = vsel %vm3727, %v1249, 0
    %v3890 = vsel %vm3727, %v2145, 0
    %v3893 = vsel %vm3727, %v2281, 0
    %3895 = vmatprep.subr.mxu0 0.0
    %3896 = vmatpush1.xpose.msra.mxu0 %v3890
    %3897 = vmatprep.subr.mxu0 0.0
    %3898 = vmatpush1.xpose.msra.mxu0 %v3893
    %3899 = vmatprep.subr.mxu0 0.0
    %3900 = vmatpush1.xpose.msra.mxu0 0.0
    %3901 = vmatprep.subr.mxu0 0.0
    %3902 = vmatpush1.xpose.msra.mxu0 0.0
    %3903 = vmatprep.subr.mxu0 0.0
    %3904 = vmatpush1.xpose.msra.mxu0 0.0
    %3905 = vmatprep.subr.mxu0 0.0
    %3906 = vmatpush1.xpose.msra.mxu0 0.0
    %3907 = vmatprep.subr.mxu0 0.0
    %3908 = vmatpush1.xpose.msra.mxu0 0.0
    %3909 = vmatprep.subr.mxu0 0.0
    %3910 = vmatpush1.xpose.msra.mxu0 0.0
    %3911 = vmatprep.subr.mxu0 0.0
    %3912 = vmatpush1.xpose.msra.mxu0 0.0
    %3913 = vmatprep.subr.mxu0 0.0
    %3914 = vmatpush1.xpose.msra.mxu0 0.0
    %3915 = vmatprep.subr.mxu0 0.0
    %3916 = vmatpush1.xpose.msra.mxu0 0.0
    %3917 = vmatprep.subr.mxu0 0.0
    %3918 = vmatpush1.xpose.msra.mxu0 0.0
    %3919 = vmatprep.subr.mxu0 0.0
    %3920 = vmatpush1.xpose.msra.mxu0 0.0
    %3921 = vmatprep.subr.mxu0 0.0
    %3922 = vmatpush1.xpose.msra.mxu0 0.0
    %3923 = vmatprep.subr.mxu0 0.0
    %3924 = vmatpush1.xpose.msra.mxu0 0.0
    %3925 = vmatprep.subr.mxu0 0.0
    %3926 = vmatpush1.xpose.msra.mxu0 0.0
    %3927 = vmatprep.subr.mxu0 0.0
    %3928 = vmatpush1.xpose.msra.mxu0 0.0
    %3929 = vmatprep.subr.mxu0 0.0
    %3930 = vmatpush1.xpose.msra.mxu0 0.0
    %3931 = vmatprep.subr.mxu0 0.0
    %3932 = vmatpush1.xpose.msra.mxu0 0.0
    %3933 = vmatprep.subr.mxu0 0.0
    %3934 = vmatpush1.xpose.msra.mxu0 0.0
    %3935 = vmatprep.subr.mxu0 0.0
    %3936 = vmatpush1.xpose.msra.mxu0 0.0
    %3937 = vmatprep.subr.mxu0 0.0
    %3938 = vmatpush1.xpose.msra.mxu0 0.0
    %3939 = vmatprep.subr.mxu0 0.0
    %3940 = vmatpush1.xpose.msra.mxu0 0.0
    %3941 = vmatprep.subr.mxu0 0.0
    %3942 = vmatpush1.xpose.msra.mxu0 0.0
    %3943 = vmatprep.subr.mxu0 0.0
    %3944 = vmatpush1.xpose.msra.mxu0 0.0
    %3945 = vmatprep.subr.mxu0 0.0
    %3946 = vmatpush1.xpose.msra.mxu0 0.0
    %3947 = vmatprep.subr.mxu0 0.0
    %3948 = vmatpush1.xpose.msra.mxu0 0.0
    %3949 = vmatprep.subr.mxu0 0.0
    %3950 = vmatpush1.xpose.msra.mxu0 0.0
    %3951 = vmatprep.subr.mxu0 0.0
    %3952 = vmatpush1.xpose.msra.mxu0 0.0
    %3953 = vmatprep.subr.mxu0 0.0
    %3954 = vmatpush1.xpose.msra.mxu0 0.0
    %3955 = vmatprep.subr.mxu0 0.0
    %3956 = vmatpush1.xpose.msra.mxu0 0.0
    %3957 = vmatprep.subr.mxu0 0.0
    %3958 = vmatpush1.xpose.msra.mxu0 0.0
    %3959 = vmatprep.mubr.f32.mxu0 0.0
    %3960 = vmatmul.mubr.f32.gmra.mrb[0].mxu0 %v3887
    %v3961 = vpop.f32.mrb[0].mxu0
    %v3962 = vadd.f32 0.0, %v3961
    %v3963 = vpop.f32.mrb[0].mxu0
    %3964 = vdwg.mxu0
    %v3966 = vsel %vm3727, %v1250, 0
    %v3969 = vsel %vm3727, %v2146, 0
    %v3972 = vsel %vm3727, %v2282, 0
    %3974 = vmatprep.subr.mxu0 0.0
    %3975 = vmatpush1.xpose.msra.mxu0 %v3969
    %3976 = vmatprep.subr.mxu0 0.0
    %3977 = vmatpush1.xpose.msra.mxu0 %v3972
    %3978 = vmatprep.subr.mxu0 0.0
    %3979 = vmatpush1.xpose.msra.mxu0 0.0
    %3980 = vmatprep.subr.mxu0 0.0
    %3981 = vmatpush1.xpose.msra.mxu0 0.0
    %3982 = vmatprep.subr.mxu0 0.0
    %3983 = vmatpush1.xpose.msra.mxu0 0.0
    %3984 = vmatprep.subr.mxu0 0.0
    %3985 = vmatpush1.xpose.msra.mxu0 0.0
    %3986 = vmatprep.subr.mxu0 0.0
    %3987 = vmatpush1.xpose.msra.mxu0 0.0
    %3988 = vmatprep.subr.mxu0 0.0
    %3989 = vmatpush1.xpose.msra.mxu0 0.0
    %3990 = vmatprep.subr.mxu0 0.0
    %3991 = vmatpush1.xpose.msra.mxu0 0.0
    %3992 = vmatprep.subr.mxu0 0.0
    %3993 = vmatpush1.xpose.msra.mxu0 0.0
    %3994 = vmatprep.subr.mxu0 0.0
    %3995 = vmatpush1.xpose.msra.mxu0 0.0
    %3996 = vmatprep.subr.mxu0 0.0
    %3997 = vmatpush1.xpose.msra.mxu0 0.0
    %3998 = vmatprep.subr.mxu0 0.0
    %3999 = vmatpush1.xpose.msra.mxu0 0.0
    %4000 = vmatprep.subr.mxu0 0.0
    %4001 = vmatpush1.xpose.msra.mxu0 0.0
    %4002 = vmatprep.subr.mxu0 0.0
    %4003 = vmatpush1.xpose.msra.mxu0 0.0
    %4004 = vmatprep.subr.mxu0 0.0
    %4005 = vmatpush1.xpose.msra.mxu0 0.0
    %4006 = vmatprep.subr.mxu0 0.0
    %4007 = vmatpush1.xpose.msra.mxu0 0.0
    %4008 = vmatprep.subr.mxu0 0.0
    %4009 = vmatpush1.xpose.msra.mxu0 0.0
    %4010 = vmatprep.subr.mxu0 0.0
    %4011 = vmatpush1.xpose.msra.mxu0 0.0
    %4012 = vmatprep.subr.mxu0 0.0
    %4013 = vmatpush1.xpose.msra.mxu0 0.0
    %4014 = vmatprep.subr.mxu0 0.0
    %4015 = vmatpush1.xpose.msra.mxu0 0.0
    %4016 = vmatprep.subr.mxu0 0.0
    %4017 = vmatpush1.xpose.msra.mxu0 0.0
    %4018 = vmatprep.subr.mxu0 0.0
    %4019 = vmatpush1.xpose.msra.mxu0 0.0
    %4020 = vmatprep.subr.mxu0 0.0
    %4021 = vmatpush1.xpose.msra.mxu0 0.0
    %4022 = vmatprep.subr.mxu0 0.0
    %4023 = vmatpush1.xpose.msra.mxu0 0.0
    %4024 = vmatprep.subr.mxu0 0.0
    %4025 = vmatpush1.xpose.msra.mxu0 0.0
    %4026 = vmatprep.subr.mxu0 0.0
    %4027 = vmatpush1.xpose.msra.mxu0 0.0
    %4028 = vmatprep.subr.mxu0 0.0
    %4029 = vmatpush1.xpose.msra.mxu0 0.0
    %4030 = vmatprep.subr.mxu0 0.0
    %4031 = vmatpush1.xpose.msra.mxu0 0.0
    %4032 = vmatprep.subr.mxu0 0.0
    %4033 = vmatpush1.xpose.msra.mxu0 0.0
    %4034 = vmatprep.subr.mxu0 0.0
    %4035 = vmatpush1.xpose.msra.mxu0 0.0
    %4036 = vmatprep.subr.mxu0 0.0
    %4037 = vmatpush1.xpose.msra.mxu0 0.0
    %4038 = vmatprep.mubr.f32.mxu0 0.0
    %4039 = vmatmul.mubr.f32.gmra.mrb[0].mxu0 %v3966
    %v4040 = vpop.f32.mrb[0].mxu0
    %v4041 = vadd.f32 0.0, %v4040
    %v4042 = vpop.f32.mrb[0].mxu0
    %4043 = vdwg.mxu0
    %v4045 = vsel %vm3727, %v1251, 0
    %v4048 = vsel %vm3727, %v2147, 0
    %v4051 = vsel %vm3727, %v2283, 0
    %4053 = vmatprep.subr.mxu0 0.0
    %4054 = vmatpush1.xpose.msra.mxu0 %v4048
    %4055 = vmatprep.subr.mxu0 0.0
    %4056 = vmatpush1.xpose.msra.mxu0 %v4051
    %4057 = vmatprep.subr.mxu0 0.0
    %4058 = vmatpush1.xpose.msra.mxu0 0.0
    %4059 = vmatprep.subr.mxu0 0.0
    %4060 = vmatpush1.xpose.msra.mxu0 0.0
    %4061 = vmatprep.subr.mxu0 0.0
    %4062 = vmatpush1.xpose.msra.mxu0 0.0
    %4063 = vmatprep.subr.mxu0 0.0
    %4064 = vmatpush1.xpose.msra.mxu0 0.0
    %4065 = vmatprep.subr.mxu0 0.0
    %4066 = vmatpush1.xpose.msra.mxu0 0.0
    %4067 = vmatprep.subr.mxu0 0.0
    %4068 = vmatpush1.xpose.msra.mxu0 0.0
    %4069 = vmatprep.subr.mxu0 0.0
    %4070 = vmatpush1.xpose.msra.mxu0 0.0
    %4071 = vmatprep.subr.mxu0 0.0
    %4072 = vmatpush1.xpose.msra.mxu0 0.0
    %4073 = vmatprep.subr.mxu0 0.0
    %4074 = vmatpush1.xpose.msra.mxu0 0.0
    %4075 = vmatprep.subr.mxu0 0.0
    %4076 = vmatpush1.xpose.msra.mxu0 0.0
    %4077 = vmatprep.subr.mxu0 0.0
    %4078 = vmatpush1.xpose.msra.mxu0 0.0
    %4079 = vmatprep.subr.mxu0 0.0
    %4080 = vmatpush1.xpose.msra.mxu0 0.0
    %4081 = vmatprep.subr.mxu0 0.0
    %4082 = vmatpush1.xpose.msra.mxu0 0.0
    %4083 = vmatprep.subr.mxu0 0.0
    %4084 = vmatpush1.xpose.msra.mxu0 0.0
    %4085 = vmatprep.subr.mxu0 0.0
    %4086 = vmatpush1.xpose.msra.mxu0 0.0
    %4087 = vmatprep.subr.mxu0 0.0
    %4088 = vmatpush1.xpose.msra.mxu0 0.0
    %4089 = vmatprep.subr.mxu0 0.0
    %4090 = vmatpush1.xpose.msra.mxu0 0.0
    %4091 = vmatprep.subr.mxu0 0.0
    %4092 = vmatpush1.xpose.msra.mxu0 0.0
    %4093 = vmatprep.subr.mxu0 0.0
    %4094 = vmatpush1.xpose.msra.mxu0 0.0
    %4095 = vmatprep.subr.mxu0 0.0
    %4096 = vmatpush1.xpose.msra.mxu0 0.0
    %4097 = vmatprep.subr.mxu0 0.0
    %4098 = vmatpush1.xpose.msra.mxu0 0.0
    %4099 = vmatprep.subr.mxu0 0.0
    %4100 = vmatpush1.xpose.msra.mxu0 0.0
    %4101 = vmatprep.subr.mxu0 0.0
    %4102 = vmatpush1.xpose.msra.mxu0 0.0
    %4103 = vmatprep.subr.mxu0 0.0
    %4104 = vmatpush1.xpose.msra.mxu0 0.0
    %4105 = vmatprep.subr.mxu0 0.0
    %4106 = vmatpush1.xpose.msra.mxu0 0.0
    %4107 = vmatprep.subr.mxu0 0.0
    %4108 = vmatpush1.xpose.msra.mxu0 0.0
    %4109 = vmatprep.subr.mxu0 0.0
    %4110 = vmatpush1.xpose.msra.mxu0 0.0
    %4111 = vmatprep.subr.mxu0 0.0
    %4112 = vmatpush1.xpose.msra.mxu0 0.0
    %4113 = vmatprep.subr.mxu0 0.0
    %4114 = vmatpush1.xpose.msra.mxu0 0.0
    %4115 = vmatprep.subr.mxu0 0.0
    %4116 = vmatpush1.xpose.msra.mxu0 0.0
    %4117 = vmatprep.mubr.f32.mxu0 0.0
    %4118 = vmatmul.mubr.f32.gmra.mrb[0].mxu0 %v4045
    %v4119 = vpop.f32.mrb[0].mxu0
    %v4120 = vadd.f32 0.0, %v4119
    %v4121 = vpop.f32.mrb[0].mxu0
    %4122 = vdwg.mxu0
    %v4124 = vsel %vm3727, %v1252, 0
    %v4127 = vsel %vm3727, %v2148, 0
    %v4130 = vsel %vm3727, %v2284, 0
    %4132 = vmatprep.subr.mxu0 0.0
    %4133 = vmatpush1.xpose.msra.mxu0 %v4127
    %4134 = vmatprep.subr.mxu0 0.0
    %4135 = vmatpush1.xpose.msra.mxu0 %v4130
    %4136 = vmatprep.subr.mxu0 0.0
    %4137 = vmatpush1.xpose.msra.mxu0 0.0
    %4138 = vmatprep.subr.mxu0 0.0
    %4139 = vmatpush1.xpose.msra.mxu0 0.0
    %4140 = vmatprep.subr.mxu0 0.0
    %4141 = vmatpush1.xpose.msra.mxu0 0.0
    %4142 = vmatprep.subr.mxu0 0.0
    %4143 = vmatpush1.xpose.msra.mxu0 0.0
    %4144 = vmatprep.subr.mxu0 0.0
    %4145 = vmatpush1.xpose.msra.mxu0 0.0
    %4146 = vmatprep.subr.mxu0 0.0
    %4147 = vmatpush1.xpose.msra.mxu0 0.0
    %4148 = vmatprep.subr.mxu0 0.0
    %4149 = vmatpush1.xpose.msra.mxu0 0.0
    %4150 = vmatprep.subr.mxu0 0.0
    %4151 = vmatpush1.xpose.msra.mxu0 0.0
    %4152 = vmatprep.subr.mxu0 0.0
    %4153 = vmatpush1.xpose.msra.mxu0 0.0
    %4154 = vmatprep.subr.mxu0 0.0
    %4155 = vmatpush1.xpose.msra.mxu0 0.0
    %4156 = vmatprep.subr.mxu0 0.0
    %4157 = vmatpush1.xpose.msra.mxu0 0.0
    %4158 = vmatprep.subr.mxu0 0.0
    %4159 = vmatpush1.xpose.msra.mxu0 0.0
    %4160 = vmatprep.subr.mxu0 0.0
    %4161 = vmatpush1.xpose.msra.mxu0 0.0
    %4162 = vmatprep.subr.mxu0 0.0
    %4163 = vmatpush1.xpose.msra.mxu0 0.0
    %4164 = vmatprep.subr.mxu0 0.0
    %4165 = vmatpush1.xpose.msra.mxu0 0.0
    %4166 = vmatprep.subr.mxu0 0.0
    %4167 = vmatpush1.xpose.msra.mxu0 0.0
    %4168 = vmatprep.subr.mxu0 0.0
    %4169 = vmatpush1.xpose.msra.mxu0 0.0
    %4170 = vmatprep.subr.mxu0 0.0
    %4171 = vmatpush1.xpose.msra.mxu0 0.0
    %4172 = vmatprep.subr.mxu0 0.0
    %4173 = vmatpush1.xpose.msra.mxu0 0.0
    %4174 = vmatprep.subr.mxu0 0.0
    %4175 = vmatpush1.xpose.msra.mxu0 0.0
    %4176 = vmatprep.subr.mxu0 0.0
    %4177 = vmatpush1.xpose.msra.mxu0 0.0
    %4178 = vmatprep.subr.mxu0 0.0
    %4179 = vmatpush1.xpose.msra.mxu0 0.0
    %4180 = vmatprep.subr.mxu0 0.0
    %4181 = vmatpush1.xpose.msra.mxu0 0.0
    %4182 = vmatprep.subr.mxu0 0.0
    %4183 = vmatpush1.xpose.msra.mxu0 0.0
    %4184 = vmatprep.subr.mxu0 0.0
    %4185 = vmatpush1.xpose.msra.mxu0 0.0
    %4186 = vmatprep.subr.mxu0 0.0
    %4187 = vmatpush1.xpose.msra.mxu0 0.0
    %4188 = vmatprep.subr.mxu0 0.0
    %4189 = vmatpush1.xpose.msra.mxu0 0.0
    %4190 = vmatprep.subr.mxu0 0.0
    %4191 = vmatpush1.xpose.msra.mxu0 0.0
    %4192 = vmatprep.subr.mxu0 0.0
    %4193 = vmatpush1.xpose.msra.mxu0 0.0
    %4194 = vmatprep.subr.mxu0 0.0
    %4195 = vmatpush1.xpose.msra.mxu0 0.0
    %4196 = vmatprep.mubr.f32.mxu0 0.0
    %4197 = vmatmul.mubr.f32.gmra.mrb[0].mxu0 %v4124
    %v4198 = vpop.f32.mrb[0].mxu0
    %v4199 = vadd.f32 0.0, %v4198
    %v4200 = vpop.f32.mrb[0].mxu0
    %4201 = vdwg.mxu0
    %v4203 = vsel %vm3727, %v1253, 0
    %v4206 = vsel %vm3727, %v2149, 0
    %v4209 = vsel %vm3727, %v2285, 0
    %4211 = vmatprep.subr.mxu0 0.0
    %4212 = vmatpush1.xpose.msra.mxu0 %v4206
    %4213 = vmatprep.subr.mxu0 0.0
    %4214 = vmatpush1.xpose.msra.mxu0 %v4209
    %4215 = vmatprep.subr.mxu0 0.0
    %4216 = vmatpush1.xpose.msra.mxu0 0.0
    %4217 = vmatprep.subr.mxu0 0.0
    %4218 = vmatpush1.xpose.msra.mxu0 0.0
    %4219 = vmatprep.subr.mxu0 0.0
    %4220 = vmatpush1.xpose.msra.mxu0 0.0
    %4221 = vmatprep.subr.mxu0 0.0
    %4222 = vmatpush1.xpose.msra.mxu0 0.0
    %4223 = vmatprep.subr.mxu0 0.0
    %4224 = vmatpush1.xpose.msra.mxu0 0.0
    %4225 = vmatprep.subr.mxu0 0.0
    %4226 = vmatpush1.xpose.msra.mxu0 0.0
    %4227 = vmatprep.subr.mxu0 0.0
    %4228 = vmatpush1.xpose.msra.mxu0 0.0
    %4229 = vmatprep.subr.mxu0 0.0
    %4230 = vmatpush1.xpose.msra.mxu0 0.0
    %4231 = vmatprep.subr.mxu0 0.0
    %4232 = vmatpush1.xpose.msra.mxu0 0.0
    %4233 = vmatprep.subr.mxu0 0.0
    %4234 = vmatpush1.xpose.msra.mxu0 0.0
    %4235 = vmatprep.subr.mxu0 0.0
    %4236 = vmatpush1.xpose.msra.mxu0 0.0
    %4237 = vmatprep.subr.mxu0 0.0
    %4238 = vmatpush1.xpose.msra.mxu0 0.0
    %4239 = vmatprep.subr.mxu0 0.0
    %4240 = vmatpush1.xpose.msra.mxu0 0.0
    %4241 = vmatprep.subr.mxu0 0.0
    %4242 = vmatpush1.xpose.msra.mxu0 0.0
    %4243 = vmatprep.subr.mxu0 0.0
    %4244 = vmatpush1.xpose.msra.mxu0 0.0
    %4245 = vmatprep.subr.mxu0 0.0
    %4246 = vmatpush1.xpose.msra.mxu0 0.0
    %4247 = vmatprep.subr.mxu0 0.0
    %4248 = vmatpush1.xpose.msra.mxu0 0.0
    %4249 = vmatprep.subr.mxu0 0.0
    %4250 = vmatpush1.xpose.msra.mxu0 0.0
    %4251 = vmatprep.subr.mxu0 0.0
    %4252 = vmatpush1.xpose.msra.mxu0 0.0
    %4253 = vmatprep.subr.mxu0 0.0
    %4254 = vmatpush1.xpose.msra.mxu0 0.0
    %4255 = vmatprep.subr.mxu0 0.0
    %4256 = vmatpush1.xpose.msra.mxu0 0.0
    %4257 = vmatprep.subr.mxu0 0.0
    %4258 = vmatpush1.xpose.msra.mxu0 0.0
    %4259 = vmatprep.subr.mxu0 0.0
    %4260 = vmatpush1.xpose.msra.mxu0 0.0
    %4261 = vmatprep.subr.mxu0 0.0
    %4262 = vmatpush1.xpose.msra.mxu0 0.0
    %4263 = vmatprep.subr.mxu0 0.0
    %4264 = vmatpush1.xpose.msra.mxu0 0.0
    %4265 = vmatprep.subr.mxu0 0.0
    %4266 = vmatpush1.xpose.msra.mxu0 0.0
    %4267 = vmatprep.subr.mxu0 0.0
    %4268 = vmatpush1.xpose.msra.mxu0 0.0
    %4269 = vmatprep.subr.mxu0 0.0
    %4270 = vmatpush1.xpose.msra.mxu0 0.0
    %4271 = vmatprep.subr.mxu0 0.0
    %4272 = vmatpush1.xpose.msra.mxu0 0.0
    %4273 = vmatprep.subr.mxu0 0.0
    %4274 = vmatpush1.xpose.msra.mxu0 0.0
    %4275 = vmatprep.mubr.f32.mxu0 0.0
    %4276 = vmatmul.mubr.f32.gmra.mrb[0].mxu0 %v4203
    %v4277 = vpop.f32.mrb[0].mxu0
    %v4278 = vadd.f32 0.0, %v4277
    %v4279 = vpop.f32.mrb[0].mxu0
    %4280 = vdwg.mxu0
    %v4282 = vsel %vm3727, %v1254, 0
    %v4285 = vsel %vm3727, %v2150, 0
    %v4288 = vsel %vm3727, %v2286, 0
    %4290 = vmatprep.subr.mxu0 0.0
    %4291 = vmatpush1.xpose.msra.mxu0 %v4285
    %4292 = vmatprep.subr.mxu0 0.0
    %4293 = vmatpush1.xpose.msra.mxu0 %v4288
    %4294 = vmatprep.subr.mxu0 0.0
    %4295 = vmatpush1.xpose.msra.mxu0 0.0
    %4296 = vmatprep.subr.mxu0 0.0
    %4297 = vmatpush1.xpose.msra.mxu0 0.0
    %4298 = vmatprep.subr.mxu0 0.0
    %4299 = vmatpush1.xpose.msra.mxu0 0.0
    %4300 = vmatprep.subr.mxu0 0.0
    %4301 = vmatpush1.xpose.msra.mxu0 0.0
    %4302 = vmatprep.subr.mxu0 0.0
    %4303 = vmatpush1.xpose.msra.mxu0 0.0
    %4304 = vmatprep.subr.mxu0 0.0
    %4305 = vmatpush1.xpose.msra.mxu0 0.0
    %4306 = vmatprep.subr.mxu0 0.0
    %4307 = vmatpush1.xpose.msra.mxu0 0.0
    %4308 = vmatprep.subr.mxu0 0.0
    %4309 = vmatpush1.xpose.msra.mxu0 0.0
    %4310 = vmatprep.subr.mxu0 0.0
    %4311 = vmatpush1.xpose.msra.mxu0 0.0
    %4312 = vmatprep.subr.mxu0 0.0
    %4313 = vmatpush1.xpose.msra.mxu0 0.0
    %4314 = vmatprep.subr.mxu0 0.0
    %4315 = vmatpush1.xpose.msra.mxu0 0.0
    %4316 = vmatprep.subr.mxu0 0.0
    %4317 = vmatpush1.xpose.msra.mxu0 0.0
    %4318 = vmatprep.subr.mxu0 0.0
    %4319 = vmatpush1.xpose.msra.mxu0 0.0
    %4320 = vmatprep.subr.mxu0 0.0
    %4321 = vmatpush1.xpose.msra.mxu0 0.0
    %4322 = vmatprep.subr.mxu0 0.0
    %4323 = vmatpush1.xpose.msra.mxu0 0.0
    %4324 = vmatprep.subr.mxu0 0.0
    %4325 = vmatpush1.xpose.msra.mxu0 0.0
    %4326 = vmatprep.subr.mxu0 0.0
    %4327 = vmatpush1.xpose.msra.mxu0 0.0
    %4328 = vmatprep.subr.mxu0 0.0
    %4329 = vmatpush1.xpose.msra.mxu0 0.0
    %4330 = vmatprep.subr.mxu0 0.0
    %4331 = vmatpush1.xpose.msra.mxu0 0.0
    %4332 = vmatprep.subr.mxu0 0.0
    %4333 = vmatpush1.xpose.msra.mxu0 0.0
    %4334 = vmatprep.subr.mxu0 0.0
    %4335 = vmatpush1.xpose.msra.mxu0 0.0
    %4336 = vmatprep.subr.mxu0 0.0
    %4337 = vmatpush1.xpose.msra.mxu0 0.0
    %4338 = vmatprep.subr.mxu0 0.0
    %4339 = vmatpush1.xpose.msra.mxu0 0.0
    %4340 = vmatprep.subr.mxu0 0.0
    %4341 = vmatpush1.xpose.msra.mxu0 0.0
    %4342 = vmatprep.subr.mxu0 0.0
    %4343 = vmatpush1.xpose.msra.mxu0 0.0
    %4344 = vmatprep.subr.mxu0 0.0
    %4345 = vmatpush1.xpose.msra.mxu0 0.0
    %4346 = vmatprep.subr.mxu0 0.0
    %4347 = vmatpush1.xpose.msra.mxu0 0.0
    %4348 = vmatprep.subr.mxu0 0.0
    %4349 = vmatpush1.xpose.msra.mxu0 0.0
    %4350 = vmatprep.subr.mxu0 0.0
    %4351 = vmatpush1.xpose.msra.mxu0 0.0
    %4352 = vmatprep.subr.mxu0 0.0
    %4353 = vmatpush1.xpose.msra.mxu0 0.0
    %4354 = vmatprep.mubr.f32.mxu0 0.0
    %4355 = vmatmul.mubr.f32.gmra.mrb[0].mxu0 %v4282
    %v4356 = vpop.f32.mrb[0].mxu0
    %v4357 = vadd.f32 0.0, %v4356
    %v4358 = vpop.f32.mrb[0].mxu0
    %4359 = vdwg.mxu0
    %v4361 = vsel %vm3727, %v1383, 0
    %v4364 = vsel %vm3727, %v2415, 0
    %v4367 = vsel %vm3727, %v2551, 0
    %4369 = vmatprep.subr.mxu0 0.0
    %4370 = vmatpush1.xpose.msra.mxu0 %v4364
    %4371 = vmatprep.subr.mxu0 0.0
    %4372 = vmatpush1.xpose.msra.mxu0 %v4367
    %4373 = vmatprep.subr.mxu0 0.0
    %4374 = vmatpush1.xpose.msra.mxu0 0.0
    %4375 = vmatprep.subr.mxu0 0.0
    %4376 = vmatpush1.xpose.msra.mxu0 0.0
    %4377 = vmatprep.subr.mxu0 0.0
    %4378 = vmatpush1.xpose.msra.mxu0 0.0
    %4379 = vmatprep.subr.mxu0 0.0
    %4380 = vmatpush1.xpose.msra.mxu0 0.0
    %4381 = vmatprep.subr.mxu0 0.0
    %4382 = vmatpush1.xpose.msra.mxu0 0.0
    %4383 = vmatprep.subr.mxu0 0.0
    %4384 = vmatpush1.xpose.msra.mxu0 0.0
    %4385 = vmatprep.subr.mxu0 0.0
    %4386 = vmatpush1.xpose.msra.mxu0 0.0
    %4387 = vmatprep.subr.mxu0 0.0
    %4388 = vmatpush1.xpose.msra.mxu0 0.0
    %4389 = vmatprep.subr.mxu0 0.0
    %4390 = vmatpush1.xpose.msra.mxu0 0.0
    %4391 = vmatprep.subr.mxu0 0.0
    %4392 = vmatpush1.xpose.msra.mxu0 0.0
    %4393 = vmatprep.subr.mxu0 0.0
    %4394 = vmatpush1.xpose.msra.mxu0 0.0
    %4395 = vmatprep.subr.mxu0 0.0
    %4396 = vmatpush1.xpose.msra.mxu0 0.0
    %4397 = vmatprep.subr.mxu0 0.0
    %4398 = vmatpush1.xpose.msra.mxu0 0.0
    %4399 = vmatprep.subr.mxu0 0.0
    %4400 = vmatpush1.xpose.msra.mxu0 0.0
    %4401 = vmatprep.subr.mxu0 0.0
    %4402 = vmatpush1.xpose.msra.mxu0 0.0
    %4403 = vmatprep.subr.mxu0 0.0
    %4404 = vmatpush1.xpose.msra.mxu0 0.0
    %4405 = vmatprep.subr.mxu0 0.0
    %4406 = vmatpush1.xpose.msra.mxu0 0.0
    %4407 = vmatprep.subr.mxu0 0.0
    %4408 = vmatpush1.xpose.msra.mxu0 0.0
    %4409 = vmatprep.subr.mxu0 0.0
    %4410 = vmatpush1.xpose.msra.mxu0 0.0
    %4411 = vmatprep.subr.mxu0 0.0
    %4412 = vmatpush1.xpose.msra.mxu0 0.0
    %4413 = vmatprep.subr.mxu0 0.0
    %4414 = vmatpush1.xpose.msra.mxu0 0.0
    %4415 = vmatprep.subr.mxu0 0.0
    %4416 = vmatpush1.xpose.msra.mxu0 0.0
    %4417 = vmatprep.subr.mxu0 0.0
    %4418 = vmatpush1.xpose.msra.mxu0 0.0
    %4419 = vmatprep.subr.mxu0 0.0
    %4420 = vmatpush1.xpose.msra.mxu0 0.0
    %4421 = vmatprep.subr.mxu0 0.0
    %4422 = vmatpush1.xpose.msra.mxu0 0.0
    %4423 = vmatprep.subr.mxu0 0.0
    %4424 = vmatpush1.xpose.msra.mxu0 0.0
    %4425 = vmatprep.subr.mxu0 0.0
    %4426 = vmatpush1.xpose.msra.mxu0 0.0
    %4427 = vmatprep.subr.mxu0 0.0
    %4428 = vmatpush1.xpose.msra.mxu0 0.0
    %4429 = vmatprep.subr.mxu0 0.0
    %4430 = vmatpush1.xpose.msra.mxu0 0.0
    %4431 = vmatprep.subr.mxu0 0.0
    %4432 = vmatpush1.xpose.msra.mxu0 0.0
    %4433 = vmatprep.mubr.f32.mxu0 0.0
    %4434 = vmatmul.mubr.f32.gmra.mrb[0].mxu0 %v4361
    %v4435 = vpop.f32.mrb[0].mxu0
    %v4436 = vadd.f32 0.0, %v4435
    %v4437 = vpop.f32.mrb[0].mxu0
    %4438 = vdwg.mxu0
    %v4440 = vsel %vm3727, %v1384, 0
    %v4443 = vsel %vm3727, %v2416, 0
    %v4446 = vsel %vm3727, %v2552, 0
    %4448 = vmatprep.subr.mxu0 0.0
    %4449 = vmatpush1.xpose.msra.mxu0 %v4443
    %4450 = vmatprep.subr.mxu0 0.0
    %4451 = vmatpush1.xpose.msra.mxu0 %v4446
    %4452 = vmatprep.subr.mxu0 0.0
    %4453 = vmatpush1.xpose.msra.mxu0 0.0
    %4454 = vmatprep.subr.mxu0 0.0
    %4455 = vmatpush1.xpose.msra.mxu0 0.0
    %4456 = vmatprep.subr.mxu0 0.0
    %4457 = vmatpush1.xpose.msra.mxu0 0.0
    %4458 = vmatprep.subr.mxu0 0.0
    %4459 = vmatpush1.xpose.msra.mxu0 0.0
    %4460 = vmatprep.subr.mxu0 0.0
    %4461 = vmatpush1.xpose.msra.mxu0 0.0
    %4462 = vmatprep.subr.mxu0 0.0
    %4463 = vmatpush1.xpose.msra.mxu0 0.0
    %4464 = vmatprep.subr.mxu0 0.0
    %4465 = vmatpush1.xpose.msra.mxu0 0.0
    %4466 = vmatprep.subr.mxu0 0.0
    %4467 = vmatpush1.xpose.msra.mxu0 0.0
    %4468 = vmatprep.subr.mxu0 0.0
    %4469 = vmatpush1.xpose.msra.mxu0 0.0
    %4470 = vmatprep.subr.mxu0 0.0
    %4471 = vmatpush1.xpose.msra.mxu0 0.0
    %4472 = vmatprep.subr.mxu0 0.0
    %4473 = vmatpush1.xpose.msra.mxu0 0.0
    %4474 = vmatprep.subr.mxu0 0.0
    %4475 = vmatpush1.xpose.msra.mxu0 0.0
    %4476 = vmatprep.subr.mxu0 0.0
    %4477 = vmatpush1.xpose.msra.mxu0 0.0
    %4478 = vmatprep.subr.mxu0 0.0
    %4479 = vmatpush1.xpose.msra.mxu0 0.0
    %4480 = vmatprep.subr.mxu0 0.0
    %4481 = vmatpush1.xpose.msra.mxu0 0.0
    %4482 = vmatprep.subr.mxu0 0.0
    %4483 = vmatpush1.xpose.msra.mxu0 0.0
    %4484 = vmatprep.subr.mxu0 0.0
    %4485 = vmatpush1.xpose.msra.mxu0 0.0
    %4486 = vmatprep.subr.mxu0 0.0
    %4487 = vmatpush1.xpose.msra.mxu0 0.0
    %4488 = vmatprep.subr.mxu0 0.0
    %4489 = vmatpush1.xpose.msra.mxu0 0.0
    %4490 = vmatprep.subr.mxu0 0.0
    %4491 = vmatpush1.xpose.msra.mxu0 0.0
    %4492 = vmatprep.subr.mxu0 0.0
    %4493 = vmatpush1.xpose.msra.mxu0 0.0
    %4494 = vmatprep.subr.mxu0 0.0
    %4495 = vmatpush1.xpose.msra.mxu0 0.0
    %4496 = vmatprep.subr.mxu0 0.0
    %4497 = vmatpush1.xpose.msra.mxu0 0.0
    %4498 = vmatprep.subr.mxu0 0.0
    %4499 = vmatpush1.xpose.msra.mxu0 0.0
    %4500 = vmatprep.subr.mxu0 0.0
    %4501 = vmatpush1.xpose.msra.mxu0 0.0
    %4502 = vmatprep.subr.mxu0 0.0
    %4503 = vmatpush1.xpose.msra.mxu0 0.0
    %4504 = vmatprep.subr.mxu0 0.0
    %4505 = vmatpush1.xpose.msra.mxu0 0.0
    %4506 = vmatprep.subr.mxu0 0.0
    %4507 = vmatpush1.xpose.msra.mxu0 0.0
    %4508 = vmatprep.subr.mxu0 0.0
    %4509 = vmatpush1.xpose.msra.mxu0 0.0
    %4510 = vmatprep.subr.mxu0 0.0
    %4511 = vmatpush1.xpose.msra.mxu0 0.0
    %4512 = vmatprep.mubr.f32.mxu0 0.0
    %4513 = vmatmul.mubr.f32.gmra.mrb[0].mxu0 %v4440
    %v4514 = vpop.f32.mrb[0].mxu0
    %v4515 = vadd.f32 0.0, %v4514
    %v4516 = vpop.f32.mrb[0].mxu0
    %4517 = vdwg.mxu0
    %v4519 = vsel %vm3727, %v1385, 0
    %v4522 = vsel %vm3727, %v2417, 0
    %v4525 = vsel %vm3727, %v2553, 0
    %4527 = vmatprep.subr.mxu0 0.0
    %4528 = vmatpush1.xpose.msra.mxu0 %v4522
    %4529 = vmatprep.subr.mxu0 0.0
    %4530 = vmatpush1.xpose.msra.mxu0 %v4525
    %4531 = vmatprep.subr.mxu0 0.0
    %4532 = vmatpush1.xpose.msra.mxu0 0.0
    %4533 = vmatprep.subr.mxu0 0.0
    %4534 = vmatpush1.xpose.msra.mxu0 0.0
    %4535 = vmatprep.subr.mxu0 0.0
    %4536 = vmatpush1.xpose.msra.mxu0 0.0
    %4537 = vmatprep.subr.mxu0 0.0
    %4538 = vmatpush1.xpose.msra.mxu0 0.0
    %4539 = vmatprep.subr.mxu0 0.0
    %4540 = vmatpush1.xpose.msra.mxu0 0.0
    %4541 = vmatprep.subr.mxu0 0.0
    %4542 = vmatpush1.xpose.msra.mxu0 0.0
    %4543 = vmatprep.subr.mxu0 0.0
    %4544 = vmatpush1.xpose.msra.mxu0 0.0
    %4545 = vmatprep.subr.mxu0 0.0
    %4546 = vmatpush1.xpose.msra.mxu0 0.0
    %4547 = vmatprep.subr.mxu0 0.0
    %4548 = vmatpush1.xpose.msra.mxu0 0.0
    %4549 = vmatprep.subr.mxu0 0.0
    %4550 = vmatpush1.xpose.msra.mxu0 0.0
    %4551 = vmatprep.subr.mxu0 0.0
    %4552 = vmatpush1.xpose.msra.mxu0 0.0
    %4553 = vmatprep.subr.mxu0 0.0
    %4554 = vmatpush1.xpose.msra.mxu0 0.0
    %4555 = vmatprep.subr.mxu0 0.0
    %4556 = vmatpush1.xpose.msra.mxu0 0.0
    %4557 = vmatprep.subr.mxu0 0.0
    %4558 = vmatpush1.xpose.msra.mxu0 0.0
    %4559 = vmatprep.subr.mxu0 0.0
    %4560 = vmatpush1.xpose.msra.mxu0 0.0
    %4561 = vmatprep.subr.mxu0 0.0
    %4562 = vmatpush1.xpose.msra.mxu0 0.0
    %4563 = vmatprep.subr.mxu0 0.0
    %4564 = vmatpush1.xpose.msra.mxu0 0.0
    %4565 = vmatprep.subr.mxu0 0.0
    %4566 = vmatpush1.xpose.msra.mxu0 0.0
    %4567 = vmatprep.subr.mxu0 0.0
    %4568 = vmatpush1.xpose.msra.mxu0 0.0
    %4569 = vmatprep.subr.mxu0 0.0
    %4570 = vmatpush1.xpose.msra.mxu0 0.0
    %4571 = vmatprep.subr.mxu0 0.0
    %4572 = vmatpush1.xpose.msra.mxu0 0.0
    %4573 = vmatprep.subr.mxu0 0.0
    %4574 = vmatpush1.xpose.msra.mxu0 0.0
    %4575 = vmatprep.subr.mxu0 0.0
    %4576 = vmatpush1.xpose.msra.mxu0 0.0
    %4577 = vmatprep.subr.mxu0 0.0
    %4578 = vmatpush1.xpose.msra.mxu0 0.0
    %4579 = vmatprep.subr.mxu0 0.0
    %4580 = vmatpush1.xpose.msra.mxu0 0.0
    %4581 = vmatprep.subr.mxu0 0.0
    %4582 = vmatpush1.xpose.msra.mxu0 0.0
    %4583 = vmatprep.subr.mxu0 0.0
    %4584 = vmatpush1.xpose.msra.mxu0 0.0
    %4585 = vmatprep.subr.mxu0 0.0
    %4586 = vmatpush1.xpose.msra.mxu0 0.0
    %4587 = vmatprep.subr.mxu0 0.0
    %4588 = vmatpush1.xpose.msra.mxu0 0.0
    %4589 = vmatprep.subr.mxu0 0.0
    %4590 = vmatpush1.xpose.msra.mxu0 0.0
    %4591 = vmatprep.mubr.f32.mxu0 0.0
    %4592 = vmatmul.mubr.f32.gmra.mrb[0].mxu0 %v4519
    %v4593 = vpop.f32.mrb[0].mxu0
    %v4594 = vadd.f32 0.0, %v4593
    %v4595 = vpop.f32.mrb[0].mxu0
    %4596 = vdwg.mxu0
    %v4598 = vsel %vm3727, %v1386, 0
    %v4601 = vsel %vm3727, %v2418, 0
    %v4604 = vsel %vm3727, %v2554, 0
    %4606 = vmatprep.subr.mxu0 0.0
    %4607 = vmatpush1.xpose.msra.mxu0 %v4601
    %4608 = vmatprep.subr.mxu0 0.0
    %4609 = vmatpush1.xpose.msra.mxu0 %v4604
    %4610 = vmatprep.subr.mxu0 0.0
    %4611 = vmatpush1.xpose.msra.mxu0 0.0
    %4612 = vmatprep.subr.mxu0 0.0
    %4613 = vmatpush1.xpose.msra.mxu0 0.0
    %4614 = vmatprep.subr.mxu0 0.0
    %4615 = vmatpush1.xpose.msra.mxu0 0.0
    %4616 = vmatprep.subr.mxu0 0.0
    %4617 = vmatpush1.xpose.msra.mxu0 0.0
    %4618 = vmatprep.subr.mxu0 0.0
    %4619 = vmatpush1.xpose.msra.mxu0 0.0
    %4620 = vmatprep.subr.mxu0 0.0
    %4621 = vmatpush1.xpose.msra.mxu0 0.0
    %4622 = vmatprep.subr.mxu0 0.0
    %4623 = vmatpush1.xpose.msra.mxu0 0.0
    %4624 = vmatprep.subr.mxu0 0.0
    %4625 = vmatpush1.xpose.msra.mxu0 0.0
    %4626 = vmatprep.subr.mxu0 0.0
    %4627 = vmatpush1.xpose.msra.mxu0 0.0
    %4628 = vmatprep.subr.mxu0 0.0
    %4629 = vmatpush1.xpose.msra.mxu0 0.0
    %4630 = vmatprep.subr.mxu0 0.0
    %4631 = vmatpush1.xpose.msra.mxu0 0.0
    %4632 = vmatprep.subr.mxu0 0.0
    %4633 = vmatpush1.xpose.msra.mxu0 0.0
    %4634 = vmatprep.subr.mxu0 0.0
    %4635 = vmatpush1.xpose.msra.mxu0 0.0
    %4636 = vmatprep.subr.mxu0 0.0
    %4637 = vmatpush1.xpose.msra.mxu0 0.0
    %4638 = vmatprep.subr.mxu0 0.0
    %4639 = vmatpush1.xpose.msra.mxu0 0.0
    %4640 = vmatprep.subr.mxu0 0.0
    %4641 = vmatpush1.xpose.msra.mxu0 0.0
    %4642 = vmatprep.subr.mxu0 0.0
    %4643 = vmatpush1.xpose.msra.mxu0 0.0
    %4644 = vmatprep.subr.mxu0 0.0
    %4645 = vmatpush1.xpose.msra.mxu0 0.0
    %4646 = vmatprep.subr.mxu0 0.0
    %4647 = vmatpush1.xpose.msra.mxu0 0.0
    %4648 = vmatprep.subr.mxu0 0.0
    %4649 = vmatpush1.xpose.msra.mxu0 0.0
    %4650 = vmatprep.subr.mxu0 0.0
    %4651 = vmatpush1.xpose.msra.mxu0 0.0
    %4652 = vmatprep.subr.mxu0 0.0
    %4653 = vmatpush1.xpose.msra.mxu0 0.0
    %4654 = vmatprep.subr.mxu0 0.0
    %4655 = vmatpush1.xpose.msra.mxu0 0.0
    %4656 = vmatprep.subr.mxu0 0.0
    %4657 = vmatpush1.xpose.msra.mxu0 0.0
    %4658 = vmatprep.subr.mxu0 0.0
    %4659 = vmatpush1.xpose.msra.mxu0 0.0
    %4660 = vmatprep.subr.mxu0 0.0
    %4661 = vmatpush1.xpose.msra.mxu0 0.0
    %4662 = vmatprep.subr.mxu0 0.0
    %4663 = vmatpush1.xpose.msra.mxu0 0.0
    %4664 = vmatprep.subr.mxu0 0.0
    %4665 = vmatpush1.xpose.msra.mxu0 0.0
    %4666 = vmatprep.subr.mxu0 0.0
    %4667 = vmatpush1.xpose.msra.mxu0 0.0
    %4668 = vmatprep.subr.mxu0 0.0
    %4669 = vmatpush1.xpose.msra.mxu0 0.0
    %4670 = vmatprep.mubr.f32.mxu0 0.0
    %4671 = vmatmul.mubr.f32.gmra.mrb[0].mxu0 %v4598
    %v4672 = vpop.f32.mrb[0].mxu0
    %v4673 = vadd.f32 0.0, %v4672
    %v4674 = vpop.f32.mrb[0].mxu0
    %4675 = vdwg.mxu0
    %v4677 = vsel %vm3727, %v1387, 0
    %v4680 = vsel %vm3727, %v2419, 0
    %v4683 = vsel %vm3727, %v2555, 0
    %4685 = vmatprep.subr.mxu0 0.0
    %4686 = vmatpush1.xpose.msra.mxu0 %v4680
    %4687 = vmatprep.subr.mxu0 0.0
    %4688 = vmatpush1.xpose.msra.mxu0 %v4683
    %4689 = vmatprep.subr.mxu0 0.0
    %4690 = vmatpush1.xpose.msra.mxu0 0.0
    %4691 = vmatprep.subr.mxu0 0.0
    %4692 = vmatpush1.xpose.msra.mxu0 0.0
    %4693 = vmatprep.subr.mxu0 0.0
    %4694 = vmatpush1.xpose.msra.mxu0 0.0
    %4695 = vmatprep.subr.mxu0 0.0
    %4696 = vmatpush1.xpose.msra.mxu0 0.0
    %4697 = vmatprep.subr.mxu0 0.0
    %4698 = vmatpush1.xpose.msra.mxu0 0.0
    %4699 = vmatprep.subr.mxu0 0.0
    %4700 = vmatpush1.xpose.msra.mxu0 0.0
    %4701 = vmatprep.subr.mxu0 0.0
    %4702 = vmatpush1.xpose.msra.mxu0 0.0
    %4703 = vmatprep.subr.mxu0 0.0
    %4704 = vmatpush1.xpose.msra.mxu0 0.0
    %4705 = vmatprep.subr.mxu0 0.0
    %4706 = vmatpush1.xpose.msra.mxu0 0.0
    %4707 = vmatprep.subr.mxu0 0.0
    %4708 = vmatpush1.xpose.msra.mxu0 0.0
    %4709 = vmatprep.subr.mxu0 0.0
    %4710 = vmatpush1.xpose.msra.mxu0 0.0
    %4711 = vmatprep.subr.mxu0 0.0
    %4712 = vmatpush1.xpose.msra.mxu0 0.0
    %4713 = vmatprep.subr.mxu0 0.0
    %4714 = vmatpush1.xpose.msra.mxu0 0.0
    %4715 = vmatprep.subr.mxu0 0.0
    %4716 = vmatpush1.xpose.msra.mxu0 0.0
    %4717 = vmatprep.subr.mxu0 0.0
    %4718 = vmatpush1.xpose.msra.mxu0 0.0
    %4719 = vmatprep.subr.mxu0 0.0
    %4720 = vmatpush1.xpose.msra.mxu0 0.0
    %4721 = vmatprep.subr.mxu0 0.0
    %4722 = vmatpush1.xpose.msra.mxu0 0.0
    %4723 = vmatprep.subr.mxu0 0.0
    %4724 = vmatpush1.xpose.msra.mxu0 0.0
    %4725 = vmatprep.subr.mxu0 0.0
    %4726 = vmatpush1.xpose.msra.mxu0 0.0
    %4727 = vmatprep.subr.mxu0 0.0
    %4728 = vmatpush1.xpose.msra.mxu0 0.0
    %4729 = vmatprep.subr.mxu0 0.0
    %4730 = vmatpush1.xpose.msra.mxu0 0.0
    %4731 = vmatprep.subr.mxu0 0.0
    %4732 = vmatpush1.xpose.msra.mxu0 0.0
    %4733 = vmatprep.subr.mxu0 0.0
    %4734 = vmatpush1.xpose.msra.mxu0 0.0
    %4735 = vmatprep.subr.mxu0 0.0
    %4736 = vmatpush1.xpose.msra.mxu0 0.0
    %4737 = vmatprep.subr.mxu0 0.0
    %4738 = vmatpush1.xpose.msra.mxu0 0.0
    %4739 = vmatprep.subr.mxu0 0.0
    %4740 = vmatpush1.xpose.msra.mxu0 0.0
    %4741 = vmatprep.subr.mxu0 0.0
    %4742 = vmatpush1.xpose.msra.mxu0 0.0
    %4743 = vmatprep.subr.mxu0 0.0
    %4744 = vmatpush1.xpose.msra.mxu0 0.0
    %4745 = vmatprep.subr.mxu0 0.0
    %4746 = vmatpush1.xpose.msra.mxu0 0.0
    %4747 = vmatprep.subr.mxu0 0.0
    %4748 = vmatpush1.xpose.msra.mxu0 0.0
    %4749 = vmatprep.mubr.f32.mxu0 0.0
    %4750 = vmatmul.mubr.f32.gmra.mrb[0].mxu0 %v4677
    %v4751 = vpop.f32.mrb[0].mxu0
    %v4752 = vadd.f32 0.0, %v4751
    %v4753 = vpop.f32.mrb[0].mxu0
    %4754 = vdwg.mxu0
    %v4756 = vsel %vm3727, %v1388, 0
    %v4759 = vsel %vm3727, %v2420, 0
    %v4762 = vsel %vm3727, %v2556, 0
    %4764 = vmatprep.subr.mxu0 0.0
    %4765 = vmatpush1.xpose.msra.mxu0 %v4759
    %4766 = vmatprep.subr.mxu0 0.0
    %4767 = vmatpush1.xpose.msra.mxu0 %v4762
    %4768 = vmatprep.subr.mxu0 0.0
    %4769 = vmatpush1.xpose.msra.mxu0 0.0
    %4770 = vmatprep.subr.mxu0 0.0
    %4771 = vmatpush1.xpose.msra.mxu0 0.0
    %4772 = vmatprep.subr.mxu0 0.0
    %4773 = vmatpush1.xpose.msra.mxu0 0.0
    %4774 = vmatprep.subr.mxu0 0.0
    %4775 = vmatpush1.xpose.msra.mxu0 0.0
    %4776 = vmatprep.subr.mxu0 0.0
    %4777 = vmatpush1.xpose.msra.mxu0 0.0
    %4778 = vmatprep.subr.mxu0 0.0
    %4779 = vmatpush1.xpose.msra.mxu0 0.0
    %4780 = vmatprep.subr.mxu0 0.0
    %4781 = vmatpush1.xpose.msra.mxu0 0.0
    %4782 = vmatprep.subr.mxu0 0.0
    %4783 = vmatpush1.xpose.msra.mxu0 0.0
    %4784 = vmatprep.subr.mxu0 0.0
    %4785 = vmatpush1.xpose.msra.mxu0 0.0
    %4786 = vmatprep.subr.mxu0 0.0
    %4787 = vmatpush1.xpose.msra.mxu0 0.0
    %4788 = vmatprep.subr.mxu0 0.0
    %4789 = vmatpush1.xpose.msra.mxu0 0.0
    %4790 = vmatprep.subr.mxu0 0.0
    %4791 = vmatpush1.xpose.msra.mxu0 0.0
    %4792 = vmatprep.subr.mxu0 0.0
    %4793 = vmatpush1.xpose.msra.mxu0 0.0
    %4794 = vmatprep.subr.mxu0 0.0
    %4795 = vmatpush1.xpose.msra.mxu0 0.0
    %4796 = vmatprep.subr.mxu0 0.0
    %4797 = vmatpush1.xpose.msra.mxu0 0.0
    %4798 = vmatprep.subr.mxu0 0.0
    %4799 = vmatpush1.xpose.msra.mxu0 0.0
    %4800 = vmatprep.subr.mxu0 0.0
    %4801 = vmatpush1.xpose.msra.mxu0 0.0
    %4802 = vmatprep.subr.mxu0 0.0
    %4803 = vmatpush1.xpose.msra.mxu0 0.0
    %4804 = vmatprep.subr.mxu0 0.0
    %4805 = vmatpush1.xpose.msra.mxu0 0.0
    %4806 = vmatprep.subr.mxu0 0.0
    %4807 = vmatpush1.xpose.msra.mxu0 0.0
    %4808 = vmatprep.subr.mxu0 0.0
    %4809 = vmatpush1.xpose.msra.mxu0 0.0
    %4810 = vmatprep.subr.mxu0 0.0
    %4811 = vmatpush1.xpose.msra.mxu0 0.0
    %4812 = vmatprep.subr.mxu0 0.0
    %4813 = vmatpush1.xpose.msra.mxu0 0.0
    %4814 = vmatprep.subr.mxu0 0.0
    %4815 = vmatpush1.xpose.msra.mxu0 0.0
    %4816 = vmatprep.subr.mxu0 0.0
    %4817 = vmatpush1.xpose.msra.mxu0 0.0
    %4818 = vmatprep.subr.mxu0 0.0
    %4819 = vmatpush1.xpose.msra.mxu0 0.0
    %4820 = vmatprep.subr.mxu0 0.0
    %4821 = vmatpush1.xpose.msra.mxu0 0.0
    %4822 = vmatprep.subr.mxu0 0.0
    %4823 = vmatpush1.xpose.msra.mxu0 0.0
    %4824 = vmatprep.subr.mxu0 0.0
    %4825 = vmatpush1.xpose.msra.mxu0 0.0
    %4826 = vmatprep.subr.mxu0 0.0
    %4827 = vmatpush1.xpose.msra.mxu0 0.0
    %4828 = vmatprep.mubr.f32.mxu0 0.0
    %4829 = vmatmul.mubr.f32.gmra.mrb[0].mxu0 %v4756
    %v4830 = vpop.f32.mrb[0].mxu0
    %v4831 = vadd.f32 0.0, %v4830
    %v4832 = vpop.f32.mrb[0].mxu0
    %4833 = vdwg.mxu0
    %v4835 = vsel %vm3727, %v1389, 0
    %v4838 = vsel %vm3727, %v2421, 0
    %v4841 = vsel %vm3727, %v2557, 0
    %4843 = vmatprep.subr.mxu0 0.0
    %4844 = vmatpush1.xpose.msra.mxu0 %v4838
    %4845 = vmatprep.subr.mxu0 0.0
    %4846 = vmatpush1.xpose.msra.mxu0 %v4841
    %4847 = vmatprep.subr.mxu0 0.0
    %4848 = vmatpush1.xpose.msra.mxu0 0.0
    %4849 = vmatprep.subr.mxu0 0.0
    %4850 = vmatpush1.xpose.msra.mxu0 0.0
    %4851 = vmatprep.subr.mxu0 0.0
    %4852 = vmatpush1.xpose.msra.mxu0 0.0
    %4853 = vmatprep.subr.mxu0 0.0
    %4854 = vmatpush1.xpose.msra.mxu0 0.0
    %4855 = vmatprep.subr.mxu0 0.0
    %4856 = vmatpush1.xpose.msra.mxu0 0.0
    %4857 = vmatprep.subr.mxu0 0.0
    %4858 = vmatpush1.xpose.msra.mxu0 0.0
    %4859 = vmatprep.subr.mxu0 0.0
    %4860 = vmatpush1.xpose.msra.mxu0 0.0
    %4861 = vmatprep.subr.mxu0 0.0
    %4862 = vmatpush1.xpose.msra.mxu0 0.0
    %4863 = vmatprep.subr.mxu0 0.0
    %4864 = vmatpush1.xpose.msra.mxu0 0.0
    %4865 = vmatprep.subr.mxu0 0.0
    %4866 = vmatpush1.xpose.msra.mxu0 0.0
    %4867 = vmatprep.subr.mxu0 0.0
    %4868 = vmatpush1.xpose.msra.mxu0 0.0
    %4869 = vmatprep.subr.mxu0 0.0
    %4870 = vmatpush1.xpose.msra.mxu0 0.0
    %4871 = vmatprep.subr.mxu0 0.0
    %4872 = vmatpush1.xpose.msra.mxu0 0.0
    %4873 = vmatprep.subr.mxu0 0.0
    %4874 = vmatpush1.xpose.msra.mxu0 0.0
    %4875 = vmatprep.subr.mxu0 0.0
    %4876 = vmatpush1.xpose.msra.mxu0 0.0
    %4877 = vmatprep.subr.mxu0 0.0
    %4878 = vmatpush1.xpose.msra.mxu0 0.0
    %4879 = vmatprep.subr.mxu0 0.0
    %4880 = vmatpush1.xpose.msra.mxu0 0.0
    %4881 = vmatprep.subr.mxu0 0.0
    %4882 = vmatpush1.xpose.msra.mxu0 0.0
    %4883 = vmatprep.subr.mxu0 0.0
    %4884 = vmatpush1.xpose.msra.mxu0 0.0
    %4885 = vmatprep.subr.mxu0 0.0
    %4886 = vmatpush1.xpose.msra.mxu0 0.0
    %4887 = vmatprep.subr.mxu0 0.0
    %4888 = vmatpush1.xpose.msra.mxu0 0.0
    %4889 = vmatprep.subr.mxu0 0.0
    %4890 = vmatpush1.xpose.msra.mxu0 0.0
    %4891 = vmatprep.subr.mxu0 0.0
    %4892 = vmatpush1.xpose.msra.mxu0 0.0
    %4893 = vmatprep.subr.mxu0 0.0
    %4894 = vmatpush1.xpose.msra.mxu0 0.0
    %4895 = vmatprep.subr.mxu0 0.0
    %4896 = vmatpush1.xpose.msra.mxu0 0.0
    %4897 = vmatprep.subr.mxu0 0.0
    %4898 = vmatpush1.xpose.msra.mxu0 0.0
    %4899 = vmatprep.subr.mxu0 0.0
    %4900 = vmatpush1.xpose.msra.mxu0 0.0
    %4901 = vmatprep.subr.mxu0 0.0
    %4902 = vmatpush1.xpose.msra.mxu0 0.0
    %4903 = vmatprep.subr.mxu0 0.0
    %4904 = vmatpush1.xpose.msra.mxu0 0.0
    %4905 = vmatprep.subr.mxu0 0.0
    %4906 = vmatpush1.xpose.msra.mxu0 0.0
    %4907 = vmatprep.mubr.f32.mxu0 0.0
    %4908 = vmatmul.mubr.f32.gmra.mrb[0].mxu0 %v4835
    %v4909 = vpop.f32.mrb[0].mxu0
    %v4910 = vadd.f32 0.0, %v4909
    %v4911 = vpop.f32.mrb[0].mxu0
    %4912 = vdwg.mxu0
    %v4914 = vsel %vm3727, %v1390, 0
    %v4917 = vsel %vm3727, %v2422, 0
    %v4920 = vsel %vm3727, %v2558, 0
    %4922 = vmatprep.subr.mxu0 0.0
    %4923 = vmatpush1.xpose.msra.mxu0 %v4917
    %4924 = vmatprep.subr.mxu0 0.0
    %4925 = vmatpush1.xpose.msra.mxu0 %v4920
    %4926 = vmatprep.subr.mxu0 0.0
    %4927 = vmatpush1.xpose.msra.mxu0 0.0
    %4928 = vmatprep.subr.mxu0 0.0
    %4929 = vmatpush1.xpose.msra.mxu0 0.0
    %4930 = vmatprep.subr.mxu0 0.0
    %4931 = vmatpush1.xpose.msra.mxu0 0.0
    %4932 = vmatprep.subr.mxu0 0.0
    %4933 = vmatpush1.xpose.msra.mxu0 0.0
    %4934 = vmatprep.subr.mxu0 0.0
    %4935 = vmatpush1.xpose.msra.mxu0 0.0
    %4936 = vmatprep.subr.mxu0 0.0
    %4937 = vmatpush1.xpose.msra.mxu0 0.0
    %4938 = vmatprep.subr.mxu0 0.0
    %4939 = vmatpush1.xpose.msra.mxu0 0.0
    %4940 = vmatprep.subr.mxu0 0.0
    %4941 = vmatpush1.xpose.msra.mxu0 0.0
    %4942 = vmatprep.subr.mxu0 0.0
    %4943 = vmatpush1.xpose.msra.mxu0 0.0
    %4944 = vmatprep.subr.mxu0 0.0
    %4945 = vmatpush1.xpose.msra.mxu0 0.0
    %4946 = vmatprep.subr.mxu0 0.0
    %4947 = vmatpush1.xpose.msra.mxu0 0.0
    %4948 = vmatprep.subr.mxu0 0.0
    %4949 = vmatpush1.xpose.msra.mxu0 0.0
    %4950 = vmatprep.subr.mxu0 0.0
    %4951 = vmatpush1.xpose.msra.mxu0 0.0
    %4952 = vmatprep.subr.mxu0 0.0
    %4953 = vmatpush1.xpose.msra.mxu0 0.0
    %4954 = vmatprep.subr.mxu0 0.0
    %4955 = vmatpush1.xpose.msra.mxu0 0.0
    %4956 = vmatprep.subr.mxu0 0.0
    %4957 = vmatpush1.xpose.msra.mxu0 0.0
    %4958 = vmatprep.subr.mxu0 0.0
    %4959 = vmatpush1.xpose.msra.mxu0 0.0
    %4960 = vmatprep.subr.mxu0 0.0
    %4961 = vmatpush1.xpose.msra.mxu0 0.0
    %4962 = vmatprep.subr.mxu0 0.0
    %4963 = vmatpush1.xpose.msra.mxu0 0.0
    %4964 = vmatprep.subr.mxu0 0.0
    %4965 = vmatpush1.xpose.msra.mxu0 0.0
    %4966 = vmatprep.subr.mxu0 0.0
    %4967 = vmatpush1.xpose.msra.mxu0 0.0
    %4968 = vmatprep.subr.mxu0 0.0
    %4969 = vmatpush1.xpose.msra.mxu0 0.0
    %4970 = vmatprep.subr.mxu0 0.0
    %4971 = vmatpush1.xpose.msra.mxu0 0.0
    %4972 = vmatprep.subr.mxu0 0.0
    %4973 = vmatpush1.xpose.msra.mxu0 0.0
    %4974 = vmatprep.subr.mxu0 0.0
    %4975 = vmatpush1.xpose.msra.mxu0 0.0
    %4976 = vmatprep.subr.mxu0 0.0
    %4977 = vmatpush1.xpose.msra.mxu0 0.0
    %4978 = vmatprep.subr.mxu0 0.0
    %4979 = vmatpush1.xpose.msra.mxu0 0.0
    %4980 = vmatprep.subr.mxu0 0.0
    %4981 = vmatpush1.xpose.msra.mxu0 0.0
    %4982 = vmatprep.subr.mxu0 0.0
    %4983 = vmatpush1.xpose.msra.mxu0 0.0
    %4984 = vmatprep.subr.mxu0 0.0
    %4985 = vmatpush1.xpose.msra.mxu0 0.0
    %4986 = vmatprep.mubr.f32.mxu0 0.0
    %4987 = vmatmul.mubr.f32.gmra.mrb[0].mxu0 %v4914
    %v4988 = vpop.f32.mrb[0].mxu0
    %v4989 = vadd.f32 0.0, %v4988
    %v4990 = vpop.f32.mrb[0].mxu0
    %4991 = vdwg.mxu0
    %v4992 = vmul.f32 %v3804, 0.17677669
    %v4993 = vmul.f32 %v3883, 0.17677669
    %v4994 = vmul.f32 %v3962, 0.17677669
    %v4995 = vmul.f32 %v4041, 0.17677669
    %v4996 = vmul.f32 %v4120, 0.17677669
    %v4997 = vmul.f32 %v4199, 0.17677669
    %v4998 = vmul.f32 %v4278, 0.17677669
    %v4999 = vmul.f32 %v4357, 0.17677669
    %v5000 = vmul.f32 %v4436, 0.17677669
    %v5001 = vmul.f32 %v4515, 0.17677669
    %v5002 = vmul.f32 %v4594, 0.17677669
    %v5003 = vmul.f32 %v4673, 0.17677669
    %v5004 = vmul.f32 %v4752, 0.17677669
    %v5005 = vmul.f32 %v4831, 0.17677669
    %v5006 = vmul.f32 %v4910, 0.17677669
    %v5007 = vmul.f32 %v4989, 0.17677669
    %vm5008 = vcmask 130048
    %v5009 = vsel %vm5008, %v4992, -inf
    %5010 = vmax.xlane.f32.xlu0 %v5009
    %v5011 = vpop.xlane.xlu0 %5010
    %v5012 = vsel %vm5008, %v4993, -inf
    %5013 = vmax.xlane.f32.xlu0 %v5012
    %v5014 = vpop.xlane.xlu0 %5013
    %v5015 = vsel %vm5008, %v4994, -inf
    %5016 = vmax.xlane.f32.xlu0 %v5015
    %v5017 = vpop.xlane.xlu0 %5016
    %v5018 = vsel %vm5008, %v4995, -inf
    %5019 = vmax.xlane.f32.xlu0 %v5018
    %v5020 = vpop.xlane.xlu0 %5019
    %v5021 = vsel %vm5008, %v4996, -inf
    %5022 = vmax.xlane.f32.xlu0 %v5021
    %v5023 = vpop.xlane.xlu0 %5022
    %v5024 = vsel %vm5008, %v4997, -inf
    %5025 = vmax.xlane.f32.xlu0 %v5024
    %v5026 = vpop.xlane.xlu0 %5025
    %v5027 = vsel %vm5008, %v4998, -inf
    %5028 = vmax.xlane.f32.xlu0 %v5027
    %v5029 = vpop.xlane.xlu0 %5028
    %v5030 = vsel %vm5008, %v4999, -inf
    %5031 = vmax.xlane.f32.xlu0 %v5030
    %v5032 = vpop.xlane.xlu0 %5031
    %v5033 = vsel %vm5008, %v5000, -inf
    %5034 = vmax.xlane.f32.xlu0 %v5033
    %v5035 = vpop.xlane.xlu0 %5034
    %v5036 = vsel %vm5008, %v5001, -inf
    %5037 = vmax.xlane.f32.xlu0 %v5036
    %v5038 = vpop.xlane.xlu0 %5037
    %v5039 = vsel %vm5008, %v5002, -inf
    %5040 = vmax.xlane.f32.xlu0 %v5039
    %v5041 = vpop.xlane.xlu0 %5040
    %v5042 = vsel %vm5008, %v5003, -inf
    %5043 = vmax.xlane.f32.xlu0 %v5042
    %v5044 = vpop.xlane.xlu0 %5043
    %v5045 = vsel %vm5008, %v5004, -inf
    %5046 = vmax.xlane.f32.xlu0 %v5045
    %v5047 = vpop.xlane.xlu0 %5046
    %v5048 = vsel %vm5008, %v5005, -inf
    %5049 = vmax.xlane.f32.xlu0 %v5048
    %v5050 = vpop.xlane.xlu0 %5049
    %v5051 = vsel %vm5008, %v5006, -inf
    %5052 = vmax.xlane.f32.xlu0 %v5051
    %v5053 = vpop.xlane.xlu0 %5052
    %v5054 = vsel %vm5008, %v5007, -inf
    %5055 = vmax.xlane.f32.xlu0 %v5054
    %v5056 = vpop.xlane.xlu0 %5055
    %v5057 = vsub.f32 %v4992, %v5011
    %v5058 = vsub.f32 %v4993, %v5014
    %v5059 = vsub.f32 %v4994, %v5017
    %v5060 = vsub.f32 %v4995, %v5020
    %v5061 = vsub.f32 %v4996, %v5023
    %v5062 = vsub.f32 %v4997, %v5026
    %v5063 = vsub.f32 %v4998, %v5029
    %v5064 = vsub.f32 %v4999, %v5032
    %v5065 = vsub.f32 %v5000, %v5035
    %v5066 = vsub.f32 %v5001, %v5038
    %v5067 = vsub.f32 %v5002, %v5041
    %v5068 = vsub.f32 %v5003, %v5044
    %v5069 = vsub.f32 %v5004, %v5047
    %v5070 = vsub.f32 %v5005, %v5050
    %v5071 = vsub.f32 %v5006, %v5053
    %v5072 = vsub.f32 %v5007, %v5056
    %v5073 = vmul.f32 %v5057, 1.442695
    %v5074 = vpow.pop %v5073
    %v5075 = vmul.f32 %v5058, 1.442695
    %v5076 = vpow.pop %v5075
    %v5077 = vmul.f32 %v5059, 1.442695
    %v5078 = vpow.pop %v5077
    %v5079 = vmul.f32 %v5060, 1.442695
    %v5080 = vpow.pop %v5079
    %v5081 = vmul.f32 %v5061, 1.442695
    %v5082 = vpow.pop %v5081
    %v5083 = vmul.f32 %v5062, 1.442695
    %v5084 = vpow.pop %v5083
    %v5085 = vmul.f32 %v5063, 1.442695
    %v5086 = vpow.pop %v5085
    %v5087 = vmul.f32 %v5064, 1.442695
    %v5088 = vpow.pop %v5087
    %v5089 = vmul.f32 %v5065, 1.442695
    %v5090 = vpow.pop %v5089
    %v5091 = vmul.f32 %v5066, 1.442695
    %v5092 = vpow.pop %v5091
    %v5093 = vmul.f32 %v5067, 1.442695
    %v5094 = vpow.pop %v5093
    %v5095 = vmul.f32 %v5068, 1.442695
    %v5096 = vpow.pop %v5095
    %v5097 = vmul.f32 %v5069, 1.442695
    %v5098 = vpow.pop %v5097
    %v5099 = vmul.f32 %v5070, 1.442695
    %v5100 = vpow.pop %v5099
    %v5101 = vmul.f32 %v5071, 1.442695
    %v5102 = vpow.pop %v5101
    %v5103 = vmul.f32 %v5072, 1.442695
    %v5104 = vpow.pop %v5103
    %v5105 = vsel %vm5008, %v5074, 0.0
    %5106 = vadd.xlane.f32.xlu0 %v5105
    %v5107 = vpop.xlane.xlu0 %5106
    %v5108 = vsel %vm5008, %v5076, 0.0
    %5109 = vadd.xlane.f32.xlu0 %v5108
    %v5110 = vpop.xlane.xlu0 %5109
    %v5111 = vsel %vm5008, %v5078, 0.0
    %5112 = vadd.xlane.f32.xlu0 %v5111
    %v5113 = vpop.xlane.xlu0 %5112
    %v5114 = vsel %vm5008, %v5080, 0.0
    %5115 = vadd.xlane.f32.xlu0 %v5114
    %v5116 = vpop.xlane.xlu0 %5115
    %v5117 = vsel %vm5008, %v5082, 0.0
    %5118 = vadd.xlane.f32.xlu0 %v5117
    %v5119 = vpop.xlane.xlu0 %5118
    %v5120 = vsel %vm5008, %v5084, 0.0
    %5121 = vadd.xlane.f32.xlu0 %v5120
    %v5122 = vpop.xlane.xlu0 %5121
    %v5123 = vsel %vm5008, %v5086, 0.0
    %5124 = vadd.xlane.f32.xlu0 %v5123
    %v5125 = vpop.xlane.xlu0 %5124
    %v5126 = vsel %vm5008, %v5088, 0.0
    %5127 = vadd.xlane.f32.xlu0 %v5126
    %v5128 = vpop.xlane.xlu0 %5127
    %v5129 = vsel %vm5008, %v5090, 0.0
    %5130 = vadd.xlane.f32.xlu0 %v5129
    %v5131 = vpop.xlane.xlu0 %5130
    %v5132 = vsel %vm5008, %v5092, 0.0
    %5133 = vadd.xlane.f32.xlu0 %v5132
    %v5134 = vpop.xlane.xlu0 %5133
    %v5135 = vsel %vm5008, %v5094, 0.0
    %5136 = vadd.xlane.f32.xlu0 %v5135
    %v5137 = vpop.xlane.xlu0 %5136
    %v5138 = vsel %vm5008, %v5096, 0.0
    %5139 = vadd.xlane.f32.xlu0 %v5138
    %v5140 = vpop.xlane.xlu0 %5139
    %v5141 = vsel %vm5008, %v5098, 0.0
    %5142 = vadd.xlane.f32.xlu0 %v5141
    %v5143 = vpop.xlane.xlu0 %5142
    %v5144 = vsel %vm5008, %v5100, 0.0
    %5145 = vadd.xlane.f32.xlu0 %v5144
    %v5146 = vpop.xlane.xlu0 %5145
    %v5147 = vsel %vm5008, %v5102, 0.0
    %5148 = vadd.xlane.f32.xlu0 %v5147
    %v5149 = vpop.xlane.xlu0 %5148
    %v5150 = vsel %vm5008, %v5104, 0.0
    %5151 = vadd.xlane.f32.xlu0 %v5150
    %v5152 = vpop.xlane.xlu0 %5151
    %v5153 = vrcp.pop %v5107
    %v5154 = vrcp.pop %v5110
    %v5155 = vrcp.pop %v5113
    %v5156 = vrcp.pop %v5116
    %v5157 = vrcp.pop %v5119
    %v5158 = vrcp.pop %v5122
    %v5159 = vrcp.pop %v5125
    %v5160 = vrcp.pop %v5128
    %v5161 = vrcp.pop %v5131
    %v5162 = vrcp.pop %v5134
    %v5163 = vrcp.pop %v5137
    %v5164 = vrcp.pop %v5140
    %v5165 = vrcp.pop %v5143
    %v5166 = vrcp.pop %v5146
    %v5167 = vrcp.pop %v5149
    %v5168 = vrcp.pop %v5152
    %v5169 = vmul.f32 %v5074, %v5153
    %v5170 = vmul.f32 %v5076, %v5154
    %v5171 = vmul.f32 %v5078, %v5155
    %v5172 = vmul.f32 %v5080, %v5156
    %v5173 = vmul.f32 %v5082, %v5157
    %v5174 = vmul.f32 %v5084, %v5158
    %v5175 = vmul.f32 %v5086, %v5159
    %v5176 = vmul.f32 %v5088, %v5160
    %v5177 = vmul.f32 %v5090, %v5161
    %v5178 = vmul.f32 %v5092, %v5162
    %v5179 = vmul.f32 %v5094, %v5163
    %v5180 = vmul.f32 %v5096, %v5164
    %v5181 = vmul.f32 %v5098, %v5165
    %v5182 = vmul.f32 %v5100, %v5166
    %v5183 = vmul.f32 %v5102, %v5167
    %v5184 = vmul.f32 %v5104, %v5168
    %v5186 = vsel %vm5008, %v5169, 0
    %5188 = vmatprep.subr.mxu0 0.0
    %5189 = vmatpush1.msra.mxu0 %v3311
    %5190 = vmatprep.subr.mxu0 0.0
    %5191 = vmatpush1.msra.mxu0 %v3447
    %5192 = vmatprep.subr.mxu0 0.0
    %5193 = vmatpush1.msra.mxu0 0.0
    %5194 = vmatprep.subr.mxu0 0.0
    %5195 = vmatpush1.msra.mxu0 0.0
    %5196 = vmatprep.subr.mxu0 0.0
    %5197 = vmatpush1.msra.mxu0 0.0
    %5198 = vmatprep.subr.mxu0 0.0
    %5199 = vmatpush1.msra.mxu0 0.0
    %5200 = vmatprep.subr.mxu0 0.0
    %5201 = vmatpush1.msra.mxu0 0.0
    %5202 = vmatprep.subr.mxu0 0.0
    %5203 = vmatpush1.msra.mxu0 0.0
    %5204 = vmatprep.subr.mxu0 0.0
    %5205 = vmatpush1.msra.mxu0 0.0
    %5206 = vmatprep.subr.mxu0 0.0
    %5207 = vmatpush1.msra.mxu0 0.0
    %5208 = vmatprep.subr.mxu0 0.0
    %5209 = vmatpush1.msra.mxu0 0.0
    %5210 = vmatprep.subr.mxu0 0.0
    %5211 = vmatpush1.msra.mxu0 0.0
    %5212 = vmatprep.subr.mxu0 0.0
    %5213 = vmatpush1.msra.mxu0 0.0
    %5214 = vmatprep.subr.mxu0 0.0
    %5215 = vmatpush1.msra.mxu0 0.0
    %5216 = vmatprep.subr.mxu0 0.0
    %5217 = vmatpush1.msra.mxu0 0.0
    %5218 = vmatprep.subr.mxu0 0.0
    %5219 = vmatpush1.msra.mxu0 0.0
    %5220 = vmatprep.subr.mxu0 0.0
    %5221 = vmatpush1.msra.mxu0 0.0
    %5222 = vmatprep.subr.mxu0 0.0
    %5223 = vmatpush1.msra.mxu0 0.0
    %5224 = vmatprep.subr.mxu0 0.0
    %5225 = vmatpush1.msra.mxu0 0.0
    %5226 = vmatprep.subr.mxu0 0.0
    %5227 = vmatpush1.msra.mxu0 0.0
    %5228 = vmatprep.subr.mxu0 0.0
    %5229 = vmatpush1.msra.mxu0 0.0
    %5230 = vmatprep.subr.mxu0 0.0
    %5231 = vmatpush1.msra.mxu0 0.0
    %5232 = vmatprep.subr.mxu0 0.0
    %5233 = vmatpush1.msra.mxu0 0.0
    %5234 = vmatprep.subr.mxu0 0.0
    %5235 = vmatpush1.msra.mxu0 0.0
    %5236 = vmatprep.subr.mxu0 0.0
    %5237 = vmatpush1.msra.mxu0 0.0
    %5238 = vmatprep.subr.mxu0 0.0
    %5239 = vmatpush1.msra.mxu0 0.0
    %5240 = vmatprep.subr.mxu0 0.0
    %5241 = vmatpush1.msra.mxu0 0.0
    %5242 = vmatprep.subr.mxu0 0.0
    %5243 = vmatpush1.msra.mxu0 0.0
    %5244 = vmatprep.subr.mxu0 0.0
    %5245 = vmatpush1.msra.mxu0 0.0
    %5246 = vmatprep.subr.mxu0 0.0
    %5247 = vmatpush1.msra.mxu0 0.0
    %5248 = vmatprep.subr.mxu0 0.0
    %5249 = vmatpush1.msra.mxu0 0.0
    %5250 = vmatprep.subr.mxu0 0.0
    %5251 = vmatpush1.msra.mxu0 0.0
    %5252 = vmatprep.mubr.f32.mxu0 0.0
    %5253 = vmatmul.mubr.f32.gmra.mrb[0].mxu0 %v5186
    %v5254 = vpop.f32.mrb[0].mxu0
    %v5255 = vadd.f32 0.0, %v5254
    %v5256 = vpop.f32.mrb[0].mxu0
    %5257 = vdwg.mxu0
    %v5259 = vsel %vm5008, %v5170, 0
    %5261 = vmatprep.subr.mxu0 0.0
    %5262 = vmatpush1.msra.mxu0 %v3312
    %5263 = vmatprep.subr.mxu0 0.0
    %5264 = vmatpush1.msra.mxu0 %v3448
    %5265 = vmatprep.subr.mxu0 0.0
    %5266 = vmatpush1.msra.mxu0 0.0
    %5267 = vmatprep.subr.mxu0 0.0
    %5268 = vmatpush1.msra.mxu0 0.0
    %5269 = vmatprep.subr.mxu0 0.0
    %5270 = vmatpush1.msra.mxu0 0.0
    %5271 = vmatprep.subr.mxu0 0.0
    %5272 = vmatpush1.msra.mxu0 0.0
    %5273 = vmatprep.subr.mxu0 0.0
    %5274 = vmatpush1.msra.mxu0 0.0
    %5275 = vmatprep.subr.mxu0 0.0
    %5276 = vmatpush1.msra.mxu0 0.0
    %5277 = vmatprep.subr.mxu0 0.0
    %5278 = vmatpush1.msra.mxu0 0.0
    %5279 = vmatprep.subr.mxu0 0.0
    %5280 = vmatpush1.msra.mxu0 0.0
    %5281 = vmatprep.subr.mxu0 0.0
    %5282 = vmatpush1.msra.mxu0 0.0
    %5283 = vmatprep.subr.mxu0 0.0
    %5284 = vmatpush1.msra.mxu0 0.0
    %5285 = vmatprep.subr.mxu0 0.0
    %5286 = vmatpush1.msra.mxu0 0.0
    %5287 = vmatprep.subr.mxu0 0.0
    %5288 = vmatpush1.msra.mxu0 0.0
    %5289 = vmatprep.subr.mxu0 0.0
    %5290 = vmatpush1.msra.mxu0 0.0
    %5291 = vmatprep.subr.mxu0 0.0
    %5292 = vmatpush1.msra.mxu0 0.0
    %5293 = vmatprep.subr.mxu0 0.0
    %5294 = vmatpush1.msra.mxu0 0.0
    %5295 = vmatprep.subr.mxu0 0.0
    %5296 = vmatpush1.msra.mxu0 0.0
    %5297 = vmatprep.subr.mxu0 0.0
    %5298 = vmatpush1.msra.mxu0 0.0
    %5299 = vmatprep.subr.mxu0 0.0
    %5300 = vmatpush1.msra.mxu0 0.0
    %5301 = vmatprep.subr.mxu0 0.0
    %5302 = vmatpush1.msra.mxu0 0.0
    %5303 = vmatprep.subr.mxu0 0.0
    %5304 = vmatpush1.msra.mxu0 0.0
    %5305 = vmatprep.subr.mxu0 0.0
    %5306 = vmatpush1.msra.mxu0 0.0
    %5307 = vmatprep.subr.mxu0 0.0
    %5308 = vmatpush1.msra.mxu0 0.0
    %5309 = vmatprep.subr.mxu0 0.0
    %5310 = vmatpush1.msra.mxu0 0.0
    %5311 = vmatprep.subr.mxu0 0.0
    %5312 = vmatpush1.msra.mxu0 0.0
    %5313 = vmatprep.subr.mxu0 0.0
    %5314 = vmatpush1.msra.mxu0 0.0
    %5315 = vmatprep.subr.mxu0 0.0
    %5316 = vmatpush1.msra.mxu0 0.0
    %5317 = vmatprep.subr.mxu0 0.0
    %5318 = vmatpush1.msra.mxu0 0.0
    %5319 = vmatprep.subr.mxu0 0.0
    %5320 = vmatpush1.msra.mxu0 0.0
    %5321 = vmatprep.subr.mxu0 0.0
    %5322 = vmatpush1.msra.mxu0 0.0
    %5323 = vmatprep.subr.mxu0 0.0
    %5324 = vmatpush1.msra.mxu0 0.0
    %5325 = vmatprep.mubr.f32.mxu0 0.0
    %5326 = vmatmul.mubr.f32.gmra.mrb[0].mxu0 %v5259
    %v5327 = vpop.f32.mrb[0].mxu0
    %v5328 = vadd.f32 0.0, %v5327
    %v5329 = vpop.f32.mrb[0].mxu0
    %5330 = vdwg.mxu0
    %v5332 = vsel %vm5008, %v5171, 0
    %5334 = vmatprep.subr.mxu0 0.0
    %5335 = vmatpush1.msra.mxu0 %v3313
    %5336 = vmatprep.subr.mxu0 0.0
    %5337 = vmatpush1.msra.mxu0 %v3449
    %5338 = vmatprep.subr.mxu0 0.0
    %5339 = vmatpush1.msra.mxu0 0.0
    %5340 = vmatprep.subr.mxu0 0.0
    %5341 = vmatpush1.msra.mxu0 0.0
    %5342 = vmatprep.subr.mxu0 0.0
    %5343 = vmatpush1.msra.mxu0 0.0
    %5344 = vmatprep.subr.mxu0 0.0
    %5345 = vmatpush1.msra.mxu0 0.0
    %5346 = vmatprep.subr.mxu0 0.0
    %5347 = vmatpush1.msra.mxu0 0.0
    %5348 = vmatprep.subr.mxu0 0.0
    %5349 = vmatpush1.msra.mxu0 0.0
    %5350 = vmatprep.subr.mxu0 0.0
    %5351 = vmatpush1.msra.mxu0 0.0
    %5352 = vmatprep.subr.mxu0 0.0
    %5353 = vmatpush1.msra.mxu0 0.0
    %5354 = vmatprep.subr.mxu0 0.0
    %5355 = vmatpush1.msra.mxu0 0.0
    %5356 = vmatprep.subr.mxu0 0.0
    %5357 = vmatpush1.msra.mxu0 0.0
    %5358 = vmatprep.subr.mxu0 0.0
    %5359 = vmatpush1.msra.mxu0 0.0
    %5360 = vmatprep.subr.mxu0 0.0
    %5361 = vmatpush1.msra.mxu0 0.0
    %5362 = vmatprep.subr.mxu0 0.0
    %5363 = vmatpush1.msra.mxu0 0.0
    %5364 = vmatprep.subr.mxu0 0.0
    %5365 = vmatpush1.msra.mxu0 0.0
    %5366 = vmatprep.subr.mxu0 0.0
    %5367 = vmatpush1.msra.mxu0 0.0
    %5368 = vmatprep.subr.mxu0 0.0
    %5369 = vmatpush1.msra.mxu0 0.0
    %5370 = vmatprep.subr.mxu0 0.0
    %5371 = vmatpush1.msra.mxu0 0.0
    %5372 = vmatprep.subr.mxu0 0.0
    %5373 = vmatpush1.msra.mxu0 0.0
    %5374 = vmatprep.subr.mxu0 0.0
    %5375 = vmatpush1.msra.mxu0 0.0
    %5376 = vmatprep.subr.mxu0 0.0
    %5377 = vmatpush1.msra.mxu0 0.0
    %5378 = vmatprep.subr.mxu0 0.0
    %5379 = vmatpush1.msra.mxu0 0.0
    %5380 = vmatprep.subr.mxu0 0.0
    %5381 = vmatpush1.msra.mxu0 0.0
    %5382 = vmatprep.subr.mxu0 0.0
    %5383 = vmatpush1.msra.mxu0 0.0
    %5384 = vmatprep.subr.mxu0 0.0
    %5385 = vmatpush1.msra.mxu0 0.0
    %5386 = vmatprep.subr.mxu0 0.0
    %5387 = vmatpush1.msra.mxu0 0.0
    %5388 = vmatprep.subr.mxu0 0.0
    %5389 = vmatpush1.msra.mxu0 0.0
    %5390 = vmatprep.subr.mxu0 0.0
    %5391 = vmatpush1.msra.mxu0 0.0
    %5392 = vmatprep.subr.mxu0 0.0
    %5393 = vmatpush1.msra.mxu0 0.0
    %5394 = vmatprep.subr.mxu0 0.0
    %5395 = vmatpush1.msra.mxu0 0.0
    %5396 = vmatprep.subr.mxu0 0.0
    %5397 = vmatpush1.msra.mxu0 0.0
    %5398 = vmatprep.mubr.f32.mxu0 0.0
    %5399 = vmatmul.mubr.f32.gmra.mrb[0].mxu0 %v5332
    %v5400 = vpop.f32.mrb[0].mxu0
    %v5401 = vadd.f32 0.0, %v5400
    %v5402 = vpop.f32.mrb[0].mxu0
    %5403 = vdwg.mxu0
    %v5405 = vsel %vm5008, %v5172, 0
    %5407 = vmatprep.subr.mxu0 0.0
    %5408 = vmatpush1.msra.mxu0 %v3314
    %5409 = vmatprep.subr.mxu0 0.0
    %5410 = vmatpush1.msra.mxu0 %v3450
    %5411 = vmatprep.subr.mxu0 0.0
    %5412 = vmatpush1.msra.mxu0 0.0
    %5413 = vmatprep.subr.mxu0 0.0
    %5414 = vmatpush1.msra.mxu0 0.0
    %5415 = vmatprep.subr.mxu0 0.0
    %5416 = vmatpush1.msra.mxu0 0.0
    %5417 = vmatprep.subr.mxu0 0.0
    %5418 = vmatpush1.msra.mxu0 0.0
    %5419 = vmatprep.subr.mxu0 0.0
    %5420 = vmatpush1.msra.mxu0 0.0
    %5421 = vmatprep.subr.mxu0 0.0
    %5422 = vmatpush1.msra.mxu0 0.0
    %5423 = vmatprep.subr.mxu0 0.0
    %5424 = vmatpush1.msra.mxu0 0.0
    %5425 = vmatprep.subr.mxu0 0.0
    %5426 = vmatpush1.msra.mxu0 0.0
    %5427 = vmatprep.subr.mxu0 0.0
    %5428 = vmatpush1.msra.mxu0 0.0
    %5429 = vmatprep.subr.mxu0 0.0
    %5430 = vmatpush1.msra.mxu0 0.0
    %5431 = vmatprep.subr.mxu0 0.0
    %5432 = vmatpush1.msra.mxu0 0.0
    %5433 = vmatprep.subr.mxu0 0.0
    %5434 = vmatpush1.msra.mxu0 0.0
    %5435 = vmatprep.subr.mxu0 0.0
    %5436 = vmatpush1.msra.mxu0 0.0
    %5437 = vmatprep.subr.mxu0 0.0
    %5438 = vmatpush1.msra.mxu0 0.0
    %5439 = vmatprep.subr.mxu0 0.0
    %5440 = vmatpush1.msra.mxu0 0.0
    %5441 = vmatprep.subr.mxu0 0.0
    %5442 = vmatpush1.msra.mxu0 0.0
    %5443 = vmatprep.subr.mxu0 0.0
    %5444 = vmatpush1.msra.mxu0 0.0
    %5445 = vmatprep.subr.mxu0 0.0
    %5446 = vmatpush1.msra.mxu0 0.0
    %5447 = vmatprep.subr.mxu0 0.0
    %5448 = vmatpush1.msra.mxu0 0.0
    %5449 = vmatprep.subr.mxu0 0.0
    %5450 = vmatpush1.msra.mxu0 0.0
    %5451 = vmatprep.subr.mxu0 0.0
    %5452 = vmatpush1.msra.mxu0 0.0
    %5453 = vmatprep.subr.mxu0 0.0
    %5454 = vmatpush1.msra.mxu0 0.0
    %5455 = vmatprep.subr.mxu0 0.0
    %5456 = vmatpush1.msra.mxu0 0.0
    %5457 = vmatprep.subr.mxu0 0.0
    %5458 = vmatpush1.msra.mxu0 0.0
    %5459 = vmatprep.subr.mxu0 0.0
    %5460 = vmatpush1.msra.mxu0 0.0
    %5461 = vmatprep.subr.mxu0 0.0
    %5462 = vmatpush1.msra.mxu0 0.0
    %5463 = vmatprep.subr.mxu0 0.0
    %5464 = vmatpush1.msra.mxu0 0.0
    %5465 = vmatprep.subr.mxu0 0.0
    %5466 = vmatpush1.msra.mxu0 0.0
    %5467 = vmatprep.subr.mxu0 0.0
    %5468 = vmatpush1.msra.mxu0 0.0
    %5469 = vmatprep.subr.mxu0 0.0
    %5470 = vmatpush1.msra.mxu0 0.0
    %5471 = vmatprep.mubr.f32.mxu0 0.0
    %5472 = vmatmul.mubr.f32.gmra.mrb[0].mxu0 %v5405
    %v5473 = vpop.f32.mrb[0].mxu0
    %v5474 = vadd.f32 0.0, %v5473
    %v5475 = vpop.f32.mrb[0].mxu0
    %5476 = vdwg.mxu0
    %v5478 = vsel %vm5008, %v5173, 0
    %5480 = vmatprep.subr.mxu0 0.0
    %5481 = vmatpush1.msra.mxu0 %v3315
    %5482 = vmatprep.subr.mxu0 0.0
    %5483 = vmatpush1.msra.mxu0 %v3451
    %5484 = vmatprep.subr.mxu0 0.0
    %5485 = vmatpush1.msra.mxu0 0.0
    %5486 = vmatprep.subr.mxu0 0.0
    %5487 = vmatpush1.msra.mxu0 0.0
    %5488 = vmatprep.subr.mxu0 0.0
    %5489 = vmatpush1.msra.mxu0 0.0
    %5490 = vmatprep.subr.mxu0 0.0
    %5491 = vmatpush1.msra.mxu0 0.0
    %5492 = vmatprep.subr.mxu0 0.0
    %5493 = vmatpush1.msra.mxu0 0.0
    %5494 = vmatprep.subr.mxu0 0.0
    %5495 = vmatpush1.msra.mxu0 0.0
    %5496 = vmatprep.subr.mxu0 0.0
    %5497 = vmatpush1.msra.mxu0 0.0
    %5498 = vmatprep.subr.mxu0 0.0
    %5499 = vmatpush1.msra.mxu0 0.0
    %5500 = vmatprep.subr.mxu0 0.0
    %5501 = vmatpush1.msra.mxu0 0.0
    %5502 = vmatprep.subr.mxu0 0.0
    %5503 = vmatpush1.msra.mxu0 0.0
    %5504 = vmatprep.subr.mxu0 0.0
    %5505 = vmatpush1.msra.mxu0 0.0
    %5506 = vmatprep.subr.mxu0 0.0
    %5507 = vmatpush1.msra.mxu0 0.0
    %5508 = vmatprep.subr.mxu0 0.0
    %5509 = vmatpush1.msra.mxu0 0.0
    %5510 = vmatprep.subr.mxu0 0.0
    %5511 = vmatpush1.msra.mxu0 0.0
    %5512 = vmatprep.subr.mxu0 0.0
    %5513 = vmatpush1.msra.mxu0 0.0
    %5514 = vmatprep.subr.mxu0 0.0
    %5515 = vmatpush1.msra.mxu0 0.0
    %5516 = vmatprep.subr.mxu0 0.0
    %5517 = vmatpush1.msra.mxu0 0.0
    %5518 = vmatprep.subr.mxu0 0.0
    %5519 = vmatpush1.msra.mxu0 0.0
    %5520 = vmatprep.subr.mxu0 0.0
    %5521 = vmatpush1.msra.mxu0 0.0
    %5522 = vmatprep.subr.mxu0 0.0
    %5523 = vmatpush1.msra.mxu0 0.0
    %5524 = vmatprep.subr.mxu0 0.0
    %5525 = vmatpush1.msra.mxu0 0.0
    %5526 = vmatprep.subr.mxu0 0.0
    %5527 = vmatpush1.msra.mxu0 0.0
    %5528 = vmatprep.subr.mxu0 0.0
    %5529 = vmatpush1.msra.mxu0 0.0
    %5530 = vmatprep.subr.mxu0 0.0
    %5531 = vmatpush1.msra.mxu0 0.0
    %5532 = vmatprep.subr.mxu0 0.0
    %5533 = vmatpush1.msra.mxu0 0.0
    %5534 = vmatprep.subr.mxu0 0.0
    %5535 = vmatpush1.msra.mxu0 0.0
    %5536 = vmatprep.subr.mxu0 0.0
    %5537 = vmatpush1.msra.mxu0 0.0
    %5538 = vmatprep.subr.mxu0 0.0
    %5539 = vmatpush1.msra.mxu0 0.0
    %5540 = vmatprep.subr.mxu0 0.0
    %5541 = vmatpush1.msra.mxu0 0.0
    %5542 = vmatprep.subr.mxu0 0.0
    %5543 = vmatpush1.msra.mxu0 0.0
    %5544 = vmatprep.mubr.f32.mxu0 0.0
    %5545 = vmatmul.mubr.f32.gmra.mrb[0].mxu0 %v5478
    %v5546 = vpop.f32.mrb[0].mxu0
    %v5547 = vadd.f32 0.0, %v5546
    %v5548 = vpop.f32.mrb[0].mxu0
    %5549 = vdwg.mxu0
    %v5551 = vsel %vm5008, %v5174, 0
    %5553 = vmatprep.subr.mxu0 0.0
    %5554 = vmatpush1.msra.mxu0 %v3316
    %5555 = vmatprep.subr.mxu0 0.0
    %5556 = vmatpush1.msra.mxu0 %v3452
    %5557 = vmatprep.subr.mxu0 0.0
    %5558 = vmatpush1.msra.mxu0 0.0
    %5559 = vmatprep.subr.mxu0 0.0
    %5560 = vmatpush1.msra.mxu0 0.0
    %5561 = vmatprep.subr.mxu0 0.0
    %5562 = vmatpush1.msra.mxu0 0.0
    %5563 = vmatprep.subr.mxu0 0.0
    %5564 = vmatpush1.msra.mxu0 0.0
    %5565 = vmatprep.subr.mxu0 0.0
    %5566 = vmatpush1.msra.mxu0 0.0
    %5567 = vmatprep.subr.mxu0 0.0
    %5568 = vmatpush1.msra.mxu0 0.0
    %5569 = vmatprep.subr.mxu0 0.0
    %5570 = vmatpush1.msra.mxu0 0.0
    %5571 = vmatprep.subr.mxu0 0.0
    %5572 = vmatpush1.msra.mxu0 0.0
    %5573 = vmatprep.subr.mxu0 0.0
    %5574 = vmatpush1.msra.mxu0 0.0
    %5575 = vmatprep.subr.mxu0 0.0
    %5576 = vmatpush1.msra.mxu0 0.0
    %5577 = vmatprep.subr.mxu0 0.0
    %5578 = vmatpush1.msra.mxu0 0.0
    %5579 = vmatprep.subr.mxu0 0.0
    %5580 = vmatpush1.msra.mxu0 0.0
    %5581 = vmatprep.subr.mxu0 0.0
    %5582 = vmatpush1.msra.mxu0 0.0
    %5583 = vmatprep.subr.mxu0 0.0
    %5584 = vmatpush1.msra.mxu0 0.0
    %5585 = vmatprep.subr.mxu0 0.0
    %5586 = vmatpush1.msra.mxu0 0.0
    %5587 = vmatprep.subr.mxu0 0.0
    %5588 = vmatpush1.msra.mxu0 0.0
    %5589 = vmatprep.subr.mxu0 0.0
    %5590 = vmatpush1.msra.mxu0 0.0
    %5591 = vmatprep.subr.mxu0 0.0
    %5592 = vmatpush1.msra.mxu0 0.0
    %5593 = vmatprep.subr.mxu0 0.0
    %5594 = vmatpush1.msra.mxu0 0.0
    %5595 = vmatprep.subr.mxu0 0.0
    %5596 = vmatpush1.msra.mxu0 0.0
    %5597 = vmatprep.subr.mxu0 0.0
    %5598 = vmatpush1.msra.mxu0 0.0
    %5599 = vmatprep.subr.mxu0 0.0
    %5600 = vmatpush1.msra.mxu0 0.0
    %5601 = vmatprep.subr.mxu0 0.0
    %5602 = vmatpush1.msra.mxu0 0.0
    %5603 = vmatprep.subr.mxu0 0.0
    %5604 = vmatpush1.msra.mxu0 0.0
    %5605 = vmatprep.subr.mxu0 0.0
    %5606 = vmatpush1.msra.mxu0 0.0
    %5607 = vmatprep.subr.mxu0 0.0
    %5608 = vmatpush1.msra.mxu0 0.0
    %5609 = vmatprep.subr.mxu0 0.0
    %5610 = vmatpush1.msra.mxu0 0.0
    %5611 = vmatprep.subr.mxu0 0.0
    %5612 = vmatpush1.msra.mxu0 0.0
    %5613 = vmatprep.subr.mxu0 0.0
    %5614 = vmatpush1.msra.mxu0 0.0
    %5615 = vmatprep.subr.mxu0 0.0
    %5616 = vmatpush1.msra.mxu0 0.0
    %5617 = vmatprep.mubr.f32.mxu0 0.0
    %5618 = vmatmul.mubr.f32.gmra.mrb[0].mxu0 %v5551
    %v5619 = vpop.f32.mrb[0].mxu0
    %v5620 = vadd.f32 0.0, %v5619
    %v5621 = vpop.f32.mrb[0].mxu0
    %5622 = vdwg.mxu0
    %v5624 = vsel %vm5008, %v5175, 0
    %5626 = vmatprep.subr.mxu0 0.0
    %5627 = vmatpush1.msra.mxu0 %v3317
    %5628 = vmatprep.subr.mxu0 0.0
    %5629 = vmatpush1.msra.mxu0 %v3453
    %5630 = vmatprep.subr.mxu0 0.0
    %5631 = vmatpush1.msra.mxu0 0.0
    %5632 = vmatprep.subr.mxu0 0.0
    %5633 = vmatpush1.msra.mxu0 0.0
    %5634 = vmatprep.subr.mxu0 0.0
    %5635 = vmatpush1.msra.mxu0 0.0
    %5636 = vmatprep.subr.mxu0 0.0
    %5637 = vmatpush1.msra.mxu0 0.0
    %5638 = vmatprep.subr.mxu0 0.0
    %5639 = vmatpush1.msra.mxu0 0.0
    %5640 = vmatprep.subr.mxu0 0.0
    %5641 = vmatpush1.msra.mxu0 0.0
    %5642 = vmatprep.subr.mxu0 0.0
    %5643 = vmatpush1.msra.mxu0 0.0
    %5644 = vmatprep.subr.mxu0 0.0
    %5645 = vmatpush1.msra.mxu0 0.0
    %5646 = vmatprep.subr.mxu0 0.0
    %5647 = vmatpush1.msra.mxu0 0.0
    %5648 = vmatprep.subr.mxu0 0.0
    %5649 = vmatpush1.msra.mxu0 0.0
    %5650 = vmatprep.subr.mxu0 0.0
    %5651 = vmatpush1.msra.mxu0 0.0
    %5652 = vmatprep.subr.mxu0 0.0
    %5653 = vmatpush1.msra.mxu0 0.0
    %5654 = vmatprep.subr.mxu0 0.0
    %5655 = vmatpush1.msra.mxu0 0.0
    %5656 = vmatprep.subr.mxu0 0.0
    %5657 = vmatpush1.msra.mxu0 0.0
    %5658 = vmatprep.subr.mxu0 0.0
    %5659 = vmatpush1.msra.mxu0 0.0
    %5660 = vmatprep.subr.mxu0 0.0
    %5661 = vmatpush1.msra.mxu0 0.0
    %5662 = vmatprep.subr.mxu0 0.0
    %5663 = vmatpush1.msra.mxu0 0.0
    %5664 = vmatprep.subr.mxu0 0.0
    %5665 = vmatpush1.msra.mxu0 0.0
    %5666 = vmatprep.subr.mxu0 0.0
    %5667 = vmatpush1.msra.mxu0 0.0
    %5668 = vmatprep.subr.mxu0 0.0
    %5669 = vmatpush1.msra.mxu0 0.0
    %5670 = vmatprep.subr.mxu0 0.0
    %5671 = vmatpush1.msra.mxu0 0.0
    %5672 = vmatprep.subr.mxu0 0.0
    %5673 = vmatpush1.msra.mxu0 0.0
    %5674 = vmatprep.subr.mxu0 0.0
    %5675 = vmatpush1.msra.mxu0 0.0
    %5676 = vmatprep.subr.mxu0 0.0
    %5677 = vmatpush1.msra.mxu0 0.0
    %5678 = vmatprep.subr.mxu0 0.0
    %5679 = vmatpush1.msra.mxu0 0.0
    %5680 = vmatprep.subr.mxu0 0.0
    %5681 = vmatpush1.msra.mxu0 0.0
    %5682 = vmatprep.subr.mxu0 0.0
    %5683 = vmatpush1.msra.mxu0 0.0
    %5684 = vmatprep.subr.mxu0 0.0
    %5685 = vmatpush1.msra.mxu0 0.0
    %5686 = vmatprep.subr.mxu0 0.0
    %5687 = vmatpush1.msra.mxu0 0.0
    %5688 = vmatprep.subr.mxu0 0.0
    %5689 = vmatpush1.msra.mxu0 0.0
    %5690 = vmatprep.mubr.f32.mxu0 0.0
    %5691 = vmatmul.mubr.f32.gmra.mrb[0].mxu0 %v5624
    %v5692 = vpop.f32.mrb[0].mxu0
    %v5693 = vadd.f32 0.0, %v5692
    %v5694 = vpop.f32.mrb[0].mxu0
    %5695 = vdwg.mxu0
    %v5697 = vsel %vm5008, %v5176, 0
    %5699 = vmatprep.subr.mxu0 0.0
    %5700 = vmatpush1.msra.mxu0 %v3318
    %5701 = vmatprep.subr.mxu0 0.0
    %5702 = vmatpush1.msra.mxu0 %v3454
    %5703 = vmatprep.subr.mxu0 0.0
    %5704 = vmatpush1.msra.mxu0 0.0
    %5705 = vmatprep.subr.mxu0 0.0
    %5706 = vmatpush1.msra.mxu0 0.0
    %5707 = vmatprep.subr.mxu0 0.0
    %5708 = vmatpush1.msra.mxu0 0.0
    %5709 = vmatprep.subr.mxu0 0.0
    %5710 = vmatpush1.msra.mxu0 0.0
    %5711 = vmatprep.subr.mxu0 0.0
    %5712 = vmatpush1.msra.mxu0 0.0
    %5713 = vmatprep.subr.mxu0 0.0
    %5714 = vmatpush1.msra.mxu0 0.0
    %5715 = vmatprep.subr.mxu0 0.0
    %5716 = vmatpush1.msra.mxu0 0.0
    %5717 = vmatprep.subr.mxu0 0.0
    %5718 = vmatpush1.msra.mxu0 0.0
    %5719 = vmatprep.subr.mxu0 0.0
    %5720 = vmatpush1.msra.mxu0 0.0
    %5721 = vmatprep.subr.mxu0 0.0
    %5722 = vmatpush1.msra.mxu0 0.0
    %5723 = vmatprep.subr.mxu0 0.0
    %5724 = vmatpush1.msra.mxu0 0.0
    %5725 = vmatprep.subr.mxu0 0.0
    %5726 = vmatpush1.msra.mxu0 0.0
    %5727 = vmatprep.subr.mxu0 0.0
    %5728 = vmatpush1.msra.mxu0 0.0
    %5729 = vmatprep.subr.mxu0 0.0
    %5730 = vmatpush1.msra.mxu0 0.0
    %5731 = vmatprep.subr.mxu0 0.0
    %5732 = vmatpush1.msra.mxu0 0.0
    %5733 = vmatprep.subr.mxu0 0.0
    %5734 = vmatpush1.msra.mxu0 0.0
    %5735 = vmatprep.subr.mxu0 0.0
    %5736 = vmatpush1.msra.mxu0 0.0
    %5737 = vmatprep.subr.mxu0 0.0
    %5738 = vmatpush1.msra.mxu0 0.0
    %5739 = vmatprep.subr.mxu0 0.0
    %5740 = vmatpush1.msra.mxu0 0.0
    %5741 = vmatprep.subr.mxu0 0.0
    %5742 = vmatpush1.msra.mxu0 0.0
    %5743 = vmatprep.subr.mxu0 0.0
    %5744 = vmatpush1.msra.mxu0 0.0
    %5745 = vmatprep.subr.mxu0 0.0
    %5746 = vmatpush1.msra.mxu0 0.0
    %5747 = vmatprep.subr.mxu0 0.0
    %5748 = vmatpush1.msra.mxu0 0.0
    %5749 = vmatprep.subr.mxu0 0.0
    %5750 = vmatpush1.msra.mxu0 0.0
    %5751 = vmatprep.subr.mxu0 0.0
    %5752 = vmatpush1.msra.mxu0 0.0
    %5753 = vmatprep.subr.mxu0 0.0
    %5754 = vmatpush1.msra.mxu0 0.0
    %5755 = vmatprep.subr.mxu0 0.0
    %5756 = vmatpush1.msra.mxu0 0.0
    %5757 = vmatprep.subr.mxu0 0.0
    %5758 = vmatpush1.msra.mxu0 0.0
    %5759 = vmatprep.subr.mxu0 0.0
    %5760 = vmatpush1.msra.mxu0 0.0
    %5761 = vmatprep.subr.mxu0 0.0
    %5762 = vmatpush1.msra.mxu0 0.0
    %5763 = vmatprep.mubr.f32.mxu0 0.0
    %5764 = vmatmul.mubr.f32.gmra.mrb[0].mxu0 %v5697
    %v5765 = vpop.f32.mrb[0].mxu0
    %v5766 = vadd.f32 0.0, %v5765
    %v5767 = vpop.f32.mrb[0].mxu0
    %5768 = vdwg.mxu0
    %v5770 = vsel %vm5008, %v5177, 0
    %5772 = vmatprep.subr.mxu0 0.0
    %5773 = vmatpush1.msra.mxu0 %v3583
    %5774 = vmatprep.subr.mxu0 0.0
    %5775 = vmatpush1.msra.mxu0 %v3719
    %5776 = vmatprep.subr.mxu0 0.0
    %5777 = vmatpush1.msra.mxu0 0.0
    %5778 = vmatprep.subr.mxu0 0.0
    %5779 = vmatpush1.msra.mxu0 0.0
    %5780 = vmatprep.subr.mxu0 0.0
    %5781 = vmatpush1.msra.mxu0 0.0
    %5782 = vmatprep.subr.mxu0 0.0
    %5783 = vmatpush1.msra.mxu0 0.0
    %5784 = vmatprep.subr.mxu0 0.0
    %5785 = vmatpush1.msra.mxu0 0.0
    %5786 = vmatprep.subr.mxu0 0.0
    %5787 = vmatpush1.msra.mxu0 0.0
    %5788 = vmatprep.subr.mxu0 0.0
    %5789 = vmatpush1.msra.mxu0 0.0
    %5790 = vmatprep.subr.mxu0 0.0
    %5791 = vmatpush1.msra.mxu0 0.0
    %5792 = vmatprep.subr.mxu0 0.0
    %5793 = vmatpush1.msra.mxu0 0.0
    %5794 = vmatprep.subr.mxu0 0.0
    %5795 = vmatpush1.msra.mxu0 0.0
    %5796 = vmatprep.subr.mxu0 0.0
    %5797 = vmatpush1.msra.mxu0 0.0
    %5798 = vmatprep.subr.mxu0 0.0
    %5799 = vmatpush1.msra.mxu0 0.0
    %5800 = vmatprep.subr.mxu0 0.0
    %5801 = vmatpush1.msra.mxu0 0.0
    %5802 = vmatprep.subr.mxu0 0.0
    %5803 = vmatpush1.msra.mxu0 0.0
    %5804 = vmatprep.subr.mxu0 0.0
    %5805 = vmatpush1.msra.mxu0 0.0
    %5806 = vmatprep.subr.mxu0 0.0
    %5807 = vmatpush1.msra.mxu0 0.0
    %5808 = vmatprep.subr.mxu0 0.0
    %5809 = vmatpush1.msra.mxu0 0.0
    %5810 = vmatprep.subr.mxu0 0.0
    %5811 = vmatpush1.msra.mxu0 0.0
    %5812 = vmatprep.subr.mxu0 0.0
    %5813 = vmatpush1.msra.mxu0 0.0
    %5814 = vmatprep.subr.mxu0 0.0
    %5815 = vmatpush1.msra.mxu0 0.0
    %5816 = vmatprep.subr.mxu0 0.0
    %5817 = vmatpush1.msra.mxu0 0.0
    %5818 = vmatprep.subr.mxu0 0.0
    %5819 = vmatpush1.msra.mxu0 0.0
    %5820 = vmatprep.subr.mxu0 0.0
    %5821 = vmatpush1.msra.mxu0 0.0
    %5822 = vmatprep.subr.mxu0 0.0
    %5823 = vmatpush1.msra.mxu0 0.0
    %5824 = vmatprep.subr.mxu0 0.0
    %5825 = vmatpush1.msra.mxu0 0.0
    %5826 = vmatprep.subr.mxu0 0.0
    %5827 = vmatpush1.msra.mxu0 0.0
    %5828 = vmatprep.subr.mxu0 0.0
    %5829 = vmatpush1.msra.mxu0 0.0
    %5830 = vmatprep.subr.mxu0 0.0
    %5831 = vmatpush1.msra.mxu0 0.0
    %5832 = vmatprep.subr.mxu0 0.0
    %5833 = vmatpush1.msra.mxu0 0.0
    %5834 = vmatprep.subr.mxu0 0.0
    %5835 = vmatpush1.msra.mxu0 0.0
    %5836 = vmatprep.mubr.f32.mxu0 0.0
    %5837 = vmatmul.mubr.f32.gmra.mrb[0].mxu0 %v5770
    %v5838 = vpop.f32.mrb[0].mxu0
    %v5839 = vadd.f32 0.0, %v5838
    %v5840 = vpop.f32.mrb[0].mxu0
    %5841 = vdwg.mxu0
    %v5843 = vsel %vm5008, %v5178, 0
    %5845 = vmatprep.subr.mxu0 0.0
    %5846 = vmatpush1.msra.mxu0 %v3584
    %5847 = vmatprep.subr.mxu0 0.0
    %5848 = vmatpush1.msra.mxu0 %v3720
    %5849 = vmatprep.subr.mxu0 0.0
    %5850 = vmatpush1.msra.mxu0 0.0
    %5851 = vmatprep.subr.mxu0 0.0
    %5852 = vmatpush1.msra.mxu0 0.0
    %5853 = vmatprep.subr.mxu0 0.0
    %5854 = vmatpush1.msra.mxu0 0.0
    %5855 = vmatprep.subr.mxu0 0.0
    %5856 = vmatpush1.msra.mxu0 0.0
    %5857 = vmatprep.subr.mxu0 0.0
    %5858 = vmatpush1.msra.mxu0 0.0
    %5859 = vmatprep.subr.mxu0 0.0
    %5860 = vmatpush1.msra.mxu0 0.0
    %5861 = vmatprep.subr.mxu0 0.0
    %5862 = vmatpush1.msra.mxu0 0.0
    %5863 = vmatprep.subr.mxu0 0.0
    %5864 = vmatpush1.msra.mxu0 0.0
    %5865 = vmatprep.subr.mxu0 0.0
    %5866 = vmatpush1.msra.mxu0 0.0
    %5867 = vmatprep.subr.mxu0 0.0
    %5868 = vmatpush1.msra.mxu0 0.0
    %5869 = vmatprep.subr.mxu0 0.0
    %5870 = vmatpush1.msra.mxu0 0.0
    %5871 = vmatprep.subr.mxu0 0.0
    %5872 = vmatpush1.msra.mxu0 0.0
    %5873 = vmatprep.subr.mxu0 0.0
    %5874 = vmatpush1.msra.mxu0 0.0
    %5875 = vmatprep.subr.mxu0 0.0
    %5876 = vmatpush1.msra.mxu0 0.0
    %5877 = vmatprep.subr.mxu0 0.0
    %5878 = vmatpush1.msra.mxu0 0.0
    %5879 = vmatprep.subr.mxu0 0.0
    %5880 = vmatpush1.msra.mxu0 0.0
    %5881 = vmatprep.subr.mxu0 0.0
    %5882 = vmatpush1.msra.mxu0 0.0
    %5883 = vmatprep.subr.mxu0 0.0
    %5884 = vmatpush1.msra.mxu0 0.0
    %5885 = vmatprep.subr.mxu0 0.0
    %5886 = vmatpush1.msra.mxu0 0.0
    %5887 = vmatprep.subr.mxu0 0.0
    %5888 = vmatpush1.msra.mxu0 0.0
    %5889 = vmatprep.subr.mxu0 0.0
    %5890 = vmatpush1.msra.mxu0 0.0
    %5891 = vmatprep.subr.mxu0 0.0
    %5892 = vmatpush1.msra.mxu0 0.0
    %5893 = vmatprep.subr.mxu0 0.0
    %5894 = vmatpush1.msra.mxu0 0.0
    %5895 = vmatprep.subr.mxu0 0.0
    %5896 = vmatpush1.msra.mxu0 0.0
    %5897 = vmatprep.subr.mxu0 0.0
    %5898 = vmatpush1.msra.mxu0 0.0
    %5899 = vmatprep.subr.mxu0 0.0
    %5900 = vmatpush1.msra.mxu0 0.0
    %5901 = vmatprep.subr.mxu0 0.0
    %5902 = vmatpush1.msra.mxu0 0.0
    %5903 = vmatprep.subr.mxu0 0.0
    %5904 = vmatpush1.msra.mxu0 0.0
    %5905 = vmatprep.subr.mxu0 0.0
    %5906 = vmatpush1.msra.mxu0 0.0
    %5907 = vmatprep.subr.mxu0 0.0
    %5908 = vmatpush1.msra.mxu0 0.0
    %5909 = vmatprep.mubr.f32.mxu0 0.0
    %5910 = vmatmul.mubr.f32.gmra.mrb[0].mxu0 %v5843
    %v5911 = vpop.f32.mrb[0].mxu0
    %v5912 = vadd.f32 0.0, %v5911
    %v5913 = vpop.f32.mrb[0].mxu0
    %5914 = vdwg.mxu0
    %v5916 = vsel %vm5008, %v5179, 0
    %5918 = vmatprep.subr.mxu0 0.0
    %5919 = vmatpush1.msra.mxu0 %v3585
    %5920 = vmatprep.subr.mxu0 0.0
    %5921 = vmatpush1.msra.mxu0 %v3721
    %5922 = vmatprep.subr.mxu0 0.0
    %5923 = vmatpush1.msra.mxu0 0.0
    %5924 = vmatprep.subr.mxu0 0.0
    %5925 = vmatpush1.msra.mxu0 0.0
    %5926 = vmatprep.subr.mxu0 0.0
    %5927 = vmatpush1.msra.mxu0 0.0
    %5928 = vmatprep.subr.mxu0 0.0
    %5929 = vmatpush1.msra.mxu0 0.0
    %5930 = vmatprep.subr.mxu0 0.0
    %5931 = vmatpush1.msra.mxu0 0.0
    %5932 = vmatprep.subr.mxu0 0.0
    %5933 = vmatpush1.msra.mxu0 0.0
    %5934 = vmatprep.subr.mxu0 0.0
    %5935 = vmatpush1.msra.mxu0 0.0
    %5936 = vmatprep.subr.mxu0 0.0
    %5937 = vmatpush1.msra.mxu0 0.0
    %5938 = vmatprep.subr.mxu0 0.0
    %5939 = vmatpush1.msra.mxu0 0.0
    %5940 = vmatprep.subr.mxu0 0.0
    %5941 = vmatpush1.msra.mxu0 0.0
    %5942 = vmatprep.subr.mxu0 0.0
    %5943 = vmatpush1.msra.mxu0 0.0
    %5944 = vmatprep.subr.mxu0 0.0
    %5945 = vmatpush1.msra.mxu0 0.0
    %5946 = vmatprep.subr.mxu0 0.0
    %5947 = vmatpush1.msra.mxu0 0.0
    %5948 = vmatprep.subr.mxu0 0.0
    %5949 = vmatpush1.msra.mxu0 0.0
    %5950 = vmatprep.subr.mxu0 0.0
    %5951 = vmatpush1.msra.mxu0 0.0
    %5952 = vmatprep.subr.mxu0 0.0
    %5953 = vmatpush1.msra.mxu0 0.0
    %5954 = vmatprep.subr.mxu0 0.0
    %5955 = vmatpush1.msra.mxu0 0.0
    %5956 = vmatprep.subr.mxu0 0.0
    %5957 = vmatpush1.msra.mxu0 0.0
    %5958 = vmatprep.subr.mxu0 0.0
    %5959 = vmatpush1.msra.mxu0 0.0
    %5960 = vmatprep.subr.mxu0 0.0
    %5961 = vmatpush1.msra.mxu0 0.0
    %5962 = vmatprep.subr.mxu0 0.0
    %5963 = vmatpush1.msra.mxu0 0.0
    %5964 = vmatprep.subr.mxu0 0.0
    %5965 = vmatpush1.msra.mxu0 0.0
    %5966 = vmatprep.subr.mxu0 0.0
    %5967 = vmatpush1.msra.mxu0 0.0
    %5968 = vmatprep.subr.mxu0 0.0
    %5969 = vmatpush1.msra.mxu0 0.0
    %5970 = vmatprep.subr.mxu0 0.0
    %5971 = vmatpush1.msra.mxu0 0.0
    %5972 = vmatprep.subr.mxu0 0.0
    %5973 = vmatpush1.msra.mxu0 0.0
    %5974 = vmatprep.subr.mxu0 0.0
    %5975 = vmatpush1.msra.mxu0 0.0
    %5976 = vmatprep.subr.mxu0 0.0
    %5977 = vmatpush1.msra.mxu0 0.0
    %5978 = vmatprep.subr.mxu0 0.0
    %5979 = vmatpush1.msra.mxu0 0.0
    %5980 = vmatprep.subr.mxu0 0.0
    %5981 = vmatpush1.msra.mxu0 0.0
    %5982 = vmatprep.mubr.f32.mxu0 0.0
    %5983 = vmatmul.mubr.f32.gmra.mrb[0].mxu0 %v5916
    %v5984 = vpop.f32.mrb[0].mxu0
    %v5985 = vadd.f32 0.0, %v5984
    %v5986 = vpop.f32.mrb[0].mxu0
    %5987 = vdwg.mxu0
    %v5989 = vsel %vm5008, %v5180, 0
    %5991 = vmatprep.subr.mxu0 0.0
    %5992 = vmatpush1.msra.mxu0 %v3586
    %5993 = vmatprep.subr.mxu0 0.0
    %5994 = vmatpush1.msra.mxu0 %v3722
    %5995 = vmatprep.subr.mxu0 0.0
    %5996 = vmatpush1.msra.mxu0 0.0
    %5997 = vmatprep.subr.mxu0 0.0
    %5998 = vmatpush1.msra.mxu0 0.0
    %5999 = vmatprep.subr.mxu0 0.0
    %6000 = vmatpush1.msra.mxu0 0.0
    %6001 = vmatprep.subr.mxu0 0.0
    %6002 = vmatpush1.msra.mxu0 0.0
    %6003 = vmatprep.subr.mxu0 0.0
    %6004 = vmatpush1.msra.mxu0 0.0
    %6005 = vmatprep.subr.mxu0 0.0
    %6006 = vmatpush1.msra.mxu0 0.0
    %6007 = vmatprep.subr.mxu0 0.0
    %6008 = vmatpush1.msra.mxu0 0.0
    %6009 = vmatprep.subr.mxu0 0.0
    %6010 = vmatpush1.msra.mxu0 0.0
    %6011 = vmatprep.subr.mxu0 0.0
    %6012 = vmatpush1.msra.mxu0 0.0
    %6013 = vmatprep.subr.mxu0 0.0
    %6014 = vmatpush1.msra.mxu0 0.0
    %6015 = vmatprep.subr.mxu0 0.0
    %6016 = vmatpush1.msra.mxu0 0.0
    %6017 = vmatprep.subr.mxu0 0.0
    %6018 = vmatpush1.msra.mxu0 0.0
    %6019 = vmatprep.subr.mxu0 0.0
    %6020 = vmatpush1.msra.mxu0 0.0
    %6021 = vmatprep.subr.mxu0 0.0
    %6022 = vmatpush1.msra.mxu0 0.0
    %6023 = vmatprep.subr.mxu0 0.0
    %6024 = vmatpush1.msra.mxu0 0.0
    %6025 = vmatprep.subr.mxu0 0.0
    %6026 = vmatpush1.msra.mxu0 0.0
    %6027 = vmatprep.subr.mxu0 0.0
    %6028 = vmatpush1.msra.mxu0 0.0
    %6029 = vmatprep.subr.mxu0 0.0
    %6030 = vmatpush1.msra.mxu0 0.0
    %6031 = vmatprep.subr.mxu0 0.0
    %6032 = vmatpush1.msra.mxu0 0.0
    %6033 = vmatprep.subr.mxu0 0.0
    %6034 = vmatpush1.msra.mxu0 0.0
    %6035 = vmatprep.subr.mxu0 0.0
    %6036 = vmatpush1.msra.mxu0 0.0
    %6037 = vmatprep.subr.mxu0 0.0
    %6038 = vmatpush1.msra.mxu0 0.0
    %6039 = vmatprep.subr.mxu0 0.0
    %6040 = vmatpush1.msra.mxu0 0.0
    %6041 = vmatprep.subr.mxu0 0.0
    %6042 = vmatpush1.msra.mxu0 0.0
    %6043 = vmatprep.subr.mxu0 0.0
    %6044 = vmatpush1.msra.mxu0 0.0
    %6045 = vmatprep.subr.mxu0 0.0
    %6046 = vmatpush1.msra.mxu0 0.0
    %6047 = vmatprep.subr.mxu0 0.0
    %6048 = vmatpush1.msra.mxu0 0.0
    %6049 = vmatprep.subr.mxu0 0.0
    %6050 = vmatpush1.msra.mxu0 0.0
    %6051 = vmatprep.subr.mxu0 0.0
    %6052 = vmatpush1.msra.mxu0 0.0
    %6053 = vmatprep.subr.mxu0 0.0
    %6054 = vmatpush1.msra.mxu0 0.0
    %6055 = vmatprep.mubr.f32.mxu0 0.0
    %6056 = vmatmul.mubr.f32.gmra.mrb[0].mxu0 %v5989
    %v6057 = vpop.f32.mrb[0].mxu0
    %v6058 = vadd.f32 0.0, %v6057
    %v6059 = vpop.f32.mrb[0].mxu0
    %6060 = vdwg.mxu0
    %v6062 = vsel %vm5008, %v5181, 0
    %6064 = vmatprep.subr.mxu0 0.0
    %6065 = vmatpush1.msra.mxu0 %v3587
    %6066 = vmatprep.subr.mxu0 0.0
    %6067 = vmatpush1.msra.mxu0 %v3723
    %6068 = vmatprep.subr.mxu0 0.0
    %6069 = vmatpush1.msra.mxu0 0.0
    %6070 = vmatprep.subr.mxu0 0.0
    %6071 = vmatpush1.msra.mxu0 0.0
    %6072 = vmatprep.subr.mxu0 0.0
    %6073 = vmatpush1.msra.mxu0 0.0
    %6074 = vmatprep.subr.mxu0 0.0
    %6075 = vmatpush1.msra.mxu0 0.0
    %6076 = vmatprep.subr.mxu0 0.0
    %6077 = vmatpush1.msra.mxu0 0.0
    %6078 = vmatprep.subr.mxu0 0.0
    %6079 = vmatpush1.msra.mxu0 0.0
    %6080 = vmatprep.subr.mxu0 0.0
    %6081 = vmatpush1.msra.mxu0 0.0
    %6082 = vmatprep.subr.mxu0 0.0
    %6083 = vmatpush1.msra.mxu0 0.0
    %6084 = vmatprep.subr.mxu0 0.0
    %6085 = vmatpush1.msra.mxu0 0.0
    %6086 = vmatprep.subr.mxu0 0.0
    %6087 = vmatpush1.msra.mxu0 0.0
    %6088 = vmatprep.subr.mxu0 0.0
    %6089 = vmatpush1.msra.mxu0 0.0
    %6090 = vmatprep.subr.mxu0 0.0
    %6091 = vmatpush1.msra.mxu0 0.0
    %6092 = vmatprep.subr.mxu0 0.0
    %6093 = vmatpush1.msra.mxu0 0.0
    %6094 = vmatprep.subr.mxu0 0.0
    %6095 = vmatpush1.msra.mxu0 0.0
    %6096 = vmatprep.subr.mxu0 0.0
    %6097 = vmatpush1.msra.mxu0 0.0
    %6098 = vmatprep.subr.mxu0 0.0
    %6099 = vmatpush1.msra.mxu0 0.0
    %6100 = vmatprep.subr.mxu0 0.0
    %6101 = vmatpush1.msra.mxu0 0.0
    %6102 = vmatprep.subr.mxu0 0.0
    %6103 = vmatpush1.msra.mxu0 0.0
    %6104 = vmatprep.subr.mxu0 0.0
    %6105 = vmatpush1.msra.mxu0 0.0
    %6106 = vmatprep.subr.mxu0 0.0
    %6107 = vmatpush1.msra.mxu0 0.0
    %6108 = vmatprep.subr.mxu0 0.0
    %6109 = vmatpush1.msra.mxu0 0.0
    %6110 = vmatprep.subr.mxu0 0.0
    %6111 = vmatpush1.msra.mxu0 0.0
    %6112 = vmatprep.subr.mxu0 0.0
    %6113 = vmatpush1.msra.mxu0 0.0
    %6114 = vmatprep.subr.mxu0 0.0
    %6115 = vmatpush1.msra.mxu0 0.0
    %6116 = vmatprep.subr.mxu0 0.0
    %6117 = vmatpush1.msra.mxu0 0.0
    %6118 = vmatprep.subr.mxu0 0.0
    %6119 = vmatpush1.msra.mxu0 0.0
    %6120 = vmatprep.subr.mxu0 0.0
    %6121 = vmatpush1.msra.mxu0 0.0
    %6122 = vmatprep.subr.mxu0 0.0
    %6123 = vmatpush1.msra.mxu0 0.0
    %6124 = vmatprep.subr.mxu0 0.0
    %6125 = vmatpush1.msra.mxu0 0.0
    %6126 = vmatprep.subr.mxu0 0.0
    %6127 = vmatpush1.msra.mxu0 0.0
    %6128 = vmatprep.mubr.f32.mxu0 0.0
    %6129 = vmatmul.mubr.f32.gmra.mrb[0].mxu0 %v6062
    %v6130 = vpop.f32.mrb[0].mxu0
    %v6131 = vadd.f32 0.0, %v6130
    %v6132 = vpop.f32.mrb[0].mxu0
    %6133 = vdwg.mxu0
    %v6135 = vsel %vm5008, %v5182, 0
    %6137 = vmatprep.subr.mxu0 0.0
    %6138 = vmatpush1.msra.mxu0 %v3588
    %6139 = vmatprep.subr.mxu0 0.0
    %6140 = vmatpush1.msra.mxu0 %v3724
    %6141 = vmatprep.subr.mxu0 0.0
    %6142 = vmatpush1.msra.mxu0 0.0
    %6143 = vmatprep.subr.mxu0 0.0
    %6144 = vmatpush1.msra.mxu0 0.0
    %6145 = vmatprep.subr.mxu0 0.0
    %6146 = vmatpush1.msra.mxu0 0.0
    %6147 = vmatprep.subr.mxu0 0.0
    %6148 = vmatpush1.msra.mxu0 0.0
    %6149 = vmatprep.subr.mxu0 0.0
    %6150 = vmatpush1.msra.mxu0 0.0
    %6151 = vmatprep.subr.mxu0 0.0
    %6152 = vmatpush1.msra.mxu0 0.0
    %6153 = vmatprep.subr.mxu0 0.0
    %6154 = vmatpush1.msra.mxu0 0.0
    %6155 = vmatprep.subr.mxu0 0.0
    %6156 = vmatpush1.msra.mxu0 0.0
    %6157 = vmatprep.subr.mxu0 0.0
    %6158 = vmatpush1.msra.mxu0 0.0
    %6159 = vmatprep.subr.mxu0 0.0
    %6160 = vmatpush1.msra.mxu0 0.0
    %6161 = vmatprep.subr.mxu0 0.0
    %6162 = vmatpush1.msra.mxu0 0.0
    %6163 = vmatprep.subr.mxu0 0.0
    %6164 = vmatpush1.msra.mxu0 0.0
    %6165 = vmatprep.subr.mxu0 0.0
    %6166 = vmatpush1.msra.mxu0 0.0
    %6167 = vmatprep.subr.mxu0 0.0
    %6168 = vmatpush1.msra.mxu0 0.0
    %6169 = vmatprep.subr.mxu0 0.0
    %6170 = vmatpush1.msra.mxu0 0.0
    %6171 = vmatprep.subr.mxu0 0.0
    %6172 = vmatpush1.msra.mxu0 0.0
    %6173 = vmatprep.subr.mxu0 0.0
    %6174 = vmatpush1.msra.mxu0 0.0
    %6175 = vmatprep.subr.mxu0 0.0
    %6176 = vmatpush1.msra.mxu0 0.0
    %6177 = vmatprep.subr.mxu0 0.0
    %6178 = vmatpush1.msra.mxu0 0.0
    %6179 = vmatprep.subr.mxu0 0.0
    %6180 = vmatpush1.msra.mxu0 0.0
    %6181 = vmatprep.subr.mxu0 0.0
    %6182 = vmatpush1.msra.mxu0 0.0
    %6183 = vmatprep.subr.mxu0 0.0
    %6184 = vmatpush1.msra.mxu0 0.0
    %6185 = vmatprep.subr.mxu0 0.0
    %6186 = vmatpush1.msra.mxu0 0.0
    %6187 = vmatprep.subr.mxu0 0.0
    %6188 = vmatpush1.msra.mxu0 0.0
    %6189 = vmatprep.subr.mxu0 0.0
    %6190 = vmatpush1.msra.mxu0 0.0
    %6191 = vmatprep.subr.mxu0 0.0
    %6192 = vmatpush1.msra.mxu0 0.0
    %6193 = vmatprep.subr.mxu0 0.0
    %6194 = vmatpush1.msra.mxu0 0.0
    %6195 = vmatprep.subr.mxu0 0.0
    %6196 = vmatpush1.msra.mxu0 0.0
    %6197 = vmatprep.subr.mxu0 0.0
    %6198 = vmatpush1.msra.mxu0 0.0
    %6199 = vmatprep.subr.mxu0 0.0
    %6200 = vmatpush1.msra.mxu0 0.0
    %6201 = vmatprep.mubr.f32.mxu0 0.0
    %6202 = vmatmul.mubr.f32.gmra.mrb[0].mxu0 %v6135
    %v6203 = vpop.f32.mrb[0].mxu0
    %v6204 = vadd.f32 0.0, %v6203
    %v6205 = vpop.f32.mrb[0].mxu0
    %6206 = vdwg.mxu0
    %v6208 = vsel %vm5008, %v5183, 0
    %6210 = vmatprep.subr.mxu0 0.0
    %6211 = vmatpush1.msra.mxu0 %v3589
    %6212 = vmatprep.subr.mxu0 0.0
    %6213 = vmatpush1.msra.mxu0 %v3725
    %6214 = vmatprep.subr.mxu0 0.0
    %6215 = vmatpush1.msra.mxu0 0.0
    %6216 = vmatprep.subr.mxu0 0.0
    %6217 = vmatpush1.msra.mxu0 0.0
    %6218 = vmatprep.subr.mxu0 0.0
    %6219 = vmatpush1.msra.mxu0 0.0
    %6220 = vmatprep.subr.mxu0 0.0
    %6221 = vmatpush1.msra.mxu0 0.0
    %6222 = vmatprep.subr.mxu0 0.0
    %6223 = vmatpush1.msra.mxu0 0.0
    %6224 = vmatprep.subr.mxu0 0.0
    %6225 = vmatpush1.msra.mxu0 0.0
    %6226 = vmatprep.subr.mxu0 0.0
    %6227 = vmatpush1.msra.mxu0 0.0
    %6228 = vmatprep.subr.mxu0 0.0
    %6229 = vmatpush1.msra.mxu0 0.0
    %6230 = vmatprep.subr.mxu0 0.0
    %6231 = vmatpush1.msra.mxu0 0.0
    %6232 = vmatprep.subr.mxu0 0.0
    %6233 = vmatpush1.msra.mxu0 0.0
    %6234 = vmatprep.subr.mxu0 0.0
    %6235 = vmatpush1.msra.mxu0 0.0
    %6236 = vmatprep.subr.mxu0 0.0
    %6237 = vmatpush1.msra.mxu0 0.0
    %6238 = vmatprep.subr.mxu0 0.0
    %6239 = vmatpush1.msra.mxu0 0.0
    %6240 = vmatprep.subr.mxu0 0.0
    %6241 = vmatpush1.msra.mxu0 0.0
    %6242 = vmatprep.subr.mxu0 0.0
    %6243 = vmatpush1.msra.mxu0 0.0
    %6244 = vmatprep.subr.mxu0 0.0
    %6245 = vmatpush1.msra.mxu0 0.0
    %6246 = vmatprep.subr.mxu0 0.0
    %6247 = vmatpush1.msra.mxu0 0.0
    %6248 = vmatprep.subr.mxu0 0.0
    %6249 = vmatpush1.msra.mxu0 0.0
    %6250 = vmatprep.subr.mxu0 0.0
    %6251 = vmatpush1.msra.mxu0 0.0
    %6252 = vmatprep.subr.mxu0 0.0
    %6253 = vmatpush1.msra.mxu0 0.0
    %6254 = vmatprep.subr.mxu0 0.0
    %6255 = vmatpush1.msra.mxu0 0.0
    %6256 = vmatprep.subr.mxu0 0.0
    %6257 = vmatpush1.msra.mxu0 0.0
    %6258 = vmatprep.subr.mxu0 0.0
    %6259 = vmatpush1.msra.mxu0 0.0
    %6260 = vmatprep.subr.mxu0 0.0
    %6261 = vmatpush1.msra.mxu0 0.0
    %6262 = vmatprep.subr.mxu0 0.0
    %6263 = vmatpush1.msra.mxu0 0.0
    %6264 = vmatprep.subr.mxu0 0.0
    %6265 = vmatpush1.msra.mxu0 0.0
    %6266 = vmatprep.subr.mxu0 0.0
    %6267 = vmatpush1.msra.mxu0 0.0
    %6268 = vmatprep.subr.mxu0 0.0
    %6269 = vmatpush1.msra.mxu0 0.0
    %6270 = vmatprep.subr.mxu0 0.0
    %6271 = vmatpush1.msra.mxu0 0.0
    %6272 = vmatprep.subr.mxu0 0.0
    %6273 = vmatpush1.msra.mxu0 0.0
    %6274 = vmatprep.mubr.f32.mxu0 0.0
    %6275 = vmatmul.mubr.f32.gmra.mrb[0].mxu0 %v6208
    %v6276 = vpop.f32.mrb[0].mxu0
    %v6277 = vadd.f32 0.0, %v6276
    %v6278 = vpop.f32.mrb[0].mxu0
    %6279 = vdwg.mxu0
    %v6281 = vsel %vm5008, %v5184, 0
    %6283 = vmatprep.subr.mxu0 0.0
    %6284 = vmatpush1.msra.mxu0 %v3590
    %6285 = vmatprep.subr.mxu0 0.0
    %6286 = vmatpush1.msra.mxu0 %v3726
    %6287 = vmatprep.subr.mxu0 0.0
    %6288 = vmatpush1.msra.mxu0 0.0
    %6289 = vmatprep.subr.mxu0 0.0
    %6290 = vmatpush1.msra.mxu0 0.0
    %6291 = vmatprep.subr.mxu0 0.0
    %6292 = vmatpush1.msra.mxu0 0.0
    %6293 = vmatprep.subr.mxu0 0.0
    %6294 = vmatpush1.msra.mxu0 0.0
    %6295 = vmatprep.subr.mxu0 0.0
    %6296 = vmatpush1.msra.mxu0 0.0
    %6297 = vmatprep.subr.mxu0 0.0
    %6298 = vmatpush1.msra.mxu0 0.0
    %6299 = vmatprep.subr.mxu0 0.0
    %6300 = vmatpush1.msra.mxu0 0.0
    %6301 = vmatprep.subr.mxu0 0.0
    %6302 = vmatpush1.msra.mxu0 0.0
    %6303 = vmatprep.subr.mxu0 0.0
    %6304 = vmatpush1.msra.mxu0 0.0
    %6305 = vmatprep.subr.mxu0 0.0
    %6306 = vmatpush1.msra.mxu0 0.0
    %6307 = vmatprep.subr.mxu0 0.0
    %6308 = vmatpush1.msra.mxu0 0.0
    %6309 = vmatprep.subr.mxu0 0.0
    %6310 = vmatpush1.msra.mxu0 0.0
    %6311 = vmatprep.subr.mxu0 0.0
    %6312 = vmatpush1.msra.mxu0 0.0
    %6313 = vmatprep.subr.mxu0 0.0
    %6314 = vmatpush1.msra.mxu0 0.0
    %6315 = vmatprep.subr.mxu0 0.0
    %6316 = vmatpush1.msra.mxu0 0.0
    %6317 = vmatprep.subr.mxu0 0.0
    %6318 = vmatpush1.msra.mxu0 0.0
    %6319 = vmatprep.subr.mxu0 0.0
    %6320 = vmatpush1.msra.mxu0 0.0
    %6321 = vmatprep.subr.mxu0 0.0
    %6322 = vmatpush1.msra.mxu0 0.0
    %6323 = vmatprep.subr.mxu0 0.0
    %6324 = vmatpush1.msra.mxu0 0.0
    %6325 = vmatprep.subr.mxu0 0.0
    %6326 = vmatpush1.msra.mxu0 0.0
    %6327 = vmatprep.subr.mxu0 0.0
    %6328 = vmatpush1.msra.mxu0 0.0
    %6329 = vmatprep.subr.mxu0 0.0
    %6330 = vmatpush1.msra.mxu0 0.0
    %6331 = vmatprep.subr.mxu0 0.0
    %6332 = vmatpush1.msra.mxu0 0.0
    %6333 = vmatprep.subr.mxu0 0.0
    %6334 = vmatpush1.msra.mxu0 0.0
    %6335 = vmatprep.subr.mxu0 0.0
    %6336 = vmatpush1.msra.mxu0 0.0
    %6337 = vmatprep.subr.mxu0 0.0
    %6338 = vmatpush1.msra.mxu0 0.0
    %6339 = vmatprep.subr.mxu0 0.0
    %6340 = vmatpush1.msra.mxu0 0.0
    %6341 = vmatprep.subr.mxu0 0.0
    %6342 = vmatpush1.msra.mxu0 0.0
    %6343 = vmatprep.subr.mxu0 0.0
    %6344 = vmatpush1.msra.mxu0 0.0
    %6345 = vmatprep.subr.mxu0 0.0
    %6346 = vmatpush1.msra.mxu0 0.0
    %6347 = vmatprep.mubr.f32.mxu0 0.0
    %6348 = vmatmul.mubr.f32.gmra.mrb[0].mxu0 %v6281
    %v6349 = vpop.f32.mrb[0].mxu0
    %v6350 = vadd.f32 0.0, %v6349
    %v6351 = vpop.f32.mrb[0].mxu0
    %6352 = vdwg.mxu0
    %v6353 = vcombine.low %v5255, %v5401
    %v6354 = vcombine.high %v5255, %v5401
    %v6356 = vunpack.c.l.s4 1983009808
    %v6357 = vunpack.c.0.s8 %v6356
    %v6358 = vlaneseq
    %v6359 = vshrl.u32 %v6358, 7
    %v6360 = vsub.s32 %v6357, %v6359
    %v6361 = vrot.slane %v6353, %v6360
    %v6363 = vunpack.c.l.s4 1983009808
    %v6364 = vunpack.c.0.s8 %v6363
    %v6365 = vlaneseq
    %v6366 = vshrl.u32 %v6365, 7
    %v6367 = vsub.s32 %v6364, %v6366
    %v6368 = vrot.slane %v6354, %v6367
    %v6369 = vcombine.low %v5328, %v5474
    %v6370 = vcombine.high %v5328, %v5474
    %v6372 = vunpack.c.l.s4 1983009808
    %v6373 = vunpack.c.0.s8 %v6372
    %v6374 = vlaneseq
    %v6375 = vshrl.u32 %v6374, 7
    %v6376 = vsub.s32 %v6373, %v6375
    %v6377 = vrot.slane %v6369, %v6376
    %v6379 = vunpack.c.l.s4 1983009808
    %v6380 = vunpack.c.0.s8 %v6379
    %v6381 = vlaneseq
    %v6382 = vshrl.u32 %v6381, 7
    %v6383 = vsub.s32 %v6380, %v6382
    %v6384 = vrot.slane %v6370, %v6383
    %v6385 = vcombine.low %v5547, %v5693
    %v6386 = vcombine.high %v5547, %v5693
    %v6388 = vunpack.c.l.s4 1983009808
    %v6389 = vunpack.c.0.s8 %v6388
    %v6390 = vlaneseq
    %v6391 = vshrl.u32 %v6390, 7
    %v6392 = vsub.s32 %v6389, %v6391
    %v6393 = vrot.slane %v6385, %v6392
    %v6395 = vunpack.c.l.s4 1983009808
    %v6396 = vunpack.c.0.s8 %v6395
    %v6397 = vlaneseq
    %v6398 = vshrl.u32 %v6397, 7
    %v6399 = vsub.s32 %v6396, %v6398
    %v6400 = vrot.slane %v6386, %v6399
    %v6401 = vcombine.low %v5620, %v5766
    %v6402 = vcombine.high %v5620, %v5766
    %v6404 = vunpack.c.l.s4 1983009808
    %v6405 = vunpack.c.0.s8 %v6404
    %v6406 = vlaneseq
    %v6407 = vshrl.u32 %v6406, 7
    %v6408 = vsub.s32 %v6405, %v6407
    %v6409 = vrot.slane %v6401, %v6408
    %v6411 = vunpack.c.l.s4 1983009808
    %v6412 = vunpack.c.0.s8 %v6411
    %v6413 = vlaneseq
    %v6414 = vshrl.u32 %v6413, 7
    %v6415 = vsub.s32 %v6412, %v6414
    %v6416 = vrot.slane %v6402, %v6415
    %v6417 = vcombine.low %v6361, %v6377
    %v6418 = vcombine.high %v6361, %v6377
    %v6420 = vunpack.c.l.s4 1934713408
    %v6421 = vunpack.c.0.s8 %v6420
    %v6422 = vlaneseq
    %v6423 = vshrl.u32 %v6422, 7
    %v6424 = vsub.s32 %v6421, %v6423
    %v6425 = vrot.slane %v6417, %v6424
    %v6427 = vunpack.c.l.s4 1934713408
    %v6428 = vunpack.c.0.s8 %v6427
    %v6429 = vlaneseq
    %v6430 = vshrl.u32 %v6429, 7
    %v6431 = vsub.s32 %v6428, %v6430
    %v6432 = vrot.slane %v6418, %v6431
    %v6433 = vcombine.low %v6368, %v6384
    %v6434 = vcombine.high %v6368, %v6384
    %v6436 = vunpack.c.l.s4 1934713408
    %v6437 = vunpack.c.0.s8 %v6436
    %v6438 = vlaneseq
    %v6439 = vshrl.u32 %v6438, 7
    %v6440 = vsub.s32 %v6437, %v6439
    %v6441 = vrot.slane %v6433, %v6440
    %v6443 = vunpack.c.l.s4 1934713408
    %v6444 = vunpack.c.0.s8 %v6443
    %v6445 = vlaneseq
    %v6446 = vshrl.u32 %v6445, 7
    %v6447 = vsub.s32 %v6444, %v6446
    %v6448 = vrot.slane %v6434, %v6447
    %v6449 = vcombine.low %v6393, %v6409
    %v6450 = vcombine.high %v6393, %v6409
    %v6452 = vunpack.c.l.s4 1934713408
    %v6453 = vunpack.c.0.s8 %v6452
    %v6454 = vlaneseq
    %v6455 = vshrl.u32 %v6454, 7
    %v6456 = vsub.s32 %v6453, %v6455
    %v6457 = vrot.slane %v6449, %v6456
    %v6459 = vunpack.c.l.s4 1934713408
    %v6460 = vunpack.c.0.s8 %v6459
    %v6461 = vlaneseq
    %v6462 = vshrl.u32 %v6461, 7
    %v6463 = vsub.s32 %v6460, %v6462
    %v6464 = vrot.slane %v6450, %v6463
    %v6465 = vcombine.low %v6400, %v6416
    %v6466 = vcombine.high %v6400, %v6416
    %v6468 = vunpack.c.l.s4 1934713408
    %v6469 = vunpack.c.0.s8 %v6468
    %v6470 = vlaneseq
    %v6471 = vshrl.u32 %v6470, 7
    %v6472 = vsub.s32 %v6469, %v6471
    %v6473 = vrot.slane %v6465, %v6472
    %v6475 = vunpack.c.l.s4 1934713408
    %v6476 = vunpack.c.0.s8 %v6475
    %v6477 = vlaneseq
    %v6478 = vshrl.u32 %v6477, 7
    %v6479 = vsub.s32 %v6476, %v6478
    %v6480 = vrot.slane %v6466, %v6479
    %v6481 = vcombine.low %v6425, %v6457
    %v6482 = vcombine.high %v6425, %v6457
    %v6483 = vcombine.low %v6432, %v6464
    %v6484 = vcombine.high %v6432, %v6464
    %v6485 = vcombine.low %v6441, %v6473
    %v6486 = vcombine.high %v6441, %v6473
    %v6487 = vcombine.low %v6448, %v6480
    %v6488 = vcombine.high %v6448, %v6480
    %v6489 = vcombine.low %v5839, %v5985
    %v6490 = vcombine.high %v5839, %v5985
    %v6492 = vunpack.c.l.s4 1983009808
    %v6493 = vunpack.c.0.s8 %v6492
    %v6494 = vlaneseq
    %v6495 = vshrl.u32 %v6494, 7
    %v6496 = vsub.s32 %v6493, %v6495
    %v6497 = vrot.slane %v6489, %v6496
    %v6499 = vunpack.c.l.s4 1983009808
    %v6500 = vunpack.c.0.s8 %v6499
    %v6501 = vlaneseq
    %v6502 = vshrl.u32 %v6501, 7
    %v6503 = vsub.s32 %v6500, %v6502
    %v6504 = vrot.slane %v6490, %v6503
    %v6505 = vcombine.low %v5912, %v6058
    %v6506 = vcombine.high %v5912, %v6058
    %v6508 = vunpack.c.l.s4 1983009808
    %v6509 = vunpack.c.0.s8 %v6508
    %v6510 = vlaneseq
    %v6511 = vshrl.u32 %v6510, 7
    %v6512 = vsub.s32 %v6509, %v6511
    %v6513 = vrot.slane %v6505, %v6512
    %v6515 = vunpack.c.l.s4 1983009808
    %v6516 = vunpack.c.0.s8 %v6515
    %v6517 = vlaneseq
    %v6518 = vshrl.u32 %v6517, 7
    %v6519 = vsub.s32 %v6516, %v6518
    %v6520 = vrot.slane %v6506, %v6519
    %v6521 = vcombine.low %v6131, %v6277
    %v6522 = vcombine.high %v6131, %v6277
    %v6524 = vunpack.c.l.s4 1983009808
    %v6525 = vunpack.c.0.s8 %v6524
    %v6526 = vlaneseq
    %v6527 = vshrl.u32 %v6526, 7
    %v6528 = vsub.s32 %v6525, %v6527
    %v6529 = vrot.slane %v6521, %v6528
    %v6531 = vunpack.c.l.s4 1983009808
    %v6532 = vunpack.c.0.s8 %v6531
    %v6533 = vlaneseq
    %v6534 = vshrl.u32 %v6533, 7
    %v6535 = vsub.s32 %v6532, %v6534
    %v6536 = vrot.slane %v6522, %v6535
    %v6537 = vcombine.low %v6204, %v6350
    %v6538 = vcombine.high %v6204, %v6350
    %v6540 = vunpack.c.l.s4 1983009808
    %v6541 = vunpack.c.0.s8 %v6540
    %v6542 = vlaneseq
    %v6543 = vshrl.u32 %v6542, 7
    %v6544 = vsub.s32 %v6541, %v6543
    %v6545 = vrot.slane %v6537, %v6544
    %v6547 = vunpack.c.l.s4 1983009808
    %v6548 = vunpack.c.0.s8 %v6547
    %v6549 = vlaneseq
    %v6550 = vshrl.u32 %v6549, 7
    %v6551 = vsub.s32 %v6548, %v6550
    %v6552 = vrot.slane %v6538, %v6551
    %v6553 = vcombine.low %v6497, %v6513
    %v6554 = vcombine.high %v6497, %v6513
    %v6556 = vunpack.c.l.s4 1934713408
    %v6557 = vunpack.c.0.s8 %v6556
    %v6558 = vlaneseq
    %v6559 = vshrl.u32 %v6558, 7
    %v6560 = vsub.s32 %v6557, %v6559
    %v6561 = vrot.slane %v6553, %v6560
    %v6563 = vunpack.c.l.s4 1934713408
    %v6564 = vunpack.c.0.s8 %v6563
    %v6565 = vlaneseq
    %v6566 = vshrl.u32 %v6565, 7
    %v6567 = vsub.s32 %v6564, %v6566
    %v6568 = vrot.slane %v6554, %v6567
    %v6569 = vcombine.low %v6504, %v6520
    %v6570 = vcombine.high %v6504, %v6520
    %v6572 = vunpack.c.l.s4 1934713408
    %v6573 = vunpack.c.0.s8 %v6572
    %v6574 = vlaneseq
    %v6575 = vshrl.u32 %v6574, 7
    %v6576 = vsub.s32 %v6573, %v6575
    %v6577 = vrot.slane %v6569, %v6576
    %v6579 = vunpack.c.l.s4 1934713408
    %v6580 = vunpack.c.0.s8 %v6579
    %v6581 = vlaneseq
    %v6582 = vshrl.u32 %v6581, 7
    %v6583 = vsub.s32 %v6580, %v6582
    %v6584 = vrot.slane %v6570, %v6583
    %v6585 = vcombine.low %v6529, %v6545
    %v6586 = vcombine.high %v6529, %v6545
    %v6588 = vunpack.c.l.s4 1934713408
    %v6589 = vunpack.c.0.s8 %v6588
    %v6590 = vlaneseq
    %v6591 = vshrl.u32 %v6590, 7
    %v6592 = vsub.s32 %v6589, %v6591
    %v6593 = vrot.slane %v6585, %v6592
    %v6595 = vunpack.c.l.s4 1934713408
    %v6596 = vunpack.c.0.s8 %v6595
    %v6597 = vlaneseq
    %v6598 = vshrl.u32 %v6597, 7
    %v6599 = vsub.s32 %v6596, %v6598
    %v6600 = vrot.slane %v6586, %v6599
    %v6601 = vcombine.low %v6536, %v6552
    %v6602 = vcombine.high %v6536, %v6552
    %v6604 = vunpack.c.l.s4 1934713408
    %v6605 = vunpack.c.0.s8 %v6604
    %v6606 = vlaneseq
    %v6607 = vshrl.u32 %v6606, 7
    %v6608 = vsub.s32 %v6605, %v6607
    %v6609 = vrot.slane %v6601, %v6608
    %v6611 = vunpack.c.l.s4 1934713408
    %v6612 = vunpack.c.0.s8 %v6611
    %v6613 = vlaneseq
    %v6614 = vshrl.u32 %v6613, 7
    %v6615 = vsub.s32 %v6612, %v6614
    %v6616 = vrot.slane %v6602, %v6615
    %v6617 = vcombine.low %v6561, %v6593
    %v6618 = vcombine.high %v6561, %v6593
    %v6619 = vcombine.low %v6568, %v6600
    %v6620 = vcombine.high %v6568, %v6600
    %v6621 = vcombine.low %v6577, %v6609
    %v6622 = vcombine.high %v6577, %v6609
    %v6623 = vcombine.low %v6584, %v6616
    %v6624 = vcombine.high %v6584, %v6616
    %v6625 = vcombine.low %v6481, %v6483
    %v6626 = vcombine.high %v6481, %v6483
    %v6628 = vunpack.c.l.s4 1983009808
    %v6629 = vunpack.c.0.s8 %v6628
    %v6630 = vlaneseq
    %v6631 = vshrl.u32 %v6630, 7
    %v6632 = vsub.s32 %v6629, %v6631
    %v6633 = vrot.slane %v6625, %v6632
    %v6635 = vunpack.c.l.s4 1983009808
    %v6636 = vunpack.c.0.s8 %v6635
    %v6637 = vlaneseq
    %v6638 = vshrl.u32 %v6637, 7
    %v6639 = vsub.s32 %v6636, %v6638
    %v6640 = vrot.slane %v6626, %v6639
    %v6641 = vcombine.low %v6482, %v6484
    %v6642 = vcombine.high %v6482, %v6484
    %v6644 = vunpack.c.l.s4 1983009808
    %v6645 = vunpack.c.0.s8 %v6644
    %v6646 = vlaneseq
    %v6647 = vshrl.u32 %v6646, 7
    %v6648 = vsub.s32 %v6645, %v6647
    %v6649 = vrot.slane %v6641, %v6648
    %v6651 = vunpack.c.l.s4 1983009808
    %v6652 = vunpack.c.0.s8 %v6651
    %v6653 = vlaneseq
    %v6654 = vshrl.u32 %v6653, 7
    %v6655 = vsub.s32 %v6652, %v6654
    %v6656 = vrot.slane %v6642, %v6655
    %v6657 = vcombine.low %v6485, %v6487
    %v6658 = vcombine.high %v6485, %v6487
    %v6660 = vunpack.c.l.s4 1983009808
    %v6661 = vunpack.c.0.s8 %v6660
    %v6662 = vlaneseq
    %v6663 = vshrl.u32 %v6662, 7
    %v6664 = vsub.s32 %v6661, %v6663
    %v6665 = vrot.slane %v6657, %v6664
    %v6667 = vunpack.c.l.s4 1983009808
    %v6668 = vunpack.c.0.s8 %v6667
    %v6669 = vlaneseq
    %v6670 = vshrl.u32 %v6669, 7
    %v6671 = vsub.s32 %v6668, %v6670
    %v6672 = vrot.slane %v6658, %v6671
    %v6673 = vcombine.low %v6486, %v6488
    %v6674 = vcombine.high %v6486, %v6488
    %v6676 = vunpack.c.l.s4 1983009808
    %v6677 = vunpack.c.0.s8 %v6676
    %v6678 = vlaneseq
    %v6679 = vshrl.u32 %v6678, 7
    %v6680 = vsub.s32 %v6677, %v6679
    %v6681 = vrot.slane %v6673, %v6680
    %v6683 = vunpack.c.l.s4 1983009808
    %v6684 = vunpack.c.0.s8 %v6683
    %v6685 = vlaneseq
    %v6686 = vshrl.u32 %v6685, 7
    %v6687 = vsub.s32 %v6684, %v6686
    %v6688 = vrot.slane %v6674, %v6687
    %v6689 = vcombine.low %v6633, %v6649
    %v6690 = vcombine.high %v6633, %v6649
    %v6692 = vunpack.c.l.s4 1934713408
    %v6693 = vunpack.c.0.s8 %v6692
    %v6694 = vlaneseq
    %v6695 = vshrl.u32 %v6694, 7
    %v6696 = vsub.s32 %v6693, %v6695
    %v6697 = vrot.slane %v6689, %v6696
    %v6699 = vunpack.c.l.s4 1934713408
    %v6700 = vunpack.c.0.s8 %v6699
    %v6701 = vlaneseq
    %v6702 = vshrl.u32 %v6701, 7
    %v6703 = vsub.s32 %v6700, %v6702
    %v6704 = vrot.slane %v6690, %v6703
    %v6705 = vcombine.low %v6640, %v6656
    %v6706 = vcombine.high %v6640, %v6656
    %v6708 = vunpack.c.l.s4 1934713408
    %v6709 = vunpack.c.0.s8 %v6708
    %v6710 = vlaneseq
    %v6711 = vshrl.u32 %v6710, 7
    %v6712 = vsub.s32 %v6709, %v6711
    %v6713 = vrot.slane %v6705, %v6712
    %v6715 = vunpack.c.l.s4 1934713408
    %v6716 = vunpack.c.0.s8 %v6715
    %v6717 = vlaneseq
    %v6718 = vshrl.u32 %v6717, 7
    %v6719 = vsub.s32 %v6716, %v6718
    %v6720 = vrot.slane %v6706, %v6719
    %v6721 = vcombine.low %v6665, %v6681
    %v6722 = vcombine.high %v6665, %v6681
    %v6724 = vunpack.c.l.s4 1934713408
    %v6725 = vunpack.c.0.s8 %v6724
    %v6726 = vlaneseq
    %v6727 = vshrl.u32 %v6726, 7
    %v6728 = vsub.s32 %v6725, %v6727
    %v6729 = vrot.slane %v6721, %v6728
    %v6731 = vunpack.c.l.s4 1934713408
    %v6732 = vunpack.c.0.s8 %v6731
    %v6733 = vlaneseq
    %v6734 = vshrl.u32 %v6733, 7
    %v6735 = vsub.s32 %v6732, %v6734
    %v6736 = vrot.slane %v6722, %v6735
    %v6737 = vcombine.low %v6672, %v6688
    %v6738 = vcombine.high %v6672, %v6688
    %v6740 = vunpack.c.l.s4 1934713408
    %v6741 = vunpack.c.0.s8 %v6740
    %v6742 = vlaneseq
    %v6743 = vshrl.u32 %v6742, 7
    %v6744 = vsub.s32 %v6741, %v6743
    %v6745 = vrot.slane %v6737, %v6744
    %v6747 = vunpack.c.l.s4 1934713408
    %v6748 = vunpack.c.0.s8 %v6747
    %v6749 = vlaneseq
    %v6750 = vshrl.u32 %v6749, 7
    %v6751 = vsub.s32 %v6748, %v6750
    %v6752 = vrot.slane %v6738, %v6751
    %v6753 = vcombine.low %v6697, %v6729
    %v6754 = vcombine.high %v6697, %v6729
    %v6755 = vcombine.low %v6704, %v6736
    %v6756 = vcombine.high %v6704, %v6736
    %v6757 = vcombine.low %v6713, %v6745
    %v6758 = vcombine.high %v6713, %v6745
    %v6759 = vcombine.low %v6720, %v6752
    %v6760 = vcombine.high %v6720, %v6752
    %v6761 = vcombine.low %v6617, %v6619
    %v6762 = vcombine.high %v6617, %v6619
    %v6764 = vunpack.c.l.s4 1983009808
    %v6765 = vunpack.c.0.s8 %v6764
    %v6766 = vlaneseq
    %v6767 = vshrl.u32 %v6766, 7
    %v6768 = vsub.s32 %v6765, %v6767
    %v6769 = vrot.slane %v6761, %v6768
    %v6771 = vunpack.c.l.s4 1983009808
    %v6772 = vunpack.c.0.s8 %v6771
    %v6773 = vlaneseq
    %v6774 = vshrl.u32 %v6773, 7
    %v6775 = vsub.s32 %v6772, %v6774
    %v6776 = vrot.slane %v6762, %v6775
    %v6777 = vcombine.low %v6618, %v6620
    %v6778 = vcombine.high %v6618, %v6620
    %v6780 = vunpack.c.l.s4 1983009808
    %v6781 = vunpack.c.0.s8 %v6780
    %v6782 = vlaneseq
    %v6783 = vshrl.u32 %v6782, 7
    %v6784 = vsub.s32 %v6781, %v6783
    %v6785 = vrot.slane %v6777, %v6784
    %v6787 = vunpack.c.l.s4 1983009808
    %v6788 = vunpack.c.0.s8 %v6787
    %v6789 = vlaneseq
    %v6790 = vshrl.u32 %v6789, 7
    %v6791 = vsub.s32 %v6788, %v6790
    %v6792 = vrot.slane %v6778, %v6791
    %v6793 = vcombine.low %v6621, %v6623
    %v6794 = vcombine.high %v6621, %v6623
    %v6796 = vunpack.c.l.s4 1983009808
    %v6797 = vunpack.c.0.s8 %v6796
    %v6798 = vlaneseq
    %v6799 = vshrl.u32 %v6798, 7
    %v6800 = vsub.s32 %v6797, %v6799
    %v6801 = vrot.slane %v6793, %v6800
    %v6803 = vunpack.c.l.s4 1983009808
    %v6804 = vunpack.c.0.s8 %v6803
    %v6805 = vlaneseq
    %v6806 = vshrl.u32 %v6805, 7
    %v6807 = vsub.s32 %v6804, %v6806
    %v6808 = vrot.slane %v6794, %v6807
    %v6809 = vcombine.low %v6622, %v6624
    %v6810 = vcombine.high %v6622, %v6624
    %v6812 = vunpack.c.l.s4 1983009808
    %v6813 = vunpack.c.0.s8 %v6812
    %v6814 = vlaneseq
    %v6815 = vshrl.u32 %v6814, 7
    %v6816 = vsub.s32 %v6813, %v6815
    %v6817 = vrot.slane %v6809, %v6816
    %v6819 = vunpack.c.l.s4 1983009808
    %v6820 = vunpack.c.0.s8 %v6819
    %v6821 = vlaneseq
    %v6822 = vshrl.u32 %v6821, 7
    %v6823 = vsub.s32 %v6820, %v6822
    %v6824 = vrot.slane %v6810, %v6823
    %v6825 = vcombine.low %v6769, %v6785
    %v6826 = vcombine.high %v6769, %v6785
    %v6828 = vunpack.c.l.s4 1934713408
    %v6829 = vunpack.c.0.s8 %v6828
    %v6830 = vlaneseq
    %v6831 = vshrl.u32 %v6830, 7
    %v6832 = vsub.s32 %v6829, %v6831
    %v6833 = vrot.slane %v6825, %v6832
    %v6835 = vunpack.c.l.s4 1934713408
    %v6836 = vunpack.c.0.s8 %v6835
    %v6837 = vlaneseq
    %v6838 = vshrl.u32 %v6837, 7
    %v6839 = vsub.s32 %v6836, %v6838
    %v6840 = vrot.slane %v6826, %v6839
    %v6841 = vcombine.low %v6776, %v6792
    %v6842 = vcombine.high %v6776, %v6792
    %v6844 = vunpack.c.l.s4 1934713408
    %v6845 = vunpack.c.0.s8 %v6844
    %v6846 = vlaneseq
    %v6847 = vshrl.u32 %v6846, 7
    %v6848 = vsub.s32 %v6845, %v6847
    %v6849 = vrot.slane %v6841, %v6848
    %v6851 = vunpack.c.l.s4 1934713408
    %v6852 = vunpack.c.0.s8 %v6851
    %v6853 = vlaneseq
    %v6854 = vshrl.u32 %v6853, 7
    %v6855 = vsub.s32 %v6852, %v6854
    %v6856 = vrot.slane %v6842, %v6855
    %v6857 = vcombine.low %v6801, %v6817
    %v6858 = vcombine.high %v6801, %v6817
    %v6860 = vunpack.c.l.s4 1934713408
    %v6861 = vunpack.c.0.s8 %v6860
    %v6862 = vlaneseq
    %v6863 = vshrl.u32 %v6862, 7
    %v6864 = vsub.s32 %v6861, %v6863
    %v6865 = vrot.slane %v6857, %v6864
    %v6867 = vunpack.c.l.s4 1934713408
    %v6868 = vunpack.c.0.s8 %v6867
    %v6869 = vlaneseq
    %v6870 = vshrl.u32 %v6869, 7
    %v6871 = vsub.s32 %v6868, %v6870
    %v6872 = vrot.slane %v6858, %v6871
    %v6873 = vcombine.low %v6808, %v6824
    %v6874 = vcombine.high %v6808, %v6824
    %v6876 = vunpack.c.l.s4 1934713408
    %v6877 = vunpack.c.0.s8 %v6876
    %v6878 = vlaneseq
    %v6879 = vshrl.u32 %v6878, 7
    %v6880 = vsub.s32 %v6877, %v6879
    %v6881 = vrot.slane %v6873, %v6880
    %v6883 = vunpack.c.l.s4 1934713408
    %v6884 = vunpack.c.0.s8 %v6883
    %v6885 = vlaneseq
    %v6886 = vshrl.u32 %v6885, 7
    %v6887 = vsub.s32 %v6884, %v6886
    %v6888 = vrot.slane %v6874, %v6887
    %v6889 = vcombine.low %v6833, %v6865
    %v6890 = vcombine.high %v6833, %v6865
    %v6891 = vcombine.low %v6840, %v6872
    %v6892 = vcombine.high %v6840, %v6872
    %v6893 = vcombine.low %v6849, %v6881
    %v6894 = vcombine.high %v6849, %v6881
    %v6895 = vcombine.low %v6856, %v6888
    %v6896 = vcombine.high %v6856, %v6888
    %6899 = vrot.lane.b32.xlu0 %v6754, 32
    %v6900 = vpop.permute.xlu0 %6899
    %6901 = vrot.lane.b32.xlu0 %v6890, 32
    %v6902 = vpop.permute.xlu0 %6901
    %6907 = vrot.lane.b32.xlu0 %v6755, 64
    %v6908 = vpop.permute.xlu0 %6907
    %6909 = vrot.lane.b32.xlu0 %v6891, 64
    %v6910 = vpop.permute.xlu0 %6909
    %6915 = vrot.lane.b32.xlu0 %v6756, 96
    %v6916 = vpop.permute.xlu0 %6915
    %6917 = vrot.lane.b32.xlu0 %v6892, 96
    %v6918 = vpop.permute.xlu0 %6917
    %6923 = vrot.lane.b32.xlu0 %v6758, 32
    %v6924 = vpop.permute.xlu0 %6923
    %6925 = vrot.lane.b32.xlu0 %v6894, 32
    %v6926 = vpop.permute.xlu0 %6925
    %6931 = vrot.lane.b32.xlu0 %v6759, 64
    %v6932 = vpop.permute.xlu0 %6931
    %6933 = vrot.lane.b32.xlu0 %v6895, 64
    %v6934 = vpop.permute.xlu0 %6933
    %6939 = vrot.lane.b32.xlu0 %v6760, 96
    %v6940 = vpop.permute.xlu0 %6939
    %6941 = vrot.lane.b32.xlu0 %v6896, 96
    %v6942 = vpop.permute.xlu0 %6941
    %v6945 = vsel %vm3727, %v6753, %v6900
    %v6946 = vsel %vm3727, %v6889, %v6902
    %vm6947 = vcmask 523264
    %v6948 = vsel %vm6947, %v6945, %v6908
    %v6949 = vsel %vm6947, %v6946, %v6910
    %vm6950 = vcmask 785408
    %v6951 = vsel %vm6950, %v6948, %v6916
    %v6952 = vsel %vm6950, %v6949, %v6918
    %v6953 = vsel %vm3727, %v6757, %v6924
    %v6954 = vsel %vm3727, %v6893, %v6926
    %v6955 = vsel %vm6947, %v6953, %v6932
    %v6956 = vsel %vm6947, %v6954, %v6934
    %v6957 = vsel %vm6950, %v6955, %v6940
    %v6958 = vsel %vm6950, %v6956, %v6942
    %v6959 = vld [vmem:[#allocation13] sm:$0xff]
    %v6960 = vld [vmem:[#allocation13 + $0x8] sm:$0xff]
    %v6961 = vld [vmem:[#allocation13 + $0x10] sm:$0xff]
    %v6962 = vld [vmem:[#allocation13 + $0x18] sm:$0xff]
    %v6963 = vld [vmem:[#allocation13 + $0x20] sm:$0xff]
    %v6964 = vld [vmem:[#allocation13 + $0x28] sm:$0xff]
    %v6965 = vld [vmem:[#allocation13 + $0x30] sm:$0xff]
    %v6966 = vld [vmem:[#allocation13 + $0x38] sm:$0xff]
    %v6967 = vld [vmem:[#allocation13 + $0x40] sm:$0xff]
    %v6968 = vld [vmem:[#allocation13 + $0x48] sm:$0xff]
    %v6969 = vld [vmem:[#allocation13 + $0x50] sm:$0xff]
    %v6970 = vld [vmem:[#allocation13 + $0x58] sm:$0xff]
    %v6971 = vld [vmem:[#allocation13 + $0x60] sm:$0xff]
    %v6972 = vld [vmem:[#allocation13 + $0x68] sm:$0xff]
    %v6973 = vld [vmem:[#allocation13 + $0x70] sm:$0xff]
    %v6974 = vld [vmem:[#allocation13 + $0x78] sm:$0xff]
    %v6975 = vld [vmem:[#allocation13 + $0x80] sm:$0xff]
    %v6976 = vld [vmem:[#allocation13 + $0x88] sm:$0xff]
    %v6977 = vld [vmem:[#allocation13 + $0x90] sm:$0xff]
    %v6978 = vld [vmem:[#allocation13 + $0x98] sm:$0xff]
    %v6979 = vld [vmem:[#allocation13 + $0xa0] sm:$0xff]
    %v6980 = vld [vmem:[#allocation13 + $0xa8] sm:$0xff]
    %v6981 = vld [vmem:[#allocation13 + $0xb0] sm:$0xff]
    %v6982 = vld [vmem:[#allocation13 + $0xb8] sm:$0xff]
    %v6983 = vld [vmem:[#allocation13 + $0xc0] sm:$0xff]
    %v6984 = vld [vmem:[#allocation13 + $0xc8] sm:$0xff]
    %v6985 = vld [vmem:[#allocation13 + $0xd0] sm:$0xff]
    %v6986 = vld [vmem:[#allocation13 + $0xd8] sm:$0xff]
    %v6987 = vld [vmem:[#allocation13 + $0xe0] sm:$0xff]
    %v6988 = vld [vmem:[#allocation13 + $0xe8] sm:$0xff]
    %v6989 = vld [vmem:[#allocation13 + $0xf0] sm:$0xff]
    %v6990 = vld [vmem:[#allocation13 + $0xf8] sm:$0xff]
    %v6991 = vld [vmem:[#allocation13 + $0x100] sm:$0xff]
    %v6992 = vld [vmem:[#allocation13 + $0x108] sm:$0xff]
    %v6993 = vld [vmem:[#allocation13 + $0x110] sm:$0xff]
    %v6994 = vld [vmem:[#allocation13 + $0x118] sm:$0xff]
    %v6995 = vld [vmem:[#allocation13 + $0x120] sm:$0xff]
    %v6996 = vld [vmem:[#allocation13 + $0x128] sm:$0xff]
    %v6997 = vld [vmem:[#allocation13 + $0x130] sm:$0xff]
    %v6998 = vld [vmem:[#allocation13 + $0x138] sm:$0xff]
    %v6999 = vld [vmem:[#allocation13 + $0x140] sm:$0xff]
    %v7000 = vld [vmem:[#allocation13 + $0x148] sm:$0xff]
    %v7001 = vld [vmem:[#allocation13 + $0x150] sm:$0xff]
    %v7002 = vld [vmem:[#allocation13 + $0x158] sm:$0xff]
    %v7003 = vld [vmem:[#allocation13 + $0x160] sm:$0xff]
    %v7004 = vld [vmem:[#allocation13 + $0x168] sm:$0xff]
    %v7005 = vld [vmem:[#allocation13 + $0x170] sm:$0xff]
    %v7006 = vld [vmem:[#allocation13 + $0x178] sm:$0xff]
    %v7007 = vld [vmem:[#allocation13 + $0x180] sm:$0xff]
    %v7008 = vld [vmem:[#allocation13 + $0x188] sm:$0xff]
    %v7009 = vld [vmem:[#allocation13 + $0x190] sm:$0xff]
    %v7010 = vld [vmem:[#allocation13 + $0x198] sm:$0xff]
    %v7011 = vld [vmem:[#allocation13 + $0x1a0] sm:$0xff]
    %v7012 = vld [vmem:[#allocation13 + $0x1a8] sm:$0xff]
    %v7013 = vld [vmem:[#allocation13 + $0x1b0] sm:$0xff]
    %v7014 = vld [vmem:[#allocation13 + $0x1b8] sm:$0xff]
    %v7015 = vld [vmem:[#allocation13 + $0x1c0] sm:$0xff]
    %v7016 = vld [vmem:[#allocation13 + $0x1c8] sm:$0xff]
    %v7017 = vld [vmem:[#allocation13 + $0x1d0] sm:$0xff]
    %v7018 = vld [vmem:[#allocation13 + $0x1d8] sm:$0xff]
    %v7019 = vld [vmem:[#allocation13 + $0x1e0] sm:$0xff]
    %v7020 = vld [vmem:[#allocation13 + $0x1e8] sm:$0xff]
    %v7021 = vld [vmem:[#allocation13 + $0x1f0] sm:$0xff]
    %v7022 = vld [vmem:[#allocation13 + $0x1f8] sm:$0xff]
    %v7023 = vld [vmem:[%s9] sm:$0x3]
    %v7025 = vlaneseq
    %v7026 = vshrl.u32 %v7025, 7
    %v7027 = vsub.s32 0, %v7026
    %v7028 = vrot.slane %v7023, %v7027
    %v7029 = vlaneseq
    %v7030 = vshrl.u32 %v7029, 7
    %v7031 = vsub.s32 1, %v7030
    %v7032 = vrot.slane %v7023, %v7031
    %7035 = vmatprep.subr.mxu0 %v6960
    %7036 = vmatpush1.msra.mxu0 %v6959
    %7037 = vmatprep.subr.mxu0 %v6962
    %7038 = vmatpush1.msra.mxu0 %v6961
    %7039 = vmatprep.subr.mxu0 %v6964
    %7040 = vmatpush1.msra.mxu0 %v6963
    %7041 = vmatprep.subr.mxu0 %v6966
    %7042 = vmatpush1.msra.mxu0 %v6965
    %7043 = vmatprep.subr.mxu0 %v6968
    %7044 = vmatpush1.msra.mxu0 %v6967
    %7045 = vmatprep.subr.mxu0 %v6970
    %7046 = vmatpush1.msra.mxu0 %v6969
    %7047 = vmatprep.subr.mxu0 %v6972
    %7048 = vmatpush1.msra.mxu0 %v6971
    %7049 = vmatprep.subr.mxu0 %v6974
    %7050 = vmatpush1.msra.mxu0 %v6973
    %7051 = vmatprep.subr.mxu0 %v6976
    %7052 = vmatpush1.msra.mxu0 %v6975
    %7053 = vmatprep.subr.mxu0 %v6978
    %7054 = vmatpush1.msra.mxu0 %v6977
    %7055 = vmatprep.subr.mxu0 %v6980
    %7056 = vmatpush1.msra.mxu0 %v6979
    %7057 = vmatprep.subr.mxu0 %v6982
    %7058 = vmatpush1.msra.mxu0 %v6981
    %7059 = vmatprep.subr.mxu0 %v6984
    %7060 = vmatpush1.msra.mxu0 %v6983
    %7061 = vmatprep.subr.mxu0 %v6986
    %7062 = vmatpush1.msra.mxu0 %v6985
    %7063 = vmatprep.subr.mxu0 %v6988
    %7064 = vmatpush1.msra.mxu0 %v6987
    %7065 = vmatprep.subr.mxu0 %v6990
    %7066 = vmatpush1.msra.mxu0 %v6989
    %7067 = vmatprep.subr.mxu0 %v6992
    %7068 = vmatpush1.msra.mxu0 %v6991
    %7069 = vmatprep.subr.mxu0 %v6994
    %7070 = vmatpush1.msra.mxu0 %v6993
    %7071 = vmatprep.subr.mxu0 %v6996
    %7072 = vmatpush1.msra.mxu0 %v6995
    %7073 = vmatprep.subr.mxu0 %v6998
    %7074 = vmatpush1.msra.mxu0 %v6997
    %7075 = vmatprep.subr.mxu0 %v7000
    %7076 = vmatpush1.msra.mxu0 %v6999
    %7077 = vmatprep.subr.mxu0 %v7002
    %7078 = vmatpush1.msra.mxu0 %v7001
    %7079 = vmatprep.subr.mxu0 %v7004
    %7080 = vmatpush1.msra.mxu0 %v7003
    %7081 = vmatprep.subr.mxu0 %v7006
    %7082 = vmatpush1.msra.mxu0 %v7005
    %7083 = vmatprep.subr.mxu0 %v7008
    %7084 = vmatpush1.msra.mxu0 %v7007
    %7085 = vmatprep.subr.mxu0 %v7010
    %7086 = vmatpush1.msra.mxu0 %v7009
    %7087 = vmatprep.subr.mxu0 %v7012
    %7088 = vmatpush1.msra.mxu0 %v7011
    %7089 = vmatprep.subr.mxu0 %v7014
    %7090 = vmatpush1.msra.mxu0 %v7013
    %7091 = vmatprep.subr.mxu0 %v7016
    %7092 = vmatpush1.msra.mxu0 %v7015
    %7093 = vmatprep.subr.mxu0 %v7018
    %7094 = vmatpush1.msra.mxu0 %v7017
    %7095 = vmatprep.subr.mxu0 %v7020
    %7096 = vmatpush1.msra.mxu0 %v7019
    %7097 = vmatprep.subr.mxu0 %v7022
    %7098 = vmatpush1.msra.mxu0 %v7021
    %7099 = vmatprep.mubr.f32.mxu0 %v6957
    %7100 = vmatmul.mubr.f32.gmra.mrb[0].mxu0 %v6951
    %v7101 = vpop.f32.mrb[0].mxu0
    %v7102 = vadd.f32 %v7028, %v7101
    %v7103 = vpop.f32.mrb[0].mxu0
    %v7104 = vadd.f32 %v7032, %v7103
    %7105 = vmatprep.mubr.f32.mxu0 %v6958
    %7106 = vmatmul.mubr.f32.gmra.mrb[0].mxu0 %v6952
    %v7107 = vpop.f32.mrb[0].mxu0
    %v7108 = vadd.f32 %v7028, %v7107
    %v7109 = vpop.f32.mrb[0].mxu0
    %v7110 = vadd.f32 %v7032, %v7109
    %7111 = vdwg.mxu0
    %v7112 = vadd.f32 %v137, %v7102
    %v7113 = vadd.f32 %v138, %v7104
    %v7114 = vadd.f32 %v139, %v7108
    %v7115 = vadd.f32 %v140, %v7110
    %v7116 = vld [vmem:[%s10] sm:$0x3]
    %v7117 = vld [vmem:[%s11] sm:$0x3]
    %v7118 = vadd.f32 %v7112, %v7113
    %7119 = vadd.xlane.f32.xlu0 %v7118
    %v7120 = vpop.xlane.xlu0 %7119
    %v7121 = vadd.f32 %v7114, %v7115
    %7122 = vadd.xlane.f32.xlu0 %v7121
    %v7123 = vpop.xlane.xlu0 %7122
    %v7124 = vrcp.pop 256.0
    %v7125 = vmul.f32 %v7120, %v7124
    %v7126 = vmul.f32 %v7123, %v7124
    %v7127 = vsub.f32 %v7112, %v7125
    %v7128 = vsub.f32 %v7113, %v7125
    %v7129 = vsub.f32 %v7114, %v7126
    %v7130 = vsub.f32 %v7115, %v7126
    %v7131 = vmul.f32 %v7127, %v7127
    %v7132 = vmul.f32 %v7128, %v7128
    %v7133 = vmul.f32 %v7129, %v7129
    %v7134 = vmul.f32 %v7130, %v7130
    %v7135 = vadd.f32 %v7131, %v7132
    %7136 = vadd.xlane.f32.xlu0 %v7135
    %v7137 = vpop.xlane.xlu0 %7136
    %v7138 = vadd.f32 %v7133, %v7134
    %7139 = vadd.xlane.f32.xlu0 %v7138
    %v7140 = vpop.xlane.xlu0 %7139
    %v7141 = vmul.f32 %v7137, %v7124
    %v7142 = vmul.f32 %v7140, %v7124
    %v7143 = vadd.f32 %v7141, 1e-05
    %v7144 = vadd.f32 %v7142, 1e-05
    %v7145 = vrsqrt.pop %v7143
    %v7146 = vrsqrt.pop %v7144
    %v7147 = vmul.f32 %v7127, %v7145
    %v7148 = vmul.f32 %v7128, %v7145
    %v7149 = vmul.f32 %v7129, %v7146
    %v7150 = vmul.f32 %v7130, %v7146
    %v7152 = vlaneseq
    %v7153 = vshrl.u32 %v7152, 7
    %v7154 = vsub.s32 0, %v7153
    %v7155 = vrot.slane %v7116, %v7154
    %v7156 = vlaneseq
    %v7157 = vshrl.u32 %v7156, 7
    %v7158 = vsub.s32 1, %v7157
    %v7159 = vrot.slane %v7116, %v7158
    %v7162 = vmul.f32 %v7147, %v7155
    %v7163 = vmul.f32 %v7148, %v7159
    %v7164 = vmul.f32 %v7149, %v7155
    %v7165 = vmul.f32 %v7150, %v7159
    %v7167 = vlaneseq
    %v7168 = vshrl.u32 %v7167, 7
    %v7169 = vsub.s32 0, %v7168
    %v7170 = vrot.slane %v7117, %v7169
    %v7171 = vlaneseq
    %v7172 = vshrl.u32 %v7171, 7
    %v7173 = vsub.s32 1, %v7172
    %v7174 = vrot.slane %v7117, %v7173
    %v7177 = vadd.f32 %v7162, %v7170
    %v7178 = vadd.f32 %v7163, %v7174
    %v7179 = vadd.f32 %v7164, %v7170
    %v7180 = vadd.f32 %v7165, %v7174
    %7181 = vst [vmem:[#allocation14] sm:$0xff] %v7177
    %7182 = vst [vmem:[#allocation14 + $0x8] sm:$0xff] %v7178
    %7183 = vst [vmem:[#allocation14 + $0x10] sm:$0xff] %v7179
    %7184 = vst [vmem:[#allocation14 + $0x18] sm:$0xff] %v7180
    // Predicated region
    $region78: #{tpu_custom_call.1} parent=1 // pred_check
      _
    $region79: #{tpu_custom_call.1} parent=1 // pred_check_branch
      %7186 = sbr.rel (0) target = $region81
    $region80: #{tpu_custom_call.1} parent=1 // pred_region
      %s7188 = ssub.s32 512, 512
      %7189 = vsyncadd [#allocation4], %s7188
      %s7190 = sshll.u32 [#allocation14], 4
      %s7191 = int_to_ptr.vmem [resolvable:$true] %s7190
      %7196 = dma.vmem_to_hbm [thread:$0]  %s7191, 512, %s12, [#allocation4], 256, 256, 16
    $region81: #{tpu_custom_call.1} parent=1 // pred_fallthru
      _
    // Predicated region
    $region82: #{tpu_custom_call.1} parent=1 // pred_check
      _
    $region83: #{tpu_custom_call.1} parent=1 // pred_check_branch
      %7198 = sbr.rel (0) target = $region85
    $region84: #{tpu_custom_call.1} parent=1 // pred_region
      %7199 = dma.done [#allocation4], 512
    $region85: #{tpu_custom_call.1} parent=1 // pred_fallthru
      _
    %7200 = vsyncpa [#allocation3], 1
    %7201 = vsyncpa [#allocation6], 1
    %7202 = vsyncpa [#allocation9], 1
    %7203 = vsyncpa [#allocation12], 1
    %7204 = vsyncpa [#allocation4], 1

</llo_original>
